<compile_context>
chip_gen: v7x
topology: tpu7x:2x2x1
jax: 0.10.0
libtpu: 0.0.40
codegen_flags: <defaults>
</compile_context>

<pallas_src>
import math
import jax
import jax.numpy as jnp
from jax.experimental import pallas as pl
from jax.experimental.pallas import tpu as pltpu

# Small, self-consistent shapes
S = 8            # sequence length
B = 2            # batch
E = 32           # embed dim
H = 4            # attention heads
DH = E // H      # head dim
F = 64           # feed-forward hidden dim
NUM_LAYERS = 2
EPS = 1e-5


def _layer_norm(x, gamma, beta):
    mu = jnp.mean(x, axis=-1, keepdims=True)
    var = jnp.mean((x - mu) ** 2, axis=-1, keepdims=True)
    return (x - mu) * jax.lax.rsqrt(var + EPS) * gamma + beta


def decoder_stack_kernel(x_ref, pos_ref, mask_ref,
                         wqkv_ref, bqkv_ref, wo_ref, vece_ref, w1b_ref, w2_ref,
                         out_ref, attn_ref):
    num_layers = attn_ref.shape[0]
    batch = x_ref.shape[0]
    seq, emb = x_ref.shape[1], x_ref.shape[2]
    nheads, dh = wqkv_ref.shape[2], wqkv_ref.shape[4]
    scale = 1.0 / math.sqrt(dh)

    # Per-batch activations carried across all layers (stay in VMEM/vregs).
    xs = [x_ref[b] for b in range(batch)]                       # each [S, E]
    poss = [pos_ref[b] for b in range(batch)]                   # each [S, E]
    # Hoisted: additive key-padding bias, computed once per batch element.
    biases = [(mask_ref[b] * (-1e9))[None, :, :] for b in range(batch)]  # [1,1,S]

    for l in range(num_layers):          # static unroll over layers
        wqkv_l = wqkv_ref[l]             # [3, H, E, DH]
        wq, wk, wv = wqkv_l[0], wqkv_l[1], wqkv_l[2]
        bqkv_l = bqkv_ref[l]             # [3, H, 1, DH]
        bq, bk, bv = bqkv_l[0], bqkv_l[1], bqkv_l[2]
        wo = wo_ref[l]                   # [H, DH, E]
        ve = vece_ref[l]                 # [6, E]
        bo, g1, be1, bf2, g2, be2 = (ve[0:1], ve[1:2], ve[2:3],
                                     ve[3:4], ve[4:5], ve[5:6])
        w1b = w1b_ref[l]                 # [E+1, F]
        w1, bf1 = w1b[:emb, :], w1b[emb:emb + 1, :]
        w2 = w2_ref[l]                   # [F, E]

        for b in range(batch):           # static unroll over (tiny) batch
            x = xs[b]                    # [S, E]
            qk_in = x + poss[b]          # q/k carry position embedding, v does not
            qk3 = jnp.broadcast_to(qk_in[None], (nheads, seq, emb))
            x3 = jnp.broadcast_to(x[None], (nheads, seq, emb))

            # per-head projections as leading-batch batched matmuls
            q = jnp.einsum('hse,hed->hsd', qk3, wq,
                           preferred_element_type=jnp.float32) + bq   # [H,S,DH]
            k = jnp.einsum('hse,hed->hsd', qk3, wk,
                           preferred_element_type=jnp.float32) + bk
            v = jnp.einsum('hse,hed->hsd', x3, wv,
                           preferred_element_type=jnp.float32) + bv

            s = jnp.einsum('hqd,hkd->hqk', q, k,
                           preferred_element_type=jnp.float32) * scale + biases[b]
            p = jax.nn.softmax(s, axis=-1)                            # [H,S,S]
            attn_ref[l, b] = jnp.mean(p, axis=0)                      # head-averaged

            ctx = jnp.einsum('hqk,hkd->hqd', p, v,
                             preferred_element_type=jnp.float32)       # [H,S,DH]
            heads_out = jnp.einsum('hsd,hde->hse', ctx, wo,
                                   preferred_element_type=jnp.float32)  # [H,S,E]
            attn_out = jnp.sum(heads_out, axis=0) + bo                 # [S,E]

            y = _layer_norm(x + attn_out, g1, be1)

            ff = jnp.dot(y, w1, preferred_element_type=jnp.float32) + bf1
            ff = jnp.maximum(ff, 0.0)
            ff = jnp.dot(ff, w2, preferred_element_type=jnp.float32) + bf2
            xs[b] = _layer_norm(y + ff, g2, be2)

    for b in range(batch):
        out_ref[b] = xs[b]


def _pack_layer_params(layer_params):
    """Stack per-layer params along L and pack the small vectors into slabs."""
    wqkv, bqkv, wo_h, vece, w1b, w2s = [], [], [], [], [], []
    for (wq, bq, wk, bk, wv, bv, wo, bo,
         g1, be1, w1, bf1, w2, bf2, g2, be2) in layer_params:
        def split_in(w):     # [E, E] -> [H, E, DH]  (columns h*DH:(h+1)*DH)
            return jnp.transpose(w.reshape(E, H, DH), (1, 0, 2))

        def split_b(bias):   # [1, E] -> [H, 1, DH]
            return bias.reshape(H, 1, DH)

        wqkv.append(jnp.stack([split_in(wq), split_in(wk), split_in(wv)], axis=0))
        bqkv.append(jnp.stack([split_b(bq), split_b(bk), split_b(bv)], axis=0))
        wo_h.append(wo.reshape(H, DH, E))
        vece.append(jnp.concatenate([bo, g1, be1, bf2, g2, be2], axis=0))  # [6, E]
        w1b.append(jnp.concatenate([w1, bf1], axis=0))                     # [E+1, F]
        w2s.append(w2)
    return (jnp.stack(wqkv), jnp.stack(bqkv), jnp.stack(wo_h),
            jnp.stack(vece), jnp.stack(w1b), jnp.stack(w2s))


def transformer_decoder(global_input, input_key_padding_mask, position_embed,
                        layer_params):
    """global_input / position_embed: [S, B, E]; mask: [B, S] bool.
    Returns (output [S, B, E], weights [num_layers, B, S, S])."""
    if len(layer_params) == 0:
        return global_input, None

    num_layers = len(layer_params)
    x = jnp.transpose(global_input, (1, 0, 2))        # [B, S, E]  (once, total)
    pos = jnp.transpose(position_embed, (1, 0, 2))    # [B, S, E]
    mask = input_key_padding_mask.astype(jnp.float32)[:, None, :]   # [B, 1, S]
    packed = _pack_layer_params(layer_params)

    vmem = pl.BlockSpec(memory_space=pltpu.MemorySpace.VMEM)   # whole array in VMEM
    out_bse, attn = pl.pallas_call(
        decoder_stack_kernel,
        out_shape=(jax.ShapeDtypeStruct((B, S, E), jnp.float32),
                   jax.ShapeDtypeStruct((num_layers, B, S, S), jnp.float32)),
        in_specs=[vmem] * (3 + len(packed)),
        out_specs=(vmem, vmem),
    )(x, pos, mask, *packed)

    return jnp.transpose(out_bse, (1, 0, 2)), attn


def init_layer_params(key):
    ks = jax.random.split(key, 10)
    sc = 0.1
    wq = jax.random.normal(ks[0], (E, E), jnp.float32) * sc
    wk = jax.random.normal(ks[1], (E, E), jnp.float32) * sc
    wv = jax.random.normal(ks[2], (E, E), jnp.float32) * sc
    wo = jax.random.normal(ks[3], (E, E), jnp.float32) * sc
    bq = jnp.zeros((1, E), jnp.float32)
    bk = jnp.zeros((1, E), jnp.float32)
    bv = jnp.zeros((1, E), jnp.float32)
    bo = jnp.zeros((1, E), jnp.float32)
    g1 = jnp.ones((1, E), jnp.float32)
    be1 = jnp.zeros((1, E), jnp.float32)
    w1 = jax.random.normal(ks[4], (E, F), jnp.float32) * sc
    bf1 = jnp.zeros((1, F), jnp.float32)
    w2 = jax.random.normal(ks[5], (F, E), jnp.float32) * sc
    bf2 = jnp.zeros((1, E), jnp.float32)
    g2 = jnp.ones((1, E), jnp.float32)
    be2 = jnp.zeros((1, E), jnp.float32)
    return (wq, bq, wk, bk, wv, bv, wo, bo,
            g1, be1, w1, bf1, w2, bf2, g2, be2)


def _reference_decoder(global_input, input_key_padding_mask, position_embed,
                       layer_params):
    """Pure-JAX reference with identical math (for correctness check)."""
    x = jnp.transpose(global_input, (1, 0, 2))        # [B, S, E]
    pos = jnp.transpose(position_embed, (1, 0, 2))
    bias = input_key_padding_mask.astype(jnp.float32)[:, None, None, :] * (-1e9)
    weights = []
    for (wq, bq, wk, bk, wv, bv, wo, bo,
         g1, be1, w1, bf1, w2, bf2, g2, be2) in layer_params:
        qk_in = x + pos
        q = qk_in @ wq + bq
        k = qk_in @ wk + bk
        v = x @ wv + bv

        def heads(t):
            return t.reshape(B, S, H, DH).transpose(0, 2, 1, 3)   # [B,H,S,DH]

        qh, kh, vh = heads(q), heads(k), heads(v)
        s = jnp.einsum('bhqd,bhkd->bhqk', qh, kh) / math.sqrt(DH) + bias
        p = jax.nn.softmax(s, axis=-1)
        weights.append(jnp.mean(p, axis=1))                        # [B,S,S]
        ctx = jnp.einsum('bhqk,bhkd->bhqd', p, vh)
        ctx = ctx.transpose(0, 2, 1, 3).reshape(B, S, E)
        attn_out = ctx @ wo + bo
        y = _layer_norm(x + attn_out, g1, be1)
        ff = jnp.maximum(y @ w1 + bf1, 0.0)
        ff = ff @ w2 + bf2
        x = _layer_norm(y + ff, g2, be2)
    return jnp.transpose(x, (1, 0, 2)), jnp.stack(weights, axis=0)


if __name__ == "__main__":
    key = jax.random.PRNGKey(0)
    k_in, k_pos, k_layers = jax.random.split(key, 3)

    global_input = jax.random.normal(k_in, (S, B, E), jnp.float32)
    position_embed = jax.random.normal(k_pos, (S, B, E), jnp.float32)
    # key padding mask [B, S]: True == padded (last two positions of batch 1)
    input_key_padding_mask = jnp.zeros((B, S), jnp.bool_).at[1, -2:].set(True)

    layer_keys = jax.random.split(k_layers, NUM_LAYERS)
    layer_params = [init_layer_params(lk) for lk in layer_keys]

    fwd = jax.jit(transformer_decoder)
    output, weights = fwd(global_input, input_key_padding_mask,
                          position_embed, layer_params)
    output = jax.block_until_ready(output)
    weights = jax.block_until_ready(weights)

    ref_out, ref_w = _reference_decoder(global_input, input_key_padding_mask,
                                        position_embed, layer_params)

    assert output.shape == (S, B, E)
    assert weights.shape == (NUM_LAYERS, B, S, S)
    assert bool(jnp.all(jnp.isfinite(output)))
    assert bool(jnp.all(jnp.isfinite(weights)))
    # attention rows sum to 1
    assert bool(jnp.allclose(weights.sum(-1), 1.0, atol=1e-4))
    # matches the pure-JAX reference
    assert bool(jnp.allclose(output, ref_out, atol=1e-3, rtol=1e-3))
    assert bool(jnp.allclose(weights, ref_w, atol=1e-3, rtol=1e-3))
    print("KERNEL_OK")
</pallas_src>

<mosaic_0001>
module attributes {stable_mosaic.version = 11 : i64} {
  func.func @decoder_stack_kernel(%arg0: memref<2x8x32xf32, #tpu.memory_space<vmem>>, %arg1: memref<2x8x32xf32, #tpu.memory_space<vmem>>, %arg2: memref<2x1x8xf32, #tpu.memory_space<vmem>>, %arg3: memref<2x3x4x32x8xf32, #tpu.memory_space<vmem>>, %arg4: memref<2x3x4x1x8xf32, #tpu.memory_space<vmem>>, %arg5: memref<2x4x8x32xf32, #tpu.memory_space<vmem>>, %arg6: memref<2x6x32xf32, #tpu.memory_space<vmem>>, %arg7: memref<2x33x64xf32, #tpu.memory_space<vmem>>, %arg8: memref<2x64x32xf32, #tpu.memory_space<vmem>>, %arg9: memref<2x8x32xf32, #tpu.memory_space<vmem>>, %arg10: memref<2x2x8x8xf32, #tpu.memory_space<vmem>>) attributes {dimension_semantics = [], scalar_prefetch = 0 : i64, scratch_operands = 0 : i64, tpu.core_type = #tpu.core_type<tc>} {
    %c0 = arith.constant 0 : index
    %c0_0 = arith.constant 0 : index
    %c0_1 = arith.constant 0 : index
    %0 = vector.load %arg0[%c0, %c0_0, %c0_1] : memref<2x8x32xf32, #tpu.memory_space<vmem>>, vector<1x8x32xf32>
    %1 = vector.shape_cast %0 : vector<1x8x32xf32> to vector<8x32xf32>
    %c1 = arith.constant 1 : index
    %c0_2 = arith.constant 0 : index
    %c0_3 = arith.constant 0 : index
    %2 = vector.load %arg0[%c1, %c0_2, %c0_3] : memref<2x8x32xf32, #tpu.memory_space<vmem>>, vector<1x8x32xf32>
    %3 = vector.shape_cast %2 : vector<1x8x32xf32> to vector<8x32xf32>
    %c0_4 = arith.constant 0 : index
    %c0_5 = arith.constant 0 : index
    %c0_6 = arith.constant 0 : index
    %4 = vector.load %arg1[%c0_4, %c0_5, %c0_6] : memref<2x8x32xf32, #tpu.memory_space<vmem>>, vector<1x8x32xf32>
    %5 = vector.shape_cast %4 : vector<1x8x32xf32> to vector<8x32xf32>
    %c1_7 = arith.constant 1 : index
    %c0_8 = arith.constant 0 : index
    %c0_9 = arith.constant 0 : index
    %6 = vector.load %arg1[%c1_7, %c0_8, %c0_9] : memref<2x8x32xf32, #tpu.memory_space<vmem>>, vector<1x8x32xf32>
    %7 = vector.shape_cast %6 : vector<1x8x32xf32> to vector<8x32xf32>
    %c0_10 = arith.constant 0 : index
    %c0_11 = arith.constant 0 : index
    %c0_12 = arith.constant 0 : index
    %8 = vector.load %arg2[%c0_10, %c0_11, %c0_12] : memref<2x1x8xf32, #tpu.memory_space<vmem>>, vector<1x1x8xf32>
    %9 = vector.shape_cast %8 : vector<1x1x8xf32> to vector<1x8xf32>
    %cst = arith.constant -1.000000e+09 : f32
    %10 = vector.broadcast %cst : f32 to vector<1x8xf32>
    %11 = arith.mulf %9, %10 : vector<1x8xf32>
    %12 = vector.shape_cast %11 : vector<1x8xf32> to vector<1x1x8xf32>
    %c1_13 = arith.constant 1 : index
    %c0_14 = arith.constant 0 : index
    %c0_15 = arith.constant 0 : index
    %13 = vector.load %arg2[%c1_13, %c0_14, %c0_15] : memref<2x1x8xf32, #tpu.memory_space<vmem>>, vector<1x1x8xf32>
    %14 = vector.shape_cast %13 : vector<1x1x8xf32> to vector<1x8xf32>
    %cst_16 = arith.constant -1.000000e+09 : f32
    %15 = vector.broadcast %cst_16 : f32 to vector<1x8xf32>
    %16 = arith.mulf %14, %15 : vector<1x8xf32>
    %17 = vector.shape_cast %16 : vector<1x8xf32> to vector<1x1x8xf32>
    %c0_17 = arith.constant 0 : index
    %c0_18 = arith.constant 0 : index
    %c0_19 = arith.constant 0 : index
    %c0_20 = arith.constant 0 : index
    %c0_21 = arith.constant 0 : index
    %18 = vector.load %arg3[%c0_17, %c0_18, %c0_19, %c0_20, %c0_21] : memref<2x3x4x32x8xf32, #tpu.memory_space<vmem>>, vector<1x3x4x32x8xf32>
    %19 = vector.shape_cast %18 : vector<1x3x4x32x8xf32> to vector<3x4x32x8xf32>
    %20 = vector.extract_strided_slice %19 {offsets = [0, 0, 0, 0], sizes = [1, 4, 32, 8], strides = [1, 1, 1, 1]} : vector<3x4x32x8xf32> to vector<1x4x32x8xf32>
    %21 = vector.shape_cast %20 : vector<1x4x32x8xf32> to vector<4x32x8xf32>
    %22 = vector.extract_strided_slice %19 {offsets = [1, 0, 0, 0], sizes = [1, 4, 32, 8], strides = [1, 1, 1, 1]} : vector<3x4x32x8xf32> to vector<1x4x32x8xf32>
    %23 = vector.shape_cast %22 : vector<1x4x32x8xf32> to vector<4x32x8xf32>
    %24 = vector.extract_strided_slice %19 {offsets = [2, 0, 0, 0], sizes = [1, 4, 32, 8], strides = [1, 1, 1, 1]} : vector<3x4x32x8xf32> to vector<1x4x32x8xf32>
    %25 = vector.shape_cast %24 : vector<1x4x32x8xf32> to vector<4x32x8xf32>
    %c0_22 = arith.constant 0 : index
    %c0_23 = arith.constant 0 : index
    %c0_24 = arith.constant 0 : index
    %c0_25 = arith.constant 0 : index
    %c0_26 = arith.constant 0 : index
    %26 = vector.load %arg4[%c0_22, %c0_23, %c0_24, %c0_25, %c0_26] : memref<2x3x4x1x8xf32, #tpu.memory_space<vmem>>, vector<1x3x4x1x8xf32>
    %27 = vector.shape_cast %26 : vector<1x3x4x1x8xf32> to vector<3x4x1x8xf32>
    %28 = vector.extract_strided_slice %27 {offsets = [0, 0, 0, 0], sizes = [1, 4, 1, 8], strides = [1, 1, 1, 1]} : vector<3x4x1x8xf32> to vector<1x4x1x8xf32>
    %29 = vector.shape_cast %28 : vector<1x4x1x8xf32> to vector<4x1x8xf32>
    %30 = vector.extract_strided_slice %27 {offsets = [1, 0, 0, 0], sizes = [1, 4, 1, 8], strides = [1, 1, 1, 1]} : vector<3x4x1x8xf32> to vector<1x4x1x8xf32>
    %31 = vector.shape_cast %30 : vector<1x4x1x8xf32> to vector<4x1x8xf32>
    %32 = vector.extract_strided_slice %27 {offsets = [2, 0, 0, 0], sizes = [1, 4, 1, 8], strides = [1, 1, 1, 1]} : vector<3x4x1x8xf32> to vector<1x4x1x8xf32>
    %33 = vector.shape_cast %32 : vector<1x4x1x8xf32> to vector<4x1x8xf32>
    %c0_27 = arith.constant 0 : index
    %c0_28 = arith.constant 0 : index
    %c0_29 = arith.constant 0 : index
    %c0_30 = arith.constant 0 : index
    %34 = vector.load %arg5[%c0_27, %c0_28, %c0_29, %c0_30] : memref<2x4x8x32xf32, #tpu.memory_space<vmem>>, vector<1x4x8x32xf32>
    %35 = vector.shape_cast %34 : vector<1x4x8x32xf32> to vector<4x8x32xf32>
    %c0_31 = arith.constant 0 : index
    %c0_32 = arith.constant 0 : index
    %c0_33 = arith.constant 0 : index
    %36 = vector.load %arg6[%c0_31, %c0_32, %c0_33] : memref<2x6x32xf32, #tpu.memory_space<vmem>>, vector<1x6x32xf32>
    %37 = vector.shape_cast %36 : vector<1x6x32xf32> to vector<6x32xf32>
    %38 = vector.extract_strided_slice %37 {offsets = [0, 0], sizes = [1, 32], strides = [1, 1]} : vector<6x32xf32> to vector<1x32xf32>
    %39 = vector.extract_strided_slice %37 {offsets = [1, 0], sizes = [1, 32], strides = [1, 1]} : vector<6x32xf32> to vector<1x32xf32>
    %40 = vector.extract_strided_slice %37 {offsets = [2, 0], sizes = [1, 32], strides = [1, 1]} : vector<6x32xf32> to vector<1x32xf32>
    %41 = vector.extract_strided_slice %37 {offsets = [3, 0], sizes = [1, 32], strides = [1, 1]} : vector<6x32xf32> to vector<1x32xf32>
    %42 = vector.extract_strided_slice %37 {offsets = [4, 0], sizes = [1, 32], strides = [1, 1]} : vector<6x32xf32> to vector<1x32xf32>
    %43 = vector.extract_strided_slice %37 {offsets = [5, 0], sizes = [1, 32], strides = [1, 1]} : vector<6x32xf32> to vector<1x32xf32>
    %c0_34 = arith.constant 0 : index
    %c0_35 = arith.constant 0 : index
    %c0_36 = arith.constant 0 : index
    %44 = vector.load %arg7[%c0_34, %c0_35, %c0_36] : memref<2x33x64xf32, #tpu.memory_space<vmem>>, vector<1x33x64xf32>
    %45 = vector.shape_cast %44 : vector<1x33x64xf32> to vector<33x64xf32>
    %46 = vector.extract_strided_slice %45 {offsets = [0, 0], sizes = [32, 64], strides = [1, 1]} : vector<33x64xf32> to vector<32x64xf32>
    %47 = vector.extract_strided_slice %45 {offsets = [32, 0], sizes = [1, 64], strides = [1, 1]} : vector<33x64xf32> to vector<1x64xf32>
    %c0_37 = arith.constant 0 : index
    %c0_38 = arith.constant 0 : index
    %c0_39 = arith.constant 0 : index
    %48 = vector.load %arg8[%c0_37, %c0_38, %c0_39] : memref<2x64x32xf32, #tpu.memory_space<vmem>>, vector<1x64x32xf32>
    %49 = vector.shape_cast %48 : vector<1x64x32xf32> to vector<64x32xf32>
    %50 = arith.addf %1, %5 : vector<8x32xf32>
    %51 = vector.shape_cast %50 : vector<8x32xf32> to vector<1x8x32xf32>
    %52 = vector.shape_cast %51 : vector<1x8x32xf32> to vector<1x8x32xf32>
    %53 = vector.broadcast %52 : vector<1x8x32xf32> to vector<4x8x32xf32>
    %54 = vector.shape_cast %1 : vector<8x32xf32> to vector<1x8x32xf32>
    %55 = vector.shape_cast %54 : vector<1x8x32xf32> to vector<1x8x32xf32>
    %56 = vector.broadcast %55 : vector<1x8x32xf32> to vector<4x8x32xf32>
    "tpu.trace_start"() <{level = 10 : i32, message = "hse,hed->hsd"}> : () -> ()
    %cst_40 = arith.constant dense<0.000000e+00> : vector<4x8x8xf32>
    %57 = tpu.matmul %53, %21, %cst_40 {dimension_numbers = #tpu.dot_dimension_numbers<[2], [1], [1], [2], [0, 0, 0, 1, 1, 2], [0], [0]>} : vector<4x8x32xf32>, vector<4x32x8xf32>, vector<4x8x8xf32> -> vector<4x8x8xf32>
    "tpu.trace_stop"() : () -> ()
    %58 = vector.broadcast %29 : vector<4x1x8xf32> to vector<4x8x8xf32>
    %59 = arith.addf %57, %58 : vector<4x8x8xf32>
    "tpu.trace_start"() <{level = 10 : i32, message = "hse,hed->hsd"}> : () -> ()
    %cst_41 = arith.constant dense<0.000000e+00> : vector<4x8x8xf32>
    %60 = tpu.matmul %53, %23, %cst_41 {dimension_numbers = #tpu.dot_dimension_numbers<[2], [1], [1], [2], [0, 0, 0, 1, 1, 2], [0], [0]>} : vector<4x8x32xf32>, vector<4x32x8xf32>, vector<4x8x8xf32> -> vector<4x8x8xf32>
    "tpu.trace_stop"() : () -> ()
    %61 = vector.broadcast %31 : vector<4x1x8xf32> to vector<4x8x8xf32>
    %62 = arith.addf %60, %61 : vector<4x8x8xf32>
    "tpu.trace_start"() <{level = 10 : i32, message = "hse,hed->hsd"}> : () -> ()
    %cst_42 = arith.constant dense<0.000000e+00> : vector<4x8x8xf32>
    %63 = tpu.matmul %56, %25, %cst_42 {dimension_numbers = #tpu.dot_dimension_numbers<[2], [1], [1], [2], [0, 0, 0, 1, 1, 2], [0], [0]>} : vector<4x8x32xf32>, vector<4x32x8xf32>, vector<4x8x8xf32> -> vector<4x8x8xf32>
    "tpu.trace_stop"() : () -> ()
    %64 = vector.broadcast %33 : vector<4x1x8xf32> to vector<4x8x8xf32>
    %65 = arith.addf %63, %64 : vector<4x8x8xf32>
    "tpu.trace_start"() <{level = 10 : i32, message = "hqd,hkd->hqk"}> : () -> ()
    %cst_43 = arith.constant dense<0.000000e+00> : vector<4x8x8xf32>
    %66 = tpu.matmul %59, %62, %cst_43 {dimension_numbers = #tpu.dot_dimension_numbers<[2], [2], [1], [1], [0, 0, 0, 1, 1, 1], [0], [0]>} : vector<4x8x8xf32>, vector<4x8x8xf32>, vector<4x8x8xf32> -> vector<4x8x8xf32>
    "tpu.trace_stop"() : () -> ()
    %cst_44 = arith.constant 0.353553385 : f32
    %67 = vector.broadcast %cst_44 : f32 to vector<4x8x8xf32>
    %68 = arith.mulf %66, %67 : vector<4x8x8xf32>
    %69 = vector.broadcast %12 : vector<1x1x8xf32> to vector<4x8x8xf32>
    %70 = arith.addf %68, %69 : vector<4x8x8xf32>
    %cst_45 = arith.constant dense<0xFF800000> : vector<4x8xf32>
    %71 = vector.multi_reduction <maximumf>, %70, %cst_45 [2] : vector<4x8x8xf32> to vector<4x8xf32>
    %cst_46 = arith.constant 0xFF800000 : f32
    %72 = vector.broadcast %cst_46 : f32 to vector<4x8xf32>
    %73 = arith.maximumf %72, %71 : vector<4x8xf32>
    %74 = vector.shape_cast %73 : vector<4x8xf32> to vector<4x8x1xf32>
    %75 = vector.broadcast %74 : vector<4x8x1xf32> to vector<4x8x8xf32>
    %76 = arith.subf %70, %75 : vector<4x8x8xf32>
    %77 = math.exp %76 : vector<4x8x8xf32>
    %cst_47 = arith.constant dense<0.000000e+00> : vector<4x8xf32>
    %78 = vector.multi_reduction <add>, %77, %cst_47 [2] : vector<4x8x8xf32> to vector<4x8xf32>
    %79 = vector.shape_cast %78 : vector<4x8xf32> to vector<4x8x1xf32>
    %80 = vector.broadcast %79 : vector<4x8x1xf32> to vector<4x8x8xf32>
    %81 = arith.divf %77, %80 : vector<4x8x8xf32>
    %cst_48 = arith.constant dense<0.000000e+00> : vector<8x8xf32>
    %82 = vector.multi_reduction <add>, %81, %cst_48 [0] : vector<4x8x8xf32> to vector<8x8xf32>
    %cst_49 = arith.constant 4.000000e+00 : f32
    %83 = vector.broadcast %cst_49 : f32 to vector<8x8xf32>
    %84 = arith.divf %82, %83 : vector<8x8xf32>
    %c0_50 = arith.constant 0 : index
    %c0_51 = arith.constant 0 : index
    %c0_52 = arith.constant 0 : index
    %c0_53 = arith.constant 0 : index
    %85 = vector.load %arg10[%c0_50, %c0_51, %c0_52, %c0_53] : memref<2x2x8x8xf32, #tpu.memory_space<vmem>>, vector<1x1x8x8xf32>
    %86 = vector.shape_cast %85 : vector<1x1x8x8xf32> to vector<8x8xf32>
    %87 = vector.shape_cast %84 : vector<8x8xf32> to vector<1x1x8x8xf32>
    tpu.vector_store %arg10[%c0_50, %c0_51, %c0_52, %c0_53], %87 {strides = array<i32>} : memref<2x2x8x8xf32, #tpu.memory_space<vmem>>, vector<1x1x8x8xf32>,
    "tpu.trace_start"() <{level = 10 : i32, message = "hqk,hkd->hqd"}> : () -> ()
    %cst_54 = arith.constant dense<0.000000e+00> : vector<4x8x8xf32>
    %88 = tpu.matmul %81, %65, %cst_54 {dimension_numbers = #tpu.dot_dimension_numbers<[2], [1], [1], [2], [0, 0, 0, 1, 1, 2], [0], [0]>} : vector<4x8x8xf32>, vector<4x8x8xf32>, vector<4x8x8xf32> -> vector<4x8x8xf32>
    "tpu.trace_stop"() : () -> ()
    "tpu.trace_start"() <{level = 10 : i32, message = "hsd,hde->hse"}> : () -> ()
    %cst_55 = arith.constant dense<0.000000e+00> : vector<4x8x32xf32>
    %89 = tpu.matmul %88, %35, %cst_55 {dimension_numbers = #tpu.dot_dimension_numbers<[2], [1], [1], [2], [0, 0, 0, 1, 1, 2], [0], [0]>} : vector<4x8x8xf32>, vector<4x8x32xf32>, vector<4x8x32xf32> -> vector<4x8x32xf32>
    "tpu.trace_stop"() : () -> ()
    %cst_56 = arith.constant dense<0.000000e+00> : vector<8x32xf32>
    %90 = vector.multi_reduction <add>, %89, %cst_56 [0] : vector<4x8x32xf32> to vector<8x32xf32>
    %91 = vector.broadcast %38 : vector<1x32xf32> to vector<8x32xf32>
    %92 = arith.addf %90, %91 : vector<8x32xf32>
    %93 = arith.addf %1, %92 : vector<8x32xf32>
    %cst_57 = arith.constant dense<0.000000e+00> : vector<8xf32>
    %94 = vector.multi_reduction <add>, %93, %cst_57 [1] : vector<8x32xf32> to vector<8xf32>
    %95 = vector.shape_cast %94 : vector<8xf32> to vector<8x1xf32>
    %cst_58 = arith.constant 3.200000e+01 : f32
    %96 = vector.broadcast %cst_58 : f32 to vector<8x1xf32>
    %97 = arith.divf %95, %96 : vector<8x1xf32>
    %98 = vector.broadcast %97 : vector<8x1xf32> to vector<8x32xf32>
    %99 = arith.subf %93, %98 : vector<8x32xf32>
    %100 = arith.mulf %99, %99 : vector<8x32xf32>
    %cst_59 = arith.constant dense<0.000000e+00> : vector<8xf32>
    %101 = vector.multi_reduction <add>, %100, %cst_59 [1] : vector<8x32xf32> to vector<8xf32>
    %102 = vector.shape_cast %101 : vector<8xf32> to vector<8x1xf32>
    %cst_60 = arith.constant 3.200000e+01 : f32
    %103 = vector.broadcast %cst_60 : f32 to vector<8x1xf32>
    %104 = arith.divf %102, %103 : vector<8x1xf32>
    %105 = vector.broadcast %97 : vector<8x1xf32> to vector<8x32xf32>
    %106 = arith.subf %93, %105 : vector<8x32xf32>
    %cst_61 = arith.constant 9.99999974E-6 : f32
    %107 = vector.broadcast %cst_61 : f32 to vector<8x1xf32>
    %108 = arith.addf %104, %107 : vector<8x1xf32>
    %109 = math.rsqrt %108 : vector<8x1xf32>
    %110 = vector.broadcast %109 : vector<8x1xf32> to vector<8x32xf32>
    %111 = arith.mulf %106, %110 : vector<8x32xf32>
    %112 = vector.broadcast %39 : vector<1x32xf32> to vector<8x32xf32>
    %113 = arith.mulf %111, %112 : vector<8x32xf32>
    %114 = vector.broadcast %40 : vector<1x32xf32> to vector<8x32xf32>
    %115 = arith.addf %113, %114 : vector<8x32xf32>
    %cst_62 = arith.constant dense<0.000000e+00> : vector<8x64xf32>
    %116 = tpu.matmul %115, %46, %cst_62 {dimension_numbers = #tpu.dot_dimension_numbers<[1], [0], [0], [1], [0, 0, 1, 1], [], []>} : vector<8x32xf32>, vector<32x64xf32>, vector<8x64xf32> -> vector<8x64xf32>
    %117 = vector.broadcast %47 : vector<1x64xf32> to vector<8x64xf32>
    %118 = arith.addf %116, %117 : vector<8x64xf32>
    %cst_63 = arith.constant 0.000000e+00 : f32
    %119 = vector.broadcast %cst_63 : f32 to vector<8x64xf32>
    %120 = arith.maximumf %118, %119 : vector<8x64xf32>
    %cst_64 = arith.constant dense<0.000000e+00> : vector<8x32xf32>
    %121 = tpu.matmul %120, %49, %cst_64 {dimension_numbers = #tpu.dot_dimension_numbers<[1], [0], [0], [1], [0, 0, 1, 1], [], []>} : vector<8x64xf32>, vector<64x32xf32>, vector<8x32xf32> -> vector<8x32xf32>
    %122 = vector.broadcast %41 : vector<1x32xf32> to vector<8x32xf32>
    %123 = arith.addf %121, %122 : vector<8x32xf32>
    %124 = arith.addf %115, %123 : vector<8x32xf32>
    %cst_65 = arith.constant dense<0.000000e+00> : vector<8xf32>
    %125 = vector.multi_reduction <add>, %124, %cst_65 [1] : vector<8x32xf32> to vector<8xf32>
    %126 = vector.shape_cast %125 : vector<8xf32> to vector<8x1xf32>
    %cst_66 = arith.constant 3.200000e+01 : f32
    %127 = vector.broadcast %cst_66 : f32 to vector<8x1xf32>
    %128 = arith.divf %126, %127 : vector<8x1xf32>
    %129 = vector.broadcast %128 : vector<8x1xf32> to vector<8x32xf32>
    %130 = arith.subf %124, %129 : vector<8x32xf32>
    %131 = arith.mulf %130, %130 : vector<8x32xf32>
    %cst_67 = arith.constant dense<0.000000e+00> : vector<8xf32>
    %132 = vector.multi_reduction <add>, %131, %cst_67 [1] : vector<8x32xf32> to vector<8xf32>
    %133 = vector.shape_cast %132 : vector<8xf32> to vector<8x1xf32>
    %cst_68 = arith.constant 3.200000e+01 : f32
    %134 = vector.broadcast %cst_68 : f32 to vector<8x1xf32>
    %135 = arith.divf %133, %134 : vector<8x1xf32>
    %136 = vector.broadcast %128 : vector<8x1xf32> to vector<8x32xf32>
    %137 = arith.subf %124, %136 : vector<8x32xf32>
    %cst_69 = arith.constant 9.99999974E-6 : f32
    %138 = vector.broadcast %cst_69 : f32 to vector<8x1xf32>
    %139 = arith.addf %135, %138 : vector<8x1xf32>
    %140 = math.rsqrt %139 : vector<8x1xf32>
    %141 = vector.broadcast %140 : vector<8x1xf32> to vector<8x32xf32>
    %142 = arith.mulf %137, %141 : vector<8x32xf32>
    %143 = vector.broadcast %42 : vector<1x32xf32> to vector<8x32xf32>
    %144 = arith.mulf %142, %143 : vector<8x32xf32>
    %145 = vector.broadcast %43 : vector<1x32xf32> to vector<8x32xf32>
    %146 = arith.addf %144, %145 : vector<8x32xf32>
    %147 = arith.addf %3, %7 : vector<8x32xf32>
    %148 = vector.shape_cast %147 : vector<8x32xf32> to vector<1x8x32xf32>
    %149 = vector.shape_cast %148 : vector<1x8x32xf32> to vector<1x8x32xf32>
    %150 = vector.broadcast %149 : vector<1x8x32xf32> to vector<4x8x32xf32>
    %151 = vector.shape_cast %3 : vector<8x32xf32> to vector<1x8x32xf32>
    %152 = vector.shape_cast %151 : vector<1x8x32xf32> to vector<1x8x32xf32>
    %153 = vector.broadcast %152 : vector<1x8x32xf32> to vector<4x8x32xf32>
    "tpu.trace_start"() <{level = 10 : i32, message = "hse,hed->hsd"}> : () -> ()
    %cst_70 = arith.constant dense<0.000000e+00> : vector<4x8x8xf32>
    %154 = tpu.matmul %150, %21, %cst_70 {dimension_numbers = #tpu.dot_dimension_numbers<[2], [1], [1], [2], [0, 0, 0, 1, 1, 2], [0], [0]>} : vector<4x8x32xf32>, vector<4x32x8xf32>, vector<4x8x8xf32> -> vector<4x8x8xf32>
    "tpu.trace_stop"() : () -> ()
    %155 = vector.broadcast %29 : vector<4x1x8xf32> to vector<4x8x8xf32>
    %156 = arith.addf %154, %155 : vector<4x8x8xf32>
    "tpu.trace_start"() <{level = 10 : i32, message = "hse,hed->hsd"}> : () -> ()
    %cst_71 = arith.constant dense<0.000000e+00> : vector<4x8x8xf32>
    %157 = tpu.matmul %150, %23, %cst_71 {dimension_numbers = #tpu.dot_dimension_numbers<[2], [1], [1], [2], [0, 0, 0, 1, 1, 2], [0], [0]>} : vector<4x8x32xf32>, vector<4x32x8xf32>, vector<4x8x8xf32> -> vector<4x8x8xf32>
    "tpu.trace_stop"() : () -> ()
    %158 = vector.broadcast %31 : vector<4x1x8xf32> to vector<4x8x8xf32>
    %159 = arith.addf %157, %158 : vector<4x8x8xf32>
    "tpu.trace_start"() <{level = 10 : i32, message = "hse,hed->hsd"}> : () -> ()
    %cst_72 = arith.constant dense<0.000000e+00> : vector<4x8x8xf32>
    %160 = tpu.matmul %153, %25, %cst_72 {dimension_numbers = #tpu.dot_dimension_numbers<[2], [1], [1], [2], [0, 0, 0, 1, 1, 2], [0], [0]>} : vector<4x8x32xf32>, vector<4x32x8xf32>, vector<4x8x8xf32> -> vector<4x8x8xf32>
    "tpu.trace_stop"() : () -> ()
    %161 = vector.broadcast %33 : vector<4x1x8xf32> to vector<4x8x8xf32>
    %162 = arith.addf %160, %161 : vector<4x8x8xf32>
    "tpu.trace_start"() <{level = 10 : i32, message = "hqd,hkd->hqk"}> : () -> ()
    %cst_73 = arith.constant dense<0.000000e+00> : vector<4x8x8xf32>
    %163 = tpu.matmul %156, %159, %cst_73 {dimension_numbers = #tpu.dot_dimension_numbers<[2], [2], [1], [1], [0, 0, 0, 1, 1, 1], [0], [0]>} : vector<4x8x8xf32>, vector<4x8x8xf32>, vector<4x8x8xf32> -> vector<4x8x8xf32>
    "tpu.trace_stop"() : () -> ()
    %cst_74 = arith.constant 0.353553385 : f32
    %164 = vector.broadcast %cst_74 : f32 to vector<4x8x8xf32>
    %165 = arith.mulf %163, %164 : vector<4x8x8xf32>
    %166 = vector.broadcast %17 : vector<1x1x8xf32> to vector<4x8x8xf32>
    %167 = arith.addf %165, %166 : vector<4x8x8xf32>
    %cst_75 = arith.constant dense<0xFF800000> : vector<4x8xf32>
    %168 = vector.multi_reduction <maximumf>, %167, %cst_75 [2] : vector<4x8x8xf32> to vector<4x8xf32>
    %cst_76 = arith.constant 0xFF800000 : f32
    %169 = vector.broadcast %cst_76 : f32 to vector<4x8xf32>
    %170 = arith.maximumf %169, %168 : vector<4x8xf32>
    %171 = vector.shape_cast %170 : vector<4x8xf32> to vector<4x8x1xf32>
    %172 = vector.broadcast %171 : vector<4x8x1xf32> to vector<4x8x8xf32>
    %173 = arith.subf %167, %172 : vector<4x8x8xf32>
    %174 = math.exp %173 : vector<4x8x8xf32>
    %cst_77 = arith.constant dense<0.000000e+00> : vector<4x8xf32>
    %175 = vector.multi_reduction <add>, %174, %cst_77 [2] : vector<4x8x8xf32> to vector<4x8xf32>
    %176 = vector.shape_cast %175 : vector<4x8xf32> to vector<4x8x1xf32>
    %177 = vector.broadcast %176 : vector<4x8x1xf32> to vector<4x8x8xf32>
    %178 = arith.divf %174, %177 : vector<4x8x8xf32>
    %cst_78 = arith.constant dense<0.000000e+00> : vector<8x8xf32>
    %179 = vector.multi_reduction <add>, %178, %cst_78 [0] : vector<4x8x8xf32> to vector<8x8xf32>
    %cst_79 = arith.constant 4.000000e+00 : f32
    %180 = vector.broadcast %cst_79 : f32 to vector<8x8xf32>
    %181 = arith.divf %179, %180 : vector<8x8xf32>
    %c0_80 = arith.constant 0 : index
    %c1_81 = arith.constant 1 : index
    %c0_82 = arith.constant 0 : index
    %c0_83 = arith.constant 0 : index
    %182 = vector.load %arg10[%c0_80, %c1_81, %c0_82, %c0_83] : memref<2x2x8x8xf32, #tpu.memory_space<vmem>>, vector<1x1x8x8xf32>
    %183 = vector.shape_cast %182 : vector<1x1x8x8xf32> to vector<8x8xf32>
    %184 = vector.shape_cast %181 : vector<8x8xf32> to vector<1x1x8x8xf32>
    tpu.vector_store %arg10[%c0_80, %c1_81, %c0_82, %c0_83], %184 {strides = array<i32>} : memref<2x2x8x8xf32, #tpu.memory_space<vmem>>, vector<1x1x8x8xf32>,
    "tpu.trace_start"() <{level = 10 : i32, message = "hqk,hkd->hqd"}> : () -> ()
    %cst_84 = arith.constant dense<0.000000e+00> : vector<4x8x8xf32>
    %185 = tpu.matmul %178, %162, %cst_84 {dimension_numbers = #tpu.dot_dimension_numbers<[2], [1], [1], [2], [0, 0, 0, 1, 1, 2], [0], [0]>} : vector<4x8x8xf32>, vector<4x8x8xf32>, vector<4x8x8xf32> -> vector<4x8x8xf32>
    "tpu.trace_stop"() : () -> ()
    "tpu.trace_start"() <{level = 10 : i32, message = "hsd,hde->hse"}> : () -> ()
    %cst_85 = arith.constant dense<0.000000e+00> : vector<4x8x32xf32>
    %186 = tpu.matmul %185, %35, %cst_85 {dimension_numbers = #tpu.dot_dimension_numbers<[2], [1], [1], [2], [0, 0, 0, 1, 1, 2], [0], [0]>} : vector<4x8x8xf32>, vector<4x8x32xf32>, vector<4x8x32xf32> -> vector<4x8x32xf32>
    "tpu.trace_stop"() : () -> ()
    %cst_86 = arith.constant dense<0.000000e+00> : vector<8x32xf32>
    %187 = vector.multi_reduction <add>, %186, %cst_86 [0] : vector<4x8x32xf32> to vector<8x32xf32>
    %188 = vector.broadcast %38 : vector<1x32xf32> to vector<8x32xf32>
    %189 = arith.addf %187, %188 : vector<8x32xf32>
    %190 = arith.addf %3, %189 : vector<8x32xf32>
    %cst_87 = arith.constant dense<0.000000e+00> : vector<8xf32>
    %191 = vector.multi_reduction <add>, %190, %cst_87 [1] : vector<8x32xf32> to vector<8xf32>
    %192 = vector.shape_cast %191 : vector<8xf32> to vector<8x1xf32>
    %cst_88 = arith.constant 3.200000e+01 : f32
    %193 = vector.broadcast %cst_88 : f32 to vector<8x1xf32>
    %194 = arith.divf %192, %193 : vector<8x1xf32>
    %195 = vector.broadcast %194 : vector<8x1xf32> to vector<8x32xf32>
    %196 = arith.subf %190, %195 : vector<8x32xf32>
    %197 = arith.mulf %196, %196 : vector<8x32xf32>
    %cst_89 = arith.constant dense<0.000000e+00> : vector<8xf32>
    %198 = vector.multi_reduction <add>, %197, %cst_89 [1] : vector<8x32xf32> to vector<8xf32>
    %199 = vector.shape_cast %198 : vector<8xf32> to vector<8x1xf32>
    %cst_90 = arith.constant 3.200000e+01 : f32
    %200 = vector.broadcast %cst_90 : f32 to vector<8x1xf32>
    %201 = arith.divf %199, %200 : vector<8x1xf32>
    %202 = vector.broadcast %194 : vector<8x1xf32> to vector<8x32xf32>
    %203 = arith.subf %190, %202 : vector<8x32xf32>
    %cst_91 = arith.constant 9.99999974E-6 : f32
    %204 = vector.broadcast %cst_91 : f32 to vector<8x1xf32>
    %205 = arith.addf %201, %204 : vector<8x1xf32>
    %206 = math.rsqrt %205 : vector<8x1xf32>
    %207 = vector.broadcast %206 : vector<8x1xf32> to vector<8x32xf32>
    %208 = arith.mulf %203, %207 : vector<8x32xf32>
    %209 = vector.broadcast %39 : vector<1x32xf32> to vector<8x32xf32>
    %210 = arith.mulf %208, %209 : vector<8x32xf32>
    %211 = vector.broadcast %40 : vector<1x32xf32> to vector<8x32xf32>
    %212 = arith.addf %210, %211 : vector<8x32xf32>
    %cst_92 = arith.constant dense<0.000000e+00> : vector<8x64xf32>
    %213 = tpu.matmul %212, %46, %cst_92 {dimension_numbers = #tpu.dot_dimension_numbers<[1], [0], [0], [1], [0, 0, 1, 1], [], []>} : vector<8x32xf32>, vector<32x64xf32>, vector<8x64xf32> -> vector<8x64xf32>
    %214 = vector.broadcast %47 : vector<1x64xf32> to vector<8x64xf32>
    %215 = arith.addf %213, %214 : vector<8x64xf32>
    %cst_93 = arith.constant 0.000000e+00 : f32
    %216 = vector.broadcast %cst_93 : f32 to vector<8x64xf32>
    %217 = arith.maximumf %215, %216 : vector<8x64xf32>
    %cst_94 = arith.constant dense<0.000000e+00> : vector<8x32xf32>
    %218 = tpu.matmul %217, %49, %cst_94 {dimension_numbers = #tpu.dot_dimension_numbers<[1], [0], [0], [1], [0, 0, 1, 1], [], []>} : vector<8x64xf32>, vector<64x32xf32>, vector<8x32xf32> -> vector<8x32xf32>
    %219 = vector.broadcast %41 : vector<1x32xf32> to vector<8x32xf32>
    %220 = arith.addf %218, %219 : vector<8x32xf32>
    %221 = arith.addf %212, %220 : vector<8x32xf32>
    %cst_95 = arith.constant dense<0.000000e+00> : vector<8xf32>
    %222 = vector.multi_reduction <add>, %221, %cst_95 [1] : vector<8x32xf32> to vector<8xf32>
    %223 = vector.shape_cast %222 : vector<8xf32> to vector<8x1xf32>
    %cst_96 = arith.constant 3.200000e+01 : f32
    %224 = vector.broadcast %cst_96 : f32 to vector<8x1xf32>
    %225 = arith.divf %223, %224 : vector<8x1xf32>
    %226 = vector.broadcast %225 : vector<8x1xf32> to vector<8x32xf32>
    %227 = arith.subf %221, %226 : vector<8x32xf32>
    %228 = arith.mulf %227, %227 : vector<8x32xf32>
    %cst_97 = arith.constant dense<0.000000e+00> : vector<8xf32>
    %229 = vector.multi_reduction <add>, %228, %cst_97 [1] : vector<8x32xf32> to vector<8xf32>
    %230 = vector.shape_cast %229 : vector<8xf32> to vector<8x1xf32>
    %cst_98 = arith.constant 3.200000e+01 : f32
    %231 = vector.broadcast %cst_98 : f32 to vector<8x1xf32>
    %232 = arith.divf %230, %231 : vector<8x1xf32>
    %233 = vector.broadcast %225 : vector<8x1xf32> to vector<8x32xf32>
    %234 = arith.subf %221, %233 : vector<8x32xf32>
    %cst_99 = arith.constant 9.99999974E-6 : f32
    %235 = vector.broadcast %cst_99 : f32 to vector<8x1xf32>
    %236 = arith.addf %232, %235 : vector<8x1xf32>
    %237 = math.rsqrt %236 : vector<8x1xf32>
    %238 = vector.broadcast %237 : vector<8x1xf32> to vector<8x32xf32>
    %239 = arith.mulf %234, %238 : vector<8x32xf32>
    %240 = vector.broadcast %42 : vector<1x32xf32> to vector<8x32xf32>
    %241 = arith.mulf %239, %240 : vector<8x32xf32>
    %242 = vector.broadcast %43 : vector<1x32xf32> to vector<8x32xf32>
    %243 = arith.addf %241, %242 : vector<8x32xf32>
    %c1_100 = arith.constant 1 : index
    %c0_101 = arith.constant 0 : index
    %c0_102 = arith.constant 0 : index
    %c0_103 = arith.constant 0 : index
    %c0_104 = arith.constant 0 : index
    %244 = vector.load %arg3[%c1_100, %c0_101, %c0_102, %c0_103, %c0_104] : memref<2x3x4x32x8xf32, #tpu.memory_space<vmem>>, vector<1x3x4x32x8xf32>
    %245 = vector.shape_cast %244 : vector<1x3x4x32x8xf32> to vector<3x4x32x8xf32>
    %246 = vector.extract_strided_slice %245 {offsets = [0, 0, 0, 0], sizes = [1, 4, 32, 8], strides = [1, 1, 1, 1]} : vector<3x4x32x8xf32> to vector<1x4x32x8xf32>
    %247 = vector.shape_cast %246 : vector<1x4x32x8xf32> to vector<4x32x8xf32>
    %248 = vector.extract_strided_slice %245 {offsets = [1, 0, 0, 0], sizes = [1, 4, 32, 8], strides = [1, 1, 1, 1]} : vector<3x4x32x8xf32> to vector<1x4x32x8xf32>
    %249 = vector.shape_cast %248 : vector<1x4x32x8xf32> to vector<4x32x8xf32>
    %250 = vector.extract_strided_slice %245 {offsets = [2, 0, 0, 0], sizes = [1, 4, 32, 8], strides = [1, 1, 1, 1]} : vector<3x4x32x8xf32> to vector<1x4x32x8xf32>
    %251 = vector.shape_cast %250 : vector<1x4x32x8xf32> to vector<4x32x8xf32>
    %c1_105 = arith.constant 1 : index
    %c0_106 = arith.constant 0 : index
    %c0_107 = arith.constant 0 : index
    %c0_108 = arith.constant 0 : index
    %c0_109 = arith.constant 0 : index
    %252 = vector.load %arg4[%c1_105, %c0_106, %c0_107, %c0_108, %c0_109] : memref<2x3x4x1x8xf32, #tpu.memory_space<vmem>>, vector<1x3x4x1x8xf32>
    %253 = vector.shape_cast %252 : vector<1x3x4x1x8xf32> to vector<3x4x1x8xf32>
    %254 = vector.extract_strided_slice %253 {offsets = [0, 0, 0, 0], sizes = [1, 4, 1, 8], strides = [1, 1, 1, 1]} : vector<3x4x1x8xf32> to vector<1x4x1x8xf32>
    %255 = vector.shape_cast %254 : vector<1x4x1x8xf32> to vector<4x1x8xf32>
    %256 = vector.extract_strided_slice %253 {offsets = [1, 0, 0, 0], sizes = [1, 4, 1, 8], strides = [1, 1, 1, 1]} : vector<3x4x1x8xf32> to vector<1x4x1x8xf32>
    %257 = vector.shape_cast %256 : vector<1x4x1x8xf32> to vector<4x1x8xf32>
    %258 = vector.extract_strided_slice %253 {offsets = [2, 0, 0, 0], sizes = [1, 4, 1, 8], strides = [1, 1, 1, 1]} : vector<3x4x1x8xf32> to vector<1x4x1x8xf32>
    %259 = vector.shape_cast %258 : vector<1x4x1x8xf32> to vector<4x1x8xf32>
    %c1_110 = arith.constant 1 : index
    %c0_111 = arith.constant 0 : index
    %c0_112 = arith.constant 0 : index
    %c0_113 = arith.constant 0 : index
    %260 = vector.load %arg5[%c1_110, %c0_111, %c0_112, %c0_113] : memref<2x4x8x32xf32, #tpu.memory_space<vmem>>, vector<1x4x8x32xf32>
    %261 = vector.shape_cast %260 : vector<1x4x8x32xf32> to vector<4x8x32xf32>
    %c1_114 = arith.constant 1 : index
    %c0_115 = arith.constant 0 : index
    %c0_116 = arith.constant 0 : index
    %262 = vector.load %arg6[%c1_114, %c0_115, %c0_116] : memref<2x6x32xf32, #tpu.memory_space<vmem>>, vector<1x6x32xf32>
    %263 = vector.shape_cast %262 : vector<1x6x32xf32> to vector<6x32xf32>
    %264 = vector.extract_strided_slice %263 {offsets = [0, 0], sizes = [1, 32], strides = [1, 1]} : vector<6x32xf32> to vector<1x32xf32>
    %265 = vector.extract_strided_slice %263 {offsets = [1, 0], sizes = [1, 32], strides = [1, 1]} : vector<6x32xf32> to vector<1x32xf32>
    %266 = vector.extract_strided_slice %263 {offsets = [2, 0], sizes = [1, 32], strides = [1, 1]} : vector<6x32xf32> to vector<1x32xf32>
    %267 = vector.extract_strided_slice %263 {offsets = [3, 0], sizes = [1, 32], strides = [1, 1]} : vector<6x32xf32> to vector<1x32xf32>
    %268 = vector.extract_strided_slice %263 {offsets = [4, 0], sizes = [1, 32], strides = [1, 1]} : vector<6x32xf32> to vector<1x32xf32>
    %269 = vector.extract_strided_slice %263 {offsets = [5, 0], sizes = [1, 32], strides = [1, 1]} : vector<6x32xf32> to vector<1x32xf32>
    %c1_117 = arith.constant 1 : index
    %c0_118 = arith.constant 0 : index
    %c0_119 = arith.constant 0 : index
    %270 = vector.load %arg7[%c1_117, %c0_118, %c0_119] : memref<2x33x64xf32, #tpu.memory_space<vmem>>, vector<1x33x64xf32>
    %271 = vector.shape_cast %270 : vector<1x33x64xf32> to vector<33x64xf32>
    %272 = vector.extract_strided_slice %271 {offsets = [0, 0], sizes = [32, 64], strides = [1, 1]} : vector<33x64xf32> to vector<32x64xf32>
    %273 = vector.extract_strided_slice %271 {offsets = [32, 0], sizes = [1, 64], strides = [1, 1]} : vector<33x64xf32> to vector<1x64xf32>
    %c1_120 = arith.constant 1 : index
    %c0_121 = arith.constant 0 : index
    %c0_122 = arith.constant 0 : index
    %274 = vector.load %arg8[%c1_120, %c0_121, %c0_122] : memref<2x64x32xf32, #tpu.memory_space<vmem>>, vector<1x64x32xf32>
    %275 = vector.shape_cast %274 : vector<1x64x32xf32> to vector<64x32xf32>
    %276 = arith.addf %146, %5 : vector<8x32xf32>
    %277 = vector.shape_cast %276 : vector<8x32xf32> to vector<1x8x32xf32>
    %278 = vector.shape_cast %277 : vector<1x8x32xf32> to vector<1x8x32xf32>
    %279 = vector.broadcast %278 : vector<1x8x32xf32> to vector<4x8x32xf32>
    %280 = vector.shape_cast %146 : vector<8x32xf32> to vector<1x8x32xf32>
    %281 = vector.shape_cast %280 : vector<1x8x32xf32> to vector<1x8x32xf32>
    %282 = vector.broadcast %281 : vector<1x8x32xf32> to vector<4x8x32xf32>
    "tpu.trace_start"() <{level = 10 : i32, message = "hse,hed->hsd"}> : () -> ()
    %cst_123 = arith.constant dense<0.000000e+00> : vector<4x8x8xf32>
    %283 = tpu.matmul %279, %247, %cst_123 {dimension_numbers = #tpu.dot_dimension_numbers<[2], [1], [1], [2], [0, 0, 0, 1, 1, 2], [0], [0]>} : vector<4x8x32xf32>, vector<4x32x8xf32>, vector<4x8x8xf32> -> vector<4x8x8xf32>
    "tpu.trace_stop"() : () -> ()
    %284 = vector.broadcast %255 : vector<4x1x8xf32> to vector<4x8x8xf32>
    %285 = arith.addf %283, %284 : vector<4x8x8xf32>
    "tpu.trace_start"() <{level = 10 : i32, message = "hse,hed->hsd"}> : () -> ()
    %cst_124 = arith.constant dense<0.000000e+00> : vector<4x8x8xf32>
    %286 = tpu.matmul %279, %249, %cst_124 {dimension_numbers = #tpu.dot_dimension_numbers<[2], [1], [1], [2], [0, 0, 0, 1, 1, 2], [0], [0]>} : vector<4x8x32xf32>, vector<4x32x8xf32>, vector<4x8x8xf32> -> vector<4x8x8xf32>
    "tpu.trace_stop"() : () -> ()
    %287 = vector.broadcast %257 : vector<4x1x8xf32> to vector<4x8x8xf32>
    %288 = arith.addf %286, %287 : vector<4x8x8xf32>
    "tpu.trace_start"() <{level = 10 : i32, message = "hse,hed->hsd"}> : () -> ()
    %cst_125 = arith.constant dense<0.000000e+00> : vector<4x8x8xf32>
    %289 = tpu.matmul %282, %251, %cst_125 {dimension_numbers = #tpu.dot_dimension_numbers<[2], [1], [1], [2], [0, 0, 0, 1, 1, 2], [0], [0]>} : vector<4x8x32xf32>, vector<4x32x8xf32>, vector<4x8x8xf32> -> vector<4x8x8xf32>
    "tpu.trace_stop"() : () -> ()
    %290 = vector.broadcast %259 : vector<4x1x8xf32> to vector<4x8x8xf32>
    %291 = arith.addf %289, %290 : vector<4x8x8xf32>
    "tpu.trace_start"() <{level = 10 : i32, message = "hqd,hkd->hqk"}> : () -> ()
    %cst_126 = arith.constant dense<0.000000e+00> : vector<4x8x8xf32>
    %292 = tpu.matmul %285, %288, %cst_126 {dimension_numbers = #tpu.dot_dimension_numbers<[2], [2], [1], [1], [0, 0, 0, 1, 1, 1], [0], [0]>} : vector<4x8x8xf32>, vector<4x8x8xf32>, vector<4x8x8xf32> -> vector<4x8x8xf32>
    "tpu.trace_stop"() : () -> ()
    %cst_127 = arith.constant 0.353553385 : f32
    %293 = vector.broadcast %cst_127 : f32 to vector<4x8x8xf32>
    %294 = arith.mulf %292, %293 : vector<4x8x8xf32>
    %295 = vector.broadcast %12 : vector<1x1x8xf32> to vector<4x8x8xf32>
    %296 = arith.addf %294, %295 : vector<4x8x8xf32>
    %cst_128 = arith.constant dense<0xFF800000> : vector<4x8xf32>
    %297 = vector.multi_reduction <maximumf>, %296, %cst_128 [2] : vector<4x8x8xf32> to vector<4x8xf32>
    %cst_129 = arith.constant 0xFF800000 : f32
    %298 = vector.broadcast %cst_129 : f32 to vector<4x8xf32>
    %299 = arith.maximumf %298, %297 : vector<4x8xf32>
    %300 = vector.shape_cast %299 : vector<4x8xf32> to vector<4x8x1xf32>
    %301 = vector.broadcast %300 : vector<4x8x1xf32> to vector<4x8x8xf32>
    %302 = arith.subf %296, %301 : vector<4x8x8xf32>
    %303 = math.exp %302 : vector<4x8x8xf32>
    %cst_130 = arith.constant dense<0.000000e+00> : vector<4x8xf32>
    %304 = vector.multi_reduction <add>, %303, %cst_130 [2] : vector<4x8x8xf32> to vector<4x8xf32>
    %305 = vector.shape_cast %304 : vector<4x8xf32> to vector<4x8x1xf32>
    %306 = vector.broadcast %305 : vector<4x8x1xf32> to vector<4x8x8xf32>
    %307 = arith.divf %303, %306 : vector<4x8x8xf32>
    %cst_131 = arith.constant dense<0.000000e+00> : vector<8x8xf32>
    %308 = vector.multi_reduction <add>, %307, %cst_131 [0] : vector<4x8x8xf32> to vector<8x8xf32>
    %cst_132 = arith.constant 4.000000e+00 : f32
    %309 = vector.broadcast %cst_132 : f32 to vector<8x8xf32>
    %310 = arith.divf %308, %309 : vector<8x8xf32>
    %c1_133 = arith.constant 1 : index
    %c0_134 = arith.constant 0 : index
    %c0_135 = arith.constant 0 : index
    %c0_136 = arith.constant 0 : index
    %311 = vector.load %arg10[%c1_133, %c0_134, %c0_135, %c0_136] : memref<2x2x8x8xf32, #tpu.memory_space<vmem>>, vector<1x1x8x8xf32>
    %312 = vector.shape_cast %311 : vector<1x1x8x8xf32> to vector<8x8xf32>
    %313 = vector.shape_cast %310 : vector<8x8xf32> to vector<1x1x8x8xf32>
    tpu.vector_store %arg10[%c1_133, %c0_134, %c0_135, %c0_136], %313 {strides = array<i32>} : memref<2x2x8x8xf32, #tpu.memory_space<vmem>>, vector<1x1x8x8xf32>,
    "tpu.trace_start"() <{level = 10 : i32, message = "hqk,hkd->hqd"}> : () -> ()
    %cst_137 = arith.constant dense<0.000000e+00> : vector<4x8x8xf32>
    %314 = tpu.matmul %307, %291, %cst_137 {dimension_numbers = #tpu.dot_dimension_numbers<[2], [1], [1], [2], [0, 0, 0, 1, 1, 2], [0], [0]>} : vector<4x8x8xf32>, vector<4x8x8xf32>, vector<4x8x8xf32> -> vector<4x8x8xf32>
    "tpu.trace_stop"() : () -> ()
    "tpu.trace_start"() <{level = 10 : i32, message = "hsd,hde->hse"}> : () -> ()
    %cst_138 = arith.constant dense<0.000000e+00> : vector<4x8x32xf32>
    %315 = tpu.matmul %314, %261, %cst_138 {dimension_numbers = #tpu.dot_dimension_numbers<[2], [1], [1], [2], [0, 0, 0, 1, 1, 2], [0], [0]>} : vector<4x8x8xf32>, vector<4x8x32xf32>, vector<4x8x32xf32> -> vector<4x8x32xf32>
    "tpu.trace_stop"() : () -> ()
    %cst_139 = arith.constant dense<0.000000e+00> : vector<8x32xf32>
    %316 = vector.multi_reduction <add>, %315, %cst_139 [0] : vector<4x8x32xf32> to vector<8x32xf32>
    %317 = vector.broadcast %264 : vector<1x32xf32> to vector<8x32xf32>
    %318 = arith.addf %316, %317 : vector<8x32xf32>
    %319 = arith.addf %146, %318 : vector<8x32xf32>
    %cst_140 = arith.constant dense<0.000000e+00> : vector<8xf32>
    %320 = vector.multi_reduction <add>, %319, %cst_140 [1] : vector<8x32xf32> to vector<8xf32>
    %321 = vector.shape_cast %320 : vector<8xf32> to vector<8x1xf32>
    %cst_141 = arith.constant 3.200000e+01 : f32
    %322 = vector.broadcast %cst_141 : f32 to vector<8x1xf32>
    %323 = arith.divf %321, %322 : vector<8x1xf32>
    %324 = vector.broadcast %323 : vector<8x1xf32> to vector<8x32xf32>
    %325 = arith.subf %319, %324 : vector<8x32xf32>
    %326 = arith.mulf %325, %325 : vector<8x32xf32>
    %cst_142 = arith.constant dense<0.000000e+00> : vector<8xf32>
    %327 = vector.multi_reduction <add>, %326, %cst_142 [1] : vector<8x32xf32> to vector<8xf32>
    %328 = vector.shape_cast %327 : vector<8xf32> to vector<8x1xf32>
    %cst_143 = arith.constant 3.200000e+01 : f32
    %329 = vector.broadcast %cst_143 : f32 to vector<8x1xf32>
    %330 = arith.divf %328, %329 : vector<8x1xf32>
    %331 = vector.broadcast %323 : vector<8x1xf32> to vector<8x32xf32>
    %332 = arith.subf %319, %331 : vector<8x32xf32>
    %cst_144 = arith.constant 9.99999974E-6 : f32
    %333 = vector.broadcast %cst_144 : f32 to vector<8x1xf32>
    %334 = arith.addf %330, %333 : vector<8x1xf32>
    %335 = math.rsqrt %334 : vector<8x1xf32>
    %336 = vector.broadcast %335 : vector<8x1xf32> to vector<8x32xf32>
    %337 = arith.mulf %332, %336 : vector<8x32xf32>
    %338 = vector.broadcast %265 : vector<1x32xf32> to vector<8x32xf32>
    %339 = arith.mulf %337, %338 : vector<8x32xf32>
    %340 = vector.broadcast %266 : vector<1x32xf32> to vector<8x32xf32>
    %341 = arith.addf %339, %340 : vector<8x32xf32>
    %cst_145 = arith.constant dense<0.000000e+00> : vector<8x64xf32>
    %342 = tpu.matmul %341, %272, %cst_145 {dimension_numbers = #tpu.dot_dimension_numbers<[1], [0], [0], [1], [0, 0, 1, 1], [], []>} : vector<8x32xf32>, vector<32x64xf32>, vector<8x64xf32> -> vector<8x64xf32>
    %343 = vector.broadcast %273 : vector<1x64xf32> to vector<8x64xf32>
    %344 = arith.addf %342, %343 : vector<8x64xf32>
    %cst_146 = arith.constant 0.000000e+00 : f32
    %345 = vector.broadcast %cst_146 : f32 to vector<8x64xf32>
    %346 = arith.maximumf %344, %345 : vector<8x64xf32>
    %cst_147 = arith.constant dense<0.000000e+00> : vector<8x32xf32>
    %347 = tpu.matmul %346, %275, %cst_147 {dimension_numbers = #tpu.dot_dimension_numbers<[1], [0], [0], [1], [0, 0, 1, 1], [], []>} : vector<8x64xf32>, vector<64x32xf32>, vector<8x32xf32> -> vector<8x32xf32>
    %348 = vector.broadcast %267 : vector<1x32xf32> to vector<8x32xf32>
    %349 = arith.addf %347, %348 : vector<8x32xf32>
    %350 = arith.addf %341, %349 : vector<8x32xf32>
    %cst_148 = arith.constant dense<0.000000e+00> : vector<8xf32>
    %351 = vector.multi_reduction <add>, %350, %cst_148 [1] : vector<8x32xf32> to vector<8xf32>
    %352 = vector.shape_cast %351 : vector<8xf32> to vector<8x1xf32>
    %cst_149 = arith.constant 3.200000e+01 : f32
    %353 = vector.broadcast %cst_149 : f32 to vector<8x1xf32>
    %354 = arith.divf %352, %353 : vector<8x1xf32>
    %355 = vector.broadcast %354 : vector<8x1xf32> to vector<8x32xf32>
    %356 = arith.subf %350, %355 : vector<8x32xf32>
    %357 = arith.mulf %356, %356 : vector<8x32xf32>
    %cst_150 = arith.constant dense<0.000000e+00> : vector<8xf32>
    %358 = vector.multi_reduction <add>, %357, %cst_150 [1] : vector<8x32xf32> to vector<8xf32>
    %359 = vector.shape_cast %358 : vector<8xf32> to vector<8x1xf32>
    %cst_151 = arith.constant 3.200000e+01 : f32
    %360 = vector.broadcast %cst_151 : f32 to vector<8x1xf32>
    %361 = arith.divf %359, %360 : vector<8x1xf32>
    %362 = vector.broadcast %354 : vector<8x1xf32> to vector<8x32xf32>
    %363 = arith.subf %350, %362 : vector<8x32xf32>
    %cst_152 = arith.constant 9.99999974E-6 : f32
    %364 = vector.broadcast %cst_152 : f32 to vector<8x1xf32>
    %365 = arith.addf %361, %364 : vector<8x1xf32>
    %366 = math.rsqrt %365 : vector<8x1xf32>
    %367 = vector.broadcast %366 : vector<8x1xf32> to vector<8x32xf32>
    %368 = arith.mulf %363, %367 : vector<8x32xf32>
    %369 = vector.broadcast %268 : vector<1x32xf32> to vector<8x32xf32>
    %370 = arith.mulf %368, %369 : vector<8x32xf32>
    %371 = vector.broadcast %269 : vector<1x32xf32> to vector<8x32xf32>
    %372 = arith.addf %370, %371 : vector<8x32xf32>
    %373 = arith.addf %243, %7 : vector<8x32xf32>
    %374 = vector.shape_cast %373 : vector<8x32xf32> to vector<1x8x32xf32>
    %375 = vector.shape_cast %374 : vector<1x8x32xf32> to vector<1x8x32xf32>
    %376 = vector.broadcast %375 : vector<1x8x32xf32> to vector<4x8x32xf32>
    %377 = vector.shape_cast %243 : vector<8x32xf32> to vector<1x8x32xf32>
    %378 = vector.shape_cast %377 : vector<1x8x32xf32> to vector<1x8x32xf32>
    %379 = vector.broadcast %378 : vector<1x8x32xf32> to vector<4x8x32xf32>
    "tpu.trace_start"() <{level = 10 : i32, message = "hse,hed->hsd"}> : () -> ()
    %cst_153 = arith.constant dense<0.000000e+00> : vector<4x8x8xf32>
    %380 = tpu.matmul %376, %247, %cst_153 {dimension_numbers = #tpu.dot_dimension_numbers<[2], [1], [1], [2], [0, 0, 0, 1, 1, 2], [0], [0]>} : vector<4x8x32xf32>, vector<4x32x8xf32>, vector<4x8x8xf32> -> vector<4x8x8xf32>
    "tpu.trace_stop"() : () -> ()
    %381 = vector.broadcast %255 : vector<4x1x8xf32> to vector<4x8x8xf32>
    %382 = arith.addf %380, %381 : vector<4x8x8xf32>
    "tpu.trace_start"() <{level = 10 : i32, message = "hse,hed->hsd"}> : () -> ()
    %cst_154 = arith.constant dense<0.000000e+00> : vector<4x8x8xf32>
    %383 = tpu.matmul %376, %249, %cst_154 {dimension_numbers = #tpu.dot_dimension_numbers<[2], [1], [1], [2], [0, 0, 0, 1, 1, 2], [0], [0]>} : vector<4x8x32xf32>, vector<4x32x8xf32>, vector<4x8x8xf32> -> vector<4x8x8xf32>
    "tpu.trace_stop"() : () -> ()
    %384 = vector.broadcast %257 : vector<4x1x8xf32> to vector<4x8x8xf32>
    %385 = arith.addf %383, %384 : vector<4x8x8xf32>
    "tpu.trace_start"() <{level = 10 : i32, message = "hse,hed->hsd"}> : () -> ()
    %cst_155 = arith.constant dense<0.000000e+00> : vector<4x8x8xf32>
    %386 = tpu.matmul %379, %251, %cst_155 {dimension_numbers = #tpu.dot_dimension_numbers<[2], [1], [1], [2], [0, 0, 0, 1, 1, 2], [0], [0]>} : vector<4x8x32xf32>, vector<4x32x8xf32>, vector<4x8x8xf32> -> vector<4x8x8xf32>
    "tpu.trace_stop"() : () -> ()
    %387 = vector.broadcast %259 : vector<4x1x8xf32> to vector<4x8x8xf32>
    %388 = arith.addf %386, %387 : vector<4x8x8xf32>
    "tpu.trace_start"() <{level = 10 : i32, message = "hqd,hkd->hqk"}> : () -> ()
    %cst_156 = arith.constant dense<0.000000e+00> : vector<4x8x8xf32>
    %389 = tpu.matmul %382, %385, %cst_156 {dimension_numbers = #tpu.dot_dimension_numbers<[2], [2], [1], [1], [0, 0, 0, 1, 1, 1], [0], [0]>} : vector<4x8x8xf32>, vector<4x8x8xf32>, vector<4x8x8xf32> -> vector<4x8x8xf32>
    "tpu.trace_stop"() : () -> ()
    %cst_157 = arith.constant 0.353553385 : f32
    %390 = vector.broadcast %cst_157 : f32 to vector<4x8x8xf32>
    %391 = arith.mulf %389, %390 : vector<4x8x8xf32>
    %392 = vector.broadcast %17 : vector<1x1x8xf32> to vector<4x8x8xf32>
    %393 = arith.addf %391, %392 : vector<4x8x8xf32>
    %cst_158 = arith.constant dense<0xFF800000> : vector<4x8xf32>
    %394 = vector.multi_reduction <maximumf>, %393, %cst_158 [2] : vector<4x8x8xf32> to vector<4x8xf32>
    %cst_159 = arith.constant 0xFF800000 : f32
    %395 = vector.broadcast %cst_159 : f32 to vector<4x8xf32>
    %396 = arith.maximumf %395, %394 : vector<4x8xf32>
    %397 = vector.shape_cast %396 : vector<4x8xf32> to vector<4x8x1xf32>
    %398 = vector.broadcast %397 : vector<4x8x1xf32> to vector<4x8x8xf32>
    %399 = arith.subf %393, %398 : vector<4x8x8xf32>
    %400 = math.exp %399 : vector<4x8x8xf32>
    %cst_160 = arith.constant dense<0.000000e+00> : vector<4x8xf32>
    %401 = vector.multi_reduction <add>, %400, %cst_160 [2] : vector<4x8x8xf32> to vector<4x8xf32>
    %402 = vector.shape_cast %401 : vector<4x8xf32> to vector<4x8x1xf32>
    %403 = vector.broadcast %402 : vector<4x8x1xf32> to vector<4x8x8xf32>
    %404 = arith.divf %400, %403 : vector<4x8x8xf32>
    %cst_161 = arith.constant dense<0.000000e+00> : vector<8x8xf32>
    %405 = vector.multi_reduction <add>, %404, %cst_161 [0] : vector<4x8x8xf32> to vector<8x8xf32>
    %cst_162 = arith.constant 4.000000e+00 : f32
    %406 = vector.broadcast %cst_162 : f32 to vector<8x8xf32>
    %407 = arith.divf %405, %406 : vector<8x8xf32>
    %c1_163 = arith.constant 1 : index
    %c1_164 = arith.constant 1 : index
    %c0_165 = arith.constant 0 : index
    %c0_166 = arith.constant 0 : index
    %408 = vector.load %arg10[%c1_163, %c1_164, %c0_165, %c0_166] : memref<2x2x8x8xf32, #tpu.memory_space<vmem>>, vector<1x1x8x8xf32>
    %409 = vector.shape_cast %408 : vector<1x1x8x8xf32> to vector<8x8xf32>
    %410 = vector.shape_cast %407 : vector<8x8xf32> to vector<1x1x8x8xf32>
    tpu.vector_store %arg10[%c1_163, %c1_164, %c0_165, %c0_166], %410 {strides = array<i32>} : memref<2x2x8x8xf32, #tpu.memory_space<vmem>>, vector<1x1x8x8xf32>,
    "tpu.trace_start"() <{level = 10 : i32, message = "hqk,hkd->hqd"}> : () -> ()
    %cst_167 = arith.constant dense<0.000000e+00> : vector<4x8x8xf32>
    %411 = tpu.matmul %404, %388, %cst_167 {dimension_numbers = #tpu.dot_dimension_numbers<[2], [1], [1], [2], [0, 0, 0, 1, 1, 2], [0], [0]>} : vector<4x8x8xf32>, vector<4x8x8xf32>, vector<4x8x8xf32> -> vector<4x8x8xf32>
    "tpu.trace_stop"() : () -> ()
    "tpu.trace_start"() <{level = 10 : i32, message = "hsd,hde->hse"}> : () -> ()
    %cst_168 = arith.constant dense<0.000000e+00> : vector<4x8x32xf32>
    %412 = tpu.matmul %411, %261, %cst_168 {dimension_numbers = #tpu.dot_dimension_numbers<[2], [1], [1], [2], [0, 0, 0, 1, 1, 2], [0], [0]>} : vector<4x8x8xf32>, vector<4x8x32xf32>, vector<4x8x32xf32> -> vector<4x8x32xf32>
    "tpu.trace_stop"() : () -> ()
    %cst_169 = arith.constant dense<0.000000e+00> : vector<8x32xf32>
    %413 = vector.multi_reduction <add>, %412, %cst_169 [0] : vector<4x8x32xf32> to vector<8x32xf32>
    %414 = vector.broadcast %264 : vector<1x32xf32> to vector<8x32xf32>
    %415 = arith.addf %413, %414 : vector<8x32xf32>
    %416 = arith.addf %243, %415 : vector<8x32xf32>
    %cst_170 = arith.constant dense<0.000000e+00> : vector<8xf32>
    %417 = vector.multi_reduction <add>, %416, %cst_170 [1] : vector<8x32xf32> to vector<8xf32>
    %418 = vector.shape_cast %417 : vector<8xf32> to vector<8x1xf32>
    %cst_171 = arith.constant 3.200000e+01 : f32
    %419 = vector.broadcast %cst_171 : f32 to vector<8x1xf32>
    %420 = arith.divf %418, %419 : vector<8x1xf32>
    %421 = vector.broadcast %420 : vector<8x1xf32> to vector<8x32xf32>
    %422 = arith.subf %416, %421 : vector<8x32xf32>
    %423 = arith.mulf %422, %422 : vector<8x32xf32>
    %cst_172 = arith.constant dense<0.000000e+00> : vector<8xf32>
    %424 = vector.multi_reduction <add>, %423, %cst_172 [1] : vector<8x32xf32> to vector<8xf32>
    %425 = vector.shape_cast %424 : vector<8xf32> to vector<8x1xf32>
    %cst_173 = arith.constant 3.200000e+01 : f32
    %426 = vector.broadcast %cst_173 : f32 to vector<8x1xf32>
    %427 = arith.divf %425, %426 : vector<8x1xf32>
    %428 = vector.broadcast %420 : vector<8x1xf32> to vector<8x32xf32>
    %429 = arith.subf %416, %428 : vector<8x32xf32>
    %cst_174 = arith.constant 9.99999974E-6 : f32
    %430 = vector.broadcast %cst_174 : f32 to vector<8x1xf32>
    %431 = arith.addf %427, %430 : vector<8x1xf32>
    %432 = math.rsqrt %431 : vector<8x1xf32>
    %433 = vector.broadcast %432 : vector<8x1xf32> to vector<8x32xf32>
    %434 = arith.mulf %429, %433 : vector<8x32xf32>
    %435 = vector.broadcast %265 : vector<1x32xf32> to vector<8x32xf32>
    %436 = arith.mulf %434, %435 : vector<8x32xf32>
    %437 = vector.broadcast %266 : vector<1x32xf32> to vector<8x32xf32>
    %438 = arith.addf %436, %437 : vector<8x32xf32>
    %cst_175 = arith.constant dense<0.000000e+00> : vector<8x64xf32>
    %439 = tpu.matmul %438, %272, %cst_175 {dimension_numbers = #tpu.dot_dimension_numbers<[1], [0], [0], [1], [0, 0, 1, 1], [], []>} : vector<8x32xf32>, vector<32x64xf32>, vector<8x64xf32> -> vector<8x64xf32>
    %440 = vector.broadcast %273 : vector<1x64xf32> to vector<8x64xf32>
    %441 = arith.addf %439, %440 : vector<8x64xf32>
    %cst_176 = arith.constant 0.000000e+00 : f32
    %442 = vector.broadcast %cst_176 : f32 to vector<8x64xf32>
    %443 = arith.maximumf %441, %442 : vector<8x64xf32>
    %cst_177 = arith.constant dense<0.000000e+00> : vector<8x32xf32>
    %444 = tpu.matmul %443, %275, %cst_177 {dimension_numbers = #tpu.dot_dimension_numbers<[1], [0], [0], [1], [0, 0, 1, 1], [], []>} : vector<8x64xf32>, vector<64x32xf32>, vector<8x32xf32> -> vector<8x32xf32>
    %445 = vector.broadcast %267 : vector<1x32xf32> to vector<8x32xf32>
    %446 = arith.addf %444, %445 : vector<8x32xf32>
    %447 = arith.addf %438, %446 : vector<8x32xf32>
    %cst_178 = arith.constant dense<0.000000e+00> : vector<8xf32>
    %448 = vector.multi_reduction <add>, %447, %cst_178 [1] : vector<8x32xf32> to vector<8xf32>
    %449 = vector.shape_cast %448 : vector<8xf32> to vector<8x1xf32>
    %cst_179 = arith.constant 3.200000e+01 : f32
    %450 = vector.broadcast %cst_179 : f32 to vector<8x1xf32>
    %451 = arith.divf %449, %450 : vector<8x1xf32>
    %452 = vector.broadcast %451 : vector<8x1xf32> to vector<8x32xf32>
    %453 = arith.subf %447, %452 : vector<8x32xf32>
    %454 = arith.mulf %453, %453 : vector<8x32xf32>
    %cst_180 = arith.constant dense<0.000000e+00> : vector<8xf32>
    %455 = vector.multi_reduction <add>, %454, %cst_180 [1] : vector<8x32xf32> to vector<8xf32>
    %456 = vector.shape_cast %455 : vector<8xf32> to vector<8x1xf32>
    %cst_181 = arith.constant 3.200000e+01 : f32
    %457 = vector.broadcast %cst_181 : f32 to vector<8x1xf32>
    %458 = arith.divf %456, %457 : vector<8x1xf32>
    %459 = vector.broadcast %451 : vector<8x1xf32> to vector<8x32xf32>
    %460 = arith.subf %447, %459 : vector<8x32xf32>
    %cst_182 = arith.constant 9.99999974E-6 : f32
    %461 = vector.broadcast %cst_182 : f32 to vector<8x1xf32>
    %462 = arith.addf %458, %461 : vector<8x1xf32>
    %463 = math.rsqrt %462 : vector<8x1xf32>
    %464 = vector.broadcast %463 : vector<8x1xf32> to vector<8x32xf32>
    %465 = arith.mulf %460, %464 : vector<8x32xf32>
    %466 = vector.broadcast %268 : vector<1x32xf32> to vector<8x32xf32>
    %467 = arith.mulf %465, %466 : vector<8x32xf32>
    %468 = vector.broadcast %269 : vector<1x32xf32> to vector<8x32xf32>
    %469 = arith.addf %467, %468 : vector<8x32xf32>
    %c0_183 = arith.constant 0 : index
    %c0_184 = arith.constant 0 : index
    %c0_185 = arith.constant 0 : index
    %470 = vector.load %arg9[%c0_183, %c0_184, %c0_185] : memref<2x8x32xf32, #tpu.memory_space<vmem>>, vector<1x8x32xf32>
    %471 = vector.shape_cast %470 : vector<1x8x32xf32> to vector<8x32xf32>
    %472 = vector.shape_cast %372 : vector<8x32xf32> to vector<1x8x32xf32>
    tpu.vector_store %arg9[%c0_183, %c0_184, %c0_185], %472 {strides = array<i32>} : memref<2x8x32xf32, #tpu.memory_space<vmem>>, vector<1x8x32xf32>,
    %c1_186 = arith.constant 1 : index
    %c0_187 = arith.constant 0 : index
    %c0_188 = arith.constant 0 : index
    %473 = vector.load %arg9[%c1_186, %c0_187, %c0_188] : memref<2x8x32xf32, #tpu.memory_space<vmem>>, vector<1x8x32xf32>
    %474 = vector.shape_cast %473 : vector<1x8x32xf32> to vector<8x32xf32>
    %475 = vector.shape_cast %469 : vector<8x32xf32> to vector<1x8x32xf32>
    tpu.vector_store %arg9[%c1_186, %c0_187, %c0_188], %475 {strides = array<i32>} : memref<2x8x32xf32, #tpu.memory_space<vmem>>, vector<1x8x32xf32>,
    return
  }
}

</mosaic_0001>

<llo_original>
// kernel: transformer_decoder.1
$region0: #{transformer_decoder.1}
  #allocation0 [shape = 'u32[]', space=smem, size = 0x4, offset = 0x4, fixed_abs, tag = 'smem constant byte address 0x4 - core index']
  #allocation1 [shape = 'u32[144,128]{1,0:T(1,128)}', space=vmem, size = 0x12000, scoped, tag = 'internal scratch']
  %s0 = inlined_call_operand.vmem [shape: f32[2,8,32], index: 0, kind: input, shape index: {}]
  %s1 = inlined_call_operand.vmem [shape: f32[2,8,32], index: 1, kind: input, shape index: {}]
  %s2 = inlined_call_operand.vmem [shape: f32[2,1,8], index: 2, kind: input, shape index: {}]
  %s3 = inlined_call_operand.vmem [shape: f32[2,3,4,32,8], index: 3, kind: input, shape index: {}]
  %s4 = inlined_call_operand.vmem [shape: f32[2,3,4,1,8], index: 4, kind: input, shape index: {}]
  %s5 = inlined_call_operand.vmem [shape: f32[2,4,8,32], index: 5, kind: input, shape index: {}]
  %s6 = inlined_call_operand.vmem [shape: f32[2,6,32], index: 6, kind: input, shape index: {}]
  %s7 = inlined_call_operand.vmem [shape: f32[2,33,64], index: 7, kind: input, shape index: {}]
  %s8 = inlined_call_operand.vmem [shape: f32[2,64,32], index: 8, kind: input, shape index: {}]
  %s9 = inlined_call_operand.vmem [shape: f32[2,8,32], index: 9, kind: output, shape index: {0}]
  %s10 = inlined_call_operand.hbm [shape: f32[2,2,8,8], index: 10, kind: output, shape index: {1}]
  %11 = xla_tuple %s9, %s10
  %s12 = sld [smem:[#allocation0]]
  $region54: #{transformer_decoder.1} parent=0
    _
  %s14 = ssub.s32 1, %s12
  %s15 = scalar_select 0, %s14, %s12
  $region1: #{transformer_decoder.1} parent=0
    #allocation2 [shape = 'u8[16384]{0}', space=vmem, size = 0x4000, scoped, tag = 'output window, operand 1, single buffered']
    #allocation3 [shape = 's32[1]{0}', space=sflag, size = 0x4, scoped, tag = 'scoped memory for transformer_decoder.1']
    %16 = vsyncpa [#allocation3], 0
    // Predicated region
    $region2: #{transformer_decoder.1} parent=1 // pred_check
      _
    $region3: #{transformer_decoder.1} parent=1 // pred_check_branch
      %18 = sbr.rel (0) target = $region5
    $region4: #{transformer_decoder.1} parent=1 // pred_region
      _
    $region5: #{transformer_decoder.1} parent=1 // pred_fallthru
      _
    // Predicated region
    $region6: #{transformer_decoder.1} parent=1 // pred_check
      _
    $region7: #{transformer_decoder.1} parent=1 // pred_check_branch
      %20 = sbr.rel (0) target = $region9
    $region8: #{transformer_decoder.1} parent=1 // pred_region
      _
    $region9: #{transformer_decoder.1} parent=1 // pred_fallthru
      _
    // Predicated region
    $region10: #{transformer_decoder.1} parent=1 // pred_check
      _
    $region11: #{transformer_decoder.1} parent=1 // pred_check_branch
      %22 = sbr.rel (0) target = $region13
    $region12: #{transformer_decoder.1} parent=1 // pred_region
      _
    $region13: #{transformer_decoder.1} parent=1 // pred_fallthru
      _
    // Predicated region
    $region14: #{transformer_decoder.1} parent=1 // pred_check
      _
    $region15: #{transformer_decoder.1} parent=1 // pred_check_branch
      %24 = sbr.rel (0) target = $region17
    $region16: #{transformer_decoder.1} parent=1 // pred_region
      _
    $region17: #{transformer_decoder.1} parent=1 // pred_fallthru
      _
    // Predicated region
    $region18: #{transformer_decoder.1} parent=1 // pred_check
      _
    $region19: #{transformer_decoder.1} parent=1 // pred_check_branch
      %26 = sbr.rel (0) target = $region21
    $region20: #{transformer_decoder.1} parent=1 // pred_region
      _
    $region21: #{transformer_decoder.1} parent=1 // pred_fallthru
      _
    // Predicated region
    $region22: #{transformer_decoder.1} parent=1 // pred_check
      _
    $region23: #{transformer_decoder.1} parent=1 // pred_check_branch
      %28 = sbr.rel (0) target = $region25
    $region24: #{transformer_decoder.1} parent=1 // pred_region
      _
    $region25: #{transformer_decoder.1} parent=1 // pred_fallthru
      _
    // Predicated region
    $region26: #{transformer_decoder.1} parent=1 // pred_check
      _
    $region27: #{transformer_decoder.1} parent=1 // pred_check_branch
      %30 = sbr.rel (0) target = $region29
    $region28: #{transformer_decoder.1} parent=1 // pred_region
      _
    $region29: #{transformer_decoder.1} parent=1 // pred_fallthru
      _
    // Predicated region
    $region30: #{transformer_decoder.1} parent=1 // pred_check
      _
    $region31: #{transformer_decoder.1} parent=1 // pred_check_branch
      %32 = sbr.rel (0) target = $region33
    $region32: #{transformer_decoder.1} parent=1 // pred_region
      _
    $region33: #{transformer_decoder.1} parent=1 // pred_fallthru
      _
    // Predicated region
    $region34: #{transformer_decoder.1} parent=1 // pred_check
      _
    $region35: #{transformer_decoder.1} parent=1 // pred_check_branch
      %34 = sbr.rel (0) target = $region37
    $region36: #{transformer_decoder.1} parent=1 // pred_region
      _
    $region37: #{transformer_decoder.1} parent=1 // pred_fallthru
      _
    %v35 = vld [vmem:[%s0] sm:$0xff]
    %s36 = scalar_lea.vmem %s0, 8
    %v37 = vld [vmem:[%s36] sm:$0xff]
    %v38 = vld [vmem:[%s1] sm:$0xff]
    %s39 = scalar_lea.vmem %s1, 8
    %v40 = vld [vmem:[%s39] sm:$0xff]
    %v41 = vld [vmem:[%s2] sm:$0x1]
    %v42 = vmul.f32 %v41, -1e+09
    %s43 = scalar_lea.vmem %s2, 1
    %v44 = vld [vmem:[%s43] sm:$0x1]
    %v45 = vmul.f32 %v44, -1e+09
    %v46 = vld [vmem:[%s3] sm:$0xff]
    %v47 = vld [vmem:[%s3 + $0x8] sm:$0xff]
    %v48 = vld [vmem:[%s3 + $0x10] sm:$0xff]
    %v49 = vld [vmem:[%s3 + $0x18] sm:$0xff]
    %v50 = vld [vmem:[%s3 + $0x20] sm:$0xff]
    %v51 = vld [vmem:[%s3 + $0x28] sm:$0xff]
    %v52 = vld [vmem:[%s3 + $0x30] sm:$0xff]
    %v53 = vld [vmem:[%s3 + $0x38] sm:$0xff]
    %v54 = vld [vmem:[%s3 + $0x40] sm:$0xff]
    %v55 = vld [vmem:[%s3 + $0x48] sm:$0xff]
    %v56 = vld [vmem:[%s3 + $0x50] sm:$0xff]
    %v57 = vld [vmem:[%s3 + $0x58] sm:$0xff]
    %v58 = vld [vmem:[%s3 + $0x60] sm:$0xff]
    %v59 = vld [vmem:[%s3 + $0x68] sm:$0xff]
    %v60 = vld [vmem:[%s3 + $0x70] sm:$0xff]
    %v61 = vld [vmem:[%s3 + $0x78] sm:$0xff]
    %v62 = vld [vmem:[%s3 + $0x80] sm:$0xff]
    %v63 = vld [vmem:[%s3 + $0x88] sm:$0xff]
    %v64 = vld [vmem:[%s3 + $0x90] sm:$0xff]
    %v65 = vld [vmem:[%s3 + $0x98] sm:$0xff]
    %v66 = vld [vmem:[%s3 + $0xa0] sm:$0xff]
    %v67 = vld [vmem:[%s3 + $0xa8] sm:$0xff]
    %v68 = vld [vmem:[%s3 + $0xb0] sm:$0xff]
    %v69 = vld [vmem:[%s3 + $0xb8] sm:$0xff]
    %v70 = vld [vmem:[%s3 + $0xc0] sm:$0xff]
    %v71 = vld [vmem:[%s3 + $0xc8] sm:$0xff]
    %v72 = vld [vmem:[%s3 + $0xd0] sm:$0xff]
    %v73 = vld [vmem:[%s3 + $0xd8] sm:$0xff]
    %v74 = vld [vmem:[%s3 + $0xe0] sm:$0xff]
    %v75 = vld [vmem:[%s3 + $0xe8] sm:$0xff]
    %v76 = vld [vmem:[%s3 + $0xf0] sm:$0xff]
    %v77 = vld [vmem:[%s3 + $0xf8] sm:$0xff]
    %v78 = vld [vmem:[%s3 + $0x100] sm:$0xff]
    %v79 = vld [vmem:[%s3 + $0x108] sm:$0xff]
    %v80 = vld [vmem:[%s3 + $0x110] sm:$0xff]
    %v81 = vld [vmem:[%s3 + $0x118] sm:$0xff]
    %v82 = vld [vmem:[%s3 + $0x120] sm:$0xff]
    %v83 = vld [vmem:[%s3 + $0x128] sm:$0xff]
    %v84 = vld [vmem:[%s3 + $0x130] sm:$0xff]
    %v85 = vld [vmem:[%s3 + $0x138] sm:$0xff]
    %v86 = vld [vmem:[%s3 + $0x140] sm:$0xff]
    %v87 = vld [vmem:[%s3 + $0x148] sm:$0xff]
    %v88 = vld [vmem:[%s3 + $0x150] sm:$0xff]
    %v89 = vld [vmem:[%s3 + $0x158] sm:$0xff]
    %v90 = vld [vmem:[%s3 + $0x160] sm:$0xff]
    %v91 = vld [vmem:[%s3 + $0x168] sm:$0xff]
    %v92 = vld [vmem:[%s3 + $0x170] sm:$0xff]
    %v93 = vld [vmem:[%s3 + $0x178] sm:$0xff]
    %v94 = vld [vmem:[%s4] sm:$0x1]
    %v95 = vld [vmem:[%s4 + $0x1] sm:$0x1]
    %v96 = vld [vmem:[%s4 + $0x2] sm:$0x1]
    %v97 = vld [vmem:[%s4 + $0x3] sm:$0x1]
    %v98 = vld [vmem:[%s4 + $0x4] sm:$0x1]
    %v99 = vld [vmem:[%s4 + $0x5] sm:$0x1]
    %v100 = vld [vmem:[%s4 + $0x6] sm:$0x1]
    %v101 = vld [vmem:[%s4 + $0x7] sm:$0x1]
    %v102 = vld [vmem:[%s4 + $0x8] sm:$0x1]
    %v103 = vld [vmem:[%s4 + $0x9] sm:$0x1]
    %v104 = vld [vmem:[%s4 + $0xa] sm:$0x1]
    %v105 = vld [vmem:[%s4 + $0xb] sm:$0x1]
    %v106 = vld [vmem:[%s5] sm:$0xff]
    %v107 = vld [vmem:[%s5 + $0x8] sm:$0xff]
    %v108 = vld [vmem:[%s5 + $0x10] sm:$0xff]
    %v109 = vld [vmem:[%s5 + $0x18] sm:$0xff]
    %v110 = vld [vmem:[%s6] sm:$0x3f]
    %v111 = vld [vmem:[%s7] sm:$0xff]
    %v112 = vld [vmem:[%s7 + $0x8] sm:$0xff]
    %v113 = vld [vmem:[%s7 + $0x10] sm:$0xff]
    %v114 = vld [vmem:[%s7 + $0x18] sm:$0xff]
    %v115 = vld [vmem:[%s7 + $0x20] sm:$0x1]
    %v116 = vld [vmem:[%s8] sm:$0xff]
    %v117 = vld [vmem:[%s8 + $0x8] sm:$0xff]
    %v118 = vld [vmem:[%s8 + $0x10] sm:$0xff]
    %v119 = vld [vmem:[%s8 + $0x18] sm:$0xff]
    %v120 = vld [vmem:[%s8 + $0x20] sm:$0xff]
    %v121 = vld [vmem:[%s8 + $0x28] sm:$0xff]
    %v122 = vld [vmem:[%s8 + $0x30] sm:$0xff]
    %v123 = vld [vmem:[%s8 + $0x38] sm:$0xff]
    %v124 = vadd.f32 %v35, %v38
    %v129 = vlaneseq
    %v130 = vshrl.u32 %v129, 7
    %v131 = vsub.s32 0, %v130
    %v132 = vrot.slane %v94, %v131
    %v133 = vlaneseq
    %v134 = vshrl.u32 %v133, 7
    %v135 = vsub.s32 0, %v134
    %v136 = vrot.slane %v95, %v135
    %v137 = vlaneseq
    %v138 = vshrl.u32 %v137, 7
    %v139 = vsub.s32 0, %v138
    %v140 = vrot.slane %v96, %v139
    %v141 = vlaneseq
    %v142 = vshrl.u32 %v141, 7
    %v143 = vsub.s32 0, %v142
    %v144 = vrot.slane %v97, %v143
    %vm149 = vcmask 261120
    %v151 = vsel %vm149, %v124, 0
    %153 = vmatprep.subr.mxu0 0.0
    %154 = vmatpush1.msra.mxu0 %v46
    %155 = vmatprep.subr.mxu0 0.0
    %156 = vmatpush1.msra.mxu0 %v47
    %157 = vmatprep.subr.mxu0 0.0
    %158 = vmatpush1.msra.mxu0 %v48
    %159 = vmatprep.subr.mxu0 0.0
    %160 = vmatpush1.msra.mxu0 %v49
    %161 = vmatprep.subr.mxu0 0.0
    %162 = vmatpush1.msra.mxu0 0.0
    %163 = vmatprep.subr.mxu0 0.0
    %164 = vmatpush1.msra.mxu0 0.0
    %165 = vmatprep.subr.mxu0 0.0
    %166 = vmatpush1.msra.mxu0 0.0
    %167 = vmatprep.subr.mxu0 0.0
    %168 = vmatpush1.msra.mxu0 0.0
    %169 = vmatprep.subr.mxu0 0.0
    %170 = vmatpush1.msra.mxu0 0.0
    %171 = vmatprep.subr.mxu0 0.0
    %172 = vmatpush1.msra.mxu0 0.0
    %173 = vmatprep.subr.mxu0 0.0
    %174 = vmatpush1.msra.mxu0 0.0
    %175 = vmatprep.subr.mxu0 0.0
    %176 = vmatpush1.msra.mxu0 0.0
    %177 = vmatprep.subr.mxu0 0.0
    %178 = vmatpush1.msra.mxu0 0.0
    %179 = vmatprep.subr.mxu0 0.0
    %180 = vmatpush1.msra.mxu0 0.0
    %181 = vmatprep.subr.mxu0 0.0
    %182 = vmatpush1.msra.mxu0 0.0
    %183 = vmatprep.subr.mxu0 0.0
    %184 = vmatpush1.msra.mxu0 0.0
    %185 = vmatprep.subr.mxu0 0.0
    %186 = vmatpush1.msra.mxu0 0.0
    %187 = vmatprep.subr.mxu0 0.0
    %188 = vmatpush1.msra.mxu0 0.0
    %189 = vmatprep.subr.mxu0 0.0
    %190 = vmatpush1.msra.mxu0 0.0
    %191 = vmatprep.subr.mxu0 0.0
    %192 = vmatpush1.msra.mxu0 0.0
    %193 = vmatprep.subr.mxu0 0.0
    %194 = vmatpush1.msra.mxu0 0.0
    %195 = vmatprep.subr.mxu0 0.0
    %196 = vmatpush1.msra.mxu0 0.0
    %197 = vmatprep.subr.mxu0 0.0
    %198 = vmatpush1.msra.mxu0 0.0
    %199 = vmatprep.subr.mxu0 0.0
    %200 = vmatpush1.msra.mxu0 0.0
    %201 = vmatprep.subr.mxu0 0.0
    %202 = vmatpush1.msra.mxu0 0.0
    %203 = vmatprep.subr.mxu0 0.0
    %204 = vmatpush1.msra.mxu0 0.0
    %205 = vmatprep.subr.mxu0 0.0
    %206 = vmatpush1.msra.mxu0 0.0
    %207 = vmatprep.subr.mxu0 0.0
    %208 = vmatpush1.msra.mxu0 0.0
    %209 = vmatprep.subr.mxu0 0.0
    %210 = vmatpush1.msra.mxu0 0.0
    %211 = vmatprep.subr.mxu0 0.0
    %212 = vmatpush1.msra.mxu0 0.0
    %213 = vmatprep.subr.mxu0 0.0
    %214 = vmatpush1.msra.mxu0 0.0
    %215 = vmatprep.subr.mxu0 0.0
    %216 = vmatpush1.msra.mxu0 0.0
    %217 = vmatprep.mubr.f32.mxu0 0.0
    %218 = vmatmul.mubr.f32.gmra.mrb[0].mxu0 %v151
    %v219 = vpop.f32.mrb[0].mxu0
    %v220 = vadd.f32 %v132, %v219
    %v221 = vpop.f32.mrb[0].mxu0
    %222 = vdwg.mxu0
    %223 = vmatprep.subr.mxu0 0.0
    %224 = vmatpush1.msra.mxu0 %v50
    %225 = vmatprep.subr.mxu0 0.0
    %226 = vmatpush1.msra.mxu0 %v51
    %227 = vmatprep.subr.mxu0 0.0
    %228 = vmatpush1.msra.mxu0 %v52
    %229 = vmatprep.subr.mxu0 0.0
    %230 = vmatpush1.msra.mxu0 %v53
    %231 = vmatprep.subr.mxu0 0.0
    %232 = vmatpush1.msra.mxu0 0.0
    %233 = vmatprep.subr.mxu0 0.0
    %234 = vmatpush1.msra.mxu0 0.0
    %235 = vmatprep.subr.mxu0 0.0
    %236 = vmatpush1.msra.mxu0 0.0
    %237 = vmatprep.subr.mxu0 0.0
    %238 = vmatpush1.msra.mxu0 0.0
    %239 = vmatprep.subr.mxu0 0.0
    %240 = vmatpush1.msra.mxu0 0.0
    %241 = vmatprep.subr.mxu0 0.0
    %242 = vmatpush1.msra.mxu0 0.0
    %243 = vmatprep.subr.mxu0 0.0
    %244 = vmatpush1.msra.mxu0 0.0
    %245 = vmatprep.subr.mxu0 0.0
    %246 = vmatpush1.msra.mxu0 0.0
    %247 = vmatprep.subr.mxu0 0.0
    %248 = vmatpush1.msra.mxu0 0.0
    %249 = vmatprep.subr.mxu0 0.0
    %250 = vmatpush1.msra.mxu0 0.0
    %251 = vmatprep.subr.mxu0 0.0
    %252 = vmatpush1.msra.mxu0 0.0
    %253 = vmatprep.subr.mxu0 0.0
    %254 = vmatpush1.msra.mxu0 0.0
    %255 = vmatprep.subr.mxu0 0.0
    %256 = vmatpush1.msra.mxu0 0.0
    %257 = vmatprep.subr.mxu0 0.0
    %258 = vmatpush1.msra.mxu0 0.0
    %259 = vmatprep.subr.mxu0 0.0
    %260 = vmatpush1.msra.mxu0 0.0
    %261 = vmatprep.subr.mxu0 0.0
    %262 = vmatpush1.msra.mxu0 0.0
    %263 = vmatprep.subr.mxu0 0.0
    %264 = vmatpush1.msra.mxu0 0.0
    %265 = vmatprep.subr.mxu0 0.0
    %266 = vmatpush1.msra.mxu0 0.0
    %267 = vmatprep.subr.mxu0 0.0
    %268 = vmatpush1.msra.mxu0 0.0
    %269 = vmatprep.subr.mxu0 0.0
    %270 = vmatpush1.msra.mxu0 0.0
    %271 = vmatprep.subr.mxu0 0.0
    %272 = vmatpush1.msra.mxu0 0.0
    %273 = vmatprep.subr.mxu0 0.0
    %274 = vmatpush1.msra.mxu0 0.0
    %275 = vmatprep.subr.mxu0 0.0
    %276 = vmatpush1.msra.mxu0 0.0
    %277 = vmatprep.subr.mxu0 0.0
    %278 = vmatpush1.msra.mxu0 0.0
    %279 = vmatprep.subr.mxu0 0.0
    %280 = vmatpush1.msra.mxu0 0.0
    %281 = vmatprep.subr.mxu0 0.0
    %282 = vmatpush1.msra.mxu0 0.0
    %283 = vmatprep.subr.mxu0 0.0
    %284 = vmatpush1.msra.mxu0 0.0
    %285 = vmatprep.subr.mxu0 0.0
    %286 = vmatpush1.msra.mxu0 0.0
    %287 = vmatprep.mubr.f32.mxu0 0.0
    %288 = vmatmul.mubr.f32.gmra.mrb[0].mxu0 %v151
    %v289 = vpop.f32.mrb[0].mxu0
    %v290 = vadd.f32 %v136, %v289
    %v291 = vpop.f32.mrb[0].mxu0
    %292 = vdwg.mxu0
    %293 = vmatprep.subr.mxu0 0.0
    %294 = vmatpush1.msra.mxu0 %v54
    %295 = vmatprep.subr.mxu0 0.0
    %296 = vmatpush1.msra.mxu0 %v55
    %297 = vmatprep.subr.mxu0 0.0
    %298 = vmatpush1.msra.mxu0 %v56
    %299 = vmatprep.subr.mxu0 0.0
    %300 = vmatpush1.msra.mxu0 %v57
    %301 = vmatprep.subr.mxu0 0.0
    %302 = vmatpush1.msra.mxu0 0.0
    %303 = vmatprep.subr.mxu0 0.0
    %304 = vmatpush1.msra.mxu0 0.0
    %305 = vmatprep.subr.mxu0 0.0
    %306 = vmatpush1.msra.mxu0 0.0
    %307 = vmatprep.subr.mxu0 0.0
    %308 = vmatpush1.msra.mxu0 0.0
    %309 = vmatprep.subr.mxu0 0.0
    %310 = vmatpush1.msra.mxu0 0.0
    %311 = vmatprep.subr.mxu0 0.0
    %312 = vmatpush1.msra.mxu0 0.0
    %313 = vmatprep.subr.mxu0 0.0
    %314 = vmatpush1.msra.mxu0 0.0
    %315 = vmatprep.subr.mxu0 0.0
    %316 = vmatpush1.msra.mxu0 0.0
    %317 = vmatprep.subr.mxu0 0.0
    %318 = vmatpush1.msra.mxu0 0.0
    %319 = vmatprep.subr.mxu0 0.0
    %320 = vmatpush1.msra.mxu0 0.0
    %321 = vmatprep.subr.mxu0 0.0
    %322 = vmatpush1.msra.mxu0 0.0
    %323 = vmatprep.subr.mxu0 0.0
    %324 = vmatpush1.msra.mxu0 0.0
    %325 = vmatprep.subr.mxu0 0.0
    %326 = vmatpush1.msra.mxu0 0.0
    %327 = vmatprep.subr.mxu0 0.0
    %328 = vmatpush1.msra.mxu0 0.0
    %329 = vmatprep.subr.mxu0 0.0
    %330 = vmatpush1.msra.mxu0 0.0
    %331 = vmatprep.subr.mxu0 0.0
    %332 = vmatpush1.msra.mxu0 0.0
    %333 = vmatprep.subr.mxu0 0.0
    %334 = vmatpush1.msra.mxu0 0.0
    %335 = vmatprep.subr.mxu0 0.0
    %336 = vmatpush1.msra.mxu0 0.0
    %337 = vmatprep.subr.mxu0 0.0
    %338 = vmatpush1.msra.mxu0 0.0
    %339 = vmatprep.subr.mxu0 0.0
    %340 = vmatpush1.msra.mxu0 0.0
    %341 = vmatprep.subr.mxu0 0.0
    %342 = vmatpush1.msra.mxu0 0.0
    %343 = vmatprep.subr.mxu0 0.0
    %344 = vmatpush1.msra.mxu0 0.0
    %345 = vmatprep.subr.mxu0 0.0
    %346 = vmatpush1.msra.mxu0 0.0
    %347 = vmatprep.subr.mxu0 0.0
    %348 = vmatpush1.msra.mxu0 0.0
    %349 = vmatprep.subr.mxu0 0.0
    %350 = vmatpush1.msra.mxu0 0.0
    %351 = vmatprep.subr.mxu0 0.0
    %352 = vmatpush1.msra.mxu0 0.0
    %353 = vmatprep.subr.mxu0 0.0
    %354 = vmatpush1.msra.mxu0 0.0
    %355 = vmatprep.subr.mxu0 0.0
    %356 = vmatpush1.msra.mxu0 0.0
    %357 = vmatprep.mubr.f32.mxu0 0.0
    %358 = vmatmul.mubr.f32.gmra.mrb[0].mxu0 %v151
    %v359 = vpop.f32.mrb[0].mxu0
    %v360 = vadd.f32 %v140, %v359
    %v361 = vpop.f32.mrb[0].mxu0
    %362 = vdwg.mxu0
    %363 = vmatprep.subr.mxu0 0.0
    %364 = vmatpush1.msra.mxu0 %v58
    %365 = vmatprep.subr.mxu0 0.0
    %366 = vmatpush1.msra.mxu0 %v59
    %367 = vmatprep.subr.mxu0 0.0
    %368 = vmatpush1.msra.mxu0 %v60
    %369 = vmatprep.subr.mxu0 0.0
    %370 = vmatpush1.msra.mxu0 %v61
    %371 = vmatprep.subr.mxu0 0.0
    %372 = vmatpush1.msra.mxu0 0.0
    %373 = vmatprep.subr.mxu0 0.0
    %374 = vmatpush1.msra.mxu0 0.0
    %375 = vmatprep.subr.mxu0 0.0
    %376 = vmatpush1.msra.mxu0 0.0
    %377 = vmatprep.subr.mxu0 0.0
    %378 = vmatpush1.msra.mxu0 0.0
    %379 = vmatprep.subr.mxu0 0.0
    %380 = vmatpush1.msra.mxu0 0.0
    %381 = vmatprep.subr.mxu0 0.0
    %382 = vmatpush1.msra.mxu0 0.0
    %383 = vmatprep.subr.mxu0 0.0
    %384 = vmatpush1.msra.mxu0 0.0
    %385 = vmatprep.subr.mxu0 0.0
    %386 = vmatpush1.msra.mxu0 0.0
    %387 = vmatprep.subr.mxu0 0.0
    %388 = vmatpush1.msra.mxu0 0.0
    %389 = vmatprep.subr.mxu0 0.0
    %390 = vmatpush1.msra.mxu0 0.0
    %391 = vmatprep.subr.mxu0 0.0
    %392 = vmatpush1.msra.mxu0 0.0
    %393 = vmatprep.subr.mxu0 0.0
    %394 = vmatpush1.msra.mxu0 0.0
    %395 = vmatprep.subr.mxu0 0.0
    %396 = vmatpush1.msra.mxu0 0.0
    %397 = vmatprep.subr.mxu0 0.0
    %398 = vmatpush1.msra.mxu0 0.0
    %399 = vmatprep.subr.mxu0 0.0
    %400 = vmatpush1.msra.mxu0 0.0
    %401 = vmatprep.subr.mxu0 0.0
    %402 = vmatpush1.msra.mxu0 0.0
    %403 = vmatprep.subr.mxu0 0.0
    %404 = vmatpush1.msra.mxu0 0.0
    %405 = vmatprep.subr.mxu0 0.0
    %406 = vmatpush1.msra.mxu0 0.0
    %407 = vmatprep.subr.mxu0 0.0
    %408 = vmatpush1.msra.mxu0 0.0
    %409 = vmatprep.subr.mxu0 0.0
    %410 = vmatpush1.msra.mxu0 0.0
    %411 = vmatprep.subr.mxu0 0.0
    %412 = vmatpush1.msra.mxu0 0.0
    %413 = vmatprep.subr.mxu0 0.0
    %414 = vmatpush1.msra.mxu0 0.0
    %415 = vmatprep.subr.mxu0 0.0
    %416 = vmatpush1.msra.mxu0 0.0
    %417 = vmatprep.subr.mxu0 0.0
    %418 = vmatpush1.msra.mxu0 0.0
    %419 = vmatprep.subr.mxu0 0.0
    %420 = vmatpush1.msra.mxu0 0.0
    %421 = vmatprep.subr.mxu0 0.0
    %422 = vmatpush1.msra.mxu0 0.0
    %423 = vmatprep.subr.mxu0 0.0
    %424 = vmatpush1.msra.mxu0 0.0
    %425 = vmatprep.subr.mxu0 0.0
    %426 = vmatpush1.msra.mxu0 0.0
    %427 = vmatprep.mubr.f32.mxu0 0.0
    %428 = vmatmul.mubr.f32.gmra.mrb[0].mxu0 %v151
    %v429 = vpop.f32.mrb[0].mxu0
    %v430 = vadd.f32 %v144, %v429
    %v431 = vpop.f32.mrb[0].mxu0
    %432 = vdwg.mxu0
    %v437 = vlaneseq
    %v438 = vshrl.u32 %v437, 7
    %v439 = vsub.s32 0, %v438
    %v440 = vrot.slane %v98, %v439
    %v441 = vlaneseq
    %v442 = vshrl.u32 %v441, 7
    %v443 = vsub.s32 0, %v442
    %v444 = vrot.slane %v99, %v443
    %v445 = vlaneseq
    %v446 = vshrl.u32 %v445, 7
    %v447 = vsub.s32 0, %v446
    %v448 = vrot.slane %v100, %v447
    %v449 = vlaneseq
    %v450 = vshrl.u32 %v449, 7
    %v451 = vsub.s32 0, %v450
    %v452 = vrot.slane %v101, %v451
    %457 = vmatprep.subr.mxu0 0.0
    %458 = vmatpush1.msra.mxu0 %v62
    %459 = vmatprep.subr.mxu0 0.0
    %460 = vmatpush1.msra.mxu0 %v63
    %461 = vmatprep.subr.mxu0 0.0
    %462 = vmatpush1.msra.mxu0 %v64
    %463 = vmatprep.subr.mxu0 0.0
    %464 = vmatpush1.msra.mxu0 %v65
    %465 = vmatprep.subr.mxu0 0.0
    %466 = vmatpush1.msra.mxu0 0.0
    %467 = vmatprep.subr.mxu0 0.0
    %468 = vmatpush1.msra.mxu0 0.0
    %469 = vmatprep.subr.mxu0 0.0
    %470 = vmatpush1.msra.mxu0 0.0
    %471 = vmatprep.subr.mxu0 0.0
    %472 = vmatpush1.msra.mxu0 0.0
    %473 = vmatprep.subr.mxu0 0.0
    %474 = vmatpush1.msra.mxu0 0.0
    %475 = vmatprep.subr.mxu0 0.0
    %476 = vmatpush1.msra.mxu0 0.0
    %477 = vmatprep.subr.mxu0 0.0
    %478 = vmatpush1.msra.mxu0 0.0
    %479 = vmatprep.subr.mxu0 0.0
    %480 = vmatpush1.msra.mxu0 0.0
    %481 = vmatprep.subr.mxu0 0.0
    %482 = vmatpush1.msra.mxu0 0.0
    %483 = vmatprep.subr.mxu0 0.0
    %484 = vmatpush1.msra.mxu0 0.0
    %485 = vmatprep.subr.mxu0 0.0
    %486 = vmatpush1.msra.mxu0 0.0
    %487 = vmatprep.subr.mxu0 0.0
    %488 = vmatpush1.msra.mxu0 0.0
    %489 = vmatprep.subr.mxu0 0.0
    %490 = vmatpush1.msra.mxu0 0.0
    %491 = vmatprep.subr.mxu0 0.0
    %492 = vmatpush1.msra.mxu0 0.0
    %493 = vmatprep.subr.mxu0 0.0
    %494 = vmatpush1.msra.mxu0 0.0
    %495 = vmatprep.subr.mxu0 0.0
    %496 = vmatpush1.msra.mxu0 0.0
    %497 = vmatprep.subr.mxu0 0.0
    %498 = vmatpush1.msra.mxu0 0.0
    %499 = vmatprep.subr.mxu0 0.0
    %500 = vmatpush1.msra.mxu0 0.0
    %501 = vmatprep.subr.mxu0 0.0
    %502 = vmatpush1.msra.mxu0 0.0
    %503 = vmatprep.subr.mxu0 0.0
    %504 = vmatpush1.msra.mxu0 0.0
    %505 = vmatprep.subr.mxu0 0.0
    %506 = vmatpush1.msra.mxu0 0.0
    %507 = vmatprep.subr.mxu0 0.0
    %508 = vmatpush1.msra.mxu0 0.0
    %509 = vmatprep.subr.mxu0 0.0
    %510 = vmatpush1.msra.mxu0 0.0
    %511 = vmatprep.subr.mxu0 0.0
    %512 = vmatpush1.msra.mxu0 0.0
    %513 = vmatprep.subr.mxu0 0.0
    %514 = vmatpush1.msra.mxu0 0.0
    %515 = vmatprep.subr.mxu0 0.0
    %516 = vmatpush1.msra.mxu0 0.0
    %517 = vmatprep.subr.mxu0 0.0
    %518 = vmatpush1.msra.mxu0 0.0
    %519 = vmatprep.subr.mxu0 0.0
    %520 = vmatpush1.msra.mxu0 0.0
    %521 = vmatprep.mubr.f32.mxu0 0.0
    %522 = vmatmul.mubr.f32.gmra.mrb[0].mxu0 %v151
    %v523 = vpop.f32.mrb[0].mxu0
    %v524 = vadd.f32 %v440, %v523
    %v525 = vpop.f32.mrb[0].mxu0
    %526 = vdwg.mxu0
    %527 = vmatprep.subr.mxu0 0.0
    %528 = vmatpush1.msra.mxu0 %v66
    %529 = vmatprep.subr.mxu0 0.0
    %530 = vmatpush1.msra.mxu0 %v67
    %531 = vmatprep.subr.mxu0 0.0
    %532 = vmatpush1.msra.mxu0 %v68
    %533 = vmatprep.subr.mxu0 0.0
    %534 = vmatpush1.msra.mxu0 %v69
    %535 = vmatprep.subr.mxu0 0.0
    %536 = vmatpush1.msra.mxu0 0.0
    %537 = vmatprep.subr.mxu0 0.0
    %538 = vmatpush1.msra.mxu0 0.0
    %539 = vmatprep.subr.mxu0 0.0
    %540 = vmatpush1.msra.mxu0 0.0
    %541 = vmatprep.subr.mxu0 0.0
    %542 = vmatpush1.msra.mxu0 0.0
    %543 = vmatprep.subr.mxu0 0.0
    %544 = vmatpush1.msra.mxu0 0.0
    %545 = vmatprep.subr.mxu0 0.0
    %546 = vmatpush1.msra.mxu0 0.0
    %547 = vmatprep.subr.mxu0 0.0
    %548 = vmatpush1.msra.mxu0 0.0
    %549 = vmatprep.subr.mxu0 0.0
    %550 = vmatpush1.msra.mxu0 0.0
    %551 = vmatprep.subr.mxu0 0.0
    %552 = vmatpush1.msra.mxu0 0.0
    %553 = vmatprep.subr.mxu0 0.0
    %554 = vmatpush1.msra.mxu0 0.0
    %555 = vmatprep.subr.mxu0 0.0
    %556 = vmatpush1.msra.mxu0 0.0
    %557 = vmatprep.subr.mxu0 0.0
    %558 = vmatpush1.msra.mxu0 0.0
    %559 = vmatprep.subr.mxu0 0.0
    %560 = vmatpush1.msra.mxu0 0.0
    %561 = vmatprep.subr.mxu0 0.0
    %562 = vmatpush1.msra.mxu0 0.0
    %563 = vmatprep.subr.mxu0 0.0
    %564 = vmatpush1.msra.mxu0 0.0
    %565 = vmatprep.subr.mxu0 0.0
    %566 = vmatpush1.msra.mxu0 0.0
    %567 = vmatprep.subr.mxu0 0.0
    %568 = vmatpush1.msra.mxu0 0.0
    %569 = vmatprep.subr.mxu0 0.0
    %570 = vmatpush1.msra.mxu0 0.0
    %571 = vmatprep.subr.mxu0 0.0
    %572 = vmatpush1.msra.mxu0 0.0
    %573 = vmatprep.subr.mxu0 0.0
    %574 = vmatpush1.msra.mxu0 0.0
    %575 = vmatprep.subr.mxu0 0.0
    %576 = vmatpush1.msra.mxu0 0.0
    %577 = vmatprep.subr.mxu0 0.0
    %578 = vmatpush1.msra.mxu0 0.0
    %579 = vmatprep.subr.mxu0 0.0
    %580 = vmatpush1.msra.mxu0 0.0
    %581 = vmatprep.subr.mxu0 0.0
    %582 = vmatpush1.msra.mxu0 0.0
    %583 = vmatprep.subr.mxu0 0.0
    %584 = vmatpush1.msra.mxu0 0.0
    %585 = vmatprep.subr.mxu0 0.0
    %586 = vmatpush1.msra.mxu0 0.0
    %587 = vmatprep.subr.mxu0 0.0
    %588 = vmatpush1.msra.mxu0 0.0
    %589 = vmatprep.subr.mxu0 0.0
    %590 = vmatpush1.msra.mxu0 0.0
    %591 = vmatprep.mubr.f32.mxu0 0.0
    %592 = vmatmul.mubr.f32.gmra.mrb[0].mxu0 %v151
    %v593 = vpop.f32.mrb[0].mxu0
    %v594 = vadd.f32 %v444, %v593
    %v595 = vpop.f32.mrb[0].mxu0
    %596 = vdwg.mxu0
    %597 = vmatprep.subr.mxu0 0.0
    %598 = vmatpush1.msra.mxu0 %v70
    %599 = vmatprep.subr.mxu0 0.0
    %600 = vmatpush1.msra.mxu0 %v71
    %601 = vmatprep.subr.mxu0 0.0
    %602 = vmatpush1.msra.mxu0 %v72
    %603 = vmatprep.subr.mxu0 0.0
    %604 = vmatpush1.msra.mxu0 %v73
    %605 = vmatprep.subr.mxu0 0.0
    %606 = vmatpush1.msra.mxu0 0.0
    %607 = vmatprep.subr.mxu0 0.0
    %608 = vmatpush1.msra.mxu0 0.0
    %609 = vmatprep.subr.mxu0 0.0
    %610 = vmatpush1.msra.mxu0 0.0
    %611 = vmatprep.subr.mxu0 0.0
    %612 = vmatpush1.msra.mxu0 0.0
    %613 = vmatprep.subr.mxu0 0.0
    %614 = vmatpush1.msra.mxu0 0.0
    %615 = vmatprep.subr.mxu0 0.0
    %616 = vmatpush1.msra.mxu0 0.0
    %617 = vmatprep.subr.mxu0 0.0
    %618 = vmatpush1.msra.mxu0 0.0
    %619 = vmatprep.subr.mxu0 0.0
    %620 = vmatpush1.msra.mxu0 0.0
    %621 = vmatprep.subr.mxu0 0.0
    %622 = vmatpush1.msra.mxu0 0.0
    %623 = vmatprep.subr.mxu0 0.0
    %624 = vmatpush1.msra.mxu0 0.0
    %625 = vmatprep.subr.mxu0 0.0
    %626 = vmatpush1.msra.mxu0 0.0
    %627 = vmatprep.subr.mxu0 0.0
    %628 = vmatpush1.msra.mxu0 0.0
    %629 = vmatprep.subr.mxu0 0.0
    %630 = vmatpush1.msra.mxu0 0.0
    %631 = vmatprep.subr.mxu0 0.0
    %632 = vmatpush1.msra.mxu0 0.0
    %633 = vmatprep.subr.mxu0 0.0
    %634 = vmatpush1.msra.mxu0 0.0
    %635 = vmatprep.subr.mxu0 0.0
    %636 = vmatpush1.msra.mxu0 0.0
    %637 = vmatprep.subr.mxu0 0.0
    %638 = vmatpush1.msra.mxu0 0.0
    %639 = vmatprep.subr.mxu0 0.0
    %640 = vmatpush1.msra.mxu0 0.0
    %641 = vmatprep.subr.mxu0 0.0
    %642 = vmatpush1.msra.mxu0 0.0
    %643 = vmatprep.subr.mxu0 0.0
    %644 = vmatpush1.msra.mxu0 0.0
    %645 = vmatprep.subr.mxu0 0.0
    %646 = vmatpush1.msra.mxu0 0.0
    %647 = vmatprep.subr.mxu0 0.0
    %648 = vmatpush1.msra.mxu0 0.0
    %649 = vmatprep.subr.mxu0 0.0
    %650 = vmatpush1.msra.mxu0 0.0
    %651 = vmatprep.subr.mxu0 0.0
    %652 = vmatpush1.msra.mxu0 0.0
    %653 = vmatprep.subr.mxu0 0.0
    %654 = vmatpush1.msra.mxu0 0.0
    %655 = vmatprep.subr.mxu0 0.0
    %656 = vmatpush1.msra.mxu0 0.0
    %657 = vmatprep.subr.mxu0 0.0
    %658 = vmatpush1.msra.mxu0 0.0
    %659 = vmatprep.subr.mxu0 0.0
    %660 = vmatpush1.msra.mxu0 0.0
    %661 = vmatprep.mubr.f32.mxu0 0.0
    %662 = vmatmul.mubr.f32.gmra.mrb[0].mxu0 %v151
    %v663 = vpop.f32.mrb[0].mxu0
    %v664 = vadd.f32 %v448, %v663
    %v665 = vpop.f32.mrb[0].mxu0
    %666 = vdwg.mxu0
    %667 = vmatprep.subr.mxu0 0.0
    %668 = vmatpush1.msra.mxu0 %v74
    %669 = vmatprep.subr.mxu0 0.0
    %670 = vmatpush1.msra.mxu0 %v75
    %671 = vmatprep.subr.mxu0 0.0
    %672 = vmatpush1.msra.mxu0 %v76
    %673 = vmatprep.subr.mxu0 0.0
    %674 = vmatpush1.msra.mxu0 %v77
    %675 = vmatprep.subr.mxu0 0.0
    %676 = vmatpush1.msra.mxu0 0.0
    %677 = vmatprep.subr.mxu0 0.0
    %678 = vmatpush1.msra.mxu0 0.0
    %679 = vmatprep.subr.mxu0 0.0
    %680 = vmatpush1.msra.mxu0 0.0
    %681 = vmatprep.subr.mxu0 0.0
    %682 = vmatpush1.msra.mxu0 0.0
    %683 = vmatprep.subr.mxu0 0.0
    %684 = vmatpush1.msra.mxu0 0.0
    %685 = vmatprep.subr.mxu0 0.0
    %686 = vmatpush1.msra.mxu0 0.0
    %687 = vmatprep.subr.mxu0 0.0
    %688 = vmatpush1.msra.mxu0 0.0
    %689 = vmatprep.subr.mxu0 0.0
    %690 = vmatpush1.msra.mxu0 0.0
    %691 = vmatprep.subr.mxu0 0.0
    %692 = vmatpush1.msra.mxu0 0.0
    %693 = vmatprep.subr.mxu0 0.0
    %694 = vmatpush1.msra.mxu0 0.0
    %695 = vmatprep.subr.mxu0 0.0
    %696 = vmatpush1.msra.mxu0 0.0
    %697 = vmatprep.subr.mxu0 0.0
    %698 = vmatpush1.msra.mxu0 0.0
    %699 = vmatprep.subr.mxu0 0.0
    %700 = vmatpush1.msra.mxu0 0.0
    %701 = vmatprep.subr.mxu0 0.0
    %702 = vmatpush1.msra.mxu0 0.0
    %703 = vmatprep.subr.mxu0 0.0
    %704 = vmatpush1.msra.mxu0 0.0
    %705 = vmatprep.subr.mxu0 0.0
    %706 = vmatpush1.msra.mxu0 0.0
    %707 = vmatprep.subr.mxu0 0.0
    %708 = vmatpush1.msra.mxu0 0.0
    %709 = vmatprep.subr.mxu0 0.0
    %710 = vmatpush1.msra.mxu0 0.0
    %711 = vmatprep.subr.mxu0 0.0
    %712 = vmatpush1.msra.mxu0 0.0
    %713 = vmatprep.subr.mxu0 0.0
    %714 = vmatpush1.msra.mxu0 0.0
    %715 = vmatprep.subr.mxu0 0.0
    %716 = vmatpush1.msra.mxu0 0.0
    %717 = vmatprep.subr.mxu0 0.0
    %718 = vmatpush1.msra.mxu0 0.0
    %719 = vmatprep.subr.mxu0 0.0
    %720 = vmatpush1.msra.mxu0 0.0
    %721 = vmatprep.subr.mxu0 0.0
    %722 = vmatpush1.msra.mxu0 0.0
    %723 = vmatprep.subr.mxu0 0.0
    %724 = vmatpush1.msra.mxu0 0.0
    %725 = vmatprep.subr.mxu0 0.0
    %726 = vmatpush1.msra.mxu0 0.0
    %727 = vmatprep.subr.mxu0 0.0
    %728 = vmatpush1.msra.mxu0 0.0
    %729 = vmatprep.subr.mxu0 0.0
    %730 = vmatpush1.msra.mxu0 0.0
    %731 = vmatprep.mubr.f32.mxu0 0.0
    %732 = vmatmul.mubr.f32.gmra.mrb[0].mxu0 %v151
    %v733 = vpop.f32.mrb[0].mxu0
    %v734 = vadd.f32 %v452, %v733
    %v735 = vpop.f32.mrb[0].mxu0
    %736 = vdwg.mxu0
    %v741 = vlaneseq
    %v742 = vshrl.u32 %v741, 7
    %v743 = vsub.s32 0, %v742
    %v744 = vrot.slane %v102, %v743
    %v745 = vlaneseq
    %v746 = vshrl.u32 %v745, 7
    %v747 = vsub.s32 0, %v746
    %v748 = vrot.slane %v103, %v747
    %v749 = vlaneseq
    %v750 = vshrl.u32 %v749, 7
    %v751 = vsub.s32 0, %v750
    %v752 = vrot.slane %v104, %v751
    %v753 = vlaneseq
    %v754 = vshrl.u32 %v753, 7
    %v755 = vsub.s32 0, %v754
    %v756 = vrot.slane %v105, %v755
    %v762 = vsel %vm149, %v35, 0
    %764 = vmatprep.subr.mxu0 0.0
    %765 = vmatpush1.msra.mxu0 %v78
    %766 = vmatprep.subr.mxu0 0.0
    %767 = vmatpush1.msra.mxu0 %v79
    %768 = vmatprep.subr.mxu0 0.0
    %769 = vmatpush1.msra.mxu0 %v80
    %770 = vmatprep.subr.mxu0 0.0
    %771 = vmatpush1.msra.mxu0 %v81
    %772 = vmatprep.subr.mxu0 0.0
    %773 = vmatpush1.msra.mxu0 0.0
    %774 = vmatprep.subr.mxu0 0.0
    %775 = vmatpush1.msra.mxu0 0.0
    %776 = vmatprep.subr.mxu0 0.0
    %777 = vmatpush1.msra.mxu0 0.0
    %778 = vmatprep.subr.mxu0 0.0
    %779 = vmatpush1.msra.mxu0 0.0
    %780 = vmatprep.subr.mxu0 0.0
    %781 = vmatpush1.msra.mxu0 0.0
    %782 = vmatprep.subr.mxu0 0.0
    %783 = vmatpush1.msra.mxu0 0.0
    %784 = vmatprep.subr.mxu0 0.0
    %785 = vmatpush1.msra.mxu0 0.0
    %786 = vmatprep.subr.mxu0 0.0
    %787 = vmatpush1.msra.mxu0 0.0
    %788 = vmatprep.subr.mxu0 0.0
    %789 = vmatpush1.msra.mxu0 0.0
    %790 = vmatprep.subr.mxu0 0.0
    %791 = vmatpush1.msra.mxu0 0.0
    %792 = vmatprep.subr.mxu0 0.0
    %793 = vmatpush1.msra.mxu0 0.0
    %794 = vmatprep.subr.mxu0 0.0
    %795 = vmatpush1.msra.mxu0 0.0
    %796 = vmatprep.subr.mxu0 0.0
    %797 = vmatpush1.msra.mxu0 0.0
    %798 = vmatprep.subr.mxu0 0.0
    %799 = vmatpush1.msra.mxu0 0.0
    %800 = vmatprep.subr.mxu0 0.0
    %801 = vmatpush1.msra.mxu0 0.0
    %802 = vmatprep.subr.mxu0 0.0
    %803 = vmatpush1.msra.mxu0 0.0
    %804 = vmatprep.subr.mxu0 0.0
    %805 = vmatpush1.msra.mxu0 0.0
    %806 = vmatprep.subr.mxu0 0.0
    %807 = vmatpush1.msra.mxu0 0.0
    %808 = vmatprep.subr.mxu0 0.0
    %809 = vmatpush1.msra.mxu0 0.0
    %810 = vmatprep.subr.mxu0 0.0
    %811 = vmatpush1.msra.mxu0 0.0
    %812 = vmatprep.subr.mxu0 0.0
    %813 = vmatpush1.msra.mxu0 0.0
    %814 = vmatprep.subr.mxu0 0.0
    %815 = vmatpush1.msra.mxu0 0.0
    %816 = vmatprep.subr.mxu0 0.0
    %817 = vmatpush1.msra.mxu0 0.0
    %818 = vmatprep.subr.mxu0 0.0
    %819 = vmatpush1.msra.mxu0 0.0
    %820 = vmatprep.subr.mxu0 0.0
    %821 = vmatpush1.msra.mxu0 0.0
    %822 = vmatprep.subr.mxu0 0.0
    %823 = vmatpush1.msra.mxu0 0.0
    %824 = vmatprep.subr.mxu0 0.0
    %825 = vmatpush1.msra.mxu0 0.0
    %826 = vmatprep.subr.mxu0 0.0
    %827 = vmatpush1.msra.mxu0 0.0
    %828 = vmatprep.mubr.f32.mxu0 0.0
    %829 = vmatmul.mubr.f32.gmra.mrb[0].mxu0 %v762
    %v830 = vpop.f32.mrb[0].mxu0
    %v831 = vadd.f32 %v744, %v830
    %v832 = vpop.f32.mrb[0].mxu0
    %833 = vdwg.mxu0
    %834 = vmatprep.subr.mxu0 0.0
    %835 = vmatpush1.msra.mxu0 %v82
    %836 = vmatprep.subr.mxu0 0.0
    %837 = vmatpush1.msra.mxu0 %v83
    %838 = vmatprep.subr.mxu0 0.0
    %839 = vmatpush1.msra.mxu0 %v84
    %840 = vmatprep.subr.mxu0 0.0
    %841 = vmatpush1.msra.mxu0 %v85
    %842 = vmatprep.subr.mxu0 0.0
    %843 = vmatpush1.msra.mxu0 0.0
    %844 = vmatprep.subr.mxu0 0.0
    %845 = vmatpush1.msra.mxu0 0.0
    %846 = vmatprep.subr.mxu0 0.0
    %847 = vmatpush1.msra.mxu0 0.0
    %848 = vmatprep.subr.mxu0 0.0
    %849 = vmatpush1.msra.mxu0 0.0
    %850 = vmatprep.subr.mxu0 0.0
    %851 = vmatpush1.msra.mxu0 0.0
    %852 = vmatprep.subr.mxu0 0.0
    %853 = vmatpush1.msra.mxu0 0.0
    %854 = vmatprep.subr.mxu0 0.0
    %855 = vmatpush1.msra.mxu0 0.0
    %856 = vmatprep.subr.mxu0 0.0
    %857 = vmatpush1.msra.mxu0 0.0
    %858 = vmatprep.subr.mxu0 0.0
    %859 = vmatpush1.msra.mxu0 0.0
    %860 = vmatprep.subr.mxu0 0.0
    %861 = vmatpush1.msra.mxu0 0.0
    %862 = vmatprep.subr.mxu0 0.0
    %863 = vmatpush1.msra.mxu0 0.0
    %864 = vmatprep.subr.mxu0 0.0
    %865 = vmatpush1.msra.mxu0 0.0
    %866 = vmatprep.subr.mxu0 0.0
    %867 = vmatpush1.msra.mxu0 0.0
    %868 = vmatprep.subr.mxu0 0.0
    %869 = vmatpush1.msra.mxu0 0.0
    %870 = vmatprep.subr.mxu0 0.0
    %871 = vmatpush1.msra.mxu0 0.0
    %872 = vmatprep.subr.mxu0 0.0
    %873 = vmatpush1.msra.mxu0 0.0
    %874 = vmatprep.subr.mxu0 0.0
    %875 = vmatpush1.msra.mxu0 0.0
    %876 = vmatprep.subr.mxu0 0.0
    %877 = vmatpush1.msra.mxu0 0.0
    %878 = vmatprep.subr.mxu0 0.0
    %879 = vmatpush1.msra.mxu0 0.0
    %880 = vmatprep.subr.mxu0 0.0
    %881 = vmatpush1.msra.mxu0 0.0
    %882 = vmatprep.subr.mxu0 0.0
    %883 = vmatpush1.msra.mxu0 0.0
    %884 = vmatprep.subr.mxu0 0.0
    %885 = vmatpush1.msra.mxu0 0.0
    %886 = vmatprep.subr.mxu0 0.0
    %887 = vmatpush1.msra.mxu0 0.0
    %888 = vmatprep.subr.mxu0 0.0
    %889 = vmatpush1.msra.mxu0 0.0
    %890 = vmatprep.subr.mxu0 0.0
    %891 = vmatpush1.msra.mxu0 0.0
    %892 = vmatprep.subr.mxu0 0.0
    %893 = vmatpush1.msra.mxu0 0.0
    %894 = vmatprep.subr.mxu0 0.0
    %895 = vmatpush1.msra.mxu0 0.0
    %896 = vmatprep.subr.mxu0 0.0
    %897 = vmatpush1.msra.mxu0 0.0
    %898 = vmatprep.mubr.f32.mxu0 0.0
    %899 = vmatmul.mubr.f32.gmra.mrb[0].mxu0 %v762
    %v900 = vpop.f32.mrb[0].mxu0
    %v901 = vadd.f32 %v748, %v900
    %v902 = vpop.f32.mrb[0].mxu0
    %903 = vdwg.mxu0
    %904 = vmatprep.subr.mxu0 0.0
    %905 = vmatpush1.msra.mxu0 %v86
    %906 = vmatprep.subr.mxu0 0.0
    %907 = vmatpush1.msra.mxu0 %v87
    %908 = vmatprep.subr.mxu0 0.0
    %909 = vmatpush1.msra.mxu0 %v88
    %910 = vmatprep.subr.mxu0 0.0
    %911 = vmatpush1.msra.mxu0 %v89
    %912 = vmatprep.subr.mxu0 0.0
    %913 = vmatpush1.msra.mxu0 0.0
    %914 = vmatprep.subr.mxu0 0.0
    %915 = vmatpush1.msra.mxu0 0.0
    %916 = vmatprep.subr.mxu0 0.0
    %917 = vmatpush1.msra.mxu0 0.0
    %918 = vmatprep.subr.mxu0 0.0
    %919 = vmatpush1.msra.mxu0 0.0
    %920 = vmatprep.subr.mxu0 0.0
    %921 = vmatpush1.msra.mxu0 0.0
    %922 = vmatprep.subr.mxu0 0.0
    %923 = vmatpush1.msra.mxu0 0.0
    %924 = vmatprep.subr.mxu0 0.0
    %925 = vmatpush1.msra.mxu0 0.0
    %926 = vmatprep.subr.mxu0 0.0
    %927 = vmatpush1.msra.mxu0 0.0
    %928 = vmatprep.subr.mxu0 0.0
    %929 = vmatpush1.msra.mxu0 0.0
    %930 = vmatprep.subr.mxu0 0.0
    %931 = vmatpush1.msra.mxu0 0.0
    %932 = vmatprep.subr.mxu0 0.0
    %933 = vmatpush1.msra.mxu0 0.0
    %934 = vmatprep.subr.mxu0 0.0
    %935 = vmatpush1.msra.mxu0 0.0
    %936 = vmatprep.subr.mxu0 0.0
    %937 = vmatpush1.msra.mxu0 0.0
    %938 = vmatprep.subr.mxu0 0.0
    %939 = vmatpush1.msra.mxu0 0.0
    %940 = vmatprep.subr.mxu0 0.0
    %941 = vmatpush1.msra.mxu0 0.0
    %942 = vmatprep.subr.mxu0 0.0
    %943 = vmatpush1.msra.mxu0 0.0
    %944 = vmatprep.subr.mxu0 0.0
    %945 = vmatpush1.msra.mxu0 0.0
    %946 = vmatprep.subr.mxu0 0.0
    %947 = vmatpush1.msra.mxu0 0.0
    %948 = vmatprep.subr.mxu0 0.0
    %949 = vmatpush1.msra.mxu0 0.0
    %950 = vmatprep.subr.mxu0 0.0
    %951 = vmatpush1.msra.mxu0 0.0
    %952 = vmatprep.subr.mxu0 0.0
    %953 = vmatpush1.msra.mxu0 0.0
    %954 = vmatprep.subr.mxu0 0.0
    %955 = vmatpush1.msra.mxu0 0.0
    %956 = vmatprep.subr.mxu0 0.0
    %957 = vmatpush1.msra.mxu0 0.0
    %958 = vmatprep.subr.mxu0 0.0
    %959 = vmatpush1.msra.mxu0 0.0
    %960 = vmatprep.subr.mxu0 0.0
    %961 = vmatpush1.msra.mxu0 0.0
    %962 = vmatprep.subr.mxu0 0.0
    %963 = vmatpush1.msra.mxu0 0.0
    %964 = vmatprep.subr.mxu0 0.0
    %965 = vmatpush1.msra.mxu0 0.0
    %966 = vmatprep.subr.mxu0 0.0
    %967 = vmatpush1.msra.mxu0 0.0
    %968 = vmatprep.mubr.f32.mxu0 0.0
    %969 = vmatmul.mubr.f32.gmra.mrb[0].mxu0 %v762
    %v970 = vpop.f32.mrb[0].mxu0
    %v971 = vadd.f32 %v752, %v970
    %v972 = vpop.f32.mrb[0].mxu0
    %973 = vdwg.mxu0
    %974 = vmatprep.subr.mxu0 0.0
    %975 = vmatpush1.msra.mxu0 %v90
    %976 = vmatprep.subr.mxu0 0.0
    %977 = vmatpush1.msra.mxu0 %v91
    %978 = vmatprep.subr.mxu0 0.0
    %979 = vmatpush1.msra.mxu0 %v92
    %980 = vmatprep.subr.mxu0 0.0
    %981 = vmatpush1.msra.mxu0 %v93
    %982 = vmatprep.subr.mxu0 0.0
    %983 = vmatpush1.msra.mxu0 0.0
    %984 = vmatprep.subr.mxu0 0.0
    %985 = vmatpush1.msra.mxu0 0.0
    %986 = vmatprep.subr.mxu0 0.0
    %987 = vmatpush1.msra.mxu0 0.0
    %988 = vmatprep.subr.mxu0 0.0
    %989 = vmatpush1.msra.mxu0 0.0
    %990 = vmatprep.subr.mxu0 0.0
    %991 = vmatpush1.msra.mxu0 0.0
    %992 = vmatprep.subr.mxu0 0.0
    %993 = vmatpush1.msra.mxu0 0.0
    %994 = vmatprep.subr.mxu0 0.0
    %995 = vmatpush1.msra.mxu0 0.0
    %996 = vmatprep.subr.mxu0 0.0
    %997 = vmatpush1.msra.mxu0 0.0
    %998 = vmatprep.subr.mxu0 0.0
    %999 = vmatpush1.msra.mxu0 0.0
    %1000 = vmatprep.subr.mxu0 0.0
    %1001 = vmatpush1.msra.mxu0 0.0
    %1002 = vmatprep.subr.mxu0 0.0
    %1003 = vmatpush1.msra.mxu0 0.0
    %1004 = vmatprep.subr.mxu0 0.0
    %1005 = vmatpush1.msra.mxu0 0.0
    %1006 = vmatprep.subr.mxu0 0.0
    %1007 = vmatpush1.msra.mxu0 0.0
    %1008 = vmatprep.subr.mxu0 0.0
    %1009 = vmatpush1.msra.mxu0 0.0
    %1010 = vmatprep.subr.mxu0 0.0
    %1011 = vmatpush1.msra.mxu0 0.0
    %1012 = vmatprep.subr.mxu0 0.0
    %1013 = vmatpush1.msra.mxu0 0.0
    %1014 = vmatprep.subr.mxu0 0.0
    %1015 = vmatpush1.msra.mxu0 0.0
    %1016 = vmatprep.subr.mxu0 0.0
    %1017 = vmatpush1.msra.mxu0 0.0
    %1018 = vmatprep.subr.mxu0 0.0
    %1019 = vmatpush1.msra.mxu0 0.0
    %1020 = vmatprep.subr.mxu0 0.0
    %1021 = vmatpush1.msra.mxu0 0.0
    %1022 = vmatprep.subr.mxu0 0.0
    %1023 = vmatpush1.msra.mxu0 0.0
    %1024 = vmatprep.subr.mxu0 0.0
    %1025 = vmatpush1.msra.mxu0 0.0
    %1026 = vmatprep.subr.mxu0 0.0
    %1027 = vmatpush1.msra.mxu0 0.0
    %1028 = vmatprep.subr.mxu0 0.0
    %1029 = vmatpush1.msra.mxu0 0.0
    %1030 = vmatprep.subr.mxu0 0.0
    %1031 = vmatpush1.msra.mxu0 0.0
    %1032 = vmatprep.subr.mxu0 0.0
    %1033 = vmatpush1.msra.mxu0 0.0
    %1034 = vmatprep.subr.mxu0 0.0
    %1035 = vmatpush1.msra.mxu0 0.0
    %1036 = vmatprep.subr.mxu0 0.0
    %1037 = vmatpush1.msra.mxu0 0.0
    %1038 = vmatprep.mubr.f32.mxu0 0.0
    %1039 = vmatmul.mubr.f32.gmra.mrb[0].mxu0 %v762
    %v1040 = vpop.f32.mrb[0].mxu0
    %v1041 = vadd.f32 %v756, %v1040
    %v1042 = vpop.f32.mrb[0].mxu0
    %1043 = vdwg.mxu0
    %vm1044 = vcmask 64512
    %v1046 = vsel %vm1044, %v220, 0
    %v1049 = vsel %vm1044, %v524, 0
    %1051 = vmatprep.subr.mxu0 0.0
    %1052 = vmatpush1.xpose.msra.mxu0 %v1049
    %1053 = vmatprep.subr.mxu0 0.0
    %1054 = vmatpush1.xpose.msra.mxu0 0.0
    %1055 = vmatprep.subr.mxu0 0.0
    %1056 = vmatpush1.xpose.msra.mxu0 0.0
    %1057 = vmatprep.subr.mxu0 0.0
    %1058 = vmatpush1.xpose.msra.mxu0 0.0
    %1059 = vmatprep.subr.mxu0 0.0
    %1060 = vmatpush1.xpose.msra.mxu0 0.0
    %1061 = vmatprep.subr.mxu0 0.0
    %1062 = vmatpush1.xpose.msra.mxu0 0.0
    %1063 = vmatprep.subr.mxu0 0.0
    %1064 = vmatpush1.xpose.msra.mxu0 0.0
    %1065 = vmatprep.subr.mxu0 0.0
    %1066 = vmatpush1.xpose.msra.mxu0 0.0
    %1067 = vmatprep.subr.mxu0 0.0
    %1068 = vmatpush1.xpose.msra.mxu0 0.0
    %1069 = vmatprep.subr.mxu0 0.0
    %1070 = vmatpush1.xpose.msra.mxu0 0.0
    %1071 = vmatprep.subr.mxu0 0.0
    %1072 = vmatpush1.xpose.msra.mxu0 0.0
    %1073 = vmatprep.subr.mxu0 0.0
    %1074 = vmatpush1.xpose.msra.mxu0 0.0
    %1075 = vmatprep.subr.mxu0 0.0
    %1076 = vmatpush1.xpose.msra.mxu0 0.0
    %1077 = vmatprep.subr.mxu0 0.0
    %1078 = vmatpush1.xpose.msra.mxu0 0.0
    %1079 = vmatprep.subr.mxu0 0.0
    %1080 = vmatpush1.xpose.msra.mxu0 0.0
    %1081 = vmatprep.subr.mxu0 0.0
    %1082 = vmatpush1.xpose.msra.mxu0 0.0
    %1083 = vmatprep.subr.mxu0 0.0
    %1084 = vmatpush1.xpose.msra.mxu0 0.0
    %1085 = vmatprep.subr.mxu0 0.0
    %1086 = vmatpush1.xpose.msra.mxu0 0.0
    %1087 = vmatprep.subr.mxu0 0.0
    %1088 = vmatpush1.xpose.msra.mxu0 0.0
    %1089 = vmatprep.subr.mxu0 0.0
    %1090 = vmatpush1.xpose.msra.mxu0 0.0
    %1091 = vmatprep.subr.mxu0 0.0
    %1092 = vmatpush1.xpose.msra.mxu0 0.0
    %1093 = vmatprep.subr.mxu0 0.0
    %1094 = vmatpush1.xpose.msra.mxu0 0.0
    %1095 = vmatprep.subr.mxu0 0.0
    %1096 = vmatpush1.xpose.msra.mxu0 0.0
    %1097 = vmatprep.subr.mxu0 0.0
    %1098 = vmatpush1.xpose.msra.mxu0 0.0
    %1099 = vmatprep.subr.mxu0 0.0
    %1100 = vmatpush1.xpose.msra.mxu0 0.0
    %1101 = vmatprep.subr.mxu0 0.0
    %1102 = vmatpush1.xpose.msra.mxu0 0.0
    %1103 = vmatprep.subr.mxu0 0.0
    %1104 = vmatpush1.xpose.msra.mxu0 0.0
    %1105 = vmatprep.subr.mxu0 0.0
    %1106 = vmatpush1.xpose.msra.mxu0 0.0
    %1107 = vmatprep.subr.mxu0 0.0
    %1108 = vmatpush1.xpose.msra.mxu0 0.0
    %1109 = vmatprep.subr.mxu0 0.0
    %1110 = vmatpush1.xpose.msra.mxu0 0.0
    %1111 = vmatprep.subr.mxu0 0.0
    %1112 = vmatpush1.xpose.msra.mxu0 0.0
    %1113 = vmatprep.subr.mxu0 0.0
    %1114 = vmatpush1.xpose.msra.mxu0 0.0
    %1115 = vmatprep.mubr.f32.mxu0 0.0
    %1116 = vmatmul.mubr.f32.gmra.mrb[0].mxu0 %v1046
    %v1117 = vpop.f32.mrb[0].mxu0
    %v1118 = vadd.f32 0.0, %v1117
    %v1119 = vpop.f32.mrb[0].mxu0
    %1120 = vdwg.mxu0
    %v1122 = vsel %vm1044, %v290, 0
    %v1125 = vsel %vm1044, %v594, 0
    %1127 = vmatprep.subr.mxu0 0.0
    %1128 = vmatpush1.xpose.msra.mxu0 %v1125
    %1129 = vmatprep.subr.mxu0 0.0
    %1130 = vmatpush1.xpose.msra.mxu0 0.0
    %1131 = vmatprep.subr.mxu0 0.0
    %1132 = vmatpush1.xpose.msra.mxu0 0.0
    %1133 = vmatprep.subr.mxu0 0.0
    %1134 = vmatpush1.xpose.msra.mxu0 0.0
    %1135 = vmatprep.subr.mxu0 0.0
    %1136 = vmatpush1.xpose.msra.mxu0 0.0
    %1137 = vmatprep.subr.mxu0 0.0
    %1138 = vmatpush1.xpose.msra.mxu0 0.0
    %1139 = vmatprep.subr.mxu0 0.0
    %1140 = vmatpush1.xpose.msra.mxu0 0.0
    %1141 = vmatprep.subr.mxu0 0.0
    %1142 = vmatpush1.xpose.msra.mxu0 0.0
    %1143 = vmatprep.subr.mxu0 0.0
    %1144 = vmatpush1.xpose.msra.mxu0 0.0
    %1145 = vmatprep.subr.mxu0 0.0
    %1146 = vmatpush1.xpose.msra.mxu0 0.0
    %1147 = vmatprep.subr.mxu0 0.0
    %1148 = vmatpush1.xpose.msra.mxu0 0.0
    %1149 = vmatprep.subr.mxu0 0.0
    %1150 = vmatpush1.xpose.msra.mxu0 0.0
    %1151 = vmatprep.subr.mxu0 0.0
    %1152 = vmatpush1.xpose.msra.mxu0 0.0
    %1153 = vmatprep.subr.mxu0 0.0
    %1154 = vmatpush1.xpose.msra.mxu0 0.0
    %1155 = vmatprep.subr.mxu0 0.0
    %1156 = vmatpush1.xpose.msra.mxu0 0.0
    %1157 = vmatprep.subr.mxu0 0.0
    %1158 = vmatpush1.xpose.msra.mxu0 0.0
    %1159 = vmatprep.subr.mxu0 0.0
    %1160 = vmatpush1.xpose.msra.mxu0 0.0
    %1161 = vmatprep.subr.mxu0 0.0
    %1162 = vmatpush1.xpose.msra.mxu0 0.0
    %1163 = vmatprep.subr.mxu0 0.0
    %1164 = vmatpush1.xpose.msra.mxu0 0.0
    %1165 = vmatprep.subr.mxu0 0.0
    %1166 = vmatpush1.xpose.msra.mxu0 0.0
    %1167 = vmatprep.subr.mxu0 0.0
    %1168 = vmatpush1.xpose.msra.mxu0 0.0
    %1169 = vmatprep.subr.mxu0 0.0
    %1170 = vmatpush1.xpose.msra.mxu0 0.0
    %1171 = vmatprep.subr.mxu0 0.0
    %1172 = vmatpush1.xpose.msra.mxu0 0.0
    %1173 = vmatprep.subr.mxu0 0.0
    %1174 = vmatpush1.xpose.msra.mxu0 0.0
    %1175 = vmatprep.subr.mxu0 0.0
    %1176 = vmatpush1.xpose.msra.mxu0 0.0
    %1177 = vmatprep.subr.mxu0 0.0
    %1178 = vmatpush1.xpose.msra.mxu0 0.0
    %1179 = vmatprep.subr.mxu0 0.0
    %1180 = vmatpush1.xpose.msra.mxu0 0.0
    %1181 = vmatprep.subr.mxu0 0.0
    %1182 = vmatpush1.xpose.msra.mxu0 0.0
    %1183 = vmatprep.subr.mxu0 0.0
    %1184 = vmatpush1.xpose.msra.mxu0 0.0
    %1185 = vmatprep.subr.mxu0 0.0
    %1186 = vmatpush1.xpose.msra.mxu0 0.0
    %1187 = vmatprep.subr.mxu0 0.0
    %1188 = vmatpush1.xpose.msra.mxu0 0.0
    %1189 = vmatprep.subr.mxu0 0.0
    %1190 = vmatpush1.xpose.msra.mxu0 0.0
    %1191 = vmatprep.mubr.f32.mxu0 0.0
    %1192 = vmatmul.mubr.f32.gmra.mrb[0].mxu0 %v1122
    %v1193 = vpop.f32.mrb[0].mxu0
    %v1194 = vadd.f32 0.0, %v1193
    %v1195 = vpop.f32.mrb[0].mxu0
    %1196 = vdwg.mxu0
    %v1198 = vsel %vm1044, %v360, 0
    %v1201 = vsel %vm1044, %v664, 0
    %1203 = vmatprep.subr.mxu0 0.0
    %1204 = vmatpush1.xpose.msra.mxu0 %v1201
    %1205 = vmatprep.subr.mxu0 0.0
    %1206 = vmatpush1.xpose.msra.mxu0 0.0
    %1207 = vmatprep.subr.mxu0 0.0
    %1208 = vmatpush1.xpose.msra.mxu0 0.0
    %1209 = vmatprep.subr.mxu0 0.0
    %1210 = vmatpush1.xpose.msra.mxu0 0.0
    %1211 = vmatprep.subr.mxu0 0.0
    %1212 = vmatpush1.xpose.msra.mxu0 0.0
    %1213 = vmatprep.subr.mxu0 0.0
    %1214 = vmatpush1.xpose.msra.mxu0 0.0
    %1215 = vmatprep.subr.mxu0 0.0
    %1216 = vmatpush1.xpose.msra.mxu0 0.0
    %1217 = vmatprep.subr.mxu0 0.0
    %1218 = vmatpush1.xpose.msra.mxu0 0.0
    %1219 = vmatprep.subr.mxu0 0.0
    %1220 = vmatpush1.xpose.msra.mxu0 0.0
    %1221 = vmatprep.subr.mxu0 0.0
    %1222 = vmatpush1.xpose.msra.mxu0 0.0
    %1223 = vmatprep.subr.mxu0 0.0
    %1224 = vmatpush1.xpose.msra.mxu0 0.0
    %1225 = vmatprep.subr.mxu0 0.0
    %1226 = vmatpush1.xpose.msra.mxu0 0.0
    %1227 = vmatprep.subr.mxu0 0.0
    %1228 = vmatpush1.xpose.msra.mxu0 0.0
    %1229 = vmatprep.subr.mxu0 0.0
    %1230 = vmatpush1.xpose.msra.mxu0 0.0
    %1231 = vmatprep.subr.mxu0 0.0
    %1232 = vmatpush1.xpose.msra.mxu0 0.0
    %1233 = vmatprep.subr.mxu0 0.0
    %1234 = vmatpush1.xpose.msra.mxu0 0.0
    %1235 = vmatprep.subr.mxu0 0.0
    %1236 = vmatpush1.xpose.msra.mxu0 0.0
    %1237 = vmatprep.subr.mxu0 0.0
    %1238 = vmatpush1.xpose.msra.mxu0 0.0
    %1239 = vmatprep.subr.mxu0 0.0
    %1240 = vmatpush1.xpose.msra.mxu0 0.0
    %1241 = vmatprep.subr.mxu0 0.0
    %1242 = vmatpush1.xpose.msra.mxu0 0.0
    %1243 = vmatprep.subr.mxu0 0.0
    %1244 = vmatpush1.xpose.msra.mxu0 0.0
    %1245 = vmatprep.subr.mxu0 0.0
    %1246 = vmatpush1.xpose.msra.mxu0 0.0
    %1247 = vmatprep.subr.mxu0 0.0
    %1248 = vmatpush1.xpose.msra.mxu0 0.0
    %1249 = vmatprep.subr.mxu0 0.0
    %1250 = vmatpush1.xpose.msra.mxu0 0.0
    %1251 = vmatprep.subr.mxu0 0.0
    %1252 = vmatpush1.xpose.msra.mxu0 0.0
    %1253 = vmatprep.subr.mxu0 0.0
    %1254 = vmatpush1.xpose.msra.mxu0 0.0
    %1255 = vmatprep.subr.mxu0 0.0
    %1256 = vmatpush1.xpose.msra.mxu0 0.0
    %1257 = vmatprep.subr.mxu0 0.0
    %1258 = vmatpush1.xpose.msra.mxu0 0.0
    %1259 = vmatprep.subr.mxu0 0.0
    %1260 = vmatpush1.xpose.msra.mxu0 0.0
    %1261 = vmatprep.subr.mxu0 0.0
    %1262 = vmatpush1.xpose.msra.mxu0 0.0
    %1263 = vmatprep.subr.mxu0 0.0
    %1264 = vmatpush1.xpose.msra.mxu0 0.0
    %1265 = vmatprep.subr.mxu0 0.0
    %1266 = vmatpush1.xpose.msra.mxu0 0.0
    %1267 = vmatprep.mubr.f32.mxu0 0.0
    %1268 = vmatmul.mubr.f32.gmra.mrb[0].mxu0 %v1198
    %v1269 = vpop.f32.mrb[0].mxu0
    %v1270 = vadd.f32 0.0, %v1269
    %v1271 = vpop.f32.mrb[0].mxu0
    %1272 = vdwg.mxu0
    %v1274 = vsel %vm1044, %v430, 0
    %v1277 = vsel %vm1044, %v734, 0
    %1279 = vmatprep.subr.mxu0 0.0
    %1280 = vmatpush1.xpose.msra.mxu0 %v1277
    %1281 = vmatprep.subr.mxu0 0.0
    %1282 = vmatpush1.xpose.msra.mxu0 0.0
    %1283 = vmatprep.subr.mxu0 0.0
    %1284 = vmatpush1.xpose.msra.mxu0 0.0
    %1285 = vmatprep.subr.mxu0 0.0
    %1286 = vmatpush1.xpose.msra.mxu0 0.0
    %1287 = vmatprep.subr.mxu0 0.0
    %1288 = vmatpush1.xpose.msra.mxu0 0.0
    %1289 = vmatprep.subr.mxu0 0.0
    %1290 = vmatpush1.xpose.msra.mxu0 0.0
    %1291 = vmatprep.subr.mxu0 0.0
    %1292 = vmatpush1.xpose.msra.mxu0 0.0
    %1293 = vmatprep.subr.mxu0 0.0
    %1294 = vmatpush1.xpose.msra.mxu0 0.0
    %1295 = vmatprep.subr.mxu0 0.0
    %1296 = vmatpush1.xpose.msra.mxu0 0.0
    %1297 = vmatprep.subr.mxu0 0.0
    %1298 = vmatpush1.xpose.msra.mxu0 0.0
    %1299 = vmatprep.subr.mxu0 0.0
    %1300 = vmatpush1.xpose.msra.mxu0 0.0
    %1301 = vmatprep.subr.mxu0 0.0
    %1302 = vmatpush1.xpose.msra.mxu0 0.0
    %1303 = vmatprep.subr.mxu0 0.0
    %1304 = vmatpush1.xpose.msra.mxu0 0.0
    %1305 = vmatprep.subr.mxu0 0.0
    %1306 = vmatpush1.xpose.msra.mxu0 0.0
    %1307 = vmatprep.subr.mxu0 0.0
    %1308 = vmatpush1.xpose.msra.mxu0 0.0
    %1309 = vmatprep.subr.mxu0 0.0
    %1310 = vmatpush1.xpose.msra.mxu0 0.0
    %1311 = vmatprep.subr.mxu0 0.0
    %1312 = vmatpush1.xpose.msra.mxu0 0.0
    %1313 = vmatprep.subr.mxu0 0.0
    %1314 = vmatpush1.xpose.msra.mxu0 0.0
    %1315 = vmatprep.subr.mxu0 0.0
    %1316 = vmatpush1.xpose.msra.mxu0 0.0
    %1317 = vmatprep.subr.mxu0 0.0
    %1318 = vmatpush1.xpose.msra.mxu0 0.0
    %1319 = vmatprep.subr.mxu0 0.0
    %1320 = vmatpush1.xpose.msra.mxu0 0.0
    %1321 = vmatprep.subr.mxu0 0.0
    %1322 = vmatpush1.xpose.msra.mxu0 0.0
    %1323 = vmatprep.subr.mxu0 0.0
    %1324 = vmatpush1.xpose.msra.mxu0 0.0
    %1325 = vmatprep.subr.mxu0 0.0
    %1326 = vmatpush1.xpose.msra.mxu0 0.0
    %1327 = vmatprep.subr.mxu0 0.0
    %1328 = vmatpush1.xpose.msra.mxu0 0.0
    %1329 = vmatprep.subr.mxu0 0.0
    %1330 = vmatpush1.xpose.msra.mxu0 0.0
    %1331 = vmatprep.subr.mxu0 0.0
    %1332 = vmatpush1.xpose.msra.mxu0 0.0
    %1333 = vmatprep.subr.mxu0 0.0
    %1334 = vmatpush1.xpose.msra.mxu0 0.0
    %1335 = vmatprep.subr.mxu0 0.0
    %1336 = vmatpush1.xpose.msra.mxu0 0.0
    %1337 = vmatprep.subr.mxu0 0.0
    %1338 = vmatpush1.xpose.msra.mxu0 0.0
    %1339 = vmatprep.subr.mxu0 0.0
    %1340 = vmatpush1.xpose.msra.mxu0 0.0
    %1341 = vmatprep.subr.mxu0 0.0
    %1342 = vmatpush1.xpose.msra.mxu0 0.0
    %1343 = vmatprep.mubr.f32.mxu0 0.0
    %1344 = vmatmul.mubr.f32.gmra.mrb[0].mxu0 %v1274
    %v1345 = vpop.f32.mrb[0].mxu0
    %v1346 = vadd.f32 0.0, %v1345
    %v1347 = vpop.f32.mrb[0].mxu0
    %1348 = vdwg.mxu0
    %v1349 = vmul.f32 %v1118, 0.35355338
    %v1350 = vmul.f32 %v1194, 0.35355338
    %v1351 = vmul.f32 %v1270, 0.35355338
    %v1352 = vmul.f32 %v1346, 0.35355338
    %v1354 = vlaneseq
    %v1355 = vshrl.u32 %v1354, 7
    %v1356 = vsub.s32 0, %v1355
    %v1357 = vrot.slane %v42, %v1356
    %v1359 = vadd.f32 %v1349, %v1357
    %v1360 = vadd.f32 %v1350, %v1357
    %v1361 = vadd.f32 %v1351, %v1357
    %v1362 = vadd.f32 %v1352, %v1357
    %v1363 = vsel %vm1044, %v1359, -inf
    %1364 = vmax.xlane.f32.xlu0 %v1363
    %v1365 = vpop.xlane.xlu0 %1364
    %v1366 = vsel %vm1044, %v1360, -inf
    %1367 = vmax.xlane.f32.xlu0 %v1366
    %v1368 = vpop.xlane.xlu0 %1367
    %v1369 = vsel %vm1044, %v1361, -inf
    %1370 = vmax.xlane.f32.xlu0 %v1369
    %v1371 = vpop.xlane.xlu0 %1370
    %v1372 = vsel %vm1044, %v1362, -inf
    %1373 = vmax.xlane.f32.xlu0 %v1372
    %v1374 = vpop.xlane.xlu0 %1373
    %v1375 = vsub.f32 %v1359, %v1365
    %v1376 = vsub.f32 %v1360, %v1368
    %v1377 = vsub.f32 %v1361, %v1371
    %v1378 = vsub.f32 %v1362, %v1374
    %v1379 = vmul.f32 %v1375, 1.442695
    %v1380 = vpow.pop %v1379
    %v1381 = vmul.f32 %v1376, 1.442695
    %v1382 = vpow.pop %v1381
    %v1383 = vmul.f32 %v1377, 1.442695
    %v1384 = vpow.pop %v1383
    %v1385 = vmul.f32 %v1378, 1.442695
    %v1386 = vpow.pop %v1385
    %v1387 = vsel %vm1044, %v1380, 0.0
    %1388 = vadd.xlane.f32.xlu0 %v1387
    %v1389 = vpop.xlane.xlu0 %1388
    %v1390 = vsel %vm1044, %v1382, 0.0
    %1391 = vadd.xlane.f32.xlu0 %v1390
    %v1392 = vpop.xlane.xlu0 %1391
    %v1393 = vsel %vm1044, %v1384, 0.0
    %1394 = vadd.xlane.f32.xlu0 %v1393
    %v1395 = vpop.xlane.xlu0 %1394
    %v1396 = vsel %vm1044, %v1386, 0.0
    %1397 = vadd.xlane.f32.xlu0 %v1396
    %v1398 = vpop.xlane.xlu0 %1397
    %v1399 = vrcp.pop %v1389
    %v1400 = vmul.f32 %v1380, %v1399
    %v1401 = vrcp.pop %v1392
    %v1402 = vmul.f32 %v1382, %v1401
    %v1403 = vrcp.pop %v1395
    %v1404 = vmul.f32 %v1384, %v1403
    %v1405 = vrcp.pop %v1398
    %v1406 = vmul.f32 %v1386, %v1405
    %v1407 = vsel %vm1044, %v1400, 0.0
    %v1408 = vsel %vm1044, %v1402, 0.0
    %v1409 = vadd.f32 %v1407, %v1408
    %v1410 = vsel %vm1044, %v1404, 0.0
    %v1411 = vadd.f32 %v1409, %v1410
    %v1412 = vsel %vm1044, %v1406, 0.0
    %v1413 = vadd.f32 %v1411, %v1412
    %v1414 = vrcp.pop 4.0
    %v1415 = vmul.f32 %v1413, %v1414
    %1416 = vst.msk [vmem:[#allocation2] sm:$0xff] %vm1044, %v1415
    %v1418 = vsel %vm1044, %v1400, 0
    %1420 = vmatprep.subr.mxu0 0.0
    %1421 = vmatpush1.msra.mxu0 %v831
    %1422 = vmatprep.subr.mxu0 0.0
    %1423 = vmatpush1.msra.mxu0 0.0
    %1424 = vmatprep.subr.mxu0 0.0
    %1425 = vmatpush1.msra.mxu0 0.0
    %1426 = vmatprep.subr.mxu0 0.0
    %1427 = vmatpush1.msra.mxu0 0.0
    %1428 = vmatprep.subr.mxu0 0.0
    %1429 = vmatpush1.msra.mxu0 0.0
    %1430 = vmatprep.subr.mxu0 0.0
    %1431 = vmatpush1.msra.mxu0 0.0
    %1432 = vmatprep.subr.mxu0 0.0
    %1433 = vmatpush1.msra.mxu0 0.0
    %1434 = vmatprep.subr.mxu0 0.0
    %1435 = vmatpush1.msra.mxu0 0.0
    %1436 = vmatprep.subr.mxu0 0.0
    %1437 = vmatpush1.msra.mxu0 0.0
    %1438 = vmatprep.subr.mxu0 0.0
    %1439 = vmatpush1.msra.mxu0 0.0
    %1440 = vmatprep.subr.mxu0 0.0
    %1441 = vmatpush1.msra.mxu0 0.0
    %1442 = vmatprep.subr.mxu0 0.0
    %1443 = vmatpush1.msra.mxu0 0.0
    %1444 = vmatprep.subr.mxu0 0.0
    %1445 = vmatpush1.msra.mxu0 0.0
    %1446 = vmatprep.subr.mxu0 0.0
    %1447 = vmatpush1.msra.mxu0 0.0
    %1448 = vmatprep.subr.mxu0 0.0
    %1449 = vmatpush1.msra.mxu0 0.0
    %1450 = vmatprep.subr.mxu0 0.0
    %1451 = vmatpush1.msra.mxu0 0.0
    %1452 = vmatprep.subr.mxu0 0.0
    %1453 = vmatpush1.msra.mxu0 0.0
    %1454 = vmatprep.subr.mxu0 0.0
    %1455 = vmatpush1.msra.mxu0 0.0
    %1456 = vmatprep.subr.mxu0 0.0
    %1457 = vmatpush1.msra.mxu0 0.0
    %1458 = vmatprep.subr.mxu0 0.0
    %1459 = vmatpush1.msra.mxu0 0.0
    %1460 = vmatprep.subr.mxu0 0.0
    %1461 = vmatpush1.msra.mxu0 0.0
    %1462 = vmatprep.subr.mxu0 0.0
    %1463 = vmatpush1.msra.mxu0 0.0
    %1464 = vmatprep.subr.mxu0 0.0
    %1465 = vmatpush1.msra.mxu0 0.0
    %1466 = vmatprep.subr.mxu0 0.0
    %1467 = vmatpush1.msra.mxu0 0.0
    %1468 = vmatprep.subr.mxu0 0.0
    %1469 = vmatpush1.msra.mxu0 0.0
    %1470 = vmatprep.subr.mxu0 0.0
    %1471 = vmatpush1.msra.mxu0 0.0
    %1472 = vmatprep.subr.mxu0 0.0
    %1473 = vmatpush1.msra.mxu0 0.0
    %1474 = vmatprep.subr.mxu0 0.0
    %1475 = vmatpush1.msra.mxu0 0.0
    %1476 = vmatprep.subr.mxu0 0.0
    %1477 = vmatpush1.msra.mxu0 0.0
    %1478 = vmatprep.subr.mxu0 0.0
    %1479 = vmatpush1.msra.mxu0 0.0
    %1480 = vmatprep.subr.mxu0 0.0
    %1481 = vmatpush1.msra.mxu0 0.0
    %1482 = vmatprep.subr.mxu0 0.0
    %1483 = vmatpush1.msra.mxu0 0.0
    %1484 = vmatprep.mubr.f32.mxu0 0.0
    %1485 = vmatmul.mubr.f32.gmra.mrb[0].mxu0 %v1418
    %v1486 = vpop.f32.mrb[0].mxu0
    %v1487 = vadd.f32 0.0, %v1486
    %v1488 = vpop.f32.mrb[0].mxu0
    %1489 = vdwg.mxu0
    %v1491 = vsel %vm1044, %v1402, 0
    %1493 = vmatprep.subr.mxu0 0.0
    %1494 = vmatpush1.msra.mxu0 %v901
    %1495 = vmatprep.subr.mxu0 0.0
    %1496 = vmatpush1.msra.mxu0 0.0
    %1497 = vmatprep.subr.mxu0 0.0
    %1498 = vmatpush1.msra.mxu0 0.0
    %1499 = vmatprep.subr.mxu0 0.0
    %1500 = vmatpush1.msra.mxu0 0.0
    %1501 = vmatprep.subr.mxu0 0.0
    %1502 = vmatpush1.msra.mxu0 0.0
    %1503 = vmatprep.subr.mxu0 0.0
    %1504 = vmatpush1.msra.mxu0 0.0
    %1505 = vmatprep.subr.mxu0 0.0
    %1506 = vmatpush1.msra.mxu0 0.0
    %1507 = vmatprep.subr.mxu0 0.0
    %1508 = vmatpush1.msra.mxu0 0.0
    %1509 = vmatprep.subr.mxu0 0.0
    %1510 = vmatpush1.msra.mxu0 0.0
    %1511 = vmatprep.subr.mxu0 0.0
    %1512 = vmatpush1.msra.mxu0 0.0
    %1513 = vmatprep.subr.mxu0 0.0
    %1514 = vmatpush1.msra.mxu0 0.0
    %1515 = vmatprep.subr.mxu0 0.0
    %1516 = vmatpush1.msra.mxu0 0.0
    %1517 = vmatprep.subr.mxu0 0.0
    %1518 = vmatpush1.msra.mxu0 0.0
    %1519 = vmatprep.subr.mxu0 0.0
    %1520 = vmatpush1.msra.mxu0 0.0
    %1521 = vmatprep.subr.mxu0 0.0
    %1522 = vmatpush1.msra.mxu0 0.0
    %1523 = vmatprep.subr.mxu0 0.0
    %1524 = vmatpush1.msra.mxu0 0.0
    %1525 = vmatprep.subr.mxu0 0.0
    %1526 = vmatpush1.msra.mxu0 0.0
    %1527 = vmatprep.subr.mxu0 0.0
    %1528 = vmatpush1.msra.mxu0 0.0
    %1529 = vmatprep.subr.mxu0 0.0
    %1530 = vmatpush1.msra.mxu0 0.0
    %1531 = vmatprep.subr.mxu0 0.0
    %1532 = vmatpush1.msra.mxu0 0.0
    %1533 = vmatprep.subr.mxu0 0.0
    %1534 = vmatpush1.msra.mxu0 0.0
    %1535 = vmatprep.subr.mxu0 0.0
    %1536 = vmatpush1.msra.mxu0 0.0
    %1537 = vmatprep.subr.mxu0 0.0
    %1538 = vmatpush1.msra.mxu0 0.0
    %1539 = vmatprep.subr.mxu0 0.0
    %1540 = vmatpush1.msra.mxu0 0.0
    %1541 = vmatprep.subr.mxu0 0.0
    %1542 = vmatpush1.msra.mxu0 0.0
    %1543 = vmatprep.subr.mxu0 0.0
    %1544 = vmatpush1.msra.mxu0 0.0
    %1545 = vmatprep.subr.mxu0 0.0
    %1546 = vmatpush1.msra.mxu0 0.0
    %1547 = vmatprep.subr.mxu0 0.0
    %1548 = vmatpush1.msra.mxu0 0.0
    %1549 = vmatprep.subr.mxu0 0.0
    %1550 = vmatpush1.msra.mxu0 0.0
    %1551 = vmatprep.subr.mxu0 0.0
    %1552 = vmatpush1.msra.mxu0 0.0
    %1553 = vmatprep.subr.mxu0 0.0
    %1554 = vmatpush1.msra.mxu0 0.0
    %1555 = vmatprep.subr.mxu0 0.0
    %1556 = vmatpush1.msra.mxu0 0.0
    %1557 = vmatprep.mubr.f32.mxu0 0.0
    %1558 = vmatmul.mubr.f32.gmra.mrb[0].mxu0 %v1491
    %v1559 = vpop.f32.mrb[0].mxu0
    %v1560 = vadd.f32 0.0, %v1559
    %v1561 = vpop.f32.mrb[0].mxu0
    %1562 = vdwg.mxu0
    %v1564 = vsel %vm1044, %v1404, 0
    %1566 = vmatprep.subr.mxu0 0.0
    %1567 = vmatpush1.msra.mxu0 %v971
    %1568 = vmatprep.subr.mxu0 0.0
    %1569 = vmatpush1.msra.mxu0 0.0
    %1570 = vmatprep.subr.mxu0 0.0
    %1571 = vmatpush1.msra.mxu0 0.0
    %1572 = vmatprep.subr.mxu0 0.0
    %1573 = vmatpush1.msra.mxu0 0.0
    %1574 = vmatprep.subr.mxu0 0.0
    %1575 = vmatpush1.msra.mxu0 0.0
    %1576 = vmatprep.subr.mxu0 0.0
    %1577 = vmatpush1.msra.mxu0 0.0
    %1578 = vmatprep.subr.mxu0 0.0
    %1579 = vmatpush1.msra.mxu0 0.0
    %1580 = vmatprep.subr.mxu0 0.0
    %1581 = vmatpush1.msra.mxu0 0.0
    %1582 = vmatprep.subr.mxu0 0.0
    %1583 = vmatpush1.msra.mxu0 0.0
    %1584 = vmatprep.subr.mxu0 0.0
    %1585 = vmatpush1.msra.mxu0 0.0
    %1586 = vmatprep.subr.mxu0 0.0
    %1587 = vmatpush1.msra.mxu0 0.0
    %1588 = vmatprep.subr.mxu0 0.0
    %1589 = vmatpush1.msra.mxu0 0.0
    %1590 = vmatprep.subr.mxu0 0.0
    %1591 = vmatpush1.msra.mxu0 0.0
    %1592 = vmatprep.subr.mxu0 0.0
    %1593 = vmatpush1.msra.mxu0 0.0
    %1594 = vmatprep.subr.mxu0 0.0
    %1595 = vmatpush1.msra.mxu0 0.0
    %1596 = vmatprep.subr.mxu0 0.0
    %1597 = vmatpush1.msra.mxu0 0.0
    %1598 = vmatprep.subr.mxu0 0.0
    %1599 = vmatpush1.msra.mxu0 0.0
    %1600 = vmatprep.subr.mxu0 0.0
    %1601 = vmatpush1.msra.mxu0 0.0
    %1602 = vmatprep.subr.mxu0 0.0
    %1603 = vmatpush1.msra.mxu0 0.0
    %1604 = vmatprep.subr.mxu0 0.0
    %1605 = vmatpush1.msra.mxu0 0.0
    %1606 = vmatprep.subr.mxu0 0.0
    %1607 = vmatpush1.msra.mxu0 0.0
    %1608 = vmatprep.subr.mxu0 0.0
    %1609 = vmatpush1.msra.mxu0 0.0
    %1610 = vmatprep.subr.mxu0 0.0
    %1611 = vmatpush1.msra.mxu0 0.0
    %1612 = vmatprep.subr.mxu0 0.0
    %1613 = vmatpush1.msra.mxu0 0.0
    %1614 = vmatprep.subr.mxu0 0.0
    %1615 = vmatpush1.msra.mxu0 0.0
    %1616 = vmatprep.subr.mxu0 0.0
    %1617 = vmatpush1.msra.mxu0 0.0
    %1618 = vmatprep.subr.mxu0 0.0
    %1619 = vmatpush1.msra.mxu0 0.0
    %1620 = vmatprep.subr.mxu0 0.0
    %1621 = vmatpush1.msra.mxu0 0.0
    %1622 = vmatprep.subr.mxu0 0.0
    %1623 = vmatpush1.msra.mxu0 0.0
    %1624 = vmatprep.subr.mxu0 0.0
    %1625 = vmatpush1.msra.mxu0 0.0
    %1626 = vmatprep.subr.mxu0 0.0
    %1627 = vmatpush1.msra.mxu0 0.0
    %1628 = vmatprep.subr.mxu0 0.0
    %1629 = vmatpush1.msra.mxu0 0.0
    %1630 = vmatprep.mubr.f32.mxu0 0.0
    %1631 = vmatmul.mubr.f32.gmra.mrb[0].mxu0 %v1564
    %v1632 = vpop.f32.mrb[0].mxu0
    %v1633 = vadd.f32 0.0, %v1632
    %v1634 = vpop.f32.mrb[0].mxu0
    %1635 = vdwg.mxu0
    %v1637 = vsel %vm1044, %v1406, 0
    %1639 = vmatprep.subr.mxu0 0.0
    %1640 = vmatpush1.msra.mxu0 %v1041
    %1641 = vmatprep.subr.mxu0 0.0
    %1642 = vmatpush1.msra.mxu0 0.0
    %1643 = vmatprep.subr.mxu0 0.0
    %1644 = vmatpush1.msra.mxu0 0.0
    %1645 = vmatprep.subr.mxu0 0.0
    %1646 = vmatpush1.msra.mxu0 0.0
    %1647 = vmatprep.subr.mxu0 0.0
    %1648 = vmatpush1.msra.mxu0 0.0
    %1649 = vmatprep.subr.mxu0 0.0
    %1650 = vmatpush1.msra.mxu0 0.0
    %1651 = vmatprep.subr.mxu0 0.0
    %1652 = vmatpush1.msra.mxu0 0.0
    %1653 = vmatprep.subr.mxu0 0.0
    %1654 = vmatpush1.msra.mxu0 0.0
    %1655 = vmatprep.subr.mxu0 0.0
    %1656 = vmatpush1.msra.mxu0 0.0
    %1657 = vmatprep.subr.mxu0 0.0
    %1658 = vmatpush1.msra.mxu0 0.0
    %1659 = vmatprep.subr.mxu0 0.0
    %1660 = vmatpush1.msra.mxu0 0.0
    %1661 = vmatprep.subr.mxu0 0.0
    %1662 = vmatpush1.msra.mxu0 0.0
    %1663 = vmatprep.subr.mxu0 0.0
    %1664 = vmatpush1.msra.mxu0 0.0
    %1665 = vmatprep.subr.mxu0 0.0
    %1666 = vmatpush1.msra.mxu0 0.0
    %1667 = vmatprep.subr.mxu0 0.0
    %1668 = vmatpush1.msra.mxu0 0.0
    %1669 = vmatprep.subr.mxu0 0.0
    %1670 = vmatpush1.msra.mxu0 0.0
    %1671 = vmatprep.subr.mxu0 0.0
    %1672 = vmatpush1.msra.mxu0 0.0
    %1673 = vmatprep.subr.mxu0 0.0
    %1674 = vmatpush1.msra.mxu0 0.0
    %1675 = vmatprep.subr.mxu0 0.0
    %1676 = vmatpush1.msra.mxu0 0.0
    %1677 = vmatprep.subr.mxu0 0.0
    %1678 = vmatpush1.msra.mxu0 0.0
    %1679 = vmatprep.subr.mxu0 0.0
    %1680 = vmatpush1.msra.mxu0 0.0
    %1681 = vmatprep.subr.mxu0 0.0
    %1682 = vmatpush1.msra.mxu0 0.0
    %1683 = vmatprep.subr.mxu0 0.0
    %1684 = vmatpush1.msra.mxu0 0.0
    %1685 = vmatprep.subr.mxu0 0.0
    %1686 = vmatpush1.msra.mxu0 0.0
    %1687 = vmatprep.subr.mxu0 0.0
    %1688 = vmatpush1.msra.mxu0 0.0
    %1689 = vmatprep.subr.mxu0 0.0
    %1690 = vmatpush1.msra.mxu0 0.0
    %1691 = vmatprep.subr.mxu0 0.0
    %1692 = vmatpush1.msra.mxu0 0.0
    %1693 = vmatprep.subr.mxu0 0.0
    %1694 = vmatpush1.msra.mxu0 0.0
    %1695 = vmatprep.subr.mxu0 0.0
    %1696 = vmatpush1.msra.mxu0 0.0
    %1697 = vmatprep.subr.mxu0 0.0
    %1698 = vmatpush1.msra.mxu0 0.0
    %1699 = vmatprep.subr.mxu0 0.0
    %1700 = vmatpush1.msra.mxu0 0.0
    %1701 = vmatprep.subr.mxu0 0.0
    %1702 = vmatpush1.msra.mxu0 0.0
    %1703 = vmatprep.mubr.f32.mxu0 0.0
    %1704 = vmatmul.mubr.f32.gmra.mrb[0].mxu0 %v1637
    %v1705 = vpop.f32.mrb[0].mxu0
    %v1706 = vadd.f32 0.0, %v1705
    %v1707 = vpop.f32.mrb[0].mxu0
    %1708 = vdwg.mxu0
    %v1710 = vsel %vm1044, %v1487, 0
    %1712 = vmatprep.subr.mxu0 0.0
    %1713 = vmatpush1.msra.mxu0 %v106
    %1714 = vmatprep.subr.mxu0 0.0
    %1715 = vmatpush1.msra.mxu0 0.0
    %1716 = vmatprep.subr.mxu0 0.0
    %1717 = vmatpush1.msra.mxu0 0.0
    %1718 = vmatprep.subr.mxu0 0.0
    %1719 = vmatpush1.msra.mxu0 0.0
    %1720 = vmatprep.subr.mxu0 0.0
    %1721 = vmatpush1.msra.mxu0 0.0
    %1722 = vmatprep.subr.mxu0 0.0
    %1723 = vmatpush1.msra.mxu0 0.0
    %1724 = vmatprep.subr.mxu0 0.0
    %1725 = vmatpush1.msra.mxu0 0.0
    %1726 = vmatprep.subr.mxu0 0.0
    %1727 = vmatpush1.msra.mxu0 0.0
    %1728 = vmatprep.subr.mxu0 0.0
    %1729 = vmatpush1.msra.mxu0 0.0
    %1730 = vmatprep.subr.mxu0 0.0
    %1731 = vmatpush1.msra.mxu0 0.0
    %1732 = vmatprep.subr.mxu0 0.0
    %1733 = vmatpush1.msra.mxu0 0.0
    %1734 = vmatprep.subr.mxu0 0.0
    %1735 = vmatpush1.msra.mxu0 0.0
    %1736 = vmatprep.subr.mxu0 0.0
    %1737 = vmatpush1.msra.mxu0 0.0
    %1738 = vmatprep.subr.mxu0 0.0
    %1739 = vmatpush1.msra.mxu0 0.0
    %1740 = vmatprep.subr.mxu0 0.0
    %1741 = vmatpush1.msra.mxu0 0.0
    %1742 = vmatprep.subr.mxu0 0.0
    %1743 = vmatpush1.msra.mxu0 0.0
    %1744 = vmatprep.subr.mxu0 0.0
    %1745 = vmatpush1.msra.mxu0 0.0
    %1746 = vmatprep.subr.mxu0 0.0
    %1747 = vmatpush1.msra.mxu0 0.0
    %1748 = vmatprep.subr.mxu0 0.0
    %1749 = vmatpush1.msra.mxu0 0.0
    %1750 = vmatprep.subr.mxu0 0.0
    %1751 = vmatpush1.msra.mxu0 0.0
    %1752 = vmatprep.subr.mxu0 0.0
    %1753 = vmatpush1.msra.mxu0 0.0
    %1754 = vmatprep.subr.mxu0 0.0
    %1755 = vmatpush1.msra.mxu0 0.0
    %1756 = vmatprep.subr.mxu0 0.0
    %1757 = vmatpush1.msra.mxu0 0.0
    %1758 = vmatprep.subr.mxu0 0.0
    %1759 = vmatpush1.msra.mxu0 0.0
    %1760 = vmatprep.subr.mxu0 0.0
    %1761 = vmatpush1.msra.mxu0 0.0
    %1762 = vmatprep.subr.mxu0 0.0
    %1763 = vmatpush1.msra.mxu0 0.0
    %1764 = vmatprep.subr.mxu0 0.0
    %1765 = vmatpush1.msra.mxu0 0.0
    %1766 = vmatprep.subr.mxu0 0.0
    %1767 = vmatpush1.msra.mxu0 0.0
    %1768 = vmatprep.subr.mxu0 0.0
    %1769 = vmatpush1.msra.mxu0 0.0
    %1770 = vmatprep.subr.mxu0 0.0
    %1771 = vmatpush1.msra.mxu0 0.0
    %1772 = vmatprep.subr.mxu0 0.0
    %1773 = vmatpush1.msra.mxu0 0.0
    %1774 = vmatprep.subr.mxu0 0.0
    %1775 = vmatpush1.msra.mxu0 0.0
    %1776 = vmatprep.mubr.f32.mxu0 0.0
    %1777 = vmatmul.mubr.f32.gmra.mrb[0].mxu0 %v1710
    %v1778 = vpop.f32.mrb[0].mxu0
    %v1779 = vadd.f32 0.0, %v1778
    %v1780 = vpop.f32.mrb[0].mxu0
    %1781 = vdwg.mxu0
    %v1783 = vsel %vm1044, %v1560, 0
    %1785 = vmatprep.subr.mxu0 0.0
    %1786 = vmatpush1.msra.mxu0 %v107
    %1787 = vmatprep.subr.mxu0 0.0
    %1788 = vmatpush1.msra.mxu0 0.0
    %1789 = vmatprep.subr.mxu0 0.0
    %1790 = vmatpush1.msra.mxu0 0.0
    %1791 = vmatprep.subr.mxu0 0.0
    %1792 = vmatpush1.msra.mxu0 0.0
    %1793 = vmatprep.subr.mxu0 0.0
    %1794 = vmatpush1.msra.mxu0 0.0
    %1795 = vmatprep.subr.mxu0 0.0
    %1796 = vmatpush1.msra.mxu0 0.0
    %1797 = vmatprep.subr.mxu0 0.0
    %1798 = vmatpush1.msra.mxu0 0.0
    %1799 = vmatprep.subr.mxu0 0.0
    %1800 = vmatpush1.msra.mxu0 0.0
    %1801 = vmatprep.subr.mxu0 0.0
    %1802 = vmatpush1.msra.mxu0 0.0
    %1803 = vmatprep.subr.mxu0 0.0
    %1804 = vmatpush1.msra.mxu0 0.0
    %1805 = vmatprep.subr.mxu0 0.0
    %1806 = vmatpush1.msra.mxu0 0.0
    %1807 = vmatprep.subr.mxu0 0.0
    %1808 = vmatpush1.msra.mxu0 0.0
    %1809 = vmatprep.subr.mxu0 0.0
    %1810 = vmatpush1.msra.mxu0 0.0
    %1811 = vmatprep.subr.mxu0 0.0
    %1812 = vmatpush1.msra.mxu0 0.0
    %1813 = vmatprep.subr.mxu0 0.0
    %1814 = vmatpush1.msra.mxu0 0.0
    %1815 = vmatprep.subr.mxu0 0.0
    %1816 = vmatpush1.msra.mxu0 0.0
    %1817 = vmatprep.subr.mxu0 0.0
    %1818 = vmatpush1.msra.mxu0 0.0
    %1819 = vmatprep.subr.mxu0 0.0
    %1820 = vmatpush1.msra.mxu0 0.0
    %1821 = vmatprep.subr.mxu0 0.0
    %1822 = vmatpush1.msra.mxu0 0.0
    %1823 = vmatprep.subr.mxu0 0.0
    %1824 = vmatpush1.msra.mxu0 0.0
    %1825 = vmatprep.subr.mxu0 0.0
    %1826 = vmatpush1.msra.mxu0 0.0
    %1827 = vmatprep.subr.mxu0 0.0
    %1828 = vmatpush1.msra.mxu0 0.0
    %1829 = vmatprep.subr.mxu0 0.0
    %1830 = vmatpush1.msra.mxu0 0.0
    %1831 = vmatprep.subr.mxu0 0.0
    %1832 = vmatpush1.msra.mxu0 0.0
    %1833 = vmatprep.subr.mxu0 0.0
    %1834 = vmatpush1.msra.mxu0 0.0
    %1835 = vmatprep.subr.mxu0 0.0
    %1836 = vmatpush1.msra.mxu0 0.0
    %1837 = vmatprep.subr.mxu0 0.0
    %1838 = vmatpush1.msra.mxu0 0.0
    %1839 = vmatprep.subr.mxu0 0.0
    %1840 = vmatpush1.msra.mxu0 0.0
    %1841 = vmatprep.subr.mxu0 0.0
    %1842 = vmatpush1.msra.mxu0 0.0
    %1843 = vmatprep.subr.mxu0 0.0
    %1844 = vmatpush1.msra.mxu0 0.0
    %1845 = vmatprep.subr.mxu0 0.0
    %1846 = vmatpush1.msra.mxu0 0.0
    %1847 = vmatprep.subr.mxu0 0.0
    %1848 = vmatpush1.msra.mxu0 0.0
    %1849 = vmatprep.mubr.f32.mxu0 0.0
    %1850 = vmatmul.mubr.f32.gmra.mrb[0].mxu0 %v1783
    %v1851 = vpop.f32.mrb[0].mxu0
    %v1852 = vadd.f32 0.0, %v1851
    %v1853 = vpop.f32.mrb[0].mxu0
    %1854 = vdwg.mxu0
    %v1856 = vsel %vm1044, %v1633, 0
    %1858 = vmatprep.subr.mxu0 0.0
    %1859 = vmatpush1.msra.mxu0 %v108
    %1860 = vmatprep.subr.mxu0 0.0
    %1861 = vmatpush1.msra.mxu0 0.0
    %1862 = vmatprep.subr.mxu0 0.0
    %1863 = vmatpush1.msra.mxu0 0.0
    %1864 = vmatprep.subr.mxu0 0.0
    %1865 = vmatpush1.msra.mxu0 0.0
    %1866 = vmatprep.subr.mxu0 0.0
    %1867 = vmatpush1.msra.mxu0 0.0
    %1868 = vmatprep.subr.mxu0 0.0
    %1869 = vmatpush1.msra.mxu0 0.0
    %1870 = vmatprep.subr.mxu0 0.0
    %1871 = vmatpush1.msra.mxu0 0.0
    %1872 = vmatprep.subr.mxu0 0.0
    %1873 = vmatpush1.msra.mxu0 0.0
    %1874 = vmatprep.subr.mxu0 0.0
    %1875 = vmatpush1.msra.mxu0 0.0
    %1876 = vmatprep.subr.mxu0 0.0
    %1877 = vmatpush1.msra.mxu0 0.0
    %1878 = vmatprep.subr.mxu0 0.0
    %1879 = vmatpush1.msra.mxu0 0.0
    %1880 = vmatprep.subr.mxu0 0.0
    %1881 = vmatpush1.msra.mxu0 0.0
    %1882 = vmatprep.subr.mxu0 0.0
    %1883 = vmatpush1.msra.mxu0 0.0
    %1884 = vmatprep.subr.mxu0 0.0
    %1885 = vmatpush1.msra.mxu0 0.0
    %1886 = vmatprep.subr.mxu0 0.0
    %1887 = vmatpush1.msra.mxu0 0.0
    %1888 = vmatprep.subr.mxu0 0.0
    %1889 = vmatpush1.msra.mxu0 0.0
    %1890 = vmatprep.subr.mxu0 0.0
    %1891 = vmatpush1.msra.mxu0 0.0
    %1892 = vmatprep.subr.mxu0 0.0
    %1893 = vmatpush1.msra.mxu0 0.0
    %1894 = vmatprep.subr.mxu0 0.0
    %1895 = vmatpush1.msra.mxu0 0.0
    %1896 = vmatprep.subr.mxu0 0.0
    %1897 = vmatpush1.msra.mxu0 0.0
    %1898 = vmatprep.subr.mxu0 0.0
    %1899 = vmatpush1.msra.mxu0 0.0
    %1900 = vmatprep.subr.mxu0 0.0
    %1901 = vmatpush1.msra.mxu0 0.0
    %1902 = vmatprep.subr.mxu0 0.0
    %1903 = vmatpush1.msra.mxu0 0.0
    %1904 = vmatprep.subr.mxu0 0.0
    %1905 = vmatpush1.msra.mxu0 0.0
    %1906 = vmatprep.subr.mxu0 0.0
    %1907 = vmatpush1.msra.mxu0 0.0
    %1908 = vmatprep.subr.mxu0 0.0
    %1909 = vmatpush1.msra.mxu0 0.0
    %1910 = vmatprep.subr.mxu0 0.0
    %1911 = vmatpush1.msra.mxu0 0.0
    %1912 = vmatprep.subr.mxu0 0.0
    %1913 = vmatpush1.msra.mxu0 0.0
    %1914 = vmatprep.subr.mxu0 0.0
    %1915 = vmatpush1.msra.mxu0 0.0
    %1916 = vmatprep.subr.mxu0 0.0
    %1917 = vmatpush1.msra.mxu0 0.0
    %1918 = vmatprep.subr.mxu0 0.0
    %1919 = vmatpush1.msra.mxu0 0.0
    %1920 = vmatprep.subr.mxu0 0.0
    %1921 = vmatpush1.msra.mxu0 0.0
    %1922 = vmatprep.mubr.f32.mxu0 0.0
    %1923 = vmatmul.mubr.f32.gmra.mrb[0].mxu0 %v1856
    %v1924 = vpop.f32.mrb[0].mxu0
    %v1925 = vadd.f32 0.0, %v1924
    %v1926 = vpop.f32.mrb[0].mxu0
    %1927 = vdwg.mxu0
    %v1929 = vsel %vm1044, %v1706, 0
    %1931 = vmatprep.subr.mxu0 0.0
    %1932 = vmatpush1.msra.mxu0 %v109
    %1933 = vmatprep.subr.mxu0 0.0
    %1934 = vmatpush1.msra.mxu0 0.0
    %1935 = vmatprep.subr.mxu0 0.0
    %1936 = vmatpush1.msra.mxu0 0.0
    %1937 = vmatprep.subr.mxu0 0.0
    %1938 = vmatpush1.msra.mxu0 0.0
    %1939 = vmatprep.subr.mxu0 0.0
    %1940 = vmatpush1.msra.mxu0 0.0
    %1941 = vmatprep.subr.mxu0 0.0
    %1942 = vmatpush1.msra.mxu0 0.0
    %1943 = vmatprep.subr.mxu0 0.0
    %1944 = vmatpush1.msra.mxu0 0.0
    %1945 = vmatprep.subr.mxu0 0.0
    %1946 = vmatpush1.msra.mxu0 0.0
    %1947 = vmatprep.subr.mxu0 0.0
    %1948 = vmatpush1.msra.mxu0 0.0
    %1949 = vmatprep.subr.mxu0 0.0
    %1950 = vmatpush1.msra.mxu0 0.0
    %1951 = vmatprep.subr.mxu0 0.0
    %1952 = vmatpush1.msra.mxu0 0.0
    %1953 = vmatprep.subr.mxu0 0.0
    %1954 = vmatpush1.msra.mxu0 0.0
    %1955 = vmatprep.subr.mxu0 0.0
    %1956 = vmatpush1.msra.mxu0 0.0
    %1957 = vmatprep.subr.mxu0 0.0
    %1958 = vmatpush1.msra.mxu0 0.0
    %1959 = vmatprep.subr.mxu0 0.0
    %1960 = vmatpush1.msra.mxu0 0.0
    %1961 = vmatprep.subr.mxu0 0.0
    %1962 = vmatpush1.msra.mxu0 0.0
    %1963 = vmatprep.subr.mxu0 0.0
    %1964 = vmatpush1.msra.mxu0 0.0
    %1965 = vmatprep.subr.mxu0 0.0
    %1966 = vmatpush1.msra.mxu0 0.0
    %1967 = vmatprep.subr.mxu0 0.0
    %1968 = vmatpush1.msra.mxu0 0.0
    %1969 = vmatprep.subr.mxu0 0.0
    %1970 = vmatpush1.msra.mxu0 0.0
    %1971 = vmatprep.subr.mxu0 0.0
    %1972 = vmatpush1.msra.mxu0 0.0
    %1973 = vmatprep.subr.mxu0 0.0
    %1974 = vmatpush1.msra.mxu0 0.0
    %1975 = vmatprep.subr.mxu0 0.0
    %1976 = vmatpush1.msra.mxu0 0.0
    %1977 = vmatprep.subr.mxu0 0.0
    %1978 = vmatpush1.msra.mxu0 0.0
    %1979 = vmatprep.subr.mxu0 0.0
    %1980 = vmatpush1.msra.mxu0 0.0
    %1981 = vmatprep.subr.mxu0 0.0
    %1982 = vmatpush1.msra.mxu0 0.0
    %1983 = vmatprep.subr.mxu0 0.0
    %1984 = vmatpush1.msra.mxu0 0.0
    %1985 = vmatprep.subr.mxu0 0.0
    %1986 = vmatpush1.msra.mxu0 0.0
    %1987 = vmatprep.subr.mxu0 0.0
    %1988 = vmatpush1.msra.mxu0 0.0
    %1989 = vmatprep.subr.mxu0 0.0
    %1990 = vmatpush1.msra.mxu0 0.0
    %1991 = vmatprep.subr.mxu0 0.0
    %1992 = vmatpush1.msra.mxu0 0.0
    %1993 = vmatprep.subr.mxu0 0.0
    %1994 = vmatpush1.msra.mxu0 0.0
    %1995 = vmatprep.mubr.f32.mxu0 0.0
    %1996 = vmatmul.mubr.f32.gmra.mrb[0].mxu0 %v1929
    %v1997 = vpop.f32.mrb[0].mxu0
    %v1998 = vadd.f32 0.0, %v1997
    %v1999 = vpop.f32.mrb[0].mxu0
    %2000 = vdwg.mxu0
    %v2001 = vsel %vm149, %v1779, 0.0
    %v2002 = vsel %vm149, %v1852, 0.0
    %v2003 = vadd.f32 %v2001, %v2002
    %v2004 = vsel %vm149, %v1925, 0.0
    %v2005 = vadd.f32 %v2003, %v2004
    %v2006 = vsel %vm149, %v1998, 0.0
    %v2007 = vadd.f32 %v2005, %v2006
    %v2008 = vlaneseq
    %v2009 = vshrl.u32 %v2008, 7
    %v2010 = vsub.s32 0, %v2009
    %v2011 = vrot.slane %v110, %v2010
    %v2012 = vadd.f32 %v2007, %v2011
    %v2013 = vadd.f32 %v35, %v2012
    %v2014 = vsel %vm149, %v2013, 0.0
    %2015 = vadd.xlane.f32.xlu0 %v2014
    %v2016 = vpop.xlane.xlu0 %2015
    %v2017 = vrcp.pop 32.0
    %v2018 = vmul.f32 %v2016, %v2017
    %v2019 = vsub.f32 %v2013, %v2018
    %v2020 = vmul.f32 %v2019, %v2019
    %v2021 = vsel %vm149, %v2020, 0.0
    %2022 = vadd.xlane.f32.xlu0 %v2021
    %v2023 = vpop.xlane.xlu0 %2022
    %v2024 = vmul.f32 %v2023, %v2017
    %v2025 = vadd.f32 %v2024, 1e-05
    %v2026 = vrsqrt.pop %v2025
    %v2027 = vmul.f32 %v2019, %v2026
    %v2028 = vlaneseq
    %v2029 = vshrl.u32 %v2028, 7
    %v2030 = vsub.s32 1, %v2029
    %v2031 = vrot.slane %v110, %v2030
    %v2032 = vmul.f32 %v2027, %v2031
    %v2033 = vlaneseq
    %v2034 = vshrl.u32 %v2033, 7
    %v2035 = vsub.s32 2, %v2034
    %v2036 = vrot.slane %v110, %v2035
    %v2037 = vadd.f32 %v2032, %v2036
    %v2038 = vlaneseq
    %v2039 = vshrl.u32 %v2038, 7
    %v2040 = vsub.s32 0, %v2039
    %v2041 = vrot.slane %v115, %v2040
    %v2043 = vsel %vm149, %v2037, 0
    %2045 = vmatprep.subr.mxu0 0.0
    %2046 = vmatpush1.msra.mxu0 %v111
    %2047 = vmatprep.subr.mxu0 0.0
    %2048 = vmatpush1.msra.mxu0 %v112
    %2049 = vmatprep.subr.mxu0 0.0
    %2050 = vmatpush1.msra.mxu0 %v113
    %2051 = vmatprep.subr.mxu0 0.0
    %2052 = vmatpush1.msra.mxu0 %v114
    %2053 = vmatprep.subr.mxu0 0.0
    %2054 = vmatpush1.msra.mxu0 0.0
    %2055 = vmatprep.subr.mxu0 0.0
    %2056 = vmatpush1.msra.mxu0 0.0
    %2057 = vmatprep.subr.mxu0 0.0
    %2058 = vmatpush1.msra.mxu0 0.0
    %2059 = vmatprep.subr.mxu0 0.0
    %2060 = vmatpush1.msra.mxu0 0.0
    %2061 = vmatprep.subr.mxu0 0.0
    %2062 = vmatpush1.msra.mxu0 0.0
    %2063 = vmatprep.subr.mxu0 0.0
    %2064 = vmatpush1.msra.mxu0 0.0
    %2065 = vmatprep.subr.mxu0 0.0
    %2066 = vmatpush1.msra.mxu0 0.0
    %2067 = vmatprep.subr.mxu0 0.0
    %2068 = vmatpush1.msra.mxu0 0.0
    %2069 = vmatprep.subr.mxu0 0.0
    %2070 = vmatpush1.msra.mxu0 0.0
    %2071 = vmatprep.subr.mxu0 0.0
    %2072 = vmatpush1.msra.mxu0 0.0
    %2073 = vmatprep.subr.mxu0 0.0
    %2074 = vmatpush1.msra.mxu0 0.0
    %2075 = vmatprep.subr.mxu0 0.0
    %2076 = vmatpush1.msra.mxu0 0.0
    %2077 = vmatprep.subr.mxu0 0.0
    %2078 = vmatpush1.msra.mxu0 0.0
    %2079 = vmatprep.subr.mxu0 0.0
    %2080 = vmatpush1.msra.mxu0 0.0
    %2081 = vmatprep.subr.mxu0 0.0
    %2082 = vmatpush1.msra.mxu0 0.0
    %2083 = vmatprep.subr.mxu0 0.0
    %2084 = vmatpush1.msra.mxu0 0.0
    %2085 = vmatprep.subr.mxu0 0.0
    %2086 = vmatpush1.msra.mxu0 0.0
    %2087 = vmatprep.subr.mxu0 0.0
    %2088 = vmatpush1.msra.mxu0 0.0
    %2089 = vmatprep.subr.mxu0 0.0
    %2090 = vmatpush1.msra.mxu0 0.0
    %2091 = vmatprep.subr.mxu0 0.0
    %2092 = vmatpush1.msra.mxu0 0.0
    %2093 = vmatprep.subr.mxu0 0.0
    %2094 = vmatpush1.msra.mxu0 0.0
    %2095 = vmatprep.subr.mxu0 0.0
    %2096 = vmatpush1.msra.mxu0 0.0
    %2097 = vmatprep.subr.mxu0 0.0
    %2098 = vmatpush1.msra.mxu0 0.0
    %2099 = vmatprep.subr.mxu0 0.0
    %2100 = vmatpush1.msra.mxu0 0.0
    %2101 = vmatprep.subr.mxu0 0.0
    %2102 = vmatpush1.msra.mxu0 0.0
    %2103 = vmatprep.subr.mxu0 0.0
    %2104 = vmatpush1.msra.mxu0 0.0
    %2105 = vmatprep.subr.mxu0 0.0
    %2106 = vmatpush1.msra.mxu0 0.0
    %2107 = vmatprep.subr.mxu0 0.0
    %2108 = vmatpush1.msra.mxu0 0.0
    %2109 = vmatprep.mubr.f32.mxu0 0.0
    %2110 = vmatmul.mubr.f32.gmra.mrb[0].mxu0 %v2043
    %v2111 = vpop.f32.mrb[0].mxu0
    %v2112 = vadd.f32 %v2041, %v2111
    %v2113 = vpop.f32.mrb[0].mxu0
    %2114 = vdwg.mxu0
    %v2115 = vmax.f32 %v2112, 0.0
    %v2116 = vlaneseq
    %v2117 = vshrl.u32 %v2116, 7
    %v2118 = vsub.s32 3, %v2117
    %v2119 = vrot.slane %v110, %v2118
    %vm2120 = vcmask 523264
    %v2122 = vsel %vm2120, %v2115, 0
    %2124 = vmatprep.subr.mxu0 0.0
    %2125 = vmatpush1.msra.mxu0 %v116
    %2126 = vmatprep.subr.mxu0 0.0
    %2127 = vmatpush1.msra.mxu0 %v117
    %2128 = vmatprep.subr.mxu0 0.0
    %2129 = vmatpush1.msra.mxu0 %v118
    %2130 = vmatprep.subr.mxu0 0.0
    %2131 = vmatpush1.msra.mxu0 %v119
    %2132 = vmatprep.subr.mxu0 0.0
    %2133 = vmatpush1.msra.mxu0 %v120
    %2134 = vmatprep.subr.mxu0 0.0
    %2135 = vmatpush1.msra.mxu0 %v121
    %2136 = vmatprep.subr.mxu0 0.0
    %2137 = vmatpush1.msra.mxu0 %v122
    %2138 = vmatprep.subr.mxu0 0.0
    %2139 = vmatpush1.msra.mxu0 %v123
    %2140 = vmatprep.subr.mxu0 0.0
    %2141 = vmatpush1.msra.mxu0 0.0
    %2142 = vmatprep.subr.mxu0 0.0
    %2143 = vmatpush1.msra.mxu0 0.0
    %2144 = vmatprep.subr.mxu0 0.0
    %2145 = vmatpush1.msra.mxu0 0.0
    %2146 = vmatprep.subr.mxu0 0.0
    %2147 = vmatpush1.msra.mxu0 0.0
    %2148 = vmatprep.subr.mxu0 0.0
    %2149 = vmatpush1.msra.mxu0 0.0
    %2150 = vmatprep.subr.mxu0 0.0
    %2151 = vmatpush1.msra.mxu0 0.0
    %2152 = vmatprep.subr.mxu0 0.0
    %2153 = vmatpush1.msra.mxu0 0.0
    %2154 = vmatprep.subr.mxu0 0.0
    %2155 = vmatpush1.msra.mxu0 0.0
    %2156 = vmatprep.subr.mxu0 0.0
    %2157 = vmatpush1.msra.mxu0 0.0
    %2158 = vmatprep.subr.mxu0 0.0
    %2159 = vmatpush1.msra.mxu0 0.0
    %2160 = vmatprep.subr.mxu0 0.0
    %2161 = vmatpush1.msra.mxu0 0.0
    %2162 = vmatprep.subr.mxu0 0.0
    %2163 = vmatpush1.msra.mxu0 0.0
    %2164 = vmatprep.subr.mxu0 0.0
    %2165 = vmatpush1.msra.mxu0 0.0
    %2166 = vmatprep.subr.mxu0 0.0
    %2167 = vmatpush1.msra.mxu0 0.0
    %2168 = vmatprep.subr.mxu0 0.0
    %2169 = vmatpush1.msra.mxu0 0.0
    %2170 = vmatprep.subr.mxu0 0.0
    %2171 = vmatpush1.msra.mxu0 0.0
    %2172 = vmatprep.subr.mxu0 0.0
    %2173 = vmatpush1.msra.mxu0 0.0
    %2174 = vmatprep.subr.mxu0 0.0
    %2175 = vmatpush1.msra.mxu0 0.0
    %2176 = vmatprep.subr.mxu0 0.0
    %2177 = vmatpush1.msra.mxu0 0.0
    %2178 = vmatprep.subr.mxu0 0.0
    %2179 = vmatpush1.msra.mxu0 0.0
    %2180 = vmatprep.subr.mxu0 0.0
    %2181 = vmatpush1.msra.mxu0 0.0
    %2182 = vmatprep.subr.mxu0 0.0
    %2183 = vmatpush1.msra.mxu0 0.0
    %2184 = vmatprep.subr.mxu0 0.0
    %2185 = vmatpush1.msra.mxu0 0.0
    %2186 = vmatprep.subr.mxu0 0.0
    %2187 = vmatpush1.msra.mxu0 0.0
    %2188 = vmatprep.mubr.f32.mxu0 0.0
    %2189 = vmatmul.mubr.f32.gmra.mrb[0].mxu0 %v2122
    %v2190 = vpop.f32.mrb[0].mxu0
    %v2191 = vadd.f32 %v2119, %v2190
    %v2192 = vpop.f32.mrb[0].mxu0
    %2193 = vdwg.mxu0
    %v2194 = vadd.f32 %v2037, %v2191
    %v2195 = vsel %vm149, %v2194, 0.0
    %2196 = vadd.xlane.f32.xlu0 %v2195
    %v2197 = vpop.xlane.xlu0 %2196
    %v2198 = vmul.f32 %v2197, %v2017
    %v2199 = vsub.f32 %v2194, %v2198
    %v2200 = vmul.f32 %v2199, %v2199
    %v2201 = vsel %vm149, %v2200, 0.0
    %2202 = vadd.xlane.f32.xlu0 %v2201
    %v2203 = vpop.xlane.xlu0 %2202
    %v2204 = vmul.f32 %v2203, %v2017
    %v2205 = vadd.f32 %v2204, 1e-05
    %v2206 = vrsqrt.pop %v2205
    %v2207 = vmul.f32 %v2199, %v2206
    %v2208 = vlaneseq
    %v2209 = vshrl.u32 %v2208, 7
    %v2210 = vsub.s32 4, %v2209
    %v2211 = vrot.slane %v110, %v2210
    %v2212 = vmul.f32 %v2207, %v2211
    %v2213 = vlaneseq
    %v2214 = vshrl.u32 %v2213, 7
    %v2215 = vsub.s32 5, %v2214
    %v2216 = vrot.slane %v110, %v2215
    %v2217 = vadd.f32 %v2212, %v2216
    %v2218 = vadd.f32 %v37, %v40
    %v2220 = vsel %vm149, %v2218, 0
    %2222 = vmatprep.subr.mxu0 0.0
    %2223 = vmatpush1.msra.mxu0 %v46
    %2224 = vmatprep.subr.mxu0 0.0
    %2225 = vmatpush1.msra.mxu0 %v47
    %2226 = vmatprep.subr.mxu0 0.0
    %2227 = vmatpush1.msra.mxu0 %v48
    %2228 = vmatprep.subr.mxu0 0.0
    %2229 = vmatpush1.msra.mxu0 %v49
    %2230 = vmatprep.subr.mxu0 0.0
    %2231 = vmatpush1.msra.mxu0 0.0
    %2232 = vmatprep.subr.mxu0 0.0
    %2233 = vmatpush1.msra.mxu0 0.0
    %2234 = vmatprep.subr.mxu0 0.0
    %2235 = vmatpush1.msra.mxu0 0.0
    %2236 = vmatprep.subr.mxu0 0.0
    %2237 = vmatpush1.msra.mxu0 0.0
    %2238 = vmatprep.subr.mxu0 0.0
    %2239 = vmatpush1.msra.mxu0 0.0
    %2240 = vmatprep.subr.mxu0 0.0
    %2241 = vmatpush1.msra.mxu0 0.0
    %2242 = vmatprep.subr.mxu0 0.0
    %2243 = vmatpush1.msra.mxu0 0.0
    %2244 = vmatprep.subr.mxu0 0.0
    %2245 = vmatpush1.msra.mxu0 0.0
    %2246 = vmatprep.subr.mxu0 0.0
    %2247 = vmatpush1.msra.mxu0 0.0
    %2248 = vmatprep.subr.mxu0 0.0
    %2249 = vmatpush1.msra.mxu0 0.0
    %2250 = vmatprep.subr.mxu0 0.0
    %2251 = vmatpush1.msra.mxu0 0.0
    %2252 = vmatprep.subr.mxu0 0.0
    %2253 = vmatpush1.msra.mxu0 0.0
    %2254 = vmatprep.subr.mxu0 0.0
    %2255 = vmatpush1.msra.mxu0 0.0
    %2256 = vmatprep.subr.mxu0 0.0
    %2257 = vmatpush1.msra.mxu0 0.0
    %2258 = vmatprep.subr.mxu0 0.0
    %2259 = vmatpush1.msra.mxu0 0.0
    %2260 = vmatprep.subr.mxu0 0.0
    %2261 = vmatpush1.msra.mxu0 0.0
    %2262 = vmatprep.subr.mxu0 0.0
    %2263 = vmatpush1.msra.mxu0 0.0
    %2264 = vmatprep.subr.mxu0 0.0
    %2265 = vmatpush1.msra.mxu0 0.0
    %2266 = vmatprep.subr.mxu0 0.0
    %2267 = vmatpush1.msra.mxu0 0.0
    %2268 = vmatprep.subr.mxu0 0.0
    %2269 = vmatpush1.msra.mxu0 0.0
    %2270 = vmatprep.subr.mxu0 0.0
    %2271 = vmatpush1.msra.mxu0 0.0
    %2272 = vmatprep.subr.mxu0 0.0
    %2273 = vmatpush1.msra.mxu0 0.0
    %2274 = vmatprep.subr.mxu0 0.0
    %2275 = vmatpush1.msra.mxu0 0.0
    %2276 = vmatprep.subr.mxu0 0.0
    %2277 = vmatpush1.msra.mxu0 0.0
    %2278 = vmatprep.subr.mxu0 0.0
    %2279 = vmatpush1.msra.mxu0 0.0
    %2280 = vmatprep.subr.mxu0 0.0
    %2281 = vmatpush1.msra.mxu0 0.0
    %2282 = vmatprep.subr.mxu0 0.0
    %2283 = vmatpush1.msra.mxu0 0.0
    %2284 = vmatprep.subr.mxu0 0.0
    %2285 = vmatpush1.msra.mxu0 0.0
    %2286 = vmatprep.mubr.f32.mxu0 0.0
    %2287 = vmatmul.mubr.f32.gmra.mrb[0].mxu0 %v2220
    %v2288 = vpop.f32.mrb[0].mxu0
    %v2289 = vadd.f32 %v132, %v2288
    %v2290 = vpop.f32.mrb[0].mxu0
    %2291 = vdwg.mxu0
    %2292 = vmatprep.subr.mxu0 0.0
    %2293 = vmatpush1.msra.mxu0 %v50
    %2294 = vmatprep.subr.mxu0 0.0
    %2295 = vmatpush1.msra.mxu0 %v51
    %2296 = vmatprep.subr.mxu0 0.0
    %2297 = vmatpush1.msra.mxu0 %v52
    %2298 = vmatprep.subr.mxu0 0.0
    %2299 = vmatpush1.msra.mxu0 %v53
    %2300 = vmatprep.subr.mxu0 0.0
    %2301 = vmatpush1.msra.mxu0 0.0
    %2302 = vmatprep.subr.mxu0 0.0
    %2303 = vmatpush1.msra.mxu0 0.0
    %2304 = vmatprep.subr.mxu0 0.0
    %2305 = vmatpush1.msra.mxu0 0.0
    %2306 = vmatprep.subr.mxu0 0.0
    %2307 = vmatpush1.msra.mxu0 0.0
    %2308 = vmatprep.subr.mxu0 0.0
    %2309 = vmatpush1.msra.mxu0 0.0
    %2310 = vmatprep.subr.mxu0 0.0
    %2311 = vmatpush1.msra.mxu0 0.0
    %2312 = vmatprep.subr.mxu0 0.0
    %2313 = vmatpush1.msra.mxu0 0.0
    %2314 = vmatprep.subr.mxu0 0.0
    %2315 = vmatpush1.msra.mxu0 0.0
    %2316 = vmatprep.subr.mxu0 0.0
    %2317 = vmatpush1.msra.mxu0 0.0
    %2318 = vmatprep.subr.mxu0 0.0
    %2319 = vmatpush1.msra.mxu0 0.0
    %2320 = vmatprep.subr.mxu0 0.0
    %2321 = vmatpush1.msra.mxu0 0.0
    %2322 = vmatprep.subr.mxu0 0.0
    %2323 = vmatpush1.msra.mxu0 0.0
    %2324 = vmatprep.subr.mxu0 0.0
    %2325 = vmatpush1.msra.mxu0 0.0
    %2326 = vmatprep.subr.mxu0 0.0
    %2327 = vmatpush1.msra.mxu0 0.0
    %2328 = vmatprep.subr.mxu0 0.0
    %2329 = vmatpush1.msra.mxu0 0.0
    %2330 = vmatprep.subr.mxu0 0.0
    %2331 = vmatpush1.msra.mxu0 0.0
    %2332 = vmatprep.subr.mxu0 0.0
    %2333 = vmatpush1.msra.mxu0 0.0
    %2334 = vmatprep.subr.mxu0 0.0
    %2335 = vmatpush1.msra.mxu0 0.0
    %2336 = vmatprep.subr.mxu0 0.0
    %2337 = vmatpush1.msra.mxu0 0.0
    %2338 = vmatprep.subr.mxu0 0.0
    %2339 = vmatpush1.msra.mxu0 0.0
    %2340 = vmatprep.subr.mxu0 0.0
    %2341 = vmatpush1.msra.mxu0 0.0
    %2342 = vmatprep.subr.mxu0 0.0
    %2343 = vmatpush1.msra.mxu0 0.0
    %2344 = vmatprep.subr.mxu0 0.0
    %2345 = vmatpush1.msra.mxu0 0.0
    %2346 = vmatprep.subr.mxu0 0.0
    %2347 = vmatpush1.msra.mxu0 0.0
    %2348 = vmatprep.subr.mxu0 0.0
    %2349 = vmatpush1.msra.mxu0 0.0
    %2350 = vmatprep.subr.mxu0 0.0
    %2351 = vmatpush1.msra.mxu0 0.0
    %2352 = vmatprep.subr.mxu0 0.0
    %2353 = vmatpush1.msra.mxu0 0.0
    %2354 = vmatprep.subr.mxu0 0.0
    %2355 = vmatpush1.msra.mxu0 0.0
    %2356 = vmatprep.mubr.f32.mxu0 0.0
    %2357 = vmatmul.mubr.f32.gmra.mrb[0].mxu0 %v2220
    %v2358 = vpop.f32.mrb[0].mxu0
    %v2359 = vadd.f32 %v136, %v2358
    %v2360 = vpop.f32.mrb[0].mxu0
    %2361 = vdwg.mxu0
    %2362 = vmatprep.subr.mxu0 0.0
    %2363 = vmatpush1.msra.mxu0 %v54
    %2364 = vmatprep.subr.mxu0 0.0
    %2365 = vmatpush1.msra.mxu0 %v55
    %2366 = vmatprep.subr.mxu0 0.0
    %2367 = vmatpush1.msra.mxu0 %v56
    %2368 = vmatprep.subr.mxu0 0.0
    %2369 = vmatpush1.msra.mxu0 %v57
    %2370 = vmatprep.subr.mxu0 0.0
    %2371 = vmatpush1.msra.mxu0 0.0
    %2372 = vmatprep.subr.mxu0 0.0
    %2373 = vmatpush1.msra.mxu0 0.0
    %2374 = vmatprep.subr.mxu0 0.0
    %2375 = vmatpush1.msra.mxu0 0.0
    %2376 = vmatprep.subr.mxu0 0.0
    %2377 = vmatpush1.msra.mxu0 0.0
    %2378 = vmatprep.subr.mxu0 0.0
    %2379 = vmatpush1.msra.mxu0 0.0
    %2380 = vmatprep.subr.mxu0 0.0
    %2381 = vmatpush1.msra.mxu0 0.0
    %2382 = vmatprep.subr.mxu0 0.0
    %2383 = vmatpush1.msra.mxu0 0.0
    %2384 = vmatprep.subr.mxu0 0.0
    %2385 = vmatpush1.msra.mxu0 0.0
    %2386 = vmatprep.subr.mxu0 0.0
    %2387 = vmatpush1.msra.mxu0 0.0
    %2388 = vmatprep.subr.mxu0 0.0
    %2389 = vmatpush1.msra.mxu0 0.0
    %2390 = vmatprep.subr.mxu0 0.0
    %2391 = vmatpush1.msra.mxu0 0.0
    %2392 = vmatprep.subr.mxu0 0.0
    %2393 = vmatpush1.msra.mxu0 0.0
    %2394 = vmatprep.subr.mxu0 0.0
    %2395 = vmatpush1.msra.mxu0 0.0
    %2396 = vmatprep.subr.mxu0 0.0
    %2397 = vmatpush1.msra.mxu0 0.0
    %2398 = vmatprep.subr.mxu0 0.0
    %2399 = vmatpush1.msra.mxu0 0.0
    %2400 = vmatprep.subr.mxu0 0.0
    %2401 = vmatpush1.msra.mxu0 0.0
    %2402 = vmatprep.subr.mxu0 0.0
    %2403 = vmatpush1.msra.mxu0 0.0
    %2404 = vmatprep.subr.mxu0 0.0
    %2405 = vmatpush1.msra.mxu0 0.0
    %2406 = vmatprep.subr.mxu0 0.0
    %2407 = vmatpush1.msra.mxu0 0.0
    %2408 = vmatprep.subr.mxu0 0.0
    %2409 = vmatpush1.msra.mxu0 0.0
    %2410 = vmatprep.subr.mxu0 0.0
    %2411 = vmatpush1.msra.mxu0 0.0
    %2412 = vmatprep.subr.mxu0 0.0
    %2413 = vmatpush1.msra.mxu0 0.0
    %2414 = vmatprep.subr.mxu0 0.0
    %2415 = vmatpush1.msra.mxu0 0.0
    %2416 = vmatprep.subr.mxu0 0.0
    %2417 = vmatpush1.msra.mxu0 0.0
    %2418 = vmatprep.subr.mxu0 0.0
    %2419 = vmatpush1.msra.mxu0 0.0
    %2420 = vmatprep.subr.mxu0 0.0
    %2421 = vmatpush1.msra.mxu0 0.0
    %2422 = vmatprep.subr.mxu0 0.0
    %2423 = vmatpush1.msra.mxu0 0.0
    %2424 = vmatprep.subr.mxu0 0.0
    %2425 = vmatpush1.msra.mxu0 0.0
    %2426 = vmatprep.mubr.f32.mxu0 0.0
    %2427 = vmatmul.mubr.f32.gmra.mrb[0].mxu0 %v2220
    %v2428 = vpop.f32.mrb[0].mxu0
    %v2429 = vadd.f32 %v140, %v2428
    %v2430 = vpop.f32.mrb[0].mxu0
    %2431 = vdwg.mxu0
    %2432 = vmatprep.subr.mxu0 0.0
    %2433 = vmatpush1.msra.mxu0 %v58
    %2434 = vmatprep.subr.mxu0 0.0
    %2435 = vmatpush1.msra.mxu0 %v59
    %2436 = vmatprep.subr.mxu0 0.0
    %2437 = vmatpush1.msra.mxu0 %v60
    %2438 = vmatprep.subr.mxu0 0.0
    %2439 = vmatpush1.msra.mxu0 %v61
    %2440 = vmatprep.subr.mxu0 0.0
    %2441 = vmatpush1.msra.mxu0 0.0
    %2442 = vmatprep.subr.mxu0 0.0
    %2443 = vmatpush1.msra.mxu0 0.0
    %2444 = vmatprep.subr.mxu0 0.0
    %2445 = vmatpush1.msra.mxu0 0.0
    %2446 = vmatprep.subr.mxu0 0.0
    %2447 = vmatpush1.msra.mxu0 0.0
    %2448 = vmatprep.subr.mxu0 0.0
    %2449 = vmatpush1.msra.mxu0 0.0
    %2450 = vmatprep.subr.mxu0 0.0
    %2451 = vmatpush1.msra.mxu0 0.0
    %2452 = vmatprep.subr.mxu0 0.0
    %2453 = vmatpush1.msra.mxu0 0.0
    %2454 = vmatprep.subr.mxu0 0.0
    %2455 = vmatpush1.msra.mxu0 0.0
    %2456 = vmatprep.subr.mxu0 0.0
    %2457 = vmatpush1.msra.mxu0 0.0
    %2458 = vmatprep.subr.mxu0 0.0
    %2459 = vmatpush1.msra.mxu0 0.0
    %2460 = vmatprep.subr.mxu0 0.0
    %2461 = vmatpush1.msra.mxu0 0.0
    %2462 = vmatprep.subr.mxu0 0.0
    %2463 = vmatpush1.msra.mxu0 0.0
    %2464 = vmatprep.subr.mxu0 0.0
    %2465 = vmatpush1.msra.mxu0 0.0
    %2466 = vmatprep.subr.mxu0 0.0
    %2467 = vmatpush1.msra.mxu0 0.0
    %2468 = vmatprep.subr.mxu0 0.0
    %2469 = vmatpush1.msra.mxu0 0.0
    %2470 = vmatprep.subr.mxu0 0.0
    %2471 = vmatpush1.msra.mxu0 0.0
    %2472 = vmatprep.subr.mxu0 0.0
    %2473 = vmatpush1.msra.mxu0 0.0
    %2474 = vmatprep.subr.mxu0 0.0
    %2475 = vmatpush1.msra.mxu0 0.0
    %2476 = vmatprep.subr.mxu0 0.0
    %2477 = vmatpush1.msra.mxu0 0.0
    %2478 = vmatprep.subr.mxu0 0.0
    %2479 = vmatpush1.msra.mxu0 0.0
    %2480 = vmatprep.subr.mxu0 0.0
    %2481 = vmatpush1.msra.mxu0 0.0
    %2482 = vmatprep.subr.mxu0 0.0
    %2483 = vmatpush1.msra.mxu0 0.0
    %2484 = vmatprep.subr.mxu0 0.0
    %2485 = vmatpush1.msra.mxu0 0.0
    %2486 = vmatprep.subr.mxu0 0.0
    %2487 = vmatpush1.msra.mxu0 0.0
    %2488 = vmatprep.subr.mxu0 0.0
    %2489 = vmatpush1.msra.mxu0 0.0
    %2490 = vmatprep.subr.mxu0 0.0
    %2491 = vmatpush1.msra.mxu0 0.0
    %2492 = vmatprep.subr.mxu0 0.0
    %2493 = vmatpush1.msra.mxu0 0.0
    %2494 = vmatprep.subr.mxu0 0.0
    %2495 = vmatpush1.msra.mxu0 0.0
    %2496 = vmatprep.mubr.f32.mxu0 0.0
    %2497 = vmatmul.mubr.f32.gmra.mrb[0].mxu0 %v2220
    %v2498 = vpop.f32.mrb[0].mxu0
    %v2499 = vadd.f32 %v144, %v2498
    %v2500 = vpop.f32.mrb[0].mxu0
    %2501 = vdwg.mxu0
    %2502 = vmatprep.subr.mxu0 0.0
    %2503 = vmatpush1.msra.mxu0 %v62
    %2504 = vmatprep.subr.mxu0 0.0
    %2505 = vmatpush1.msra.mxu0 %v63
    %2506 = vmatprep.subr.mxu0 0.0
    %2507 = vmatpush1.msra.mxu0 %v64
    %2508 = vmatprep.subr.mxu0 0.0
    %2509 = vmatpush1.msra.mxu0 %v65
    %2510 = vmatprep.subr.mxu0 0.0
    %2511 = vmatpush1.msra.mxu0 0.0
    %2512 = vmatprep.subr.mxu0 0.0
    %2513 = vmatpush1.msra.mxu0 0.0
    %2514 = vmatprep.subr.mxu0 0.0
    %2515 = vmatpush1.msra.mxu0 0.0
    %2516 = vmatprep.subr.mxu0 0.0
    %2517 = vmatpush1.msra.mxu0 0.0
    %2518 = vmatprep.subr.mxu0 0.0
    %2519 = vmatpush1.msra.mxu0 0.0
    %2520 = vmatprep.subr.mxu0 0.0
    %2521 = vmatpush1.msra.mxu0 0.0
    %2522 = vmatprep.subr.mxu0 0.0
    %2523 = vmatpush1.msra.mxu0 0.0
    %2524 = vmatprep.subr.mxu0 0.0
    %2525 = vmatpush1.msra.mxu0 0.0
    %2526 = vmatprep.subr.mxu0 0.0
    %2527 = vmatpush1.msra.mxu0 0.0
    %2528 = vmatprep.subr.mxu0 0.0
    %2529 = vmatpush1.msra.mxu0 0.0
    %2530 = vmatprep.subr.mxu0 0.0
    %2531 = vmatpush1.msra.mxu0 0.0
    %2532 = vmatprep.subr.mxu0 0.0
    %2533 = vmatpush1.msra.mxu0 0.0
    %2534 = vmatprep.subr.mxu0 0.0
    %2535 = vmatpush1.msra.mxu0 0.0
    %2536 = vmatprep.subr.mxu0 0.0
    %2537 = vmatpush1.msra.mxu0 0.0
    %2538 = vmatprep.subr.mxu0 0.0
    %2539 = vmatpush1.msra.mxu0 0.0
    %2540 = vmatprep.subr.mxu0 0.0
    %2541 = vmatpush1.msra.mxu0 0.0
    %2542 = vmatprep.subr.mxu0 0.0
    %2543 = vmatpush1.msra.mxu0 0.0
    %2544 = vmatprep.subr.mxu0 0.0
    %2545 = vmatpush1.msra.mxu0 0.0
    %2546 = vmatprep.subr.mxu0 0.0
    %2547 = vmatpush1.msra.mxu0 0.0
    %2548 = vmatprep.subr.mxu0 0.0
    %2549 = vmatpush1.msra.mxu0 0.0
    %2550 = vmatprep.subr.mxu0 0.0
    %2551 = vmatpush1.msra.mxu0 0.0
    %2552 = vmatprep.subr.mxu0 0.0
    %2553 = vmatpush1.msra.mxu0 0.0
    %2554 = vmatprep.subr.mxu0 0.0
    %2555 = vmatpush1.msra.mxu0 0.0
    %2556 = vmatprep.subr.mxu0 0.0
    %2557 = vmatpush1.msra.mxu0 0.0
    %2558 = vmatprep.subr.mxu0 0.0
    %2559 = vmatpush1.msra.mxu0 0.0
    %2560 = vmatprep.subr.mxu0 0.0
    %2561 = vmatpush1.msra.mxu0 0.0
    %2562 = vmatprep.subr.mxu0 0.0
    %2563 = vmatpush1.msra.mxu0 0.0
    %2564 = vmatprep.subr.mxu0 0.0
    %2565 = vmatpush1.msra.mxu0 0.0
    %2566 = vmatprep.mubr.f32.mxu0 0.0
    %2567 = vmatmul.mubr.f32.gmra.mrb[0].mxu0 %v2220
    %v2568 = vpop.f32.mrb[0].mxu0
    %v2569 = vadd.f32 %v440, %v2568
    %v2570 = vpop.f32.mrb[0].mxu0
    %2571 = vdwg.mxu0
    %2572 = vmatprep.subr.mxu0 0.0
    %2573 = vmatpush1.msra.mxu0 %v66
    %2574 = vmatprep.subr.mxu0 0.0
    %2575 = vmatpush1.msra.mxu0 %v67
    %2576 = vmatprep.subr.mxu0 0.0
    %2577 = vmatpush1.msra.mxu0 %v68
    %2578 = vmatprep.subr.mxu0 0.0
    %2579 = vmatpush1.msra.mxu0 %v69
    %2580 = vmatprep.subr.mxu0 0.0
    %2581 = vmatpush1.msra.mxu0 0.0
    %2582 = vmatprep.subr.mxu0 0.0
    %2583 = vmatpush1.msra.mxu0 0.0
    %2584 = vmatprep.subr.mxu0 0.0
    %2585 = vmatpush1.msra.mxu0 0.0
    %2586 = vmatprep.subr.mxu0 0.0
    %2587 = vmatpush1.msra.mxu0 0.0
    %2588 = vmatprep.subr.mxu0 0.0
    %2589 = vmatpush1.msra.mxu0 0.0
    %2590 = vmatprep.subr.mxu0 0.0
    %2591 = vmatpush1.msra.mxu0 0.0
    %2592 = vmatprep.subr.mxu0 0.0
    %2593 = vmatpush1.msra.mxu0 0.0
    %2594 = vmatprep.subr.mxu0 0.0
    %2595 = vmatpush1.msra.mxu0 0.0
    %2596 = vmatprep.subr.mxu0 0.0
    %2597 = vmatpush1.msra.mxu0 0.0
    %2598 = vmatprep.subr.mxu0 0.0
    %2599 = vmatpush1.msra.mxu0 0.0
    %2600 = vmatprep.subr.mxu0 0.0
    %2601 = vmatpush1.msra.mxu0 0.0
    %2602 = vmatprep.subr.mxu0 0.0
    %2603 = vmatpush1.msra.mxu0 0.0
    %2604 = vmatprep.subr.mxu0 0.0
    %2605 = vmatpush1.msra.mxu0 0.0
    %2606 = vmatprep.subr.mxu0 0.0
    %2607 = vmatpush1.msra.mxu0 0.0
    %2608 = vmatprep.subr.mxu0 0.0
    %2609 = vmatpush1.msra.mxu0 0.0
    %2610 = vmatprep.subr.mxu0 0.0
    %2611 = vmatpush1.msra.mxu0 0.0
    %2612 = vmatprep.subr.mxu0 0.0
    %2613 = vmatpush1.msra.mxu0 0.0
    %2614 = vmatprep.subr.mxu0 0.0
    %2615 = vmatpush1.msra.mxu0 0.0
    %2616 = vmatprep.subr.mxu0 0.0
    %2617 = vmatpush1.msra.mxu0 0.0
    %2618 = vmatprep.subr.mxu0 0.0
    %2619 = vmatpush1.msra.mxu0 0.0
    %2620 = vmatprep.subr.mxu0 0.0
    %2621 = vmatpush1.msra.mxu0 0.0
    %2622 = vmatprep.subr.mxu0 0.0
    %2623 = vmatpush1.msra.mxu0 0.0
    %2624 = vmatprep.subr.mxu0 0.0
    %2625 = vmatpush1.msra.mxu0 0.0
    %2626 = vmatprep.subr.mxu0 0.0
    %2627 = vmatpush1.msra.mxu0 0.0
    %2628 = vmatprep.subr.mxu0 0.0
    %2629 = vmatpush1.msra.mxu0 0.0
    %2630 = vmatprep.subr.mxu0 0.0
    %2631 = vmatpush1.msra.mxu0 0.0
    %2632 = vmatprep.subr.mxu0 0.0
    %2633 = vmatpush1.msra.mxu0 0.0
    %2634 = vmatprep.subr.mxu0 0.0
    %2635 = vmatpush1.msra.mxu0 0.0
    %2636 = vmatprep.mubr.f32.mxu0 0.0
    %2637 = vmatmul.mubr.f32.gmra.mrb[0].mxu0 %v2220
    %v2638 = vpop.f32.mrb[0].mxu0
    %v2639 = vadd.f32 %v444, %v2638
    %v2640 = vpop.f32.mrb[0].mxu0
    %2641 = vdwg.mxu0
    %2642 = vmatprep.subr.mxu0 0.0
    %2643 = vmatpush1.msra.mxu0 %v70
    %2644 = vmatprep.subr.mxu0 0.0
    %2645 = vmatpush1.msra.mxu0 %v71
    %2646 = vmatprep.subr.mxu0 0.0
    %2647 = vmatpush1.msra.mxu0 %v72
    %2648 = vmatprep.subr.mxu0 0.0
    %2649 = vmatpush1.msra.mxu0 %v73
    %2650 = vmatprep.subr.mxu0 0.0
    %2651 = vmatpush1.msra.mxu0 0.0
    %2652 = vmatprep.subr.mxu0 0.0
    %2653 = vmatpush1.msra.mxu0 0.0
    %2654 = vmatprep.subr.mxu0 0.0
    %2655 = vmatpush1.msra.mxu0 0.0
    %2656 = vmatprep.subr.mxu0 0.0
    %2657 = vmatpush1.msra.mxu0 0.0
    %2658 = vmatprep.subr.mxu0 0.0
    %2659 = vmatpush1.msra.mxu0 0.0
    %2660 = vmatprep.subr.mxu0 0.0
    %2661 = vmatpush1.msra.mxu0 0.0
    %2662 = vmatprep.subr.mxu0 0.0
    %2663 = vmatpush1.msra.mxu0 0.0
    %2664 = vmatprep.subr.mxu0 0.0
    %2665 = vmatpush1.msra.mxu0 0.0
    %2666 = vmatprep.subr.mxu0 0.0
    %2667 = vmatpush1.msra.mxu0 0.0
    %2668 = vmatprep.subr.mxu0 0.0
    %2669 = vmatpush1.msra.mxu0 0.0
    %2670 = vmatprep.subr.mxu0 0.0
    %2671 = vmatpush1.msra.mxu0 0.0
    %2672 = vmatprep.subr.mxu0 0.0
    %2673 = vmatpush1.msra.mxu0 0.0
    %2674 = vmatprep.subr.mxu0 0.0
    %2675 = vmatpush1.msra.mxu0 0.0
    %2676 = vmatprep.subr.mxu0 0.0
    %2677 = vmatpush1.msra.mxu0 0.0
    %2678 = vmatprep.subr.mxu0 0.0
    %2679 = vmatpush1.msra.mxu0 0.0
    %2680 = vmatprep.subr.mxu0 0.0
    %2681 = vmatpush1.msra.mxu0 0.0
    %2682 = vmatprep.subr.mxu0 0.0
    %2683 = vmatpush1.msra.mxu0 0.0
    %2684 = vmatprep.subr.mxu0 0.0
    %2685 = vmatpush1.msra.mxu0 0.0
    %2686 = vmatprep.subr.mxu0 0.0
    %2687 = vmatpush1.msra.mxu0 0.0
    %2688 = vmatprep.subr.mxu0 0.0
    %2689 = vmatpush1.msra.mxu0 0.0
    %2690 = vmatprep.subr.mxu0 0.0
    %2691 = vmatpush1.msra.mxu0 0.0
    %2692 = vmatprep.subr.mxu0 0.0
    %2693 = vmatpush1.msra.mxu0 0.0
    %2694 = vmatprep.subr.mxu0 0.0
    %2695 = vmatpush1.msra.mxu0 0.0
    %2696 = vmatprep.subr.mxu0 0.0
    %2697 = vmatpush1.msra.mxu0 0.0
    %2698 = vmatprep.subr.mxu0 0.0
    %2699 = vmatpush1.msra.mxu0 0.0
    %2700 = vmatprep.subr.mxu0 0.0
    %2701 = vmatpush1.msra.mxu0 0.0
    %2702 = vmatprep.subr.mxu0 0.0
    %2703 = vmatpush1.msra.mxu0 0.0
    %2704 = vmatprep.subr.mxu0 0.0
    %2705 = vmatpush1.msra.mxu0 0.0
    %2706 = vmatprep.mubr.f32.mxu0 0.0
    %2707 = vmatmul.mubr.f32.gmra.mrb[0].mxu0 %v2220
    %v2708 = vpop.f32.mrb[0].mxu0
    %v2709 = vadd.f32 %v448, %v2708
    %v2710 = vpop.f32.mrb[0].mxu0
    %2711 = vdwg.mxu0
    %2712 = vmatprep.subr.mxu0 0.0
    %2713 = vmatpush1.msra.mxu0 %v74
    %2714 = vmatprep.subr.mxu0 0.0
    %2715 = vmatpush1.msra.mxu0 %v75
    %2716 = vmatprep.subr.mxu0 0.0
    %2717 = vmatpush1.msra.mxu0 %v76
    %2718 = vmatprep.subr.mxu0 0.0
    %2719 = vmatpush1.msra.mxu0 %v77
    %2720 = vmatprep.subr.mxu0 0.0
    %2721 = vmatpush1.msra.mxu0 0.0
    %2722 = vmatprep.subr.mxu0 0.0
    %2723 = vmatpush1.msra.mxu0 0.0
    %2724 = vmatprep.subr.mxu0 0.0
    %2725 = vmatpush1.msra.mxu0 0.0
    %2726 = vmatprep.subr.mxu0 0.0
    %2727 = vmatpush1.msra.mxu0 0.0
    %2728 = vmatprep.subr.mxu0 0.0
    %2729 = vmatpush1.msra.mxu0 0.0
    %2730 = vmatprep.subr.mxu0 0.0
    %2731 = vmatpush1.msra.mxu0 0.0
    %2732 = vmatprep.subr.mxu0 0.0
    %2733 = vmatpush1.msra.mxu0 0.0
    %2734 = vmatprep.subr.mxu0 0.0
    %2735 = vmatpush1.msra.mxu0 0.0
    %2736 = vmatprep.subr.mxu0 0.0
    %2737 = vmatpush1.msra.mxu0 0.0
    %2738 = vmatprep.subr.mxu0 0.0
    %2739 = vmatpush1.msra.mxu0 0.0
    %2740 = vmatprep.subr.mxu0 0.0
    %2741 = vmatpush1.msra.mxu0 0.0
    %2742 = vmatprep.subr.mxu0 0.0
    %2743 = vmatpush1.msra.mxu0 0.0
    %2744 = vmatprep.subr.mxu0 0.0
    %2745 = vmatpush1.msra.mxu0 0.0
    %2746 = vmatprep.subr.mxu0 0.0
    %2747 = vmatpush1.msra.mxu0 0.0
    %2748 = vmatprep.subr.mxu0 0.0
    %2749 = vmatpush1.msra.mxu0 0.0
    %2750 = vmatprep.subr.mxu0 0.0
    %2751 = vmatpush1.msra.mxu0 0.0
    %2752 = vmatprep.subr.mxu0 0.0
    %2753 = vmatpush1.msra.mxu0 0.0
    %2754 = vmatprep.subr.mxu0 0.0
    %2755 = vmatpush1.msra.mxu0 0.0
    %2756 = vmatprep.subr.mxu0 0.0
    %2757 = vmatpush1.msra.mxu0 0.0
    %2758 = vmatprep.subr.mxu0 0.0
    %2759 = vmatpush1.msra.mxu0 0.0
    %2760 = vmatprep.subr.mxu0 0.0
    %2761 = vmatpush1.msra.mxu0 0.0
    %2762 = vmatprep.subr.mxu0 0.0
    %2763 = vmatpush1.msra.mxu0 0.0
    %2764 = vmatprep.subr.mxu0 0.0
    %2765 = vmatpush1.msra.mxu0 0.0
    %2766 = vmatprep.subr.mxu0 0.0
    %2767 = vmatpush1.msra.mxu0 0.0
    %2768 = vmatprep.subr.mxu0 0.0
    %2769 = vmatpush1.msra.mxu0 0.0
    %2770 = vmatprep.subr.mxu0 0.0
    %2771 = vmatpush1.msra.mxu0 0.0
    %2772 = vmatprep.subr.mxu0 0.0
    %2773 = vmatpush1.msra.mxu0 0.0
    %2774 = vmatprep.subr.mxu0 0.0
    %2775 = vmatpush1.msra.mxu0 0.0
    %2776 = vmatprep.mubr.f32.mxu0 0.0
    %2777 = vmatmul.mubr.f32.gmra.mrb[0].mxu0 %v2220
    %v2778 = vpop.f32.mrb[0].mxu0
    %v2779 = vadd.f32 %v452, %v2778
    %v2780 = vpop.f32.mrb[0].mxu0
    %2781 = vdwg.mxu0
    %v2783 = vsel %vm149, %v37, 0
    %2785 = vmatprep.subr.mxu0 0.0
    %2786 = vmatpush1.msra.mxu0 %v78
    %2787 = vmatprep.subr.mxu0 0.0
    %2788 = vmatpush1.msra.mxu0 %v79
    %2789 = vmatprep.subr.mxu0 0.0
    %2790 = vmatpush1.msra.mxu0 %v80
    %2791 = vmatprep.subr.mxu0 0.0
    %2792 = vmatpush1.msra.mxu0 %v81
    %2793 = vmatprep.subr.mxu0 0.0
    %2794 = vmatpush1.msra.mxu0 0.0
    %2795 = vmatprep.subr.mxu0 0.0
    %2796 = vmatpush1.msra.mxu0 0.0
    %2797 = vmatprep.subr.mxu0 0.0
    %2798 = vmatpush1.msra.mxu0 0.0
    %2799 = vmatprep.subr.mxu0 0.0
    %2800 = vmatpush1.msra.mxu0 0.0
    %2801 = vmatprep.subr.mxu0 0.0
    %2802 = vmatpush1.msra.mxu0 0.0
    %2803 = vmatprep.subr.mxu0 0.0
    %2804 = vmatpush1.msra.mxu0 0.0
    %2805 = vmatprep.subr.mxu0 0.0
    %2806 = vmatpush1.msra.mxu0 0.0
    %2807 = vmatprep.subr.mxu0 0.0
    %2808 = vmatpush1.msra.mxu0 0.0
    %2809 = vmatprep.subr.mxu0 0.0
    %2810 = vmatpush1.msra.mxu0 0.0
    %2811 = vmatprep.subr.mxu0 0.0
    %2812 = vmatpush1.msra.mxu0 0.0
    %2813 = vmatprep.subr.mxu0 0.0
    %2814 = vmatpush1.msra.mxu0 0.0
    %2815 = vmatprep.subr.mxu0 0.0
    %2816 = vmatpush1.msra.mxu0 0.0
    %2817 = vmatprep.subr.mxu0 0.0
    %2818 = vmatpush1.msra.mxu0 0.0
    %2819 = vmatprep.subr.mxu0 0.0
    %2820 = vmatpush1.msra.mxu0 0.0
    %2821 = vmatprep.subr.mxu0 0.0
    %2822 = vmatpush1.msra.mxu0 0.0
    %2823 = vmatprep.subr.mxu0 0.0
    %2824 = vmatpush1.msra.mxu0 0.0
    %2825 = vmatprep.subr.mxu0 0.0
    %2826 = vmatpush1.msra.mxu0 0.0
    %2827 = vmatprep.subr.mxu0 0.0
    %2828 = vmatpush1.msra.mxu0 0.0
    %2829 = vmatprep.subr.mxu0 0.0
    %2830 = vmatpush1.msra.mxu0 0.0
    %2831 = vmatprep.subr.mxu0 0.0
    %2832 = vmatpush1.msra.mxu0 0.0
    %2833 = vmatprep.subr.mxu0 0.0
    %2834 = vmatpush1.msra.mxu0 0.0
    %2835 = vmatprep.subr.mxu0 0.0
    %2836 = vmatpush1.msra.mxu0 0.0
    %2837 = vmatprep.subr.mxu0 0.0
    %2838 = vmatpush1.msra.mxu0 0.0
    %2839 = vmatprep.subr.mxu0 0.0
    %2840 = vmatpush1.msra.mxu0 0.0
    %2841 = vmatprep.subr.mxu0 0.0
    %2842 = vmatpush1.msra.mxu0 0.0
    %2843 = vmatprep.subr.mxu0 0.0
    %2844 = vmatpush1.msra.mxu0 0.0
    %2845 = vmatprep.subr.mxu0 0.0
    %2846 = vmatpush1.msra.mxu0 0.0
    %2847 = vmatprep.subr.mxu0 0.0
    %2848 = vmatpush1.msra.mxu0 0.0
    %2849 = vmatprep.mubr.f32.mxu0 0.0
    %2850 = vmatmul.mubr.f32.gmra.mrb[0].mxu0 %v2783
    %v2851 = vpop.f32.mrb[0].mxu0
    %v2852 = vadd.f32 %v744, %v2851
    %v2853 = vpop.f32.mrb[0].mxu0
    %2854 = vdwg.mxu0
    %2855 = vmatprep.subr.mxu0 0.0
    %2856 = vmatpush1.msra.mxu0 %v82
    %2857 = vmatprep.subr.mxu0 0.0
    %2858 = vmatpush1.msra.mxu0 %v83
    %2859 = vmatprep.subr.mxu0 0.0
    %2860 = vmatpush1.msra.mxu0 %v84
    %2861 = vmatprep.subr.mxu0 0.0
    %2862 = vmatpush1.msra.mxu0 %v85
    %2863 = vmatprep.subr.mxu0 0.0
    %2864 = vmatpush1.msra.mxu0 0.0
    %2865 = vmatprep.subr.mxu0 0.0
    %2866 = vmatpush1.msra.mxu0 0.0
    %2867 = vmatprep.subr.mxu0 0.0
    %2868 = vmatpush1.msra.mxu0 0.0
    %2869 = vmatprep.subr.mxu0 0.0
    %2870 = vmatpush1.msra.mxu0 0.0
    %2871 = vmatprep.subr.mxu0 0.0
    %2872 = vmatpush1.msra.mxu0 0.0
    %2873 = vmatprep.subr.mxu0 0.0
    %2874 = vmatpush1.msra.mxu0 0.0
    %2875 = vmatprep.subr.mxu0 0.0
    %2876 = vmatpush1.msra.mxu0 0.0
    %2877 = vmatprep.subr.mxu0 0.0
    %2878 = vmatpush1.msra.mxu0 0.0
    %2879 = vmatprep.subr.mxu0 0.0
    %2880 = vmatpush1.msra.mxu0 0.0
    %2881 = vmatprep.subr.mxu0 0.0
    %2882 = vmatpush1.msra.mxu0 0.0
    %2883 = vmatprep.subr.mxu0 0.0
    %2884 = vmatpush1.msra.mxu0 0.0
    %2885 = vmatprep.subr.mxu0 0.0
    %2886 = vmatpush1.msra.mxu0 0.0
    %2887 = vmatprep.subr.mxu0 0.0
    %2888 = vmatpush1.msra.mxu0 0.0
    %2889 = vmatprep.subr.mxu0 0.0
    %2890 = vmatpush1.msra.mxu0 0.0
    %2891 = vmatprep.subr.mxu0 0.0
    %2892 = vmatpush1.msra.mxu0 0.0
    %2893 = vmatprep.subr.mxu0 0.0
    %2894 = vmatpush1.msra.mxu0 0.0
    %2895 = vmatprep.subr.mxu0 0.0
    %2896 = vmatpush1.msra.mxu0 0.0
    %2897 = vmatprep.subr.mxu0 0.0
    %2898 = vmatpush1.msra.mxu0 0.0
    %2899 = vmatprep.subr.mxu0 0.0
    %2900 = vmatpush1.msra.mxu0 0.0
    %2901 = vmatprep.subr.mxu0 0.0
    %2902 = vmatpush1.msra.mxu0 0.0
    %2903 = vmatprep.subr.mxu0 0.0
    %2904 = vmatpush1.msra.mxu0 0.0
    %2905 = vmatprep.subr.mxu0 0.0
    %2906 = vmatpush1.msra.mxu0 0.0
    %2907 = vmatprep.subr.mxu0 0.0
    %2908 = vmatpush1.msra.mxu0 0.0
    %2909 = vmatprep.subr.mxu0 0.0
    %2910 = vmatpush1.msra.mxu0 0.0
    %2911 = vmatprep.subr.mxu0 0.0
    %2912 = vmatpush1.msra.mxu0 0.0
    %2913 = vmatprep.subr.mxu0 0.0
    %2914 = vmatpush1.msra.mxu0 0.0
    %2915 = vmatprep.subr.mxu0 0.0
    %2916 = vmatpush1.msra.mxu0 0.0
    %2917 = vmatprep.subr.mxu0 0.0
    %2918 = vmatpush1.msra.mxu0 0.0
    %2919 = vmatprep.mubr.f32.mxu0 0.0
    %2920 = vmatmul.mubr.f32.gmra.mrb[0].mxu0 %v2783
    %v2921 = vpop.f32.mrb[0].mxu0
    %v2922 = vadd.f32 %v748, %v2921
    %v2923 = vpop.f32.mrb[0].mxu0
    %2924 = vdwg.mxu0
    %2925 = vmatprep.subr.mxu0 0.0
    %2926 = vmatpush1.msra.mxu0 %v86
    %2927 = vmatprep.subr.mxu0 0.0
    %2928 = vmatpush1.msra.mxu0 %v87
    %2929 = vmatprep.subr.mxu0 0.0
    %2930 = vmatpush1.msra.mxu0 %v88
    %2931 = vmatprep.subr.mxu0 0.0
    %2932 = vmatpush1.msra.mxu0 %v89
    %2933 = vmatprep.subr.mxu0 0.0
    %2934 = vmatpush1.msra.mxu0 0.0
    %2935 = vmatprep.subr.mxu0 0.0
    %2936 = vmatpush1.msra.mxu0 0.0
    %2937 = vmatprep.subr.mxu0 0.0
    %2938 = vmatpush1.msra.mxu0 0.0
    %2939 = vmatprep.subr.mxu0 0.0
    %2940 = vmatpush1.msra.mxu0 0.0
    %2941 = vmatprep.subr.mxu0 0.0
    %2942 = vmatpush1.msra.mxu0 0.0
    %2943 = vmatprep.subr.mxu0 0.0
    %2944 = vmatpush1.msra.mxu0 0.0
    %2945 = vmatprep.subr.mxu0 0.0
    %2946 = vmatpush1.msra.mxu0 0.0
    %2947 = vmatprep.subr.mxu0 0.0
    %2948 = vmatpush1.msra.mxu0 0.0
    %2949 = vmatprep.subr.mxu0 0.0
    %2950 = vmatpush1.msra.mxu0 0.0
    %2951 = vmatprep.subr.mxu0 0.0
    %2952 = vmatpush1.msra.mxu0 0.0
    %2953 = vmatprep.subr.mxu0 0.0
    %2954 = vmatpush1.msra.mxu0 0.0
    %2955 = vmatprep.subr.mxu0 0.0
    %2956 = vmatpush1.msra.mxu0 0.0
    %2957 = vmatprep.subr.mxu0 0.0
    %2958 = vmatpush1.msra.mxu0 0.0
    %2959 = vmatprep.subr.mxu0 0.0
    %2960 = vmatpush1.msra.mxu0 0.0
    %2961 = vmatprep.subr.mxu0 0.0
    %2962 = vmatpush1.msra.mxu0 0.0
    %2963 = vmatprep.subr.mxu0 0.0
    %2964 = vmatpush1.msra.mxu0 0.0
    %2965 = vmatprep.subr.mxu0 0.0
    %2966 = vmatpush1.msra.mxu0 0.0
    %2967 = vmatprep.subr.mxu0 0.0
    %2968 = vmatpush1.msra.mxu0 0.0
    %2969 = vmatprep.subr.mxu0 0.0
    %2970 = vmatpush1.msra.mxu0 0.0
    %2971 = vmatprep.subr.mxu0 0.0
    %2972 = vmatpush1.msra.mxu0 0.0
    %2973 = vmatprep.subr.mxu0 0.0
    %2974 = vmatpush1.msra.mxu0 0.0
    %2975 = vmatprep.subr.mxu0 0.0
    %2976 = vmatpush1.msra.mxu0 0.0
    %2977 = vmatprep.subr.mxu0 0.0
    %2978 = vmatpush1.msra.mxu0 0.0
    %2979 = vmatprep.subr.mxu0 0.0
    %2980 = vmatpush1.msra.mxu0 0.0
    %2981 = vmatprep.subr.mxu0 0.0
    %2982 = vmatpush1.msra.mxu0 0.0
    %2983 = vmatprep.subr.mxu0 0.0
    %2984 = vmatpush1.msra.mxu0 0.0
    %2985 = vmatprep.subr.mxu0 0.0
    %2986 = vmatpush1.msra.mxu0 0.0
    %2987 = vmatprep.subr.mxu0 0.0
    %2988 = vmatpush1.msra.mxu0 0.0
    %2989 = vmatprep.mubr.f32.mxu0 0.0
    %2990 = vmatmul.mubr.f32.gmra.mrb[0].mxu0 %v2783
    %v2991 = vpop.f32.mrb[0].mxu0
    %v2992 = vadd.f32 %v752, %v2991
    %v2993 = vpop.f32.mrb[0].mxu0
    %2994 = vdwg.mxu0
    %2995 = vmatprep.subr.mxu0 0.0
    %2996 = vmatpush1.msra.mxu0 %v90
    %2997 = vmatprep.subr.mxu0 0.0
    %2998 = vmatpush1.msra.mxu0 %v91
    %2999 = vmatprep.subr.mxu0 0.0
    %3000 = vmatpush1.msra.mxu0 %v92
    %3001 = vmatprep.subr.mxu0 0.0
    %3002 = vmatpush1.msra.mxu0 %v93
    %3003 = vmatprep.subr.mxu0 0.0
    %3004 = vmatpush1.msra.mxu0 0.0
    %3005 = vmatprep.subr.mxu0 0.0
    %3006 = vmatpush1.msra.mxu0 0.0
    %3007 = vmatprep.subr.mxu0 0.0
    %3008 = vmatpush1.msra.mxu0 0.0
    %3009 = vmatprep.subr.mxu0 0.0
    %3010 = vmatpush1.msra.mxu0 0.0
    %3011 = vmatprep.subr.mxu0 0.0
    %3012 = vmatpush1.msra.mxu0 0.0
    %3013 = vmatprep.subr.mxu0 0.0
    %3014 = vmatpush1.msra.mxu0 0.0
    %3015 = vmatprep.subr.mxu0 0.0
    %3016 = vmatpush1.msra.mxu0 0.0
    %3017 = vmatprep.subr.mxu0 0.0
    %3018 = vmatpush1.msra.mxu0 0.0
    %3019 = vmatprep.subr.mxu0 0.0
    %3020 = vmatpush1.msra.mxu0 0.0
    %3021 = vmatprep.subr.mxu0 0.0
    %3022 = vmatpush1.msra.mxu0 0.0
    %3023 = vmatprep.subr.mxu0 0.0
    %3024 = vmatpush1.msra.mxu0 0.0
    %3025 = vmatprep.subr.mxu0 0.0
    %3026 = vmatpush1.msra.mxu0 0.0
    %3027 = vmatprep.subr.mxu0 0.0
    %3028 = vmatpush1.msra.mxu0 0.0
    %3029 = vmatprep.subr.mxu0 0.0
    %3030 = vmatpush1.msra.mxu0 0.0
    %3031 = vmatprep.subr.mxu0 0.0
    %3032 = vmatpush1.msra.mxu0 0.0
    %3033 = vmatprep.subr.mxu0 0.0
    %3034 = vmatpush1.msra.mxu0 0.0
    %3035 = vmatprep.subr.mxu0 0.0
    %3036 = vmatpush1.msra.mxu0 0.0
    %3037 = vmatprep.subr.mxu0 0.0
    %3038 = vmatpush1.msra.mxu0 0.0
    %3039 = vmatprep.subr.mxu0 0.0
    %3040 = vmatpush1.msra.mxu0 0.0
    %3041 = vmatprep.subr.mxu0 0.0
    %3042 = vmatpush1.msra.mxu0 0.0
    %3043 = vmatprep.subr.mxu0 0.0
    %3044 = vmatpush1.msra.mxu0 0.0
    %3045 = vmatprep.subr.mxu0 0.0
    %3046 = vmatpush1.msra.mxu0 0.0
    %3047 = vmatprep.subr.mxu0 0.0
    %3048 = vmatpush1.msra.mxu0 0.0
    %3049 = vmatprep.subr.mxu0 0.0
    %3050 = vmatpush1.msra.mxu0 0.0
    %3051 = vmatprep.subr.mxu0 0.0
    %3052 = vmatpush1.msra.mxu0 0.0
    %3053 = vmatprep.subr.mxu0 0.0
    %3054 = vmatpush1.msra.mxu0 0.0
    %3055 = vmatprep.subr.mxu0 0.0
    %3056 = vmatpush1.msra.mxu0 0.0
    %3057 = vmatprep.subr.mxu0 0.0
    %3058 = vmatpush1.msra.mxu0 0.0
    %3059 = vmatprep.mubr.f32.mxu0 0.0
    %3060 = vmatmul.mubr.f32.gmra.mrb[0].mxu0 %v2783
    %v3061 = vpop.f32.mrb[0].mxu0
    %v3062 = vadd.f32 %v756, %v3061
    %v3063 = vpop.f32.mrb[0].mxu0
    %3064 = vdwg.mxu0
    %v3066 = vsel %vm1044, %v2289, 0
    %v3069 = vsel %vm1044, %v2569, 0
    %3071 = vmatprep.subr.mxu0 0.0
    %3072 = vmatpush1.xpose.msra.mxu0 %v3069
    %3073 = vmatprep.subr.mxu0 0.0
    %3074 = vmatpush1.xpose.msra.mxu0 0.0
    %3075 = vmatprep.subr.mxu0 0.0
    %3076 = vmatpush1.xpose.msra.mxu0 0.0
    %3077 = vmatprep.subr.mxu0 0.0
    %3078 = vmatpush1.xpose.msra.mxu0 0.0
    %3079 = vmatprep.subr.mxu0 0.0
    %3080 = vmatpush1.xpose.msra.mxu0 0.0
    %3081 = vmatprep.subr.mxu0 0.0
    %3082 = vmatpush1.xpose.msra.mxu0 0.0
    %3083 = vmatprep.subr.mxu0 0.0
    %3084 = vmatpush1.xpose.msra.mxu0 0.0
    %3085 = vmatprep.subr.mxu0 0.0
    %3086 = vmatpush1.xpose.msra.mxu0 0.0
    %3087 = vmatprep.subr.mxu0 0.0
    %3088 = vmatpush1.xpose.msra.mxu0 0.0
    %3089 = vmatprep.subr.mxu0 0.0
    %3090 = vmatpush1.xpose.msra.mxu0 0.0
    %3091 = vmatprep.subr.mxu0 0.0
    %3092 = vmatpush1.xpose.msra.mxu0 0.0
    %3093 = vmatprep.subr.mxu0 0.0
    %3094 = vmatpush1.xpose.msra.mxu0 0.0
    %3095 = vmatprep.subr.mxu0 0.0
    %3096 = vmatpush1.xpose.msra.mxu0 0.0
    %3097 = vmatprep.subr.mxu0 0.0
    %3098 = vmatpush1.xpose.msra.mxu0 0.0
    %3099 = vmatprep.subr.mxu0 0.0
    %3100 = vmatpush1.xpose.msra.mxu0 0.0
    %3101 = vmatprep.subr.mxu0 0.0
    %3102 = vmatpush1.xpose.msra.mxu0 0.0
    %3103 = vmatprep.subr.mxu0 0.0
    %3104 = vmatpush1.xpose.msra.mxu0 0.0
    %3105 = vmatprep.subr.mxu0 0.0
    %3106 = vmatpush1.xpose.msra.mxu0 0.0
    %3107 = vmatprep.subr.mxu0 0.0
    %3108 = vmatpush1.xpose.msra.mxu0 0.0
    %3109 = vmatprep.subr.mxu0 0.0
    %3110 = vmatpush1.xpose.msra.mxu0 0.0
    %3111 = vmatprep.subr.mxu0 0.0
    %3112 = vmatpush1.xpose.msra.mxu0 0.0
    %3113 = vmatprep.subr.mxu0 0.0
    %3114 = vmatpush1.xpose.msra.mxu0 0.0
    %3115 = vmatprep.subr.mxu0 0.0
    %3116 = vmatpush1.xpose.msra.mxu0 0.0
    %3117 = vmatprep.subr.mxu0 0.0
    %3118 = vmatpush1.xpose.msra.mxu0 0.0
    %3119 = vmatprep.subr.mxu0 0.0
    %3120 = vmatpush1.xpose.msra.mxu0 0.0
    %3121 = vmatprep.subr.mxu0 0.0
    %3122 = vmatpush1.xpose.msra.mxu0 0.0
    %3123 = vmatprep.subr.mxu0 0.0
    %3124 = vmatpush1.xpose.msra.mxu0 0.0
    %3125 = vmatprep.subr.mxu0 0.0
    %3126 = vmatpush1.xpose.msra.mxu0 0.0
    %3127 = vmatprep.subr.mxu0 0.0
    %3128 = vmatpush1.xpose.msra.mxu0 0.0
    %3129 = vmatprep.subr.mxu0 0.0
    %3130 = vmatpush1.xpose.msra.mxu0 0.0
    %3131 = vmatprep.subr.mxu0 0.0
    %3132 = vmatpush1.xpose.msra.mxu0 0.0
    %3133 = vmatprep.subr.mxu0 0.0
    %3134 = vmatpush1.xpose.msra.mxu0 0.0
    %3135 = vmatprep.mubr.f32.mxu0 0.0
    %3136 = vmatmul.mubr.f32.gmra.mrb[0].mxu0 %v3066
    %v3137 = vpop.f32.mrb[0].mxu0
    %v3138 = vadd.f32 0.0, %v3137
    %v3139 = vpop.f32.mrb[0].mxu0
    %3140 = vdwg.mxu0
    %v3142 = vsel %vm1044, %v2359, 0
    %v3145 = vsel %vm1044, %v2639, 0
    %3147 = vmatprep.subr.mxu0 0.0
    %3148 = vmatpush1.xpose.msra.mxu0 %v3145
    %3149 = vmatprep.subr.mxu0 0.0
    %3150 = vmatpush1.xpose.msra.mxu0 0.0
    %3151 = vmatprep.subr.mxu0 0.0
    %3152 = vmatpush1.xpose.msra.mxu0 0.0
    %3153 = vmatprep.subr.mxu0 0.0
    %3154 = vmatpush1.xpose.msra.mxu0 0.0
    %3155 = vmatprep.subr.mxu0 0.0
    %3156 = vmatpush1.xpose.msra.mxu0 0.0
    %3157 = vmatprep.subr.mxu0 0.0
    %3158 = vmatpush1.xpose.msra.mxu0 0.0
    %3159 = vmatprep.subr.mxu0 0.0
    %3160 = vmatpush1.xpose.msra.mxu0 0.0
    %3161 = vmatprep.subr.mxu0 0.0
    %3162 = vmatpush1.xpose.msra.mxu0 0.0
    %3163 = vmatprep.subr.mxu0 0.0
    %3164 = vmatpush1.xpose.msra.mxu0 0.0
    %3165 = vmatprep.subr.mxu0 0.0
    %3166 = vmatpush1.xpose.msra.mxu0 0.0
    %3167 = vmatprep.subr.mxu0 0.0
    %3168 = vmatpush1.xpose.msra.mxu0 0.0
    %3169 = vmatprep.subr.mxu0 0.0
    %3170 = vmatpush1.xpose.msra.mxu0 0.0
    %3171 = vmatprep.subr.mxu0 0.0
    %3172 = vmatpush1.xpose.msra.mxu0 0.0
    %3173 = vmatprep.subr.mxu0 0.0
    %3174 = vmatpush1.xpose.msra.mxu0 0.0
    %3175 = vmatprep.subr.mxu0 0.0
    %3176 = vmatpush1.xpose.msra.mxu0 0.0
    %3177 = vmatprep.subr.mxu0 0.0
    %3178 = vmatpush1.xpose.msra.mxu0 0.0
    %3179 = vmatprep.subr.mxu0 0.0
    %3180 = vmatpush1.xpose.msra.mxu0 0.0
    %3181 = vmatprep.subr.mxu0 0.0
    %3182 = vmatpush1.xpose.msra.mxu0 0.0
    %3183 = vmatprep.subr.mxu0 0.0
    %3184 = vmatpush1.xpose.msra.mxu0 0.0
    %3185 = vmatprep.subr.mxu0 0.0
    %3186 = vmatpush1.xpose.msra.mxu0 0.0
    %3187 = vmatprep.subr.mxu0 0.0
    %3188 = vmatpush1.xpose.msra.mxu0 0.0
    %3189 = vmatprep.subr.mxu0 0.0
    %3190 = vmatpush1.xpose.msra.mxu0 0.0
    %3191 = vmatprep.subr.mxu0 0.0
    %3192 = vmatpush1.xpose.msra.mxu0 0.0
    %3193 = vmatprep.subr.mxu0 0.0
    %3194 = vmatpush1.xpose.msra.mxu0 0.0
    %3195 = vmatprep.subr.mxu0 0.0
    %3196 = vmatpush1.xpose.msra.mxu0 0.0
    %3197 = vmatprep.subr.mxu0 0.0
    %3198 = vmatpush1.xpose.msra.mxu0 0.0
    %3199 = vmatprep.subr.mxu0 0.0
    %3200 = vmatpush1.xpose.msra.mxu0 0.0
    %3201 = vmatprep.subr.mxu0 0.0
    %3202 = vmatpush1.xpose.msra.mxu0 0.0
    %3203 = vmatprep.subr.mxu0 0.0
    %3204 = vmatpush1.xpose.msra.mxu0 0.0
    %3205 = vmatprep.subr.mxu0 0.0
    %3206 = vmatpush1.xpose.msra.mxu0 0.0
    %3207 = vmatprep.subr.mxu0 0.0
    %3208 = vmatpush1.xpose.msra.mxu0 0.0
    %3209 = vmatprep.subr.mxu0 0.0
    %3210 = vmatpush1.xpose.msra.mxu0 0.0
    %3211 = vmatprep.mubr.f32.mxu0 0.0
    %3212 = vmatmul.mubr.f32.gmra.mrb[0].mxu0 %v3142
    %v3213 = vpop.f32.mrb[0].mxu0
    %v3214 = vadd.f32 0.0, %v3213
    %v3215 = vpop.f32.mrb[0].mxu0
    %3216 = vdwg.mxu0
    %v3218 = vsel %vm1044, %v2429, 0
    %v3221 = vsel %vm1044, %v2709, 0
    %3223 = vmatprep.subr.mxu0 0.0
    %3224 = vmatpush1.xpose.msra.mxu0 %v3221
    %3225 = vmatprep.subr.mxu0 0.0
    %3226 = vmatpush1.xpose.msra.mxu0 0.0
    %3227 = vmatprep.subr.mxu0 0.0
    %3228 = vmatpush1.xpose.msra.mxu0 0.0
    %3229 = vmatprep.subr.mxu0 0.0
    %3230 = vmatpush1.xpose.msra.mxu0 0.0
    %3231 = vmatprep.subr.mxu0 0.0
    %3232 = vmatpush1.xpose.msra.mxu0 0.0
    %3233 = vmatprep.subr.mxu0 0.0
    %3234 = vmatpush1.xpose.msra.mxu0 0.0
    %3235 = vmatprep.subr.mxu0 0.0
    %3236 = vmatpush1.xpose.msra.mxu0 0.0
    %3237 = vmatprep.subr.mxu0 0.0
    %3238 = vmatpush1.xpose.msra.mxu0 0.0
    %3239 = vmatprep.subr.mxu0 0.0
    %3240 = vmatpush1.xpose.msra.mxu0 0.0
    %3241 = vmatprep.subr.mxu0 0.0
    %3242 = vmatpush1.xpose.msra.mxu0 0.0
    %3243 = vmatprep.subr.mxu0 0.0
    %3244 = vmatpush1.xpose.msra.mxu0 0.0
    %3245 = vmatprep.subr.mxu0 0.0
    %3246 = vmatpush1.xpose.msra.mxu0 0.0
    %3247 = vmatprep.subr.mxu0 0.0
    %3248 = vmatpush1.xpose.msra.mxu0 0.0
    %3249 = vmatprep.subr.mxu0 0.0
    %3250 = vmatpush1.xpose.msra.mxu0 0.0
    %3251 = vmatprep.subr.mxu0 0.0
    %3252 = vmatpush1.xpose.msra.mxu0 0.0
    %3253 = vmatprep.subr.mxu0 0.0
    %3254 = vmatpush1.xpose.msra.mxu0 0.0
    %3255 = vmatprep.subr.mxu0 0.0
    %3256 = vmatpush1.xpose.msra.mxu0 0.0
    %3257 = vmatprep.subr.mxu0 0.0
    %3258 = vmatpush1.xpose.msra.mxu0 0.0
    %3259 = vmatprep.subr.mxu0 0.0
    %3260 = vmatpush1.xpose.msra.mxu0 0.0
    %3261 = vmatprep.subr.mxu0 0.0
    %3262 = vmatpush1.xpose.msra.mxu0 0.0
    %3263 = vmatprep.subr.mxu0 0.0
    %3264 = vmatpush1.xpose.msra.mxu0 0.0
    %3265 = vmatprep.subr.mxu0 0.0
    %3266 = vmatpush1.xpose.msra.mxu0 0.0
    %3267 = vmatprep.subr.mxu0 0.0
    %3268 = vmatpush1.xpose.msra.mxu0 0.0
    %3269 = vmatprep.subr.mxu0 0.0
    %3270 = vmatpush1.xpose.msra.mxu0 0.0
    %3271 = vmatprep.subr.mxu0 0.0
    %3272 = vmatpush1.xpose.msra.mxu0 0.0
    %3273 = vmatprep.subr.mxu0 0.0
    %3274 = vmatpush1.xpose.msra.mxu0 0.0
    %3275 = vmatprep.subr.mxu0 0.0
    %3276 = vmatpush1.xpose.msra.mxu0 0.0
    %3277 = vmatprep.subr.mxu0 0.0
    %3278 = vmatpush1.xpose.msra.mxu0 0.0
    %3279 = vmatprep.subr.mxu0 0.0
    %3280 = vmatpush1.xpose.msra.mxu0 0.0
    %3281 = vmatprep.subr.mxu0 0.0
    %3282 = vmatpush1.xpose.msra.mxu0 0.0
    %3283 = vmatprep.subr.mxu0 0.0
    %3284 = vmatpush1.xpose.msra.mxu0 0.0
    %3285 = vmatprep.subr.mxu0 0.0
    %3286 = vmatpush1.xpose.msra.mxu0 0.0
    %3287 = vmatprep.mubr.f32.mxu0 0.0
    %3288 = vmatmul.mubr.f32.gmra.mrb[0].mxu0 %v3218
    %v3289 = vpop.f32.mrb[0].mxu0
    %v3290 = vadd.f32 0.0, %v3289
    %v3291 = vpop.f32.mrb[0].mxu0
    %3292 = vdwg.mxu0
    %v3294 = vsel %vm1044, %v2499, 0
    %v3297 = vsel %vm1044, %v2779, 0
    %3299 = vmatprep.subr.mxu0 0.0
    %3300 = vmatpush1.xpose.msra.mxu0 %v3297
    %3301 = vmatprep.subr.mxu0 0.0
    %3302 = vmatpush1.xpose.msra.mxu0 0.0
    %3303 = vmatprep.subr.mxu0 0.0
    %3304 = vmatpush1.xpose.msra.mxu0 0.0
    %3305 = vmatprep.subr.mxu0 0.0
    %3306 = vmatpush1.xpose.msra.mxu0 0.0
    %3307 = vmatprep.subr.mxu0 0.0
    %3308 = vmatpush1.xpose.msra.mxu0 0.0
    %3309 = vmatprep.subr.mxu0 0.0
    %3310 = vmatpush1.xpose.msra.mxu0 0.0
    %3311 = vmatprep.subr.mxu0 0.0
    %3312 = vmatpush1.xpose.msra.mxu0 0.0
    %3313 = vmatprep.subr.mxu0 0.0
    %3314 = vmatpush1.xpose.msra.mxu0 0.0
    %3315 = vmatprep.subr.mxu0 0.0
    %3316 = vmatpush1.xpose.msra.mxu0 0.0
    %3317 = vmatprep.subr.mxu0 0.0
    %3318 = vmatpush1.xpose.msra.mxu0 0.0
    %3319 = vmatprep.subr.mxu0 0.0
    %3320 = vmatpush1.xpose.msra.mxu0 0.0
    %3321 = vmatprep.subr.mxu0 0.0
    %3322 = vmatpush1.xpose.msra.mxu0 0.0
    %3323 = vmatprep.subr.mxu0 0.0
    %3324 = vmatpush1.xpose.msra.mxu0 0.0
    %3325 = vmatprep.subr.mxu0 0.0
    %3326 = vmatpush1.xpose.msra.mxu0 0.0
    %3327 = vmatprep.subr.mxu0 0.0
    %3328 = vmatpush1.xpose.msra.mxu0 0.0
    %3329 = vmatprep.subr.mxu0 0.0
    %3330 = vmatpush1.xpose.msra.mxu0 0.0
    %3331 = vmatprep.subr.mxu0 0.0
    %3332 = vmatpush1.xpose.msra.mxu0 0.0
    %3333 = vmatprep.subr.mxu0 0.0
    %3334 = vmatpush1.xpose.msra.mxu0 0.0
    %3335 = vmatprep.subr.mxu0 0.0
    %3336 = vmatpush1.xpose.msra.mxu0 0.0
    %3337 = vmatprep.subr.mxu0 0.0
    %3338 = vmatpush1.xpose.msra.mxu0 0.0
    %3339 = vmatprep.subr.mxu0 0.0
    %3340 = vmatpush1.xpose.msra.mxu0 0.0
    %3341 = vmatprep.subr.mxu0 0.0
    %3342 = vmatpush1.xpose.msra.mxu0 0.0
    %3343 = vmatprep.subr.mxu0 0.0
    %3344 = vmatpush1.xpose.msra.mxu0 0.0
    %3345 = vmatprep.subr.mxu0 0.0
    %3346 = vmatpush1.xpose.msra.mxu0 0.0
    %3347 = vmatprep.subr.mxu0 0.0
    %3348 = vmatpush1.xpose.msra.mxu0 0.0
    %3349 = vmatprep.subr.mxu0 0.0
    %3350 = vmatpush1.xpose.msra.mxu0 0.0
    %3351 = vmatprep.subr.mxu0 0.0
    %3352 = vmatpush1.xpose.msra.mxu0 0.0
    %3353 = vmatprep.subr.mxu0 0.0
    %3354 = vmatpush1.xpose.msra.mxu0 0.0
    %3355 = vmatprep.subr.mxu0 0.0
    %3356 = vmatpush1.xpose.msra.mxu0 0.0
    %3357 = vmatprep.subr.mxu0 0.0
    %3358 = vmatpush1.xpose.msra.mxu0 0.0
    %3359 = vmatprep.subr.mxu0 0.0
    %3360 = vmatpush1.xpose.msra.mxu0 0.0
    %3361 = vmatprep.subr.mxu0 0.0
    %3362 = vmatpush1.xpose.msra.mxu0 0.0
    %3363 = vmatprep.mubr.f32.mxu0 0.0
    %3364 = vmatmul.mubr.f32.gmra.mrb[0].mxu0 %v3294
    %v3365 = vpop.f32.mrb[0].mxu0
    %v3366 = vadd.f32 0.0, %v3365
    %v3367 = vpop.f32.mrb[0].mxu0
    %3368 = vdwg.mxu0
    %v3369 = vmul.f32 %v3138, 0.35355338
    %v3370 = vmul.f32 %v3214, 0.35355338
    %v3371 = vmul.f32 %v3290, 0.35355338
    %v3372 = vmul.f32 %v3366, 0.35355338
    %v3374 = vlaneseq
    %v3375 = vshrl.u32 %v3374, 7
    %v3376 = vsub.s32 0, %v3375
    %v3377 = vrot.slane %v45, %v3376
    %v3379 = vadd.f32 %v3369, %v3377
    %v3380 = vadd.f32 %v3370, %v3377
    %v3381 = vadd.f32 %v3371, %v3377
    %v3382 = vadd.f32 %v3372, %v3377
    %v3383 = vsel %vm1044, %v3379, -inf
    %3384 = vmax.xlane.f32.xlu0 %v3383
    %v3385 = vpop.xlane.xlu0 %3384
    %v3386 = vsel %vm1044, %v3380, -inf
    %3387 = vmax.xlane.f32.xlu0 %v3386
    %v3388 = vpop.xlane.xlu0 %3387
    %v3389 = vsel %vm1044, %v3381, -inf
    %3390 = vmax.xlane.f32.xlu0 %v3389
    %v3391 = vpop.xlane.xlu0 %3390
    %v3392 = vsel %vm1044, %v3382, -inf
    %3393 = vmax.xlane.f32.xlu0 %v3392
    %v3394 = vpop.xlane.xlu0 %3393
    %v3395 = vsub.f32 %v3379, %v3385
    %v3396 = vsub.f32 %v3380, %v3388
    %v3397 = vsub.f32 %v3381, %v3391
    %v3398 = vsub.f32 %v3382, %v3394
    %v3399 = vmul.f32 %v3395, 1.442695
    %v3400 = vpow.pop %v3399
    %v3401 = vmul.f32 %v3396, 1.442695
    %v3402 = vpow.pop %v3401
    %v3403 = vmul.f32 %v3397, 1.442695
    %v3404 = vpow.pop %v3403
    %v3405 = vmul.f32 %v3398, 1.442695
    %v3406 = vpow.pop %v3405
    %v3407 = vsel %vm1044, %v3400, 0.0
    %3408 = vadd.xlane.f32.xlu0 %v3407
    %v3409 = vpop.xlane.xlu0 %3408
    %v3410 = vsel %vm1044, %v3402, 0.0
    %3411 = vadd.xlane.f32.xlu0 %v3410
    %v3412 = vpop.xlane.xlu0 %3411
    %v3413 = vsel %vm1044, %v3404, 0.0
    %3414 = vadd.xlane.f32.xlu0 %v3413
    %v3415 = vpop.xlane.xlu0 %3414
    %v3416 = vsel %vm1044, %v3406, 0.0
    %3417 = vadd.xlane.f32.xlu0 %v3416
    %v3418 = vpop.xlane.xlu0 %3417
    %v3419 = vrcp.pop %v3409
    %v3420 = vmul.f32 %v3400, %v3419
    %v3421 = vrcp.pop %v3412
    %v3422 = vmul.f32 %v3402, %v3421
    %v3423 = vrcp.pop %v3415
    %v3424 = vmul.f32 %v3404, %v3423
    %v3425 = vrcp.pop %v3418
    %v3426 = vmul.f32 %v3406, %v3425
    %v3427 = vsel %vm1044, %v3420, 0.0
    %v3428 = vsel %vm1044, %v3422, 0.0
    %v3429 = vadd.f32 %v3427, %v3428
    %v3430 = vsel %vm1044, %v3424, 0.0
    %v3431 = vadd.f32 %v3429, %v3430
    %v3432 = vsel %vm1044, %v3426, 0.0
    %v3433 = vadd.f32 %v3431, %v3432
    %v3434 = vmul.f32 %v3433, %v1414
    %s3435 = scalar_lea.vmem [#allocation2], 8
    %3436 = vst.msk [vmem:[%s3435] sm:$0xff] %vm1044, %v3434
    %v3438 = vsel %vm1044, %v3420, 0
    %3440 = vmatprep.subr.mxu0 0.0
    %3441 = vmatpush1.msra.mxu0 %v2852
    %3442 = vmatprep.subr.mxu0 0.0
    %3443 = vmatpush1.msra.mxu0 0.0
    %3444 = vmatprep.subr.mxu0 0.0
    %3445 = vmatpush1.msra.mxu0 0.0
    %3446 = vmatprep.subr.mxu0 0.0
    %3447 = vmatpush1.msra.mxu0 0.0
    %3448 = vmatprep.subr.mxu0 0.0
    %3449 = vmatpush1.msra.mxu0 0.0
    %3450 = vmatprep.subr.mxu0 0.0
    %3451 = vmatpush1.msra.mxu0 0.0
    %3452 = vmatprep.subr.mxu0 0.0
    %3453 = vmatpush1.msra.mxu0 0.0
    %3454 = vmatprep.subr.mxu0 0.0
    %3455 = vmatpush1.msra.mxu0 0.0
    %3456 = vmatprep.subr.mxu0 0.0
    %3457 = vmatpush1.msra.mxu0 0.0
    %3458 = vmatprep.subr.mxu0 0.0
    %3459 = vmatpush1.msra.mxu0 0.0
    %3460 = vmatprep.subr.mxu0 0.0
    %3461 = vmatpush1.msra.mxu0 0.0
    %3462 = vmatprep.subr.mxu0 0.0
    %3463 = vmatpush1.msra.mxu0 0.0
    %3464 = vmatprep.subr.mxu0 0.0
    %3465 = vmatpush1.msra.mxu0 0.0
    %3466 = vmatprep.subr.mxu0 0.0
    %3467 = vmatpush1.msra.mxu0 0.0
    %3468 = vmatprep.subr.mxu0 0.0
    %3469 = vmatpush1.msra.mxu0 0.0
    %3470 = vmatprep.subr.mxu0 0.0
    %3471 = vmatpush1.msra.mxu0 0.0
    %3472 = vmatprep.subr.mxu0 0.0
    %3473 = vmatpush1.msra.mxu0 0.0
    %3474 = vmatprep.subr.mxu0 0.0
    %3475 = vmatpush1.msra.mxu0 0.0
    %3476 = vmatprep.subr.mxu0 0.0
    %3477 = vmatpush1.msra.mxu0 0.0
    %3478 = vmatprep.subr.mxu0 0.0
    %3479 = vmatpush1.msra.mxu0 0.0
    %3480 = vmatprep.subr.mxu0 0.0
    %3481 = vmatpush1.msra.mxu0 0.0
    %3482 = vmatprep.subr.mxu0 0.0
    %3483 = vmatpush1.msra.mxu0 0.0
    %3484 = vmatprep.subr.mxu0 0.0
    %3485 = vmatpush1.msra.mxu0 0.0
    %3486 = vmatprep.subr.mxu0 0.0
    %3487 = vmatpush1.msra.mxu0 0.0
    %3488 = vmatprep.subr.mxu0 0.0
    %3489 = vmatpush1.msra.mxu0 0.0
    %3490 = vmatprep.subr.mxu0 0.0
    %3491 = vmatpush1.msra.mxu0 0.0
    %3492 = vmatprep.subr.mxu0 0.0
    %3493 = vmatpush1.msra.mxu0 0.0
    %3494 = vmatprep.subr.mxu0 0.0
    %3495 = vmatpush1.msra.mxu0 0.0
    %3496 = vmatprep.subr.mxu0 0.0
    %3497 = vmatpush1.msra.mxu0 0.0
    %3498 = vmatprep.subr.mxu0 0.0
    %3499 = vmatpush1.msra.mxu0 0.0
    %3500 = vmatprep.subr.mxu0 0.0
    %3501 = vmatpush1.msra.mxu0 0.0
    %3502 = vmatprep.subr.mxu0 0.0
    %3503 = vmatpush1.msra.mxu0 0.0
    %3504 = vmatprep.mubr.f32.mxu0 0.0
    %3505 = vmatmul.mubr.f32.gmra.mrb[0].mxu0 %v3438
    %v3506 = vpop.f32.mrb[0].mxu0
    %v3507 = vadd.f32 0.0, %v3506
    %v3508 = vpop.f32.mrb[0].mxu0
    %3509 = vdwg.mxu0
    %v3511 = vsel %vm1044, %v3422, 0
    %3513 = vmatprep.subr.mxu0 0.0
    %3514 = vmatpush1.msra.mxu0 %v2922
    %3515 = vmatprep.subr.mxu0 0.0
    %3516 = vmatpush1.msra.mxu0 0.0
    %3517 = vmatprep.subr.mxu0 0.0
    %3518 = vmatpush1.msra.mxu0 0.0
    %3519 = vmatprep.subr.mxu0 0.0
    %3520 = vmatpush1.msra.mxu0 0.0
    %3521 = vmatprep.subr.mxu0 0.0
    %3522 = vmatpush1.msra.mxu0 0.0
    %3523 = vmatprep.subr.mxu0 0.0
    %3524 = vmatpush1.msra.mxu0 0.0
    %3525 = vmatprep.subr.mxu0 0.0
    %3526 = vmatpush1.msra.mxu0 0.0
    %3527 = vmatprep.subr.mxu0 0.0
    %3528 = vmatpush1.msra.mxu0 0.0
    %3529 = vmatprep.subr.mxu0 0.0
    %3530 = vmatpush1.msra.mxu0 0.0
    %3531 = vmatprep.subr.mxu0 0.0
    %3532 = vmatpush1.msra.mxu0 0.0
    %3533 = vmatprep.subr.mxu0 0.0
    %3534 = vmatpush1.msra.mxu0 0.0
    %3535 = vmatprep.subr.mxu0 0.0
    %3536 = vmatpush1.msra.mxu0 0.0
    %3537 = vmatprep.subr.mxu0 0.0
    %3538 = vmatpush1.msra.mxu0 0.0
    %3539 = vmatprep.subr.mxu0 0.0
    %3540 = vmatpush1.msra.mxu0 0.0
    %3541 = vmatprep.subr.mxu0 0.0
    %3542 = vmatpush1.msra.mxu0 0.0
    %3543 = vmatprep.subr.mxu0 0.0
    %3544 = vmatpush1.msra.mxu0 0.0
    %3545 = vmatprep.subr.mxu0 0.0
    %3546 = vmatpush1.msra.mxu0 0.0
    %3547 = vmatprep.subr.mxu0 0.0
    %3548 = vmatpush1.msra.mxu0 0.0
    %3549 = vmatprep.subr.mxu0 0.0
    %3550 = vmatpush1.msra.mxu0 0.0
    %3551 = vmatprep.subr.mxu0 0.0
    %3552 = vmatpush1.msra.mxu0 0.0
    %3553 = vmatprep.subr.mxu0 0.0
    %3554 = vmatpush1.msra.mxu0 0.0
    %3555 = vmatprep.subr.mxu0 0.0
    %3556 = vmatpush1.msra.mxu0 0.0
    %3557 = vmatprep.subr.mxu0 0.0
    %3558 = vmatpush1.msra.mxu0 0.0
    %3559 = vmatprep.subr.mxu0 0.0
    %3560 = vmatpush1.msra.mxu0 0.0
    %3561 = vmatprep.subr.mxu0 0.0
    %3562 = vmatpush1.msra.mxu0 0.0
    %3563 = vmatprep.subr.mxu0 0.0
    %3564 = vmatpush1.msra.mxu0 0.0
    %3565 = vmatprep.subr.mxu0 0.0
    %3566 = vmatpush1.msra.mxu0 0.0
    %3567 = vmatprep.subr.mxu0 0.0
    %3568 = vmatpush1.msra.mxu0 0.0
    %3569 = vmatprep.subr.mxu0 0.0
    %3570 = vmatpush1.msra.mxu0 0.0
    %3571 = vmatprep.subr.mxu0 0.0
    %3572 = vmatpush1.msra.mxu0 0.0
    %3573 = vmatprep.subr.mxu0 0.0
    %3574 = vmatpush1.msra.mxu0 0.0
    %3575 = vmatprep.subr.mxu0 0.0
    %3576 = vmatpush1.msra.mxu0 0.0
    %3577 = vmatprep.mubr.f32.mxu0 0.0
    %3578 = vmatmul.mubr.f32.gmra.mrb[0].mxu0 %v3511
    %v3579 = vpop.f32.mrb[0].mxu0
    %v3580 = vadd.f32 0.0, %v3579
    %v3581 = vpop.f32.mrb[0].mxu0
    %3582 = vdwg.mxu0
    %v3584 = vsel %vm1044, %v3424, 0
    %3586 = vmatprep.subr.mxu0 0.0
    %3587 = vmatpush1.msra.mxu0 %v2992
    %3588 = vmatprep.subr.mxu0 0.0
    %3589 = vmatpush1.msra.mxu0 0.0
    %3590 = vmatprep.subr.mxu0 0.0
    %3591 = vmatpush1.msra.mxu0 0.0
    %3592 = vmatprep.subr.mxu0 0.0
    %3593 = vmatpush1.msra.mxu0 0.0
    %3594 = vmatprep.subr.mxu0 0.0
    %3595 = vmatpush1.msra.mxu0 0.0
    %3596 = vmatprep.subr.mxu0 0.0
    %3597 = vmatpush1.msra.mxu0 0.0
    %3598 = vmatprep.subr.mxu0 0.0
    %3599 = vmatpush1.msra.mxu0 0.0
    %3600 = vmatprep.subr.mxu0 0.0
    %3601 = vmatpush1.msra.mxu0 0.0
    %3602 = vmatprep.subr.mxu0 0.0
    %3603 = vmatpush1.msra.mxu0 0.0
    %3604 = vmatprep.subr.mxu0 0.0
    %3605 = vmatpush1.msra.mxu0 0.0
    %3606 = vmatprep.subr.mxu0 0.0
    %3607 = vmatpush1.msra.mxu0 0.0
    %3608 = vmatprep.subr.mxu0 0.0
    %3609 = vmatpush1.msra.mxu0 0.0
    %3610 = vmatprep.subr.mxu0 0.0
    %3611 = vmatpush1.msra.mxu0 0.0
    %3612 = vmatprep.subr.mxu0 0.0
    %3613 = vmatpush1.msra.mxu0 0.0
    %3614 = vmatprep.subr.mxu0 0.0
    %3615 = vmatpush1.msra.mxu0 0.0
    %3616 = vmatprep.subr.mxu0 0.0
    %3617 = vmatpush1.msra.mxu0 0.0
    %3618 = vmatprep.subr.mxu0 0.0
    %3619 = vmatpush1.msra.mxu0 0.0
    %3620 = vmatprep.subr.mxu0 0.0
    %3621 = vmatpush1.msra.mxu0 0.0
    %3622 = vmatprep.subr.mxu0 0.0
    %3623 = vmatpush1.msra.mxu0 0.0
    %3624 = vmatprep.subr.mxu0 0.0
    %3625 = vmatpush1.msra.mxu0 0.0
    %3626 = vmatprep.subr.mxu0 0.0
    %3627 = vmatpush1.msra.mxu0 0.0
    %3628 = vmatprep.subr.mxu0 0.0
    %3629 = vmatpush1.msra.mxu0 0.0
    %3630 = vmatprep.subr.mxu0 0.0
    %3631 = vmatpush1.msra.mxu0 0.0
    %3632 = vmatprep.subr.mxu0 0.0
    %3633 = vmatpush1.msra.mxu0 0.0
    %3634 = vmatprep.subr.mxu0 0.0
    %3635 = vmatpush1.msra.mxu0 0.0
    %3636 = vmatprep.subr.mxu0 0.0
    %3637 = vmatpush1.msra.mxu0 0.0
    %3638 = vmatprep.subr.mxu0 0.0
    %3639 = vmatpush1.msra.mxu0 0.0
    %3640 = vmatprep.subr.mxu0 0.0
    %3641 = vmatpush1.msra.mxu0 0.0
    %3642 = vmatprep.subr.mxu0 0.0
    %3643 = vmatpush1.msra.mxu0 0.0
    %3644 = vmatprep.subr.mxu0 0.0
    %3645 = vmatpush1.msra.mxu0 0.0
    %3646 = vmatprep.subr.mxu0 0.0
    %3647 = vmatpush1.msra.mxu0 0.0
    %3648 = vmatprep.subr.mxu0 0.0
    %3649 = vmatpush1.msra.mxu0 0.0
    %3650 = vmatprep.mubr.f32.mxu0 0.0
    %3651 = vmatmul.mubr.f32.gmra.mrb[0].mxu0 %v3584
    %v3652 = vpop.f32.mrb[0].mxu0
    %v3653 = vadd.f32 0.0, %v3652
    %v3654 = vpop.f32.mrb[0].mxu0
    %3655 = vdwg.mxu0
    %v3657 = vsel %vm1044, %v3426, 0
    %3659 = vmatprep.subr.mxu0 0.0
    %3660 = vmatpush1.msra.mxu0 %v3062
    %3661 = vmatprep.subr.mxu0 0.0
    %3662 = vmatpush1.msra.mxu0 0.0
    %3663 = vmatprep.subr.mxu0 0.0
    %3664 = vmatpush1.msra.mxu0 0.0
    %3665 = vmatprep.subr.mxu0 0.0
    %3666 = vmatpush1.msra.mxu0 0.0
    %3667 = vmatprep.subr.mxu0 0.0
    %3668 = vmatpush1.msra.mxu0 0.0
    %3669 = vmatprep.subr.mxu0 0.0
    %3670 = vmatpush1.msra.mxu0 0.0
    %3671 = vmatprep.subr.mxu0 0.0
    %3672 = vmatpush1.msra.mxu0 0.0
    %3673 = vmatprep.subr.mxu0 0.0
    %3674 = vmatpush1.msra.mxu0 0.0
    %3675 = vmatprep.subr.mxu0 0.0
    %3676 = vmatpush1.msra.mxu0 0.0
    %3677 = vmatprep.subr.mxu0 0.0
    %3678 = vmatpush1.msra.mxu0 0.0
    %3679 = vmatprep.subr.mxu0 0.0
    %3680 = vmatpush1.msra.mxu0 0.0
    %3681 = vmatprep.subr.mxu0 0.0
    %3682 = vmatpush1.msra.mxu0 0.0
    %3683 = vmatprep.subr.mxu0 0.0
    %3684 = vmatpush1.msra.mxu0 0.0
    %3685 = vmatprep.subr.mxu0 0.0
    %3686 = vmatpush1.msra.mxu0 0.0
    %3687 = vmatprep.subr.mxu0 0.0
    %3688 = vmatpush1.msra.mxu0 0.0
    %3689 = vmatprep.subr.mxu0 0.0
    %3690 = vmatpush1.msra.mxu0 0.0
    %3691 = vmatprep.subr.mxu0 0.0
    %3692 = vmatpush1.msra.mxu0 0.0
    %3693 = vmatprep.subr.mxu0 0.0
    %3694 = vmatpush1.msra.mxu0 0.0
    %3695 = vmatprep.subr.mxu0 0.0
    %3696 = vmatpush1.msra.mxu0 0.0
    %3697 = vmatprep.subr.mxu0 0.0
    %3698 = vmatpush1.msra.mxu0 0.0
    %3699 = vmatprep.subr.mxu0 0.0
    %3700 = vmatpush1.msra.mxu0 0.0
    %3701 = vmatprep.subr.mxu0 0.0
    %3702 = vmatpush1.msra.mxu0 0.0
    %3703 = vmatprep.subr.mxu0 0.0
    %3704 = vmatpush1.msra.mxu0 0.0
    %3705 = vmatprep.subr.mxu0 0.0
    %3706 = vmatpush1.msra.mxu0 0.0
    %3707 = vmatprep.subr.mxu0 0.0
    %3708 = vmatpush1.msra.mxu0 0.0
    %3709 = vmatprep.subr.mxu0 0.0
    %3710 = vmatpush1.msra.mxu0 0.0
    %3711 = vmatprep.subr.mxu0 0.0
    %3712 = vmatpush1.msra.mxu0 0.0
    %3713 = vmatprep.subr.mxu0 0.0
    %3714 = vmatpush1.msra.mxu0 0.0
    %3715 = vmatprep.subr.mxu0 0.0
    %3716 = vmatpush1.msra.mxu0 0.0
    %3717 = vmatprep.subr.mxu0 0.0
    %3718 = vmatpush1.msra.mxu0 0.0
    %3719 = vmatprep.subr.mxu0 0.0
    %3720 = vmatpush1.msra.mxu0 0.0
    %3721 = vmatprep.subr.mxu0 0.0
    %3722 = vmatpush1.msra.mxu0 0.0
    %3723 = vmatprep.mubr.f32.mxu0 0.0
    %3724 = vmatmul.mubr.f32.gmra.mrb[0].mxu0 %v3657
    %v3725 = vpop.f32.mrb[0].mxu0
    %v3726 = vadd.f32 0.0, %v3725
    %v3727 = vpop.f32.mrb[0].mxu0
    %3728 = vdwg.mxu0
    %v3730 = vsel %vm1044, %v3507, 0
    %3732 = vmatprep.subr.mxu0 0.0
    %3733 = vmatpush1.msra.mxu0 %v106
    %3734 = vmatprep.subr.mxu0 0.0
    %3735 = vmatpush1.msra.mxu0 0.0
    %3736 = vmatprep.subr.mxu0 0.0
    %3737 = vmatpush1.msra.mxu0 0.0
    %3738 = vmatprep.subr.mxu0 0.0
    %3739 = vmatpush1.msra.mxu0 0.0
    %3740 = vmatprep.subr.mxu0 0.0
    %3741 = vmatpush1.msra.mxu0 0.0
    %3742 = vmatprep.subr.mxu0 0.0
    %3743 = vmatpush1.msra.mxu0 0.0
    %3744 = vmatprep.subr.mxu0 0.0
    %3745 = vmatpush1.msra.mxu0 0.0
    %3746 = vmatprep.subr.mxu0 0.0
    %3747 = vmatpush1.msra.mxu0 0.0
    %3748 = vmatprep.subr.mxu0 0.0
    %3749 = vmatpush1.msra.mxu0 0.0
    %3750 = vmatprep.subr.mxu0 0.0
    %3751 = vmatpush1.msra.mxu0 0.0
    %3752 = vmatprep.subr.mxu0 0.0
    %3753 = vmatpush1.msra.mxu0 0.0
    %3754 = vmatprep.subr.mxu0 0.0
    %3755 = vmatpush1.msra.mxu0 0.0
    %3756 = vmatprep.subr.mxu0 0.0
    %3757 = vmatpush1.msra.mxu0 0.0
    %3758 = vmatprep.subr.mxu0 0.0
    %3759 = vmatpush1.msra.mxu0 0.0
    %3760 = vmatprep.subr.mxu0 0.0
    %3761 = vmatpush1.msra.mxu0 0.0
    %3762 = vmatprep.subr.mxu0 0.0
    %3763 = vmatpush1.msra.mxu0 0.0
    %3764 = vmatprep.subr.mxu0 0.0
    %3765 = vmatpush1.msra.mxu0 0.0
    %3766 = vmatprep.subr.mxu0 0.0
    %3767 = vmatpush1.msra.mxu0 0.0
    %3768 = vmatprep.subr.mxu0 0.0
    %3769 = vmatpush1.msra.mxu0 0.0
    %3770 = vmatprep.subr.mxu0 0.0
    %3771 = vmatpush1.msra.mxu0 0.0
    %3772 = vmatprep.subr.mxu0 0.0
    %3773 = vmatpush1.msra.mxu0 0.0
    %3774 = vmatprep.subr.mxu0 0.0
    %3775 = vmatpush1.msra.mxu0 0.0
    %3776 = vmatprep.subr.mxu0 0.0
    %3777 = vmatpush1.msra.mxu0 0.0
    %3778 = vmatprep.subr.mxu0 0.0
    %3779 = vmatpush1.msra.mxu0 0.0
    %3780 = vmatprep.subr.mxu0 0.0
    %3781 = vmatpush1.msra.mxu0 0.0
    %3782 = vmatprep.subr.mxu0 0.0
    %3783 = vmatpush1.msra.mxu0 0.0
    %3784 = vmatprep.subr.mxu0 0.0
    %3785 = vmatpush1.msra.mxu0 0.0
    %3786 = vmatprep.subr.mxu0 0.0
    %3787 = vmatpush1.msra.mxu0 0.0
    %3788 = vmatprep.subr.mxu0 0.0
    %3789 = vmatpush1.msra.mxu0 0.0
    %3790 = vmatprep.subr.mxu0 0.0
    %3791 = vmatpush1.msra.mxu0 0.0
    %3792 = vmatprep.subr.mxu0 0.0
    %3793 = vmatpush1.msra.mxu0 0.0
    %3794 = vmatprep.subr.mxu0 0.0
    %3795 = vmatpush1.msra.mxu0 0.0
    %3796 = vmatprep.mubr.f32.mxu0 0.0
    %3797 = vmatmul.mubr.f32.gmra.mrb[0].mxu0 %v3730
    %v3798 = vpop.f32.mrb[0].mxu0
    %v3799 = vadd.f32 0.0, %v3798
    %v3800 = vpop.f32.mrb[0].mxu0
    %3801 = vdwg.mxu0
    %v3803 = vsel %vm1044, %v3580, 0
    %3805 = vmatprep.subr.mxu0 0.0
    %3806 = vmatpush1.msra.mxu0 %v107
    %3807 = vmatprep.subr.mxu0 0.0
    %3808 = vmatpush1.msra.mxu0 0.0
    %3809 = vmatprep.subr.mxu0 0.0
    %3810 = vmatpush1.msra.mxu0 0.0
    %3811 = vmatprep.subr.mxu0 0.0
    %3812 = vmatpush1.msra.mxu0 0.0
    %3813 = vmatprep.subr.mxu0 0.0
    %3814 = vmatpush1.msra.mxu0 0.0
    %3815 = vmatprep.subr.mxu0 0.0
    %3816 = vmatpush1.msra.mxu0 0.0
    %3817 = vmatprep.subr.mxu0 0.0
    %3818 = vmatpush1.msra.mxu0 0.0
    %3819 = vmatprep.subr.mxu0 0.0
    %3820 = vmatpush1.msra.mxu0 0.0
    %3821 = vmatprep.subr.mxu0 0.0
    %3822 = vmatpush1.msra.mxu0 0.0
    %3823 = vmatprep.subr.mxu0 0.0
    %3824 = vmatpush1.msra.mxu0 0.0
    %3825 = vmatprep.subr.mxu0 0.0
    %3826 = vmatpush1.msra.mxu0 0.0
    %3827 = vmatprep.subr.mxu0 0.0
    %3828 = vmatpush1.msra.mxu0 0.0
    %3829 = vmatprep.subr.mxu0 0.0
    %3830 = vmatpush1.msra.mxu0 0.0
    %3831 = vmatprep.subr.mxu0 0.0
    %3832 = vmatpush1.msra.mxu0 0.0
    %3833 = vmatprep.subr.mxu0 0.0
    %3834 = vmatpush1.msra.mxu0 0.0
    %3835 = vmatprep.subr.mxu0 0.0
    %3836 = vmatpush1.msra.mxu0 0.0
    %3837 = vmatprep.subr.mxu0 0.0
    %3838 = vmatpush1.msra.mxu0 0.0
    %3839 = vmatprep.subr.mxu0 0.0
    %3840 = vmatpush1.msra.mxu0 0.0
    %3841 = vmatprep.subr.mxu0 0.0
    %3842 = vmatpush1.msra.mxu0 0.0
    %3843 = vmatprep.subr.mxu0 0.0
    %3844 = vmatpush1.msra.mxu0 0.0
    %3845 = vmatprep.subr.mxu0 0.0
    %3846 = vmatpush1.msra.mxu0 0.0
    %3847 = vmatprep.subr.mxu0 0.0
    %3848 = vmatpush1.msra.mxu0 0.0
    %3849 = vmatprep.subr.mxu0 0.0
    %3850 = vmatpush1.msra.mxu0 0.0
    %3851 = vmatprep.subr.mxu0 0.0
    %3852 = vmatpush1.msra.mxu0 0.0
    %3853 = vmatprep.subr.mxu0 0.0
    %3854 = vmatpush1.msra.mxu0 0.0
    %3855 = vmatprep.subr.mxu0 0.0
    %3856 = vmatpush1.msra.mxu0 0.0
    %3857 = vmatprep.subr.mxu0 0.0
    %3858 = vmatpush1.msra.mxu0 0.0
    %3859 = vmatprep.subr.mxu0 0.0
    %3860 = vmatpush1.msra.mxu0 0.0
    %3861 = vmatprep.subr.mxu0 0.0
    %3862 = vmatpush1.msra.mxu0 0.0
    %3863 = vmatprep.subr.mxu0 0.0
    %3864 = vmatpush1.msra.mxu0 0.0
    %3865 = vmatprep.subr.mxu0 0.0
    %3866 = vmatpush1.msra.mxu0 0.0
    %3867 = vmatprep.subr.mxu0 0.0
    %3868 = vmatpush1.msra.mxu0 0.0
    %3869 = vmatprep.mubr.f32.mxu0 0.0
    %3870 = vmatmul.mubr.f32.gmra.mrb[0].mxu0 %v3803
    %v3871 = vpop.f32.mrb[0].mxu0
    %v3872 = vadd.f32 0.0, %v3871
    %v3873 = vpop.f32.mrb[0].mxu0
    %3874 = vdwg.mxu0
    %v3876 = vsel %vm1044, %v3653, 0
    %3878 = vmatprep.subr.mxu0 0.0
    %3879 = vmatpush1.msra.mxu0 %v108
    %3880 = vmatprep.subr.mxu0 0.0
    %3881 = vmatpush1.msra.mxu0 0.0
    %3882 = vmatprep.subr.mxu0 0.0
    %3883 = vmatpush1.msra.mxu0 0.0
    %3884 = vmatprep.subr.mxu0 0.0
    %3885 = vmatpush1.msra.mxu0 0.0
    %3886 = vmatprep.subr.mxu0 0.0
    %3887 = vmatpush1.msra.mxu0 0.0
    %3888 = vmatprep.subr.mxu0 0.0
    %3889 = vmatpush1.msra.mxu0 0.0
    %3890 = vmatprep.subr.mxu0 0.0
    %3891 = vmatpush1.msra.mxu0 0.0
    %3892 = vmatprep.subr.mxu0 0.0
    %3893 = vmatpush1.msra.mxu0 0.0
    %3894 = vmatprep.subr.mxu0 0.0
    %3895 = vmatpush1.msra.mxu0 0.0
    %3896 = vmatprep.subr.mxu0 0.0
    %3897 = vmatpush1.msra.mxu0 0.0
    %3898 = vmatprep.subr.mxu0 0.0
    %3899 = vmatpush1.msra.mxu0 0.0
    %3900 = vmatprep.subr.mxu0 0.0
    %3901 = vmatpush1.msra.mxu0 0.0
    %3902 = vmatprep.subr.mxu0 0.0
    %3903 = vmatpush1.msra.mxu0 0.0
    %3904 = vmatprep.subr.mxu0 0.0
    %3905 = vmatpush1.msra.mxu0 0.0
    %3906 = vmatprep.subr.mxu0 0.0
    %3907 = vmatpush1.msra.mxu0 0.0
    %3908 = vmatprep.subr.mxu0 0.0
    %3909 = vmatpush1.msra.mxu0 0.0
    %3910 = vmatprep.subr.mxu0 0.0
    %3911 = vmatpush1.msra.mxu0 0.0
    %3912 = vmatprep.subr.mxu0 0.0
    %3913 = vmatpush1.msra.mxu0 0.0
    %3914 = vmatprep.subr.mxu0 0.0
    %3915 = vmatpush1.msra.mxu0 0.0
    %3916 = vmatprep.subr.mxu0 0.0
    %3917 = vmatpush1.msra.mxu0 0.0
    %3918 = vmatprep.subr.mxu0 0.0
    %3919 = vmatpush1.msra.mxu0 0.0
    %3920 = vmatprep.subr.mxu0 0.0
    %3921 = vmatpush1.msra.mxu0 0.0
    %3922 = vmatprep.subr.mxu0 0.0
    %3923 = vmatpush1.msra.mxu0 0.0
    %3924 = vmatprep.subr.mxu0 0.0
    %3925 = vmatpush1.msra.mxu0 0.0
    %3926 = vmatprep.subr.mxu0 0.0
    %3927 = vmatpush1.msra.mxu0 0.0
    %3928 = vmatprep.subr.mxu0 0.0
    %3929 = vmatpush1.msra.mxu0 0.0
    %3930 = vmatprep.subr.mxu0 0.0
    %3931 = vmatpush1.msra.mxu0 0.0
    %3932 = vmatprep.subr.mxu0 0.0
    %3933 = vmatpush1.msra.mxu0 0.0
    %3934 = vmatprep.subr.mxu0 0.0
    %3935 = vmatpush1.msra.mxu0 0.0
    %3936 = vmatprep.subr.mxu0 0.0
    %3937 = vmatpush1.msra.mxu0 0.0
    %3938 = vmatprep.subr.mxu0 0.0
    %3939 = vmatpush1.msra.mxu0 0.0
    %3940 = vmatprep.subr.mxu0 0.0
    %3941 = vmatpush1.msra.mxu0 0.0
    %3942 = vmatprep.mubr.f32.mxu0 0.0
    %3943 = vmatmul.mubr.f32.gmra.mrb[0].mxu0 %v3876
    %v3944 = vpop.f32.mrb[0].mxu0
    %v3945 = vadd.f32 0.0, %v3944
    %v3946 = vpop.f32.mrb[0].mxu0
    %3947 = vdwg.mxu0
    %v3949 = vsel %vm1044, %v3726, 0
    %3951 = vmatprep.subr.mxu0 0.0
    %3952 = vmatpush1.msra.mxu0 %v109
    %3953 = vmatprep.subr.mxu0 0.0
    %3954 = vmatpush1.msra.mxu0 0.0
    %3955 = vmatprep.subr.mxu0 0.0
    %3956 = vmatpush1.msra.mxu0 0.0
    %3957 = vmatprep.subr.mxu0 0.0
    %3958 = vmatpush1.msra.mxu0 0.0
    %3959 = vmatprep.subr.mxu0 0.0
    %3960 = vmatpush1.msra.mxu0 0.0
    %3961 = vmatprep.subr.mxu0 0.0
    %3962 = vmatpush1.msra.mxu0 0.0
    %3963 = vmatprep.subr.mxu0 0.0
    %3964 = vmatpush1.msra.mxu0 0.0
    %3965 = vmatprep.subr.mxu0 0.0
    %3966 = vmatpush1.msra.mxu0 0.0
    %3967 = vmatprep.subr.mxu0 0.0
    %3968 = vmatpush1.msra.mxu0 0.0
    %3969 = vmatprep.subr.mxu0 0.0
    %3970 = vmatpush1.msra.mxu0 0.0
    %3971 = vmatprep.subr.mxu0 0.0
    %3972 = vmatpush1.msra.mxu0 0.0
    %3973 = vmatprep.subr.mxu0 0.0
    %3974 = vmatpush1.msra.mxu0 0.0
    %3975 = vmatprep.subr.mxu0 0.0
    %3976 = vmatpush1.msra.mxu0 0.0
    %3977 = vmatprep.subr.mxu0 0.0
    %3978 = vmatpush1.msra.mxu0 0.0
    %3979 = vmatprep.subr.mxu0 0.0
    %3980 = vmatpush1.msra.mxu0 0.0
    %3981 = vmatprep.subr.mxu0 0.0
    %3982 = vmatpush1.msra.mxu0 0.0
    %3983 = vmatprep.subr.mxu0 0.0
    %3984 = vmatpush1.msra.mxu0 0.0
    %3985 = vmatprep.subr.mxu0 0.0
    %3986 = vmatpush1.msra.mxu0 0.0
    %3987 = vmatprep.subr.mxu0 0.0
    %3988 = vmatpush1.msra.mxu0 0.0
    %3989 = vmatprep.subr.mxu0 0.0
    %3990 = vmatpush1.msra.mxu0 0.0
    %3991 = vmatprep.subr.mxu0 0.0
    %3992 = vmatpush1.msra.mxu0 0.0
    %3993 = vmatprep.subr.mxu0 0.0
    %3994 = vmatpush1.msra.mxu0 0.0
    %3995 = vmatprep.subr.mxu0 0.0
    %3996 = vmatpush1.msra.mxu0 0.0
    %3997 = vmatprep.subr.mxu0 0.0
    %3998 = vmatpush1.msra.mxu0 0.0
    %3999 = vmatprep.subr.mxu0 0.0
    %4000 = vmatpush1.msra.mxu0 0.0
    %4001 = vmatprep.subr.mxu0 0.0
    %4002 = vmatpush1.msra.mxu0 0.0
    %4003 = vmatprep.subr.mxu0 0.0
    %4004 = vmatpush1.msra.mxu0 0.0
    %4005 = vmatprep.subr.mxu0 0.0
    %4006 = vmatpush1.msra.mxu0 0.0
    %4007 = vmatprep.subr.mxu0 0.0
    %4008 = vmatpush1.msra.mxu0 0.0
    %4009 = vmatprep.subr.mxu0 0.0
    %4010 = vmatpush1.msra.mxu0 0.0
    %4011 = vmatprep.subr.mxu0 0.0
    %4012 = vmatpush1.msra.mxu0 0.0
    %4013 = vmatprep.subr.mxu0 0.0
    %4014 = vmatpush1.msra.mxu0 0.0
    %4015 = vmatprep.mubr.f32.mxu0 0.0
    %4016 = vmatmul.mubr.f32.gmra.mrb[0].mxu0 %v3949
    %v4017 = vpop.f32.mrb[0].mxu0
    %v4018 = vadd.f32 0.0, %v4017
    %v4019 = vpop.f32.mrb[0].mxu0
    %4020 = vdwg.mxu0
    %v4021 = vsel %vm149, %v3799, 0.0
    %v4022 = vsel %vm149, %v3872, 0.0
    %v4023 = vadd.f32 %v4021, %v4022
    %v4024 = vsel %vm149, %v3945, 0.0
    %v4025 = vadd.f32 %v4023, %v4024
    %v4026 = vsel %vm149, %v4018, 0.0
    %v4027 = vadd.f32 %v4025, %v4026
    %v4028 = vadd.f32 %v4027, %v2011
    %v4029 = vadd.f32 %v37, %v4028
    %v4030 = vsel %vm149, %v4029, 0.0
    %4031 = vadd.xlane.f32.xlu0 %v4030
    %v4032 = vpop.xlane.xlu0 %4031
    %v4033 = vmul.f32 %v4032, %v2017
    %v4034 = vsub.f32 %v4029, %v4033
    %v4035 = vmul.f32 %v4034, %v4034
    %v4036 = vsel %vm149, %v4035, 0.0
    %4037 = vadd.xlane.f32.xlu0 %v4036
    %v4038 = vpop.xlane.xlu0 %4037
    %v4039 = vmul.f32 %v4038, %v2017
    %v4040 = vadd.f32 %v4039, 1e-05
    %v4041 = vrsqrt.pop %v4040
    %v4042 = vmul.f32 %v4034, %v4041
    %v4043 = vmul.f32 %v4042, %v2031
    %v4044 = vadd.f32 %v4043, %v2036
    %v4046 = vsel %vm149, %v4044, 0
    %4048 = vmatprep.subr.mxu0 0.0
    %4049 = vmatpush1.msra.mxu0 %v111
    %4050 = vmatprep.subr.mxu0 0.0
    %4051 = vmatpush1.msra.mxu0 %v112
    %4052 = vmatprep.subr.mxu0 0.0
    %4053 = vmatpush1.msra.mxu0 %v113
    %4054 = vmatprep.subr.mxu0 0.0
    %4055 = vmatpush1.msra.mxu0 %v114
    %4056 = vmatprep.subr.mxu0 0.0
    %4057 = vmatpush1.msra.mxu0 0.0
    %4058 = vmatprep.subr.mxu0 0.0
    %4059 = vmatpush1.msra.mxu0 0.0
    %4060 = vmatprep.subr.mxu0 0.0
    %4061 = vmatpush1.msra.mxu0 0.0
    %4062 = vmatprep.subr.mxu0 0.0
    %4063 = vmatpush1.msra.mxu0 0.0
    %4064 = vmatprep.subr.mxu0 0.0
    %4065 = vmatpush1.msra.mxu0 0.0
    %4066 = vmatprep.subr.mxu0 0.0
    %4067 = vmatpush1.msra.mxu0 0.0
    %4068 = vmatprep.subr.mxu0 0.0
    %4069 = vmatpush1.msra.mxu0 0.0
    %4070 = vmatprep.subr.mxu0 0.0
    %4071 = vmatpush1.msra.mxu0 0.0
    %4072 = vmatprep.subr.mxu0 0.0
    %4073 = vmatpush1.msra.mxu0 0.0
    %4074 = vmatprep.subr.mxu0 0.0
    %4075 = vmatpush1.msra.mxu0 0.0
    %4076 = vmatprep.subr.mxu0 0.0
    %4077 = vmatpush1.msra.mxu0 0.0
    %4078 = vmatprep.subr.mxu0 0.0
    %4079 = vmatpush1.msra.mxu0 0.0
    %4080 = vmatprep.subr.mxu0 0.0
    %4081 = vmatpush1.msra.mxu0 0.0
    %4082 = vmatprep.subr.mxu0 0.0
    %4083 = vmatpush1.msra.mxu0 0.0
    %4084 = vmatprep.subr.mxu0 0.0
    %4085 = vmatpush1.msra.mxu0 0.0
    %4086 = vmatprep.subr.mxu0 0.0
    %4087 = vmatpush1.msra.mxu0 0.0
    %4088 = vmatprep.subr.mxu0 0.0
    %4089 = vmatpush1.msra.mxu0 0.0
    %4090 = vmatprep.subr.mxu0 0.0
    %4091 = vmatpush1.msra.mxu0 0.0
    %4092 = vmatprep.subr.mxu0 0.0
    %4093 = vmatpush1.msra.mxu0 0.0
    %4094 = vmatprep.subr.mxu0 0.0
    %4095 = vmatpush1.msra.mxu0 0.0
    %4096 = vmatprep.subr.mxu0 0.0
    %4097 = vmatpush1.msra.mxu0 0.0
    %4098 = vmatprep.subr.mxu0 0.0
    %4099 = vmatpush1.msra.mxu0 0.0
    %4100 = vmatprep.subr.mxu0 0.0
    %4101 = vmatpush1.msra.mxu0 0.0
    %4102 = vmatprep.subr.mxu0 0.0
    %4103 = vmatpush1.msra.mxu0 0.0
    %4104 = vmatprep.subr.mxu0 0.0
    %4105 = vmatpush1.msra.mxu0 0.0
    %4106 = vmatprep.subr.mxu0 0.0
    %4107 = vmatpush1.msra.mxu0 0.0
    %4108 = vmatprep.subr.mxu0 0.0
    %4109 = vmatpush1.msra.mxu0 0.0
    %4110 = vmatprep.subr.mxu0 0.0
    %4111 = vmatpush1.msra.mxu0 0.0
    %4112 = vmatprep.mubr.f32.mxu0 0.0
    %4113 = vmatmul.mubr.f32.gmra.mrb[0].mxu0 %v4046
    %v4114 = vpop.f32.mrb[0].mxu0
    %v4115 = vadd.f32 %v2041, %v4114
    %v4116 = vpop.f32.mrb[0].mxu0
    %4117 = vdwg.mxu0
    %v4118 = vmax.f32 %v4115, 0.0
    %v4120 = vsel %vm2120, %v4118, 0
    %4122 = vmatprep.subr.mxu0 0.0
    %4123 = vmatpush1.msra.mxu0 %v116
    %4124 = vmatprep.subr.mxu0 0.0
    %4125 = vmatpush1.msra.mxu0 %v117
    %4126 = vmatprep.subr.mxu0 0.0
    %4127 = vmatpush1.msra.mxu0 %v118
    %4128 = vmatprep.subr.mxu0 0.0
    %4129 = vmatpush1.msra.mxu0 %v119
    %4130 = vmatprep.subr.mxu0 0.0
    %4131 = vmatpush1.msra.mxu0 %v120
    %4132 = vmatprep.subr.mxu0 0.0
    %4133 = vmatpush1.msra.mxu0 %v121
    %4134 = vmatprep.subr.mxu0 0.0
    %4135 = vmatpush1.msra.mxu0 %v122
    %4136 = vmatprep.subr.mxu0 0.0
    %4137 = vmatpush1.msra.mxu0 %v123
    %4138 = vmatprep.subr.mxu0 0.0
    %4139 = vmatpush1.msra.mxu0 0.0
    %4140 = vmatprep.subr.mxu0 0.0
    %4141 = vmatpush1.msra.mxu0 0.0
    %4142 = vmatprep.subr.mxu0 0.0
    %4143 = vmatpush1.msra.mxu0 0.0
    %4144 = vmatprep.subr.mxu0 0.0
    %4145 = vmatpush1.msra.mxu0 0.0
    %4146 = vmatprep.subr.mxu0 0.0
    %4147 = vmatpush1.msra.mxu0 0.0
    %4148 = vmatprep.subr.mxu0 0.0
    %4149 = vmatpush1.msra.mxu0 0.0
    %4150 = vmatprep.subr.mxu0 0.0
    %4151 = vmatpush1.msra.mxu0 0.0
    %4152 = vmatprep.subr.mxu0 0.0
    %4153 = vmatpush1.msra.mxu0 0.0
    %4154 = vmatprep.subr.mxu0 0.0
    %4155 = vmatpush1.msra.mxu0 0.0
    %4156 = vmatprep.subr.mxu0 0.0
    %4157 = vmatpush1.msra.mxu0 0.0
    %4158 = vmatprep.subr.mxu0 0.0
    %4159 = vmatpush1.msra.mxu0 0.0
    %4160 = vmatprep.subr.mxu0 0.0
    %4161 = vmatpush1.msra.mxu0 0.0
    %4162 = vmatprep.subr.mxu0 0.0
    %4163 = vmatpush1.msra.mxu0 0.0
    %4164 = vmatprep.subr.mxu0 0.0
    %4165 = vmatpush1.msra.mxu0 0.0
    %4166 = vmatprep.subr.mxu0 0.0
    %4167 = vmatpush1.msra.mxu0 0.0
    %4168 = vmatprep.subr.mxu0 0.0
    %4169 = vmatpush1.msra.mxu0 0.0
    %4170 = vmatprep.subr.mxu0 0.0
    %4171 = vmatpush1.msra.mxu0 0.0
    %4172 = vmatprep.subr.mxu0 0.0
    %4173 = vmatpush1.msra.mxu0 0.0
    %4174 = vmatprep.subr.mxu0 0.0
    %4175 = vmatpush1.msra.mxu0 0.0
    %4176 = vmatprep.subr.mxu0 0.0
    %4177 = vmatpush1.msra.mxu0 0.0
    %4178 = vmatprep.subr.mxu0 0.0
    %4179 = vmatpush1.msra.mxu0 0.0
    %4180 = vmatprep.subr.mxu0 0.0
    %4181 = vmatpush1.msra.mxu0 0.0
    %4182 = vmatprep.subr.mxu0 0.0
    %4183 = vmatpush1.msra.mxu0 0.0
    %4184 = vmatprep.subr.mxu0 0.0
    %4185 = vmatpush1.msra.mxu0 0.0
    %4186 = vmatprep.mubr.f32.mxu0 0.0
    %4187 = vmatmul.mubr.f32.gmra.mrb[0].mxu0 %v4120
    %v4188 = vpop.f32.mrb[0].mxu0
    %v4189 = vadd.f32 %v2119, %v4188
    %v4190 = vpop.f32.mrb[0].mxu0
    %4191 = vdwg.mxu0
    %v4192 = vadd.f32 %v4044, %v4189
    %v4193 = vsel %vm149, %v4192, 0.0
    %4194 = vadd.xlane.f32.xlu0 %v4193
    %v4195 = vpop.xlane.xlu0 %4194
    %v4196 = vmul.f32 %v4195, %v2017
    %v4197 = vsub.f32 %v4192, %v4196
    %v4198 = vmul.f32 %v4197, %v4197
    %v4199 = vsel %vm149, %v4198, 0.0
    %4200 = vadd.xlane.f32.xlu0 %v4199
    %v4201 = vpop.xlane.xlu0 %4200
    %v4202 = vmul.f32 %v4201, %v2017
    %v4203 = vadd.f32 %v4202, 1e-05
    %v4204 = vrsqrt.pop %v4203
    %v4205 = vmul.f32 %v4197, %v4204
    %v4206 = vmul.f32 %v4205, %v2211
    %v4207 = vadd.f32 %v4206, %v2216
    %s4208 = scalar_lea.vmem %s3, 384
    %v4209 = vld [vmem:[%s4208] sm:$0xff]
    %v4210 = vld [vmem:[%s4208 + $0x8] sm:$0xff]
    %v4211 = vld [vmem:[%s4208 + $0x10] sm:$0xff]
    %v4212 = vld [vmem:[%s4208 + $0x18] sm:$0xff]
    %v4213 = vld [vmem:[%s4208 + $0x20] sm:$0xff]
    %v4214 = vld [vmem:[%s4208 + $0x28] sm:$0xff]
    %v4215 = vld [vmem:[%s4208 + $0x30] sm:$0xff]
    %v4216 = vld [vmem:[%s4208 + $0x38] sm:$0xff]
    %v4217 = vld [vmem:[%s4208 + $0x40] sm:$0xff]
    %v4218 = vld [vmem:[%s4208 + $0x48] sm:$0xff]
    %v4219 = vld [vmem:[%s4208 + $0x50] sm:$0xff]
    %v4220 = vld [vmem:[%s4208 + $0x58] sm:$0xff]
    %v4221 = vld [vmem:[%s4208 + $0x60] sm:$0xff]
    %v4222 = vld [vmem:[%s4208 + $0x68] sm:$0xff]
    %v4223 = vld [vmem:[%s4208 + $0x70] sm:$0xff]
    %v4224 = vld [vmem:[%s4208 + $0x78] sm:$0xff]
    %v4225 = vld [vmem:[%s4208 + $0x80] sm:$0xff]
    %v4226 = vld [vmem:[%s4208 + $0x88] sm:$0xff]
    %v4227 = vld [vmem:[%s4208 + $0x90] sm:$0xff]
    %v4228 = vld [vmem:[%s4208 + $0x98] sm:$0xff]
    %v4229 = vld [vmem:[%s4208 + $0xa0] sm:$0xff]
    %v4230 = vld [vmem:[%s4208 + $0xa8] sm:$0xff]
    %v4231 = vld [vmem:[%s4208 + $0xb0] sm:$0xff]
    %v4232 = vld [vmem:[%s4208 + $0xb8] sm:$0xff]
    %v4233 = vld [vmem:[%s4208 + $0xc0] sm:$0xff]
    %v4234 = vld [vmem:[%s4208 + $0xc8] sm:$0xff]
    %v4235 = vld [vmem:[%s4208 + $0xd0] sm:$0xff]
    %v4236 = vld [vmem:[%s4208 + $0xd8] sm:$0xff]
    %v4237 = vld [vmem:[%s4208 + $0xe0] sm:$0xff]
    %v4238 = vld [vmem:[%s4208 + $0xe8] sm:$0xff]
    %v4239 = vld [vmem:[%s4208 + $0xf0] sm:$0xff]
    %v4240 = vld [vmem:[%s4208 + $0xf8] sm:$0xff]
    %v4241 = vld [vmem:[%s4208 + $0x100] sm:$0xff]
    %v4242 = vld [vmem:[%s4208 + $0x108] sm:$0xff]
    %v4243 = vld [vmem:[%s4208 + $0x110] sm:$0xff]
    %v4244 = vld [vmem:[%s4208 + $0x118] sm:$0xff]
    %v4245 = vld [vmem:[%s4208 + $0x120] sm:$0xff]
    %v4246 = vld [vmem:[%s4208 + $0x128] sm:$0xff]
    %v4247 = vld [vmem:[%s4208 + $0x130] sm:$0xff]
    %v4248 = vld [vmem:[%s4208 + $0x138] sm:$0xff]
    %v4249 = vld [vmem:[%s4208 + $0x140] sm:$0xff]
    %v4250 = vld [vmem:[%s4208 + $0x148] sm:$0xff]
    %v4251 = vld [vmem:[%s4208 + $0x150] sm:$0xff]
    %v4252 = vld [vmem:[%s4208 + $0x158] sm:$0xff]
    %v4253 = vld [vmem:[%s4208 + $0x160] sm:$0xff]
    %v4254 = vld [vmem:[%s4208 + $0x168] sm:$0xff]
    %v4255 = vld [vmem:[%s4208 + $0x170] sm:$0xff]
    %v4256 = vld [vmem:[%s4208 + $0x178] sm:$0xff]
    %s4257 = scalar_lea.vmem %s4, 12
    %v4258 = vld [vmem:[%s4257] sm:$0x1]
    %v4259 = vld [vmem:[%s4257 + $0x1] sm:$0x1]
    %v4260 = vld [vmem:[%s4257 + $0x2] sm:$0x1]
    %v4261 = vld [vmem:[%s4257 + $0x3] sm:$0x1]
    %v4262 = vld [vmem:[%s4257 + $0x4] sm:$0x1]
    %v4263 = vld [vmem:[%s4257 + $0x5] sm:$0x1]
    %v4264 = vld [vmem:[%s4257 + $0x6] sm:$0x1]
    %v4265 = vld [vmem:[%s4257 + $0x7] sm:$0x1]
    %v4266 = vld [vmem:[%s4257 + $0x8] sm:$0x1]
    %v4267 = vld [vmem:[%s4257 + $0x9] sm:$0x1]
    %v4268 = vld [vmem:[%s4257 + $0xa] sm:$0x1]
    %v4269 = vld [vmem:[%s4257 + $0xb] sm:$0x1]
    %s4270 = scalar_lea.vmem %s5, 32
    %v4271 = vld [vmem:[%s4270] sm:$0xff]
    %v4272 = vld [vmem:[%s4270 + $0x8] sm:$0xff]
    %v4273 = vld [vmem:[%s4270 + $0x10] sm:$0xff]
    %v4274 = vld [vmem:[%s4270 + $0x18] sm:$0xff]
    %s4275 = scalar_lea.vmem %s6, 8
    %v4276 = vld [vmem:[%s4275] sm:$0x3f]
    %s4277 = scalar_lea.vmem %s7, 40
    %v4278 = vld [vmem:[%s4277] sm:$0xff]
    %v4279 = vld [vmem:[%s4277 + $0x8] sm:$0xff]
    %v4280 = vld [vmem:[%s4277 + $0x10] sm:$0xff]
    %v4281 = vld [vmem:[%s4277 + $0x18] sm:$0xff]
    %v4282 = vld [vmem:[%s4277 + $0x20] sm:$0x1]
    %s4283 = scalar_lea.vmem %s8, 64
    %v4284 = vld [vmem:[%s4283] sm:$0xff]
    %v4285 = vld [vmem:[%s4283 + $0x8] sm:$0xff]
    %v4286 = vld [vmem:[%s4283 + $0x10] sm:$0xff]
    %v4287 = vld [vmem:[%s4283 + $0x18] sm:$0xff]
    %v4288 = vld [vmem:[%s4283 + $0x20] sm:$0xff]
    %v4289 = vld [vmem:[%s4283 + $0x28] sm:$0xff]
    %v4290 = vld [vmem:[%s4283 + $0x30] sm:$0xff]
    %v4291 = vld [vmem:[%s4283 + $0x38] sm:$0xff]
    %v4292 = vadd.f32 %v2217, %v38
    %v4297 = vlaneseq
    %v4298 = vshrl.u32 %v4297, 7
    %v4299 = vsub.s32 0, %v4298
    %v4300 = vrot.slane %v4258, %v4299
    %v4301 = vlaneseq
    %v4302 = vshrl.u32 %v4301, 7
    %v4303 = vsub.s32 0, %v4302
    %v4304 = vrot.slane %v4259, %v4303
    %v4305 = vlaneseq
    %v4306 = vshrl.u32 %v4305, 7
    %v4307 = vsub.s32 0, %v4306
    %v4308 = vrot.slane %v4260, %v4307
    %v4309 = vlaneseq
    %v4310 = vshrl.u32 %v4309, 7
    %v4311 = vsub.s32 0, %v4310
    %v4312 = vrot.slane %v4261, %v4311
    %v4318 = vsel %vm149, %v4292, 0
    %4320 = vmatprep.subr.mxu0 0.0
    %4321 = vmatpush1.msra.mxu0 %v4209
    %4322 = vmatprep.subr.mxu0 0.0
    %4323 = vmatpush1.msra.mxu0 %v4210
    %4324 = vmatprep.subr.mxu0 0.0
    %4325 = vmatpush1.msra.mxu0 %v4211
    %4326 = vmatprep.subr.mxu0 0.0
    %4327 = vmatpush1.msra.mxu0 %v4212
    %4328 = vmatprep.subr.mxu0 0.0
    %4329 = vmatpush1.msra.mxu0 0.0
    %4330 = vmatprep.subr.mxu0 0.0
    %4331 = vmatpush1.msra.mxu0 0.0
    %4332 = vmatprep.subr.mxu0 0.0
    %4333 = vmatpush1.msra.mxu0 0.0
    %4334 = vmatprep.subr.mxu0 0.0
    %4335 = vmatpush1.msra.mxu0 0.0
    %4336 = vmatprep.subr.mxu0 0.0
    %4337 = vmatpush1.msra.mxu0 0.0
    %4338 = vmatprep.subr.mxu0 0.0
    %4339 = vmatpush1.msra.mxu0 0.0
    %4340 = vmatprep.subr.mxu0 0.0
    %4341 = vmatpush1.msra.mxu0 0.0
    %4342 = vmatprep.subr.mxu0 0.0
    %4343 = vmatpush1.msra.mxu0 0.0
    %4344 = vmatprep.subr.mxu0 0.0
    %4345 = vmatpush1.msra.mxu0 0.0
    %4346 = vmatprep.subr.mxu0 0.0
    %4347 = vmatpush1.msra.mxu0 0.0
    %4348 = vmatprep.subr.mxu0 0.0
    %4349 = vmatpush1.msra.mxu0 0.0
    %4350 = vmatprep.subr.mxu0 0.0
    %4351 = vmatpush1.msra.mxu0 0.0
    %4352 = vmatprep.subr.mxu0 0.0
    %4353 = vmatpush1.msra.mxu0 0.0
    %4354 = vmatprep.subr.mxu0 0.0
    %4355 = vmatpush1.msra.mxu0 0.0
    %4356 = vmatprep.subr.mxu0 0.0
    %4357 = vmatpush1.msra.mxu0 0.0
    %4358 = vmatprep.subr.mxu0 0.0
    %4359 = vmatpush1.msra.mxu0 0.0
    %4360 = vmatprep.subr.mxu0 0.0
    %4361 = vmatpush1.msra.mxu0 0.0
    %4362 = vmatprep.subr.mxu0 0.0
    %4363 = vmatpush1.msra.mxu0 0.0
    %4364 = vmatprep.subr.mxu0 0.0
    %4365 = vmatpush1.msra.mxu0 0.0
    %4366 = vmatprep.subr.mxu0 0.0
    %4367 = vmatpush1.msra.mxu0 0.0
    %4368 = vmatprep.subr.mxu0 0.0
    %4369 = vmatpush1.msra.mxu0 0.0
    %4370 = vmatprep.subr.mxu0 0.0
    %4371 = vmatpush1.msra.mxu0 0.0
    %4372 = vmatprep.subr.mxu0 0.0
    %4373 = vmatpush1.msra.mxu0 0.0
    %4374 = vmatprep.subr.mxu0 0.0
    %4375 = vmatpush1.msra.mxu0 0.0
    %4376 = vmatprep.subr.mxu0 0.0
    %4377 = vmatpush1.msra.mxu0 0.0
    %4378 = vmatprep.subr.mxu0 0.0
    %4379 = vmatpush1.msra.mxu0 0.0
    %4380 = vmatprep.subr.mxu0 0.0
    %4381 = vmatpush1.msra.mxu0 0.0
    %4382 = vmatprep.subr.mxu0 0.0
    %4383 = vmatpush1.msra.mxu0 0.0
    %4384 = vmatprep.mubr.f32.mxu0 0.0
    %4385 = vmatmul.mubr.f32.gmra.mrb[0].mxu0 %v4318
    %v4386 = vpop.f32.mrb[0].mxu0
    %v4387 = vadd.f32 %v4300, %v4386
    %v4388 = vpop.f32.mrb[0].mxu0
    %4389 = vdwg.mxu0
    %4390 = vmatprep.subr.mxu0 0.0
    %4391 = vmatpush1.msra.mxu0 %v4213
    %4392 = vmatprep.subr.mxu0 0.0
    %4393 = vmatpush1.msra.mxu0 %v4214
    %4394 = vmatprep.subr.mxu0 0.0
    %4395 = vmatpush1.msra.mxu0 %v4215
    %4396 = vmatprep.subr.mxu0 0.0
    %4397 = vmatpush1.msra.mxu0 %v4216
    %4398 = vmatprep.subr.mxu0 0.0
    %4399 = vmatpush1.msra.mxu0 0.0
    %4400 = vmatprep.subr.mxu0 0.0
    %4401 = vmatpush1.msra.mxu0 0.0
    %4402 = vmatprep.subr.mxu0 0.0
    %4403 = vmatpush1.msra.mxu0 0.0
    %4404 = vmatprep.subr.mxu0 0.0
    %4405 = vmatpush1.msra.mxu0 0.0
    %4406 = vmatprep.subr.mxu0 0.0
    %4407 = vmatpush1.msra.mxu0 0.0
    %4408 = vmatprep.subr.mxu0 0.0
    %4409 = vmatpush1.msra.mxu0 0.0
    %4410 = vmatprep.subr.mxu0 0.0
    %4411 = vmatpush1.msra.mxu0 0.0
    %4412 = vmatprep.subr.mxu0 0.0
    %4413 = vmatpush1.msra.mxu0 0.0
    %4414 = vmatprep.subr.mxu0 0.0
    %4415 = vmatpush1.msra.mxu0 0.0
    %4416 = vmatprep.subr.mxu0 0.0
    %4417 = vmatpush1.msra.mxu0 0.0
    %4418 = vmatprep.subr.mxu0 0.0
    %4419 = vmatpush1.msra.mxu0 0.0
    %4420 = vmatprep.subr.mxu0 0.0
    %4421 = vmatpush1.msra.mxu0 0.0
    %4422 = vmatprep.subr.mxu0 0.0
    %4423 = vmatpush1.msra.mxu0 0.0
    %4424 = vmatprep.subr.mxu0 0.0
    %4425 = vmatpush1.msra.mxu0 0.0
    %4426 = vmatprep.subr.mxu0 0.0
    %4427 = vmatpush1.msra.mxu0 0.0
    %4428 = vmatprep.subr.mxu0 0.0
    %4429 = vmatpush1.msra.mxu0 0.0
    %4430 = vmatprep.subr.mxu0 0.0
    %4431 = vmatpush1.msra.mxu0 0.0
    %4432 = vmatprep.subr.mxu0 0.0
    %4433 = vmatpush1.msra.mxu0 0.0
    %4434 = vmatprep.subr.mxu0 0.0
    %4435 = vmatpush1.msra.mxu0 0.0
    %4436 = vmatprep.subr.mxu0 0.0
    %4437 = vmatpush1.msra.mxu0 0.0
    %4438 = vmatprep.subr.mxu0 0.0
    %4439 = vmatpush1.msra.mxu0 0.0
    %4440 = vmatprep.subr.mxu0 0.0
    %4441 = vmatpush1.msra.mxu0 0.0
    %4442 = vmatprep.subr.mxu0 0.0
    %4443 = vmatpush1.msra.mxu0 0.0
    %4444 = vmatprep.subr.mxu0 0.0
    %4445 = vmatpush1.msra.mxu0 0.0
    %4446 = vmatprep.subr.mxu0 0.0
    %4447 = vmatpush1.msra.mxu0 0.0
    %4448 = vmatprep.subr.mxu0 0.0
    %4449 = vmatpush1.msra.mxu0 0.0
    %4450 = vmatprep.subr.mxu0 0.0
    %4451 = vmatpush1.msra.mxu0 0.0
    %4452 = vmatprep.subr.mxu0 0.0
    %4453 = vmatpush1.msra.mxu0 0.0
    %4454 = vmatprep.mubr.f32.mxu0 0.0
    %4455 = vmatmul.mubr.f32.gmra.mrb[0].mxu0 %v4318
    %v4456 = vpop.f32.mrb[0].mxu0
    %v4457 = vadd.f32 %v4304, %v4456
    %v4458 = vpop.f32.mrb[0].mxu0
    %4459 = vdwg.mxu0
    %4460 = vmatprep.subr.mxu0 0.0
    %4461 = vmatpush1.msra.mxu0 %v4217
    %4462 = vmatprep.subr.mxu0 0.0
    %4463 = vmatpush1.msra.mxu0 %v4218
    %4464 = vmatprep.subr.mxu0 0.0
    %4465 = vmatpush1.msra.mxu0 %v4219
    %4466 = vmatprep.subr.mxu0 0.0
    %4467 = vmatpush1.msra.mxu0 %v4220
    %4468 = vmatprep.subr.mxu0 0.0
    %4469 = vmatpush1.msra.mxu0 0.0
    %4470 = vmatprep.subr.mxu0 0.0
    %4471 = vmatpush1.msra.mxu0 0.0
    %4472 = vmatprep.subr.mxu0 0.0
    %4473 = vmatpush1.msra.mxu0 0.0
    %4474 = vmatprep.subr.mxu0 0.0
    %4475 = vmatpush1.msra.mxu0 0.0
    %4476 = vmatprep.subr.mxu0 0.0
    %4477 = vmatpush1.msra.mxu0 0.0
    %4478 = vmatprep.subr.mxu0 0.0
    %4479 = vmatpush1.msra.mxu0 0.0
    %4480 = vmatprep.subr.mxu0 0.0
    %4481 = vmatpush1.msra.mxu0 0.0
    %4482 = vmatprep.subr.mxu0 0.0
    %4483 = vmatpush1.msra.mxu0 0.0
    %4484 = vmatprep.subr.mxu0 0.0
    %4485 = vmatpush1.msra.mxu0 0.0
    %4486 = vmatprep.subr.mxu0 0.0
    %4487 = vmatpush1.msra.mxu0 0.0
    %4488 = vmatprep.subr.mxu0 0.0
    %4489 = vmatpush1.msra.mxu0 0.0
    %4490 = vmatprep.subr.mxu0 0.0
    %4491 = vmatpush1.msra.mxu0 0.0
    %4492 = vmatprep.subr.mxu0 0.0
    %4493 = vmatpush1.msra.mxu0 0.0
    %4494 = vmatprep.subr.mxu0 0.0
    %4495 = vmatpush1.msra.mxu0 0.0
    %4496 = vmatprep.subr.mxu0 0.0
    %4497 = vmatpush1.msra.mxu0 0.0
    %4498 = vmatprep.subr.mxu0 0.0
    %4499 = vmatpush1.msra.mxu0 0.0
    %4500 = vmatprep.subr.mxu0 0.0
    %4501 = vmatpush1.msra.mxu0 0.0
    %4502 = vmatprep.subr.mxu0 0.0
    %4503 = vmatpush1.msra.mxu0 0.0
    %4504 = vmatprep.subr.mxu0 0.0
    %4505 = vmatpush1.msra.mxu0 0.0
    %4506 = vmatprep.subr.mxu0 0.0
    %4507 = vmatpush1.msra.mxu0 0.0
    %4508 = vmatprep.subr.mxu0 0.0
    %4509 = vmatpush1.msra.mxu0 0.0
    %4510 = vmatprep.subr.mxu0 0.0
    %4511 = vmatpush1.msra.mxu0 0.0
    %4512 = vmatprep.subr.mxu0 0.0
    %4513 = vmatpush1.msra.mxu0 0.0
    %4514 = vmatprep.subr.mxu0 0.0
    %4515 = vmatpush1.msra.mxu0 0.0
    %4516 = vmatprep.subr.mxu0 0.0
    %4517 = vmatpush1.msra.mxu0 0.0
    %4518 = vmatprep.subr.mxu0 0.0
    %4519 = vmatpush1.msra.mxu0 0.0
    %4520 = vmatprep.subr.mxu0 0.0
    %4521 = vmatpush1.msra.mxu0 0.0
    %4522 = vmatprep.subr.mxu0 0.0
    %4523 = vmatpush1.msra.mxu0 0.0
    %4524 = vmatprep.mubr.f32.mxu0 0.0
    %4525 = vmatmul.mubr.f32.gmra.mrb[0].mxu0 %v4318
    %v4526 = vpop.f32.mrb[0].mxu0
    %v4527 = vadd.f32 %v4308, %v4526
    %v4528 = vpop.f32.mrb[0].mxu0
    %4529 = vdwg.mxu0
    %4530 = vmatprep.subr.mxu0 0.0
    %4531 = vmatpush1.msra.mxu0 %v4221
    %4532 = vmatprep.subr.mxu0 0.0
    %4533 = vmatpush1.msra.mxu0 %v4222
    %4534 = vmatprep.subr.mxu0 0.0
    %4535 = vmatpush1.msra.mxu0 %v4223
    %4536 = vmatprep.subr.mxu0 0.0
    %4537 = vmatpush1.msra.mxu0 %v4224
    %4538 = vmatprep.subr.mxu0 0.0
    %4539 = vmatpush1.msra.mxu0 0.0
    %4540 = vmatprep.subr.mxu0 0.0
    %4541 = vmatpush1.msra.mxu0 0.0
    %4542 = vmatprep.subr.mxu0 0.0
    %4543 = vmatpush1.msra.mxu0 0.0
    %4544 = vmatprep.subr.mxu0 0.0
    %4545 = vmatpush1.msra.mxu0 0.0
    %4546 = vmatprep.subr.mxu0 0.0
    %4547 = vmatpush1.msra.mxu0 0.0
    %4548 = vmatprep.subr.mxu0 0.0
    %4549 = vmatpush1.msra.mxu0 0.0
    %4550 = vmatprep.subr.mxu0 0.0
    %4551 = vmatpush1.msra.mxu0 0.0
    %4552 = vmatprep.subr.mxu0 0.0
    %4553 = vmatpush1.msra.mxu0 0.0
    %4554 = vmatprep.subr.mxu0 0.0
    %4555 = vmatpush1.msra.mxu0 0.0
    %4556 = vmatprep.subr.mxu0 0.0
    %4557 = vmatpush1.msra.mxu0 0.0
    %4558 = vmatprep.subr.mxu0 0.0
    %4559 = vmatpush1.msra.mxu0 0.0
    %4560 = vmatprep.subr.mxu0 0.0
    %4561 = vmatpush1.msra.mxu0 0.0
    %4562 = vmatprep.subr.mxu0 0.0
    %4563 = vmatpush1.msra.mxu0 0.0
    %4564 = vmatprep.subr.mxu0 0.0
    %4565 = vmatpush1.msra.mxu0 0.0
    %4566 = vmatprep.subr.mxu0 0.0
    %4567 = vmatpush1.msra.mxu0 0.0
    %4568 = vmatprep.subr.mxu0 0.0
    %4569 = vmatpush1.msra.mxu0 0.0
    %4570 = vmatprep.subr.mxu0 0.0
    %4571 = vmatpush1.msra.mxu0 0.0
    %4572 = vmatprep.subr.mxu0 0.0
    %4573 = vmatpush1.msra.mxu0 0.0
    %4574 = vmatprep.subr.mxu0 0.0
    %4575 = vmatpush1.msra.mxu0 0.0
    %4576 = vmatprep.subr.mxu0 0.0
    %4577 = vmatpush1.msra.mxu0 0.0
    %4578 = vmatprep.subr.mxu0 0.0
    %4579 = vmatpush1.msra.mxu0 0.0
    %4580 = vmatprep.subr.mxu0 0.0
    %4581 = vmatpush1.msra.mxu0 0.0
    %4582 = vmatprep.subr.mxu0 0.0
    %4583 = vmatpush1.msra.mxu0 0.0
    %4584 = vmatprep.subr.mxu0 0.0
    %4585 = vmatpush1.msra.mxu0 0.0
    %4586 = vmatprep.subr.mxu0 0.0
    %4587 = vmatpush1.msra.mxu0 0.0
    %4588 = vmatprep.subr.mxu0 0.0
    %4589 = vmatpush1.msra.mxu0 0.0
    %4590 = vmatprep.subr.mxu0 0.0
    %4591 = vmatpush1.msra.mxu0 0.0
    %4592 = vmatprep.subr.mxu0 0.0
    %4593 = vmatpush1.msra.mxu0 0.0
    %4594 = vmatprep.mubr.f32.mxu0 0.0
    %4595 = vmatmul.mubr.f32.gmra.mrb[0].mxu0 %v4318
    %v4596 = vpop.f32.mrb[0].mxu0
    %v4597 = vadd.f32 %v4312, %v4596
    %v4598 = vpop.f32.mrb[0].mxu0
    %4599 = vdwg.mxu0
    %v4604 = vlaneseq
    %v4605 = vshrl.u32 %v4604, 7
    %v4606 = vsub.s32 0, %v4605
    %v4607 = vrot.slane %v4262, %v4606
    %v4608 = vlaneseq
    %v4609 = vshrl.u32 %v4608, 7
    %v4610 = vsub.s32 0, %v4609
    %v4611 = vrot.slane %v4263, %v4610
    %v4612 = vlaneseq
    %v4613 = vshrl.u32 %v4612, 7
    %v4614 = vsub.s32 0, %v4613
    %v4615 = vrot.slane %v4264, %v4614
    %v4616 = vlaneseq
    %v4617 = vshrl.u32 %v4616, 7
    %v4618 = vsub.s32 0, %v4617
    %v4619 = vrot.slane %v4265, %v4618
    %4624 = vmatprep.subr.mxu0 0.0
    %4625 = vmatpush1.msra.mxu0 %v4225
    %4626 = vmatprep.subr.mxu0 0.0
    %4627 = vmatpush1.msra.mxu0 %v4226
    %4628 = vmatprep.subr.mxu0 0.0
    %4629 = vmatpush1.msra.mxu0 %v4227
    %4630 = vmatprep.subr.mxu0 0.0
    %4631 = vmatpush1.msra.mxu0 %v4228
    %4632 = vmatprep.subr.mxu0 0.0
    %4633 = vmatpush1.msra.mxu0 0.0
    %4634 = vmatprep.subr.mxu0 0.0
    %4635 = vmatpush1.msra.mxu0 0.0
    %4636 = vmatprep.subr.mxu0 0.0
    %4637 = vmatpush1.msra.mxu0 0.0
    %4638 = vmatprep.subr.mxu0 0.0
    %4639 = vmatpush1.msra.mxu0 0.0
    %4640 = vmatprep.subr.mxu0 0.0
    %4641 = vmatpush1.msra.mxu0 0.0
    %4642 = vmatprep.subr.mxu0 0.0
    %4643 = vmatpush1.msra.mxu0 0.0
    %4644 = vmatprep.subr.mxu0 0.0
    %4645 = vmatpush1.msra.mxu0 0.0
    %4646 = vmatprep.subr.mxu0 0.0
    %4647 = vmatpush1.msra.mxu0 0.0
    %4648 = vmatprep.subr.mxu0 0.0
    %4649 = vmatpush1.msra.mxu0 0.0
    %4650 = vmatprep.subr.mxu0 0.0
    %4651 = vmatpush1.msra.mxu0 0.0
    %4652 = vmatprep.subr.mxu0 0.0
    %4653 = vmatpush1.msra.mxu0 0.0
    %4654 = vmatprep.subr.mxu0 0.0
    %4655 = vmatpush1.msra.mxu0 0.0
    %4656 = vmatprep.subr.mxu0 0.0
    %4657 = vmatpush1.msra.mxu0 0.0
    %4658 = vmatprep.subr.mxu0 0.0
    %4659 = vmatpush1.msra.mxu0 0.0
    %4660 = vmatprep.subr.mxu0 0.0
    %4661 = vmatpush1.msra.mxu0 0.0
    %4662 = vmatprep.subr.mxu0 0.0
    %4663 = vmatpush1.msra.mxu0 0.0
    %4664 = vmatprep.subr.mxu0 0.0
    %4665 = vmatpush1.msra.mxu0 0.0
    %4666 = vmatprep.subr.mxu0 0.0
    %4667 = vmatpush1.msra.mxu0 0.0
    %4668 = vmatprep.subr.mxu0 0.0
    %4669 = vmatpush1.msra.mxu0 0.0
    %4670 = vmatprep.subr.mxu0 0.0
    %4671 = vmatpush1.msra.mxu0 0.0
    %4672 = vmatprep.subr.mxu0 0.0
    %4673 = vmatpush1.msra.mxu0 0.0
    %4674 = vmatprep.subr.mxu0 0.0
    %4675 = vmatpush1.msra.mxu0 0.0
    %4676 = vmatprep.subr.mxu0 0.0
    %4677 = vmatpush1.msra.mxu0 0.0
    %4678 = vmatprep.subr.mxu0 0.0
    %4679 = vmatpush1.msra.mxu0 0.0
    %4680 = vmatprep.subr.mxu0 0.0
    %4681 = vmatpush1.msra.mxu0 0.0
    %4682 = vmatprep.subr.mxu0 0.0
    %4683 = vmatpush1.msra.mxu0 0.0
    %4684 = vmatprep.subr.mxu0 0.0
    %4685 = vmatpush1.msra.mxu0 0.0
    %4686 = vmatprep.subr.mxu0 0.0
    %4687 = vmatpush1.msra.mxu0 0.0
    %4688 = vmatprep.mubr.f32.mxu0 0.0
    %4689 = vmatmul.mubr.f32.gmra.mrb[0].mxu0 %v4318
    %v4690 = vpop.f32.mrb[0].mxu0
    %v4691 = vadd.f32 %v4607, %v4690
    %v4692 = vpop.f32.mrb[0].mxu0
    %4693 = vdwg.mxu0
    %4694 = vmatprep.subr.mxu0 0.0
    %4695 = vmatpush1.msra.mxu0 %v4229
    %4696 = vmatprep.subr.mxu0 0.0
    %4697 = vmatpush1.msra.mxu0 %v4230
    %4698 = vmatprep.subr.mxu0 0.0
    %4699 = vmatpush1.msra.mxu0 %v4231
    %4700 = vmatprep.subr.mxu0 0.0
    %4701 = vmatpush1.msra.mxu0 %v4232
    %4702 = vmatprep.subr.mxu0 0.0
    %4703 = vmatpush1.msra.mxu0 0.0
    %4704 = vmatprep.subr.mxu0 0.0
    %4705 = vmatpush1.msra.mxu0 0.0
    %4706 = vmatprep.subr.mxu0 0.0
    %4707 = vmatpush1.msra.mxu0 0.0
    %4708 = vmatprep.subr.mxu0 0.0
    %4709 = vmatpush1.msra.mxu0 0.0
    %4710 = vmatprep.subr.mxu0 0.0
    %4711 = vmatpush1.msra.mxu0 0.0
    %4712 = vmatprep.subr.mxu0 0.0
    %4713 = vmatpush1.msra.mxu0 0.0
    %4714 = vmatprep.subr.mxu0 0.0
    %4715 = vmatpush1.msra.mxu0 0.0
    %4716 = vmatprep.subr.mxu0 0.0
    %4717 = vmatpush1.msra.mxu0 0.0
    %4718 = vmatprep.subr.mxu0 0.0
    %4719 = vmatpush1.msra.mxu0 0.0
    %4720 = vmatprep.subr.mxu0 0.0
    %4721 = vmatpush1.msra.mxu0 0.0
    %4722 = vmatprep.subr.mxu0 0.0
    %4723 = vmatpush1.msra.mxu0 0.0
    %4724 = vmatprep.subr.mxu0 0.0
    %4725 = vmatpush1.msra.mxu0 0.0
    %4726 = vmatprep.subr.mxu0 0.0
    %4727 = vmatpush1.msra.mxu0 0.0
    %4728 = vmatprep.subr.mxu0 0.0
    %4729 = vmatpush1.msra.mxu0 0.0
    %4730 = vmatprep.subr.mxu0 0.0
    %4731 = vmatpush1.msra.mxu0 0.0
    %4732 = vmatprep.subr.mxu0 0.0
    %4733 = vmatpush1.msra.mxu0 0.0
    %4734 = vmatprep.subr.mxu0 0.0
    %4735 = vmatpush1.msra.mxu0 0.0
    %4736 = vmatprep.subr.mxu0 0.0
    %4737 = vmatpush1.msra.mxu0 0.0
    %4738 = vmatprep.subr.mxu0 0.0
    %4739 = vmatpush1.msra.mxu0 0.0
    %4740 = vmatprep.subr.mxu0 0.0
    %4741 = vmatpush1.msra.mxu0 0.0
    %4742 = vmatprep.subr.mxu0 0.0
    %4743 = vmatpush1.msra.mxu0 0.0
    %4744 = vmatprep.subr.mxu0 0.0
    %4745 = vmatpush1.msra.mxu0 0.0
    %4746 = vmatprep.subr.mxu0 0.0
    %4747 = vmatpush1.msra.mxu0 0.0
    %4748 = vmatprep.subr.mxu0 0.0
    %4749 = vmatpush1.msra.mxu0 0.0
    %4750 = vmatprep.subr.mxu0 0.0
    %4751 = vmatpush1.msra.mxu0 0.0
    %4752 = vmatprep.subr.mxu0 0.0
    %4753 = vmatpush1.msra.mxu0 0.0
    %4754 = vmatprep.subr.mxu0 0.0
    %4755 = vmatpush1.msra.mxu0 0.0
    %4756 = vmatprep.subr.mxu0 0.0
    %4757 = vmatpush1.msra.mxu0 0.0
    %4758 = vmatprep.mubr.f32.mxu0 0.0
    %4759 = vmatmul.mubr.f32.gmra.mrb[0].mxu0 %v4318
    %v4760 = vpop.f32.mrb[0].mxu0
    %v4761 = vadd.f32 %v4611, %v4760
    %v4762 = vpop.f32.mrb[0].mxu0
    %4763 = vdwg.mxu0
    %4764 = vmatprep.subr.mxu0 0.0
    %4765 = vmatpush1.msra.mxu0 %v4233
    %4766 = vmatprep.subr.mxu0 0.0
    %4767 = vmatpush1.msra.mxu0 %v4234
    %4768 = vmatprep.subr.mxu0 0.0
    %4769 = vmatpush1.msra.mxu0 %v4235
    %4770 = vmatprep.subr.mxu0 0.0
    %4771 = vmatpush1.msra.mxu0 %v4236
    %4772 = vmatprep.subr.mxu0 0.0
    %4773 = vmatpush1.msra.mxu0 0.0
    %4774 = vmatprep.subr.mxu0 0.0
    %4775 = vmatpush1.msra.mxu0 0.0
    %4776 = vmatprep.subr.mxu0 0.0
    %4777 = vmatpush1.msra.mxu0 0.0
    %4778 = vmatprep.subr.mxu0 0.0
    %4779 = vmatpush1.msra.mxu0 0.0
    %4780 = vmatprep.subr.mxu0 0.0
    %4781 = vmatpush1.msra.mxu0 0.0
    %4782 = vmatprep.subr.mxu0 0.0
    %4783 = vmatpush1.msra.mxu0 0.0
    %4784 = vmatprep.subr.mxu0 0.0
    %4785 = vmatpush1.msra.mxu0 0.0
    %4786 = vmatprep.subr.mxu0 0.0
    %4787 = vmatpush1.msra.mxu0 0.0
    %4788 = vmatprep.subr.mxu0 0.0
    %4789 = vmatpush1.msra.mxu0 0.0
    %4790 = vmatprep.subr.mxu0 0.0
    %4791 = vmatpush1.msra.mxu0 0.0
    %4792 = vmatprep.subr.mxu0 0.0
    %4793 = vmatpush1.msra.mxu0 0.0
    %4794 = vmatprep.subr.mxu0 0.0
    %4795 = vmatpush1.msra.mxu0 0.0
    %4796 = vmatprep.subr.mxu0 0.0
    %4797 = vmatpush1.msra.mxu0 0.0
    %4798 = vmatprep.subr.mxu0 0.0
    %4799 = vmatpush1.msra.mxu0 0.0
    %4800 = vmatprep.subr.mxu0 0.0
    %4801 = vmatpush1.msra.mxu0 0.0
    %4802 = vmatprep.subr.mxu0 0.0
    %4803 = vmatpush1.msra.mxu0 0.0
    %4804 = vmatprep.subr.mxu0 0.0
    %4805 = vmatpush1.msra.mxu0 0.0
    %4806 = vmatprep.subr.mxu0 0.0
    %4807 = vmatpush1.msra.mxu0 0.0
    %4808 = vmatprep.subr.mxu0 0.0
    %4809 = vmatpush1.msra.mxu0 0.0
    %4810 = vmatprep.subr.mxu0 0.0
    %4811 = vmatpush1.msra.mxu0 0.0
    %4812 = vmatprep.subr.mxu0 0.0
    %4813 = vmatpush1.msra.mxu0 0.0
    %4814 = vmatprep.subr.mxu0 0.0
    %4815 = vmatpush1.msra.mxu0 0.0
    %4816 = vmatprep.subr.mxu0 0.0
    %4817 = vmatpush1.msra.mxu0 0.0
    %4818 = vmatprep.subr.mxu0 0.0
    %4819 = vmatpush1.msra.mxu0 0.0
    %4820 = vmatprep.subr.mxu0 0.0
    %4821 = vmatpush1.msra.mxu0 0.0
    %4822 = vmatprep.subr.mxu0 0.0
    %4823 = vmatpush1.msra.mxu0 0.0
    %4824 = vmatprep.subr.mxu0 0.0
    %4825 = vmatpush1.msra.mxu0 0.0
    %4826 = vmatprep.subr.mxu0 0.0
    %4827 = vmatpush1.msra.mxu0 0.0
    %4828 = vmatprep.mubr.f32.mxu0 0.0
    %4829 = vmatmul.mubr.f32.gmra.mrb[0].mxu0 %v4318
    %v4830 = vpop.f32.mrb[0].mxu0
    %v4831 = vadd.f32 %v4615, %v4830
    %v4832 = vpop.f32.mrb[0].mxu0
    %4833 = vdwg.mxu0
    %4834 = vmatprep.subr.mxu0 0.0
    %4835 = vmatpush1.msra.mxu0 %v4237
    %4836 = vmatprep.subr.mxu0 0.0
    %4837 = vmatpush1.msra.mxu0 %v4238
    %4838 = vmatprep.subr.mxu0 0.0
    %4839 = vmatpush1.msra.mxu0 %v4239
    %4840 = vmatprep.subr.mxu0 0.0
    %4841 = vmatpush1.msra.mxu0 %v4240
    %4842 = vmatprep.subr.mxu0 0.0
    %4843 = vmatpush1.msra.mxu0 0.0
    %4844 = vmatprep.subr.mxu0 0.0
    %4845 = vmatpush1.msra.mxu0 0.0
    %4846 = vmatprep.subr.mxu0 0.0
    %4847 = vmatpush1.msra.mxu0 0.0
    %4848 = vmatprep.subr.mxu0 0.0
    %4849 = vmatpush1.msra.mxu0 0.0
    %4850 = vmatprep.subr.mxu0 0.0
    %4851 = vmatpush1.msra.mxu0 0.0
    %4852 = vmatprep.subr.mxu0 0.0
    %4853 = vmatpush1.msra.mxu0 0.0
    %4854 = vmatprep.subr.mxu0 0.0
    %4855 = vmatpush1.msra.mxu0 0.0
    %4856 = vmatprep.subr.mxu0 0.0
    %4857 = vmatpush1.msra.mxu0 0.0
    %4858 = vmatprep.subr.mxu0 0.0
    %4859 = vmatpush1.msra.mxu0 0.0
    %4860 = vmatprep.subr.mxu0 0.0
    %4861 = vmatpush1.msra.mxu0 0.0
    %4862 = vmatprep.subr.mxu0 0.0
    %4863 = vmatpush1.msra.mxu0 0.0
    %4864 = vmatprep.subr.mxu0 0.0
    %4865 = vmatpush1.msra.mxu0 0.0
    %4866 = vmatprep.subr.mxu0 0.0
    %4867 = vmatpush1.msra.mxu0 0.0
    %4868 = vmatprep.subr.mxu0 0.0
    %4869 = vmatpush1.msra.mxu0 0.0
    %4870 = vmatprep.subr.mxu0 0.0
    %4871 = vmatpush1.msra.mxu0 0.0
    %4872 = vmatprep.subr.mxu0 0.0
    %4873 = vmatpush1.msra.mxu0 0.0
    %4874 = vmatprep.subr.mxu0 0.0
    %4875 = vmatpush1.msra.mxu0 0.0
    %4876 = vmatprep.subr.mxu0 0.0
    %4877 = vmatpush1.msra.mxu0 0.0
    %4878 = vmatprep.subr.mxu0 0.0
    %4879 = vmatpush1.msra.mxu0 0.0
    %4880 = vmatprep.subr.mxu0 0.0
    %4881 = vmatpush1.msra.mxu0 0.0
    %4882 = vmatprep.subr.mxu0 0.0
    %4883 = vmatpush1.msra.mxu0 0.0
    %4884 = vmatprep.subr.mxu0 0.0
    %4885 = vmatpush1.msra.mxu0 0.0
    %4886 = vmatprep.subr.mxu0 0.0
    %4887 = vmatpush1.msra.mxu0 0.0
    %4888 = vmatprep.subr.mxu0 0.0
    %4889 = vmatpush1.msra.mxu0 0.0
    %4890 = vmatprep.subr.mxu0 0.0
    %4891 = vmatpush1.msra.mxu0 0.0
    %4892 = vmatprep.subr.mxu0 0.0
    %4893 = vmatpush1.msra.mxu0 0.0
    %4894 = vmatprep.subr.mxu0 0.0
    %4895 = vmatpush1.msra.mxu0 0.0
    %4896 = vmatprep.subr.mxu0 0.0
    %4897 = vmatpush1.msra.mxu0 0.0
    %4898 = vmatprep.mubr.f32.mxu0 0.0
    %4899 = vmatmul.mubr.f32.gmra.mrb[0].mxu0 %v4318
    %v4900 = vpop.f32.mrb[0].mxu0
    %v4901 = vadd.f32 %v4619, %v4900
    %v4902 = vpop.f32.mrb[0].mxu0
    %4903 = vdwg.mxu0
    %v4908 = vlaneseq
    %v4909 = vshrl.u32 %v4908, 7
    %v4910 = vsub.s32 0, %v4909
    %v4911 = vrot.slane %v4266, %v4910
    %v4912 = vlaneseq
    %v4913 = vshrl.u32 %v4912, 7
    %v4914 = vsub.s32 0, %v4913
    %v4915 = vrot.slane %v4267, %v4914
    %v4916 = vlaneseq
    %v4917 = vshrl.u32 %v4916, 7
    %v4918 = vsub.s32 0, %v4917
    %v4919 = vrot.slane %v4268, %v4918
    %v4920 = vlaneseq
    %v4921 = vshrl.u32 %v4920, 7
    %v4922 = vsub.s32 0, %v4921
    %v4923 = vrot.slane %v4269, %v4922
    %v4929 = vsel %vm149, %v2217, 0
    %4931 = vmatprep.subr.mxu0 0.0
    %4932 = vmatpush1.msra.mxu0 %v4241
    %4933 = vmatprep.subr.mxu0 0.0
    %4934 = vmatpush1.msra.mxu0 %v4242
    %4935 = vmatprep.subr.mxu0 0.0
    %4936 = vmatpush1.msra.mxu0 %v4243
    %4937 = vmatprep.subr.mxu0 0.0
    %4938 = vmatpush1.msra.mxu0 %v4244
    %4939 = vmatprep.subr.mxu0 0.0
    %4940 = vmatpush1.msra.mxu0 0.0
    %4941 = vmatprep.subr.mxu0 0.0
    %4942 = vmatpush1.msra.mxu0 0.0
    %4943 = vmatprep.subr.mxu0 0.0
    %4944 = vmatpush1.msra.mxu0 0.0
    %4945 = vmatprep.subr.mxu0 0.0
    %4946 = vmatpush1.msra.mxu0 0.0
    %4947 = vmatprep.subr.mxu0 0.0
    %4948 = vmatpush1.msra.mxu0 0.0
    %4949 = vmatprep.subr.mxu0 0.0
    %4950 = vmatpush1.msra.mxu0 0.0
    %4951 = vmatprep.subr.mxu0 0.0
    %4952 = vmatpush1.msra.mxu0 0.0
    %4953 = vmatprep.subr.mxu0 0.0
    %4954 = vmatpush1.msra.mxu0 0.0
    %4955 = vmatprep.subr.mxu0 0.0
    %4956 = vmatpush1.msra.mxu0 0.0
    %4957 = vmatprep.subr.mxu0 0.0
    %4958 = vmatpush1.msra.mxu0 0.0
    %4959 = vmatprep.subr.mxu0 0.0
    %4960 = vmatpush1.msra.mxu0 0.0
    %4961 = vmatprep.subr.mxu0 0.0
    %4962 = vmatpush1.msra.mxu0 0.0
    %4963 = vmatprep.subr.mxu0 0.0
    %4964 = vmatpush1.msra.mxu0 0.0
    %4965 = vmatprep.subr.mxu0 0.0
    %4966 = vmatpush1.msra.mxu0 0.0
    %4967 = vmatprep.subr.mxu0 0.0
    %4968 = vmatpush1.msra.mxu0 0.0
    %4969 = vmatprep.subr.mxu0 0.0
    %4970 = vmatpush1.msra.mxu0 0.0
    %4971 = vmatprep.subr.mxu0 0.0
    %4972 = vmatpush1.msra.mxu0 0.0
    %4973 = vmatprep.subr.mxu0 0.0
    %4974 = vmatpush1.msra.mxu0 0.0
    %4975 = vmatprep.subr.mxu0 0.0
    %4976 = vmatpush1.msra.mxu0 0.0
    %4977 = vmatprep.subr.mxu0 0.0
    %4978 = vmatpush1.msra.mxu0 0.0
    %4979 = vmatprep.subr.mxu0 0.0
    %4980 = vmatpush1.msra.mxu0 0.0
    %4981 = vmatprep.subr.mxu0 0.0
    %4982 = vmatpush1.msra.mxu0 0.0
    %4983 = vmatprep.subr.mxu0 0.0
    %4984 = vmatpush1.msra.mxu0 0.0
    %4985 = vmatprep.subr.mxu0 0.0
    %4986 = vmatpush1.msra.mxu0 0.0
    %4987 = vmatprep.subr.mxu0 0.0
    %4988 = vmatpush1.msra.mxu0 0.0
    %4989 = vmatprep.subr.mxu0 0.0
    %4990 = vmatpush1.msra.mxu0 0.0
    %4991 = vmatprep.subr.mxu0 0.0
    %4992 = vmatpush1.msra.mxu0 0.0
    %4993 = vmatprep.subr.mxu0 0.0
    %4994 = vmatpush1.msra.mxu0 0.0
    %4995 = vmatprep.mubr.f32.mxu0 0.0
    %4996 = vmatmul.mubr.f32.gmra.mrb[0].mxu0 %v4929
    %v4997 = vpop.f32.mrb[0].mxu0
    %v4998 = vadd.f32 %v4911, %v4997
    %v4999 = vpop.f32.mrb[0].mxu0
    %5000 = vdwg.mxu0
    %5001 = vmatprep.subr.mxu0 0.0
    %5002 = vmatpush1.msra.mxu0 %v4245
    %5003 = vmatprep.subr.mxu0 0.0
    %5004 = vmatpush1.msra.mxu0 %v4246
    %5005 = vmatprep.subr.mxu0 0.0
    %5006 = vmatpush1.msra.mxu0 %v4247
    %5007 = vmatprep.subr.mxu0 0.0
    %5008 = vmatpush1.msra.mxu0 %v4248
    %5009 = vmatprep.subr.mxu0 0.0
    %5010 = vmatpush1.msra.mxu0 0.0
    %5011 = vmatprep.subr.mxu0 0.0
    %5012 = vmatpush1.msra.mxu0 0.0
    %5013 = vmatprep.subr.mxu0 0.0
    %5014 = vmatpush1.msra.mxu0 0.0
    %5015 = vmatprep.subr.mxu0 0.0
    %5016 = vmatpush1.msra.mxu0 0.0
    %5017 = vmatprep.subr.mxu0 0.0
    %5018 = vmatpush1.msra.mxu0 0.0
    %5019 = vmatprep.subr.mxu0 0.0
    %5020 = vmatpush1.msra.mxu0 0.0
    %5021 = vmatprep.subr.mxu0 0.0
    %5022 = vmatpush1.msra.mxu0 0.0
    %5023 = vmatprep.subr.mxu0 0.0
    %5024 = vmatpush1.msra.mxu0 0.0
    %5025 = vmatprep.subr.mxu0 0.0
    %5026 = vmatpush1.msra.mxu0 0.0
    %5027 = vmatprep.subr.mxu0 0.0
    %5028 = vmatpush1.msra.mxu0 0.0
    %5029 = vmatprep.subr.mxu0 0.0
    %5030 = vmatpush1.msra.mxu0 0.0
    %5031 = vmatprep.subr.mxu0 0.0
    %5032 = vmatpush1.msra.mxu0 0.0
    %5033 = vmatprep.subr.mxu0 0.0
    %5034 = vmatpush1.msra.mxu0 0.0
    %5035 = vmatprep.subr.mxu0 0.0
    %5036 = vmatpush1.msra.mxu0 0.0
    %5037 = vmatprep.subr.mxu0 0.0
    %5038 = vmatpush1.msra.mxu0 0.0
    %5039 = vmatprep.subr.mxu0 0.0
    %5040 = vmatpush1.msra.mxu0 0.0
    %5041 = vmatprep.subr.mxu0 0.0
    %5042 = vmatpush1.msra.mxu0 0.0
    %5043 = vmatprep.subr.mxu0 0.0
    %5044 = vmatpush1.msra.mxu0 0.0
    %5045 = vmatprep.subr.mxu0 0.0
    %5046 = vmatpush1.msra.mxu0 0.0
    %5047 = vmatprep.subr.mxu0 0.0
    %5048 = vmatpush1.msra.mxu0 0.0
    %5049 = vmatprep.subr.mxu0 0.0
    %5050 = vmatpush1.msra.mxu0 0.0
    %5051 = vmatprep.subr.mxu0 0.0
    %5052 = vmatpush1.msra.mxu0 0.0
    %5053 = vmatprep.subr.mxu0 0.0
    %5054 = vmatpush1.msra.mxu0 0.0
    %5055 = vmatprep.subr.mxu0 0.0
    %5056 = vmatpush1.msra.mxu0 0.0
    %5057 = vmatprep.subr.mxu0 0.0
    %5058 = vmatpush1.msra.mxu0 0.0
    %5059 = vmatprep.subr.mxu0 0.0
    %5060 = vmatpush1.msra.mxu0 0.0
    %5061 = vmatprep.subr.mxu0 0.0
    %5062 = vmatpush1.msra.mxu0 0.0
    %5063 = vmatprep.subr.mxu0 0.0
    %5064 = vmatpush1.msra.mxu0 0.0
    %5065 = vmatprep.mubr.f32.mxu0 0.0
    %5066 = vmatmul.mubr.f32.gmra.mrb[0].mxu0 %v4929
    %v5067 = vpop.f32.mrb[0].mxu0
    %v5068 = vadd.f32 %v4915, %v5067
    %v5069 = vpop.f32.mrb[0].mxu0
    %5070 = vdwg.mxu0
    %5071 = vmatprep.subr.mxu0 0.0
    %5072 = vmatpush1.msra.mxu0 %v4249
    %5073 = vmatprep.subr.mxu0 0.0
    %5074 = vmatpush1.msra.mxu0 %v4250
    %5075 = vmatprep.subr.mxu0 0.0
    %5076 = vmatpush1.msra.mxu0 %v4251
    %5077 = vmatprep.subr.mxu0 0.0
    %5078 = vmatpush1.msra.mxu0 %v4252
    %5079 = vmatprep.subr.mxu0 0.0
    %5080 = vmatpush1.msra.mxu0 0.0
    %5081 = vmatprep.subr.mxu0 0.0
    %5082 = vmatpush1.msra.mxu0 0.0
    %5083 = vmatprep.subr.mxu0 0.0
    %5084 = vmatpush1.msra.mxu0 0.0
    %5085 = vmatprep.subr.mxu0 0.0
    %5086 = vmatpush1.msra.mxu0 0.0
    %5087 = vmatprep.subr.mxu0 0.0
    %5088 = vmatpush1.msra.mxu0 0.0
    %5089 = vmatprep.subr.mxu0 0.0
    %5090 = vmatpush1.msra.mxu0 0.0
    %5091 = vmatprep.subr.mxu0 0.0
    %5092 = vmatpush1.msra.mxu0 0.0
    %5093 = vmatprep.subr.mxu0 0.0
    %5094 = vmatpush1.msra.mxu0 0.0
    %5095 = vmatprep.subr.mxu0 0.0
    %5096 = vmatpush1.msra.mxu0 0.0
    %5097 = vmatprep.subr.mxu0 0.0
    %5098 = vmatpush1.msra.mxu0 0.0
    %5099 = vmatprep.subr.mxu0 0.0
    %5100 = vmatpush1.msra.mxu0 0.0
    %5101 = vmatprep.subr.mxu0 0.0
    %5102 = vmatpush1.msra.mxu0 0.0
    %5103 = vmatprep.subr.mxu0 0.0
    %5104 = vmatpush1.msra.mxu0 0.0
    %5105 = vmatprep.subr.mxu0 0.0
    %5106 = vmatpush1.msra.mxu0 0.0
    %5107 = vmatprep.subr.mxu0 0.0
    %5108 = vmatpush1.msra.mxu0 0.0
    %5109 = vmatprep.subr.mxu0 0.0
    %5110 = vmatpush1.msra.mxu0 0.0
    %5111 = vmatprep.subr.mxu0 0.0
    %5112 = vmatpush1.msra.mxu0 0.0
    %5113 = vmatprep.subr.mxu0 0.0
    %5114 = vmatpush1.msra.mxu0 0.0
    %5115 = vmatprep.subr.mxu0 0.0
    %5116 = vmatpush1.msra.mxu0 0.0
    %5117 = vmatprep.subr.mxu0 0.0
    %5118 = vmatpush1.msra.mxu0 0.0
    %5119 = vmatprep.subr.mxu0 0.0
    %5120 = vmatpush1.msra.mxu0 0.0
    %5121 = vmatprep.subr.mxu0 0.0
    %5122 = vmatpush1.msra.mxu0 0.0
    %5123 = vmatprep.subr.mxu0 0.0
    %5124 = vmatpush1.msra.mxu0 0.0
    %5125 = vmatprep.subr.mxu0 0.0
    %5126 = vmatpush1.msra.mxu0 0.0
    %5127 = vmatprep.subr.mxu0 0.0
    %5128 = vmatpush1.msra.mxu0 0.0
    %5129 = vmatprep.subr.mxu0 0.0
    %5130 = vmatpush1.msra.mxu0 0.0
    %5131 = vmatprep.subr.mxu0 0.0
    %5132 = vmatpush1.msra.mxu0 0.0
    %5133 = vmatprep.subr.mxu0 0.0
    %5134 = vmatpush1.msra.mxu0 0.0
    %5135 = vmatprep.mubr.f32.mxu0 0.0
    %5136 = vmatmul.mubr.f32.gmra.mrb[0].mxu0 %v4929
    %v5137 = vpop.f32.mrb[0].mxu0
    %v5138 = vadd.f32 %v4919, %v5137
    %v5139 = vpop.f32.mrb[0].mxu0
    %5140 = vdwg.mxu0
    %5141 = vmatprep.subr.mxu0 0.0
    %5142 = vmatpush1.msra.mxu0 %v4253
    %5143 = vmatprep.subr.mxu0 0.0
    %5144 = vmatpush1.msra.mxu0 %v4254
    %5145 = vmatprep.subr.mxu0 0.0
    %5146 = vmatpush1.msra.mxu0 %v4255
    %5147 = vmatprep.subr.mxu0 0.0
    %5148 = vmatpush1.msra.mxu0 %v4256
    %5149 = vmatprep.subr.mxu0 0.0
    %5150 = vmatpush1.msra.mxu0 0.0
    %5151 = vmatprep.subr.mxu0 0.0
    %5152 = vmatpush1.msra.mxu0 0.0
    %5153 = vmatprep.subr.mxu0 0.0
    %5154 = vmatpush1.msra.mxu0 0.0
    %5155 = vmatprep.subr.mxu0 0.0
    %5156 = vmatpush1.msra.mxu0 0.0
    %5157 = vmatprep.subr.mxu0 0.0
    %5158 = vmatpush1.msra.mxu0 0.0
    %5159 = vmatprep.subr.mxu0 0.0
    %5160 = vmatpush1.msra.mxu0 0.0
    %5161 = vmatprep.subr.mxu0 0.0
    %5162 = vmatpush1.msra.mxu0 0.0
    %5163 = vmatprep.subr.mxu0 0.0
    %5164 = vmatpush1.msra.mxu0 0.0
    %5165 = vmatprep.subr.mxu0 0.0
    %5166 = vmatpush1.msra.mxu0 0.0
    %5167 = vmatprep.subr.mxu0 0.0
    %5168 = vmatpush1.msra.mxu0 0.0
    %5169 = vmatprep.subr.mxu0 0.0
    %5170 = vmatpush1.msra.mxu0 0.0
    %5171 = vmatprep.subr.mxu0 0.0
    %5172 = vmatpush1.msra.mxu0 0.0
    %5173 = vmatprep.subr.mxu0 0.0
    %5174 = vmatpush1.msra.mxu0 0.0
    %5175 = vmatprep.subr.mxu0 0.0
    %5176 = vmatpush1.msra.mxu0 0.0
    %5177 = vmatprep.subr.mxu0 0.0
    %5178 = vmatpush1.msra.mxu0 0.0
    %5179 = vmatprep.subr.mxu0 0.0
    %5180 = vmatpush1.msra.mxu0 0.0
    %5181 = vmatprep.subr.mxu0 0.0
    %5182 = vmatpush1.msra.mxu0 0.0
    %5183 = vmatprep.subr.mxu0 0.0
    %5184 = vmatpush1.msra.mxu0 0.0
    %5185 = vmatprep.subr.mxu0 0.0
    %5186 = vmatpush1.msra.mxu0 0.0
    %5187 = vmatprep.subr.mxu0 0.0
    %5188 = vmatpush1.msra.mxu0 0.0
    %5189 = vmatprep.subr.mxu0 0.0
    %5190 = vmatpush1.msra.mxu0 0.0
    %5191 = vmatprep.subr.mxu0 0.0
    %5192 = vmatpush1.msra.mxu0 0.0
    %5193 = vmatprep.subr.mxu0 0.0
    %5194 = vmatpush1.msra.mxu0 0.0
    %5195 = vmatprep.subr.mxu0 0.0
    %5196 = vmatpush1.msra.mxu0 0.0
    %5197 = vmatprep.subr.mxu0 0.0
    %5198 = vmatpush1.msra.mxu0 0.0
    %5199 = vmatprep.subr.mxu0 0.0
    %5200 = vmatpush1.msra.mxu0 0.0
    %5201 = vmatprep.subr.mxu0 0.0
    %5202 = vmatpush1.msra.mxu0 0.0
    %5203 = vmatprep.subr.mxu0 0.0
    %5204 = vmatpush1.msra.mxu0 0.0
    %5205 = vmatprep.mubr.f32.mxu0 0.0
    %5206 = vmatmul.mubr.f32.gmra.mrb[0].mxu0 %v4929
    %v5207 = vpop.f32.mrb[0].mxu0
    %v5208 = vadd.f32 %v4923, %v5207
    %v5209 = vpop.f32.mrb[0].mxu0
    %5210 = vdwg.mxu0
    %v5212 = vsel %vm1044, %v4387, 0
    %v5215 = vsel %vm1044, %v4691, 0
    %5217 = vmatprep.subr.mxu0 0.0
    %5218 = vmatpush1.xpose.msra.mxu0 %v5215
    %5219 = vmatprep.subr.mxu0 0.0
    %5220 = vmatpush1.xpose.msra.mxu0 0.0
    %5221 = vmatprep.subr.mxu0 0.0
    %5222 = vmatpush1.xpose.msra.mxu0 0.0
    %5223 = vmatprep.subr.mxu0 0.0
    %5224 = vmatpush1.xpose.msra.mxu0 0.0
    %5225 = vmatprep.subr.mxu0 0.0
    %5226 = vmatpush1.xpose.msra.mxu0 0.0
    %5227 = vmatprep.subr.mxu0 0.0
    %5228 = vmatpush1.xpose.msra.mxu0 0.0
    %5229 = vmatprep.subr.mxu0 0.0
    %5230 = vmatpush1.xpose.msra.mxu0 0.0
    %5231 = vmatprep.subr.mxu0 0.0
    %5232 = vmatpush1.xpose.msra.mxu0 0.0
    %5233 = vmatprep.subr.mxu0 0.0
    %5234 = vmatpush1.xpose.msra.mxu0 0.0
    %5235 = vmatprep.subr.mxu0 0.0
    %5236 = vmatpush1.xpose.msra.mxu0 0.0
    %5237 = vmatprep.subr.mxu0 0.0
    %5238 = vmatpush1.xpose.msra.mxu0 0.0
    %5239 = vmatprep.subr.mxu0 0.0
    %5240 = vmatpush1.xpose.msra.mxu0 0.0
    %5241 = vmatprep.subr.mxu0 0.0
    %5242 = vmatpush1.xpose.msra.mxu0 0.0
    %5243 = vmatprep.subr.mxu0 0.0
    %5244 = vmatpush1.xpose.msra.mxu0 0.0
    %5245 = vmatprep.subr.mxu0 0.0
    %5246 = vmatpush1.xpose.msra.mxu0 0.0
    %5247 = vmatprep.subr.mxu0 0.0
    %5248 = vmatpush1.xpose.msra.mxu0 0.0
    %5249 = vmatprep.subr.mxu0 0.0
    %5250 = vmatpush1.xpose.msra.mxu0 0.0
    %5251 = vmatprep.subr.mxu0 0.0
    %5252 = vmatpush1.xpose.msra.mxu0 0.0
    %5253 = vmatprep.subr.mxu0 0.0
    %5254 = vmatpush1.xpose.msra.mxu0 0.0
    %5255 = vmatprep.subr.mxu0 0.0
    %5256 = vmatpush1.xpose.msra.mxu0 0.0
    %5257 = vmatprep.subr.mxu0 0.0
    %5258 = vmatpush1.xpose.msra.mxu0 0.0
    %5259 = vmatprep.subr.mxu0 0.0
    %5260 = vmatpush1.xpose.msra.mxu0 0.0
    %5261 = vmatprep.subr.mxu0 0.0
    %5262 = vmatpush1.xpose.msra.mxu0 0.0
    %5263 = vmatprep.subr.mxu0 0.0
    %5264 = vmatpush1.xpose.msra.mxu0 0.0
    %5265 = vmatprep.subr.mxu0 0.0
    %5266 = vmatpush1.xpose.msra.mxu0 0.0
    %5267 = vmatprep.subr.mxu0 0.0
    %5268 = vmatpush1.xpose.msra.mxu0 0.0
    %5269 = vmatprep.subr.mxu0 0.0
    %5270 = vmatpush1.xpose.msra.mxu0 0.0
    %5271 = vmatprep.subr.mxu0 0.0
    %5272 = vmatpush1.xpose.msra.mxu0 0.0
    %5273 = vmatprep.subr.mxu0 0.0
    %5274 = vmatpush1.xpose.msra.mxu0 0.0
    %5275 = vmatprep.subr.mxu0 0.0
    %5276 = vmatpush1.xpose.msra.mxu0 0.0
    %5277 = vmatprep.subr.mxu0 0.0
    %5278 = vmatpush1.xpose.msra.mxu0 0.0
    %5279 = vmatprep.subr.mxu0 0.0
    %5280 = vmatpush1.xpose.msra.mxu0 0.0
    %5281 = vmatprep.mubr.f32.mxu0 0.0
    %5282 = vmatmul.mubr.f32.gmra.mrb[0].mxu0 %v5212
    %v5283 = vpop.f32.mrb[0].mxu0
    %v5284 = vadd.f32 0.0, %v5283
    %v5285 = vpop.f32.mrb[0].mxu0
    %5286 = vdwg.mxu0
    %v5288 = vsel %vm1044, %v4457, 0
    %v5291 = vsel %vm1044, %v4761, 0
    %5293 = vmatprep.subr.mxu0 0.0
    %5294 = vmatpush1.xpose.msra.mxu0 %v5291
    %5295 = vmatprep.subr.mxu0 0.0
    %5296 = vmatpush1.xpose.msra.mxu0 0.0
    %5297 = vmatprep.subr.mxu0 0.0
    %5298 = vmatpush1.xpose.msra.mxu0 0.0
    %5299 = vmatprep.subr.mxu0 0.0
    %5300 = vmatpush1.xpose.msra.mxu0 0.0
    %5301 = vmatprep.subr.mxu0 0.0
    %5302 = vmatpush1.xpose.msra.mxu0 0.0
    %5303 = vmatprep.subr.mxu0 0.0
    %5304 = vmatpush1.xpose.msra.mxu0 0.0
    %5305 = vmatprep.subr.mxu0 0.0
    %5306 = vmatpush1.xpose.msra.mxu0 0.0
    %5307 = vmatprep.subr.mxu0 0.0
    %5308 = vmatpush1.xpose.msra.mxu0 0.0
    %5309 = vmatprep.subr.mxu0 0.0
    %5310 = vmatpush1.xpose.msra.mxu0 0.0
    %5311 = vmatprep.subr.mxu0 0.0
    %5312 = vmatpush1.xpose.msra.mxu0 0.0
    %5313 = vmatprep.subr.mxu0 0.0
    %5314 = vmatpush1.xpose.msra.mxu0 0.0
    %5315 = vmatprep.subr.mxu0 0.0
    %5316 = vmatpush1.xpose.msra.mxu0 0.0
    %5317 = vmatprep.subr.mxu0 0.0
    %5318 = vmatpush1.xpose.msra.mxu0 0.0
    %5319 = vmatprep.subr.mxu0 0.0
    %5320 = vmatpush1.xpose.msra.mxu0 0.0
    %5321 = vmatprep.subr.mxu0 0.0
    %5322 = vmatpush1.xpose.msra.mxu0 0.0
    %5323 = vmatprep.subr.mxu0 0.0
    %5324 = vmatpush1.xpose.msra.mxu0 0.0
    %5325 = vmatprep.subr.mxu0 0.0
    %5326 = vmatpush1.xpose.msra.mxu0 0.0
    %5327 = vmatprep.subr.mxu0 0.0
    %5328 = vmatpush1.xpose.msra.mxu0 0.0
    %5329 = vmatprep.subr.mxu0 0.0
    %5330 = vmatpush1.xpose.msra.mxu0 0.0
    %5331 = vmatprep.subr.mxu0 0.0
    %5332 = vmatpush1.xpose.msra.mxu0 0.0
    %5333 = vmatprep.subr.mxu0 0.0
    %5334 = vmatpush1.xpose.msra.mxu0 0.0
    %5335 = vmatprep.subr.mxu0 0.0
    %5336 = vmatpush1.xpose.msra.mxu0 0.0
    %5337 = vmatprep.subr.mxu0 0.0
    %5338 = vmatpush1.xpose.msra.mxu0 0.0
    %5339 = vmatprep.subr.mxu0 0.0
    %5340 = vmatpush1.xpose.msra.mxu0 0.0
    %5341 = vmatprep.subr.mxu0 0.0
    %5342 = vmatpush1.xpose.msra.mxu0 0.0
    %5343 = vmatprep.subr.mxu0 0.0
    %5344 = vmatpush1.xpose.msra.mxu0 0.0
    %5345 = vmatprep.subr.mxu0 0.0
    %5346 = vmatpush1.xpose.msra.mxu0 0.0
    %5347 = vmatprep.subr.mxu0 0.0
    %5348 = vmatpush1.xpose.msra.mxu0 0.0
    %5349 = vmatprep.subr.mxu0 0.0
    %5350 = vmatpush1.xpose.msra.mxu0 0.0
    %5351 = vmatprep.subr.mxu0 0.0
    %5352 = vmatpush1.xpose.msra.mxu0 0.0
    %5353 = vmatprep.subr.mxu0 0.0
    %5354 = vmatpush1.xpose.msra.mxu0 0.0
    %5355 = vmatprep.subr.mxu0 0.0
    %5356 = vmatpush1.xpose.msra.mxu0 0.0
    %5357 = vmatprep.mubr.f32.mxu0 0.0
    %5358 = vmatmul.mubr.f32.gmra.mrb[0].mxu0 %v5288
    %v5359 = vpop.f32.mrb[0].mxu0
    %v5360 = vadd.f32 0.0, %v5359
    %v5361 = vpop.f32.mrb[0].mxu0
    %5362 = vdwg.mxu0
    %v5364 = vsel %vm1044, %v4527, 0
    %v5367 = vsel %vm1044, %v4831, 0
    %5369 = vmatprep.subr.mxu0 0.0
    %5370 = vmatpush1.xpose.msra.mxu0 %v5367
    %5371 = vmatprep.subr.mxu0 0.0
    %5372 = vmatpush1.xpose.msra.mxu0 0.0
    %5373 = vmatprep.subr.mxu0 0.0
    %5374 = vmatpush1.xpose.msra.mxu0 0.0
    %5375 = vmatprep.subr.mxu0 0.0
    %5376 = vmatpush1.xpose.msra.mxu0 0.0
    %5377 = vmatprep.subr.mxu0 0.0
    %5378 = vmatpush1.xpose.msra.mxu0 0.0
    %5379 = vmatprep.subr.mxu0 0.0
    %5380 = vmatpush1.xpose.msra.mxu0 0.0
    %5381 = vmatprep.subr.mxu0 0.0
    %5382 = vmatpush1.xpose.msra.mxu0 0.0
    %5383 = vmatprep.subr.mxu0 0.0
    %5384 = vmatpush1.xpose.msra.mxu0 0.0
    %5385 = vmatprep.subr.mxu0 0.0
    %5386 = vmatpush1.xpose.msra.mxu0 0.0
    %5387 = vmatprep.subr.mxu0 0.0
    %5388 = vmatpush1.xpose.msra.mxu0 0.0
    %5389 = vmatprep.subr.mxu0 0.0
    %5390 = vmatpush1.xpose.msra.mxu0 0.0
    %5391 = vmatprep.subr.mxu0 0.0
    %5392 = vmatpush1.xpose.msra.mxu0 0.0
    %5393 = vmatprep.subr.mxu0 0.0
    %5394 = vmatpush1.xpose.msra.mxu0 0.0
    %5395 = vmatprep.subr.mxu0 0.0
    %5396 = vmatpush1.xpose.msra.mxu0 0.0
    %5397 = vmatprep.subr.mxu0 0.0
    %5398 = vmatpush1.xpose.msra.mxu0 0.0
    %5399 = vmatprep.subr.mxu0 0.0
    %5400 = vmatpush1.xpose.msra.mxu0 0.0
    %5401 = vmatprep.subr.mxu0 0.0
    %5402 = vmatpush1.xpose.msra.mxu0 0.0
    %5403 = vmatprep.subr.mxu0 0.0
    %5404 = vmatpush1.xpose.msra.mxu0 0.0
    %5405 = vmatprep.subr.mxu0 0.0
    %5406 = vmatpush1.xpose.msra.mxu0 0.0
    %5407 = vmatprep.subr.mxu0 0.0
    %5408 = vmatpush1.xpose.msra.mxu0 0.0
    %5409 = vmatprep.subr.mxu0 0.0
    %5410 = vmatpush1.xpose.msra.mxu0 0.0
    %5411 = vmatprep.subr.mxu0 0.0
    %5412 = vmatpush1.xpose.msra.mxu0 0.0
    %5413 = vmatprep.subr.mxu0 0.0
    %5414 = vmatpush1.xpose.msra.mxu0 0.0
    %5415 = vmatprep.subr.mxu0 0.0
    %5416 = vmatpush1.xpose.msra.mxu0 0.0
    %5417 = vmatprep.subr.mxu0 0.0
    %5418 = vmatpush1.xpose.msra.mxu0 0.0
    %5419 = vmatprep.subr.mxu0 0.0
    %5420 = vmatpush1.xpose.msra.mxu0 0.0
    %5421 = vmatprep.subr.mxu0 0.0
    %5422 = vmatpush1.xpose.msra.mxu0 0.0
    %5423 = vmatprep.subr.mxu0 0.0
    %5424 = vmatpush1.xpose.msra.mxu0 0.0
    %5425 = vmatprep.subr.mxu0 0.0
    %5426 = vmatpush1.xpose.msra.mxu0 0.0
    %5427 = vmatprep.subr.mxu0 0.0
    %5428 = vmatpush1.xpose.msra.mxu0 0.0
    %5429 = vmatprep.subr.mxu0 0.0
    %5430 = vmatpush1.xpose.msra.mxu0 0.0
    %5431 = vmatprep.subr.mxu0 0.0
    %5432 = vmatpush1.xpose.msra.mxu0 0.0
    %5433 = vmatprep.mubr.f32.mxu0 0.0
    %5434 = vmatmul.mubr.f32.gmra.mrb[0].mxu0 %v5364
    %v5435 = vpop.f32.mrb[0].mxu0
    %v5436 = vadd.f32 0.0, %v5435
    %v5437 = vpop.f32.mrb[0].mxu0
    %5438 = vdwg.mxu0
    %v5440 = vsel %vm1044, %v4597, 0
    %v5443 = vsel %vm1044, %v4901, 0
    %5445 = vmatprep.subr.mxu0 0.0
    %5446 = vmatpush1.xpose.msra.mxu0 %v5443
    %5447 = vmatprep.subr.mxu0 0.0
    %5448 = vmatpush1.xpose.msra.mxu0 0.0
    %5449 = vmatprep.subr.mxu0 0.0
    %5450 = vmatpush1.xpose.msra.mxu0 0.0
    %5451 = vmatprep.subr.mxu0 0.0
    %5452 = vmatpush1.xpose.msra.mxu0 0.0
    %5453 = vmatprep.subr.mxu0 0.0
    %5454 = vmatpush1.xpose.msra.mxu0 0.0
    %5455 = vmatprep.subr.mxu0 0.0
    %5456 = vmatpush1.xpose.msra.mxu0 0.0
    %5457 = vmatprep.subr.mxu0 0.0
    %5458 = vmatpush1.xpose.msra.mxu0 0.0
    %5459 = vmatprep.subr.mxu0 0.0
    %5460 = vmatpush1.xpose.msra.mxu0 0.0
    %5461 = vmatprep.subr.mxu0 0.0
    %5462 = vmatpush1.xpose.msra.mxu0 0.0
    %5463 = vmatprep.subr.mxu0 0.0
    %5464 = vmatpush1.xpose.msra.mxu0 0.0
    %5465 = vmatprep.subr.mxu0 0.0
    %5466 = vmatpush1.xpose.msra.mxu0 0.0
    %5467 = vmatprep.subr.mxu0 0.0
    %5468 = vmatpush1.xpose.msra.mxu0 0.0
    %5469 = vmatprep.subr.mxu0 0.0
    %5470 = vmatpush1.xpose.msra.mxu0 0.0
    %5471 = vmatprep.subr.mxu0 0.0
    %5472 = vmatpush1.xpose.msra.mxu0 0.0
    %5473 = vmatprep.subr.mxu0 0.0
    %5474 = vmatpush1.xpose.msra.mxu0 0.0
    %5475 = vmatprep.subr.mxu0 0.0
    %5476 = vmatpush1.xpose.msra.mxu0 0.0
    %5477 = vmatprep.subr.mxu0 0.0
    %5478 = vmatpush1.xpose.msra.mxu0 0.0
    %5479 = vmatprep.subr.mxu0 0.0
    %5480 = vmatpush1.xpose.msra.mxu0 0.0
    %5481 = vmatprep.subr.mxu0 0.0
    %5482 = vmatpush1.xpose.msra.mxu0 0.0
    %5483 = vmatprep.subr.mxu0 0.0
    %5484 = vmatpush1.xpose.msra.mxu0 0.0
    %5485 = vmatprep.subr.mxu0 0.0
    %5486 = vmatpush1.xpose.msra.mxu0 0.0
    %5487 = vmatprep.subr.mxu0 0.0
    %5488 = vmatpush1.xpose.msra.mxu0 0.0
    %5489 = vmatprep.subr.mxu0 0.0
    %5490 = vmatpush1.xpose.msra.mxu0 0.0
    %5491 = vmatprep.subr.mxu0 0.0
    %5492 = vmatpush1.xpose.msra.mxu0 0.0
    %5493 = vmatprep.subr.mxu0 0.0
    %5494 = vmatpush1.xpose.msra.mxu0 0.0
    %5495 = vmatprep.subr.mxu0 0.0
    %5496 = vmatpush1.xpose.msra.mxu0 0.0
    %5497 = vmatprep.subr.mxu0 0.0
    %5498 = vmatpush1.xpose.msra.mxu0 0.0
    %5499 = vmatprep.subr.mxu0 0.0
    %5500 = vmatpush1.xpose.msra.mxu0 0.0
    %5501 = vmatprep.subr.mxu0 0.0
    %5502 = vmatpush1.xpose.msra.mxu0 0.0
    %5503 = vmatprep.subr.mxu0 0.0
    %5504 = vmatpush1.xpose.msra.mxu0 0.0
    %5505 = vmatprep.subr.mxu0 0.0
    %5506 = vmatpush1.xpose.msra.mxu0 0.0
    %5507 = vmatprep.subr.mxu0 0.0
    %5508 = vmatpush1.xpose.msra.mxu0 0.0
    %5509 = vmatprep.mubr.f32.mxu0 0.0
    %5510 = vmatmul.mubr.f32.gmra.mrb[0].mxu0 %v5440
    %v5511 = vpop.f32.mrb[0].mxu0
    %v5512 = vadd.f32 0.0, %v5511
    %v5513 = vpop.f32.mrb[0].mxu0
    %5514 = vdwg.mxu0
    %v5515 = vmul.f32 %v5284, 0.35355338
    %v5516 = vmul.f32 %v5360, 0.35355338
    %v5517 = vmul.f32 %v5436, 0.35355338
    %v5518 = vmul.f32 %v5512, 0.35355338
    %v5519 = vadd.f32 %v5515, %v1357
    %v5520 = vadd.f32 %v5516, %v1357
    %v5521 = vadd.f32 %v5517, %v1357
    %v5522 = vadd.f32 %v5518, %v1357
    %v5523 = vsel %vm1044, %v5519, -inf
    %5524 = vmax.xlane.f32.xlu0 %v5523
    %v5525 = vpop.xlane.xlu0 %5524
    %v5526 = vsel %vm1044, %v5520, -inf
    %5527 = vmax.xlane.f32.xlu0 %v5526
    %v5528 = vpop.xlane.xlu0 %5527
    %v5529 = vsel %vm1044, %v5521, -inf
    %5530 = vmax.xlane.f32.xlu0 %v5529
    %v5531 = vpop.xlane.xlu0 %5530
    %v5532 = vsel %vm1044, %v5522, -inf
    %5533 = vmax.xlane.f32.xlu0 %v5532
    %v5534 = vpop.xlane.xlu0 %5533
    %v5535 = vsub.f32 %v5519, %v5525
    %v5536 = vsub.f32 %v5520, %v5528
    %v5537 = vsub.f32 %v5521, %v5531
    %v5538 = vsub.f32 %v5522, %v5534
    %v5539 = vmul.f32 %v5535, 1.442695
    %v5540 = vpow.pop %v5539
    %v5541 = vmul.f32 %v5536, 1.442695
    %v5542 = vpow.pop %v5541
    %v5543 = vmul.f32 %v5537, 1.442695
    %v5544 = vpow.pop %v5543
    %v5545 = vmul.f32 %v5538, 1.442695
    %v5546 = vpow.pop %v5545
    %v5547 = vsel %vm1044, %v5540, 0.0
    %5548 = vadd.xlane.f32.xlu0 %v5547
    %v5549 = vpop.xlane.xlu0 %5548
    %v5550 = vsel %vm1044, %v5542, 0.0
    %5551 = vadd.xlane.f32.xlu0 %v5550
    %v5552 = vpop.xlane.xlu0 %5551
    %v5553 = vsel %vm1044, %v5544, 0.0
    %5554 = vadd.xlane.f32.xlu0 %v5553
    %v5555 = vpop.xlane.xlu0 %5554
    %v5556 = vsel %vm1044, %v5546, 0.0
    %5557 = vadd.xlane.f32.xlu0 %v5556
    %v5558 = vpop.xlane.xlu0 %5557
    %v5559 = vrcp.pop %v5549
    %v5560 = vmul.f32 %v5540, %v5559
    %v5561 = vrcp.pop %v5552
    %v5562 = vmul.f32 %v5542, %v5561
    %v5563 = vrcp.pop %v5555
    %v5564 = vmul.f32 %v5544, %v5563
    %v5565 = vrcp.pop %v5558
    %v5566 = vmul.f32 %v5546, %v5565
    %v5567 = vsel %vm1044, %v5560, 0.0
    %v5568 = vsel %vm1044, %v5562, 0.0
    %v5569 = vadd.f32 %v5567, %v5568
    %v5570 = vsel %vm1044, %v5564, 0.0
    %v5571 = vadd.f32 %v5569, %v5570
    %v5572 = vsel %vm1044, %v5566, 0.0
    %v5573 = vadd.f32 %v5571, %v5572
    %v5574 = vmul.f32 %v5573, %v1414
    %s5575 = scalar_lea.vmem [#allocation2], 16
    %5576 = vst.msk [vmem:[%s5575] sm:$0xff] %vm1044, %v5574
    %v5578 = vsel %vm1044, %v5560, 0
    %5580 = vmatprep.subr.mxu0 0.0
    %5581 = vmatpush1.msra.mxu0 %v4998
    %5582 = vmatprep.subr.mxu0 0.0
    %5583 = vmatpush1.msra.mxu0 0.0
    %5584 = vmatprep.subr.mxu0 0.0
    %5585 = vmatpush1.msra.mxu0 0.0
    %5586 = vmatprep.subr.mxu0 0.0
    %5587 = vmatpush1.msra.mxu0 0.0
    %5588 = vmatprep.subr.mxu0 0.0
    %5589 = vmatpush1.msra.mxu0 0.0
    %5590 = vmatprep.subr.mxu0 0.0
    %5591 = vmatpush1.msra.mxu0 0.0
    %5592 = vmatprep.subr.mxu0 0.0
    %5593 = vmatpush1.msra.mxu0 0.0
    %5594 = vmatprep.subr.mxu0 0.0
    %5595 = vmatpush1.msra.mxu0 0.0
    %5596 = vmatprep.subr.mxu0 0.0
    %5597 = vmatpush1.msra.mxu0 0.0
    %5598 = vmatprep.subr.mxu0 0.0
    %5599 = vmatpush1.msra.mxu0 0.0
    %5600 = vmatprep.subr.mxu0 0.0
    %5601 = vmatpush1.msra.mxu0 0.0
    %5602 = vmatprep.subr.mxu0 0.0
    %5603 = vmatpush1.msra.mxu0 0.0
    %5604 = vmatprep.subr.mxu0 0.0
    %5605 = vmatpush1.msra.mxu0 0.0
    %5606 = vmatprep.subr.mxu0 0.0
    %5607 = vmatpush1.msra.mxu0 0.0
    %5608 = vmatprep.subr.mxu0 0.0
    %5609 = vmatpush1.msra.mxu0 0.0
    %5610 = vmatprep.subr.mxu0 0.0
    %5611 = vmatpush1.msra.mxu0 0.0
    %5612 = vmatprep.subr.mxu0 0.0
    %5613 = vmatpush1.msra.mxu0 0.0
    %5614 = vmatprep.subr.mxu0 0.0
    %5615 = vmatpush1.msra.mxu0 0.0
    %5616 = vmatprep.subr.mxu0 0.0
    %5617 = vmatpush1.msra.mxu0 0.0
    %5618 = vmatprep.subr.mxu0 0.0
    %5619 = vmatpush1.msra.mxu0 0.0
    %5620 = vmatprep.subr.mxu0 0.0
    %5621 = vmatpush1.msra.mxu0 0.0
    %5622 = vmatprep.subr.mxu0 0.0
    %5623 = vmatpush1.msra.mxu0 0.0
    %5624 = vmatprep.subr.mxu0 0.0
    %5625 = vmatpush1.msra.mxu0 0.0
    %5626 = vmatprep.subr.mxu0 0.0
    %5627 = vmatpush1.msra.mxu0 0.0
    %5628 = vmatprep.subr.mxu0 0.0
    %5629 = vmatpush1.msra.mxu0 0.0
    %5630 = vmatprep.subr.mxu0 0.0
    %5631 = vmatpush1.msra.mxu0 0.0
    %5632 = vmatprep.subr.mxu0 0.0
    %5633 = vmatpush1.msra.mxu0 0.0
    %5634 = vmatprep.subr.mxu0 0.0
    %5635 = vmatpush1.msra.mxu0 0.0
    %5636 = vmatprep.subr.mxu0 0.0
    %5637 = vmatpush1.msra.mxu0 0.0
    %5638 = vmatprep.subr.mxu0 0.0
    %5639 = vmatpush1.msra.mxu0 0.0
    %5640 = vmatprep.subr.mxu0 0.0
    %5641 = vmatpush1.msra.mxu0 0.0
    %5642 = vmatprep.subr.mxu0 0.0
    %5643 = vmatpush1.msra.mxu0 0.0
    %5644 = vmatprep.mubr.f32.mxu0 0.0
    %5645 = vmatmul.mubr.f32.gmra.mrb[0].mxu0 %v5578
    %v5646 = vpop.f32.mrb[0].mxu0
    %v5647 = vadd.f32 0.0, %v5646
    %v5648 = vpop.f32.mrb[0].mxu0
    %5649 = vdwg.mxu0
    %v5651 = vsel %vm1044, %v5562, 0
    %5653 = vmatprep.subr.mxu0 0.0
    %5654 = vmatpush1.msra.mxu0 %v5068
    %5655 = vmatprep.subr.mxu0 0.0
    %5656 = vmatpush1.msra.mxu0 0.0
    %5657 = vmatprep.subr.mxu0 0.0
    %5658 = vmatpush1.msra.mxu0 0.0
    %5659 = vmatprep.subr.mxu0 0.0
    %5660 = vmatpush1.msra.mxu0 0.0
    %5661 = vmatprep.subr.mxu0 0.0
    %5662 = vmatpush1.msra.mxu0 0.0
    %5663 = vmatprep.subr.mxu0 0.0
    %5664 = vmatpush1.msra.mxu0 0.0
    %5665 = vmatprep.subr.mxu0 0.0
    %5666 = vmatpush1.msra.mxu0 0.0
    %5667 = vmatprep.subr.mxu0 0.0
    %5668 = vmatpush1.msra.mxu0 0.0
    %5669 = vmatprep.subr.mxu0 0.0
    %5670 = vmatpush1.msra.mxu0 0.0
    %5671 = vmatprep.subr.mxu0 0.0
    %5672 = vmatpush1.msra.mxu0 0.0
    %5673 = vmatprep.subr.mxu0 0.0
    %5674 = vmatpush1.msra.mxu0 0.0
    %5675 = vmatprep.subr.mxu0 0.0
    %5676 = vmatpush1.msra.mxu0 0.0
    %5677 = vmatprep.subr.mxu0 0.0
    %5678 = vmatpush1.msra.mxu0 0.0
    %5679 = vmatprep.subr.mxu0 0.0
    %5680 = vmatpush1.msra.mxu0 0.0
    %5681 = vmatprep.subr.mxu0 0.0
    %5682 = vmatpush1.msra.mxu0 0.0
    %5683 = vmatprep.subr.mxu0 0.0
    %5684 = vmatpush1.msra.mxu0 0.0
    %5685 = vmatprep.subr.mxu0 0.0
    %5686 = vmatpush1.msra.mxu0 0.0
    %5687 = vmatprep.subr.mxu0 0.0
    %5688 = vmatpush1.msra.mxu0 0.0
    %5689 = vmatprep.subr.mxu0 0.0
    %5690 = vmatpush1.msra.mxu0 0.0
    %5691 = vmatprep.subr.mxu0 0.0
    %5692 = vmatpush1.msra.mxu0 0.0
    %5693 = vmatprep.subr.mxu0 0.0
    %5694 = vmatpush1.msra.mxu0 0.0
    %5695 = vmatprep.subr.mxu0 0.0
    %5696 = vmatpush1.msra.mxu0 0.0
    %5697 = vmatprep.subr.mxu0 0.0
    %5698 = vmatpush1.msra.mxu0 0.0
    %5699 = vmatprep.subr.mxu0 0.0
    %5700 = vmatpush1.msra.mxu0 0.0
    %5701 = vmatprep.subr.mxu0 0.0
    %5702 = vmatpush1.msra.mxu0 0.0
    %5703 = vmatprep.subr.mxu0 0.0
    %5704 = vmatpush1.msra.mxu0 0.0
    %5705 = vmatprep.subr.mxu0 0.0
    %5706 = vmatpush1.msra.mxu0 0.0
    %5707 = vmatprep.subr.mxu0 0.0
    %5708 = vmatpush1.msra.mxu0 0.0
    %5709 = vmatprep.subr.mxu0 0.0
    %5710 = vmatpush1.msra.mxu0 0.0
    %5711 = vmatprep.subr.mxu0 0.0
    %5712 = vmatpush1.msra.mxu0 0.0
    %5713 = vmatprep.subr.mxu0 0.0
    %5714 = vmatpush1.msra.mxu0 0.0
    %5715 = vmatprep.subr.mxu0 0.0
    %5716 = vmatpush1.msra.mxu0 0.0
    %5717 = vmatprep.mubr.f32.mxu0 0.0
    %5718 = vmatmul.mubr.f32.gmra.mrb[0].mxu0 %v5651
    %v5719 = vpop.f32.mrb[0].mxu0
    %v5720 = vadd.f32 0.0, %v5719
    %v5721 = vpop.f32.mrb[0].mxu0
    %5722 = vdwg.mxu0
    %v5724 = vsel %vm1044, %v5564, 0
    %5726 = vmatprep.subr.mxu0 0.0
    %5727 = vmatpush1.msra.mxu0 %v5138
    %5728 = vmatprep.subr.mxu0 0.0
    %5729 = vmatpush1.msra.mxu0 0.0
    %5730 = vmatprep.subr.mxu0 0.0
    %5731 = vmatpush1.msra.mxu0 0.0
    %5732 = vmatprep.subr.mxu0 0.0
    %5733 = vmatpush1.msra.mxu0 0.0
    %5734 = vmatprep.subr.mxu0 0.0
    %5735 = vmatpush1.msra.mxu0 0.0
    %5736 = vmatprep.subr.mxu0 0.0
    %5737 = vmatpush1.msra.mxu0 0.0
    %5738 = vmatprep.subr.mxu0 0.0
    %5739 = vmatpush1.msra.mxu0 0.0
    %5740 = vmatprep.subr.mxu0 0.0
    %5741 = vmatpush1.msra.mxu0 0.0
    %5742 = vmatprep.subr.mxu0 0.0
    %5743 = vmatpush1.msra.mxu0 0.0
    %5744 = vmatprep.subr.mxu0 0.0
    %5745 = vmatpush1.msra.mxu0 0.0
    %5746 = vmatprep.subr.mxu0 0.0
    %5747 = vmatpush1.msra.mxu0 0.0
    %5748 = vmatprep.subr.mxu0 0.0
    %5749 = vmatpush1.msra.mxu0 0.0
    %5750 = vmatprep.subr.mxu0 0.0
    %5751 = vmatpush1.msra.mxu0 0.0
    %5752 = vmatprep.subr.mxu0 0.0
    %5753 = vmatpush1.msra.mxu0 0.0
    %5754 = vmatprep.subr.mxu0 0.0
    %5755 = vmatpush1.msra.mxu0 0.0
    %5756 = vmatprep.subr.mxu0 0.0
    %5757 = vmatpush1.msra.mxu0 0.0
    %5758 = vmatprep.subr.mxu0 0.0
    %5759 = vmatpush1.msra.mxu0 0.0
    %5760 = vmatprep.subr.mxu0 0.0
    %5761 = vmatpush1.msra.mxu0 0.0
    %5762 = vmatprep.subr.mxu0 0.0
    %5763 = vmatpush1.msra.mxu0 0.0
    %5764 = vmatprep.subr.mxu0 0.0
    %5765 = vmatpush1.msra.mxu0 0.0
    %5766 = vmatprep.subr.mxu0 0.0
    %5767 = vmatpush1.msra.mxu0 0.0
    %5768 = vmatprep.subr.mxu0 0.0
    %5769 = vmatpush1.msra.mxu0 0.0
    %5770 = vmatprep.subr.mxu0 0.0
    %5771 = vmatpush1.msra.mxu0 0.0
    %5772 = vmatprep.subr.mxu0 0.0
    %5773 = vmatpush1.msra.mxu0 0.0
    %5774 = vmatprep.subr.mxu0 0.0
    %5775 = vmatpush1.msra.mxu0 0.0
    %5776 = vmatprep.subr.mxu0 0.0
    %5777 = vmatpush1.msra.mxu0 0.0
    %5778 = vmatprep.subr.mxu0 0.0
    %5779 = vmatpush1.msra.mxu0 0.0
    %5780 = vmatprep.subr.mxu0 0.0
    %5781 = vmatpush1.msra.mxu0 0.0
    %5782 = vmatprep.subr.mxu0 0.0
    %5783 = vmatpush1.msra.mxu0 0.0
    %5784 = vmatprep.subr.mxu0 0.0
    %5785 = vmatpush1.msra.mxu0 0.0
    %5786 = vmatprep.subr.mxu0 0.0
    %5787 = vmatpush1.msra.mxu0 0.0
    %5788 = vmatprep.subr.mxu0 0.0
    %5789 = vmatpush1.msra.mxu0 0.0
    %5790 = vmatprep.mubr.f32.mxu0 0.0
    %5791 = vmatmul.mubr.f32.gmra.mrb[0].mxu0 %v5724
    %v5792 = vpop.f32.mrb[0].mxu0
    %v5793 = vadd.f32 0.0, %v5792
    %v5794 = vpop.f32.mrb[0].mxu0
    %5795 = vdwg.mxu0
    %v5797 = vsel %vm1044, %v5566, 0
    %5799 = vmatprep.subr.mxu0 0.0
    %5800 = vmatpush1.msra.mxu0 %v5208
    %5801 = vmatprep.subr.mxu0 0.0
    %5802 = vmatpush1.msra.mxu0 0.0
    %5803 = vmatprep.subr.mxu0 0.0
    %5804 = vmatpush1.msra.mxu0 0.0
    %5805 = vmatprep.subr.mxu0 0.0
    %5806 = vmatpush1.msra.mxu0 0.0
    %5807 = vmatprep.subr.mxu0 0.0
    %5808 = vmatpush1.msra.mxu0 0.0
    %5809 = vmatprep.subr.mxu0 0.0
    %5810 = vmatpush1.msra.mxu0 0.0
    %5811 = vmatprep.subr.mxu0 0.0
    %5812 = vmatpush1.msra.mxu0 0.0
    %5813 = vmatprep.subr.mxu0 0.0
    %5814 = vmatpush1.msra.mxu0 0.0
    %5815 = vmatprep.subr.mxu0 0.0
    %5816 = vmatpush1.msra.mxu0 0.0
    %5817 = vmatprep.subr.mxu0 0.0
    %5818 = vmatpush1.msra.mxu0 0.0
    %5819 = vmatprep.subr.mxu0 0.0
    %5820 = vmatpush1.msra.mxu0 0.0
    %5821 = vmatprep.subr.mxu0 0.0
    %5822 = vmatpush1.msra.mxu0 0.0
    %5823 = vmatprep.subr.mxu0 0.0
    %5824 = vmatpush1.msra.mxu0 0.0
    %5825 = vmatprep.subr.mxu0 0.0
    %5826 = vmatpush1.msra.mxu0 0.0
    %5827 = vmatprep.subr.mxu0 0.0
    %5828 = vmatpush1.msra.mxu0 0.0
    %5829 = vmatprep.subr.mxu0 0.0
    %5830 = vmatpush1.msra.mxu0 0.0
    %5831 = vmatprep.subr.mxu0 0.0
    %5832 = vmatpush1.msra.mxu0 0.0
    %5833 = vmatprep.subr.mxu0 0.0
    %5834 = vmatpush1.msra.mxu0 0.0
    %5835 = vmatprep.subr.mxu0 0.0
    %5836 = vmatpush1.msra.mxu0 0.0
    %5837 = vmatprep.subr.mxu0 0.0
    %5838 = vmatpush1.msra.mxu0 0.0
    %5839 = vmatprep.subr.mxu0 0.0
    %5840 = vmatpush1.msra.mxu0 0.0
    %5841 = vmatprep.subr.mxu0 0.0
    %5842 = vmatpush1.msra.mxu0 0.0
    %5843 = vmatprep.subr.mxu0 0.0
    %5844 = vmatpush1.msra.mxu0 0.0
    %5845 = vmatprep.subr.mxu0 0.0
    %5846 = vmatpush1.msra.mxu0 0.0
    %5847 = vmatprep.subr.mxu0 0.0
    %5848 = vmatpush1.msra.mxu0 0.0
    %5849 = vmatprep.subr.mxu0 0.0
    %5850 = vmatpush1.msra.mxu0 0.0
    %5851 = vmatprep.subr.mxu0 0.0
    %5852 = vmatpush1.msra.mxu0 0.0
    %5853 = vmatprep.subr.mxu0 0.0
    %5854 = vmatpush1.msra.mxu0 0.0
    %5855 = vmatprep.subr.mxu0 0.0
    %5856 = vmatpush1.msra.mxu0 0.0
    %5857 = vmatprep.subr.mxu0 0.0
    %5858 = vmatpush1.msra.mxu0 0.0
    %5859 = vmatprep.subr.mxu0 0.0
    %5860 = vmatpush1.msra.mxu0 0.0
    %5861 = vmatprep.subr.mxu0 0.0
    %5862 = vmatpush1.msra.mxu0 0.0
    %5863 = vmatprep.mubr.f32.mxu0 0.0
    %5864 = vmatmul.mubr.f32.gmra.mrb[0].mxu0 %v5797
    %v5865 = vpop.f32.mrb[0].mxu0
    %v5866 = vadd.f32 0.0, %v5865
    %v5867 = vpop.f32.mrb[0].mxu0
    %5868 = vdwg.mxu0
    %v5870 = vsel %vm1044, %v5647, 0
    %5872 = vmatprep.subr.mxu0 0.0
    %5873 = vmatpush1.msra.mxu0 %v4271
    %5874 = vmatprep.subr.mxu0 0.0
    %5875 = vmatpush1.msra.mxu0 0.0
    %5876 = vmatprep.subr.mxu0 0.0
    %5877 = vmatpush1.msra.mxu0 0.0
    %5878 = vmatprep.subr.mxu0 0.0
    %5879 = vmatpush1.msra.mxu0 0.0
    %5880 = vmatprep.subr.mxu0 0.0
    %5881 = vmatpush1.msra.mxu0 0.0
    %5882 = vmatprep.subr.mxu0 0.0
    %5883 = vmatpush1.msra.mxu0 0.0
    %5884 = vmatprep.subr.mxu0 0.0
    %5885 = vmatpush1.msra.mxu0 0.0
    %5886 = vmatprep.subr.mxu0 0.0
    %5887 = vmatpush1.msra.mxu0 0.0
    %5888 = vmatprep.subr.mxu0 0.0
    %5889 = vmatpush1.msra.mxu0 0.0
    %5890 = vmatprep.subr.mxu0 0.0
    %5891 = vmatpush1.msra.mxu0 0.0
    %5892 = vmatprep.subr.mxu0 0.0
    %5893 = vmatpush1.msra.mxu0 0.0
    %5894 = vmatprep.subr.mxu0 0.0
    %5895 = vmatpush1.msra.mxu0 0.0
    %5896 = vmatprep.subr.mxu0 0.0
    %5897 = vmatpush1.msra.mxu0 0.0
    %5898 = vmatprep.subr.mxu0 0.0
    %5899 = vmatpush1.msra.mxu0 0.0
    %5900 = vmatprep.subr.mxu0 0.0
    %5901 = vmatpush1.msra.mxu0 0.0
    %5902 = vmatprep.subr.mxu0 0.0
    %5903 = vmatpush1.msra.mxu0 0.0
    %5904 = vmatprep.subr.mxu0 0.0
    %5905 = vmatpush1.msra.mxu0 0.0
    %5906 = vmatprep.subr.mxu0 0.0
    %5907 = vmatpush1.msra.mxu0 0.0
    %5908 = vmatprep.subr.mxu0 0.0
    %5909 = vmatpush1.msra.mxu0 0.0
    %5910 = vmatprep.subr.mxu0 0.0
    %5911 = vmatpush1.msra.mxu0 0.0
    %5912 = vmatprep.subr.mxu0 0.0
    %5913 = vmatpush1.msra.mxu0 0.0
    %5914 = vmatprep.subr.mxu0 0.0
    %5915 = vmatpush1.msra.mxu0 0.0
    %5916 = vmatprep.subr.mxu0 0.0
    %5917 = vmatpush1.msra.mxu0 0.0
    %5918 = vmatprep.subr.mxu0 0.0
    %5919 = vmatpush1.msra.mxu0 0.0
    %5920 = vmatprep.subr.mxu0 0.0
    %5921 = vmatpush1.msra.mxu0 0.0
    %5922 = vmatprep.subr.mxu0 0.0
    %5923 = vmatpush1.msra.mxu0 0.0
    %5924 = vmatprep.subr.mxu0 0.0
    %5925 = vmatpush1.msra.mxu0 0.0
    %5926 = vmatprep.subr.mxu0 0.0
    %5927 = vmatpush1.msra.mxu0 0.0
    %5928 = vmatprep.subr.mxu0 0.0
    %5929 = vmatpush1.msra.mxu0 0.0
    %5930 = vmatprep.subr.mxu0 0.0
    %5931 = vmatpush1.msra.mxu0 0.0
    %5932 = vmatprep.subr.mxu0 0.0
    %5933 = vmatpush1.msra.mxu0 0.0
    %5934 = vmatprep.subr.mxu0 0.0
    %5935 = vmatpush1.msra.mxu0 0.0
    %5936 = vmatprep.mubr.f32.mxu0 0.0
    %5937 = vmatmul.mubr.f32.gmra.mrb[0].mxu0 %v5870
    %v5938 = vpop.f32.mrb[0].mxu0
    %v5939 = vadd.f32 0.0, %v5938
    %v5940 = vpop.f32.mrb[0].mxu0
    %5941 = vdwg.mxu0
    %v5943 = vsel %vm1044, %v5720, 0
    %5945 = vmatprep.subr.mxu0 0.0
    %5946 = vmatpush1.msra.mxu0 %v4272
    %5947 = vmatprep.subr.mxu0 0.0
    %5948 = vmatpush1.msra.mxu0 0.0
    %5949 = vmatprep.subr.mxu0 0.0
    %5950 = vmatpush1.msra.mxu0 0.0
    %5951 = vmatprep.subr.mxu0 0.0
    %5952 = vmatpush1.msra.mxu0 0.0
    %5953 = vmatprep.subr.mxu0 0.0
    %5954 = vmatpush1.msra.mxu0 0.0
    %5955 = vmatprep.subr.mxu0 0.0
    %5956 = vmatpush1.msra.mxu0 0.0
    %5957 = vmatprep.subr.mxu0 0.0
    %5958 = vmatpush1.msra.mxu0 0.0
    %5959 = vmatprep.subr.mxu0 0.0
    %5960 = vmatpush1.msra.mxu0 0.0
    %5961 = vmatprep.subr.mxu0 0.0
    %5962 = vmatpush1.msra.mxu0 0.0
    %5963 = vmatprep.subr.mxu0 0.0
    %5964 = vmatpush1.msra.mxu0 0.0
    %5965 = vmatprep.subr.mxu0 0.0
    %5966 = vmatpush1.msra.mxu0 0.0
    %5967 = vmatprep.subr.mxu0 0.0
    %5968 = vmatpush1.msra.mxu0 0.0
    %5969 = vmatprep.subr.mxu0 0.0
    %5970 = vmatpush1.msra.mxu0 0.0
    %5971 = vmatprep.subr.mxu0 0.0
    %5972 = vmatpush1.msra.mxu0 0.0
    %5973 = vmatprep.subr.mxu0 0.0
    %5974 = vmatpush1.msra.mxu0 0.0
    %5975 = vmatprep.subr.mxu0 0.0
    %5976 = vmatpush1.msra.mxu0 0.0
    %5977 = vmatprep.subr.mxu0 0.0
    %5978 = vmatpush1.msra.mxu0 0.0
    %5979 = vmatprep.subr.mxu0 0.0
    %5980 = vmatpush1.msra.mxu0 0.0
    %5981 = vmatprep.subr.mxu0 0.0
    %5982 = vmatpush1.msra.mxu0 0.0
    %5983 = vmatprep.subr.mxu0 0.0
    %5984 = vmatpush1.msra.mxu0 0.0
    %5985 = vmatprep.subr.mxu0 0.0
    %5986 = vmatpush1.msra.mxu0 0.0
    %5987 = vmatprep.subr.mxu0 0.0
    %5988 = vmatpush1.msra.mxu0 0.0
    %5989 = vmatprep.subr.mxu0 0.0
    %5990 = vmatpush1.msra.mxu0 0.0
    %5991 = vmatprep.subr.mxu0 0.0
    %5992 = vmatpush1.msra.mxu0 0.0
    %5993 = vmatprep.subr.mxu0 0.0
    %5994 = vmatpush1.msra.mxu0 0.0
    %5995 = vmatprep.subr.mxu0 0.0
    %5996 = vmatpush1.msra.mxu0 0.0
    %5997 = vmatprep.subr.mxu0 0.0
    %5998 = vmatpush1.msra.mxu0 0.0
    %5999 = vmatprep.subr.mxu0 0.0
    %6000 = vmatpush1.msra.mxu0 0.0
    %6001 = vmatprep.subr.mxu0 0.0
    %6002 = vmatpush1.msra.mxu0 0.0
    %6003 = vmatprep.subr.mxu0 0.0
    %6004 = vmatpush1.msra.mxu0 0.0
    %6005 = vmatprep.subr.mxu0 0.0
    %6006 = vmatpush1.msra.mxu0 0.0
    %6007 = vmatprep.subr.mxu0 0.0
    %6008 = vmatpush1.msra.mxu0 0.0
    %6009 = vmatprep.mubr.f32.mxu0 0.0
    %6010 = vmatmul.mubr.f32.gmra.mrb[0].mxu0 %v5943
    %v6011 = vpop.f32.mrb[0].mxu0
    %v6012 = vadd.f32 0.0, %v6011
    %v6013 = vpop.f32.mrb[0].mxu0
    %6014 = vdwg.mxu0
    %v6016 = vsel %vm1044, %v5793, 0
    %6018 = vmatprep.subr.mxu0 0.0
    %6019 = vmatpush1.msra.mxu0 %v4273
    %6020 = vmatprep.subr.mxu0 0.0
    %6021 = vmatpush1.msra.mxu0 0.0
    %6022 = vmatprep.subr.mxu0 0.0
    %6023 = vmatpush1.msra.mxu0 0.0
    %6024 = vmatprep.subr.mxu0 0.0
    %6025 = vmatpush1.msra.mxu0 0.0
    %6026 = vmatprep.subr.mxu0 0.0
    %6027 = vmatpush1.msra.mxu0 0.0
    %6028 = vmatprep.subr.mxu0 0.0
    %6029 = vmatpush1.msra.mxu0 0.0
    %6030 = vmatprep.subr.mxu0 0.0
    %6031 = vmatpush1.msra.mxu0 0.0
    %6032 = vmatprep.subr.mxu0 0.0
    %6033 = vmatpush1.msra.mxu0 0.0
    %6034 = vmatprep.subr.mxu0 0.0
    %6035 = vmatpush1.msra.mxu0 0.0
    %6036 = vmatprep.subr.mxu0 0.0
    %6037 = vmatpush1.msra.mxu0 0.0
    %6038 = vmatprep.subr.mxu0 0.0
    %6039 = vmatpush1.msra.mxu0 0.0
    %6040 = vmatprep.subr.mxu0 0.0
    %6041 = vmatpush1.msra.mxu0 0.0
    %6042 = vmatprep.subr.mxu0 0.0
    %6043 = vmatpush1.msra.mxu0 0.0
    %6044 = vmatprep.subr.mxu0 0.0
    %6045 = vmatpush1.msra.mxu0 0.0
    %6046 = vmatprep.subr.mxu0 0.0
    %6047 = vmatpush1.msra.mxu0 0.0
    %6048 = vmatprep.subr.mxu0 0.0
    %6049 = vmatpush1.msra.mxu0 0.0
    %6050 = vmatprep.subr.mxu0 0.0
    %6051 = vmatpush1.msra.mxu0 0.0
    %6052 = vmatprep.subr.mxu0 0.0
    %6053 = vmatpush1.msra.mxu0 0.0
    %6054 = vmatprep.subr.mxu0 0.0
    %6055 = vmatpush1.msra.mxu0 0.0
    %6056 = vmatprep.subr.mxu0 0.0
    %6057 = vmatpush1.msra.mxu0 0.0
    %6058 = vmatprep.subr.mxu0 0.0
    %6059 = vmatpush1.msra.mxu0 0.0
    %6060 = vmatprep.subr.mxu0 0.0
    %6061 = vmatpush1.msra.mxu0 0.0
    %6062 = vmatprep.subr.mxu0 0.0
    %6063 = vmatpush1.msra.mxu0 0.0
    %6064 = vmatprep.subr.mxu0 0.0
    %6065 = vmatpush1.msra.mxu0 0.0
    %6066 = vmatprep.subr.mxu0 0.0
    %6067 = vmatpush1.msra.mxu0 0.0
    %6068 = vmatprep.subr.mxu0 0.0
    %6069 = vmatpush1.msra.mxu0 0.0
    %6070 = vmatprep.subr.mxu0 0.0
    %6071 = vmatpush1.msra.mxu0 0.0
    %6072 = vmatprep.subr.mxu0 0.0
    %6073 = vmatpush1.msra.mxu0 0.0
    %6074 = vmatprep.subr.mxu0 0.0
    %6075 = vmatpush1.msra.mxu0 0.0
    %6076 = vmatprep.subr.mxu0 0.0
    %6077 = vmatpush1.msra.mxu0 0.0
    %6078 = vmatprep.subr.mxu0 0.0
    %6079 = vmatpush1.msra.mxu0 0.0
    %6080 = vmatprep.subr.mxu0 0.0
    %6081 = vmatpush1.msra.mxu0 0.0
    %6082 = vmatprep.mubr.f32.mxu0 0.0
    %6083 = vmatmul.mubr.f32.gmra.mrb[0].mxu0 %v6016
    %v6084 = vpop.f32.mrb[0].mxu0
    %v6085 = vadd.f32 0.0, %v6084
    %v6086 = vpop.f32.mrb[0].mxu0
    %6087 = vdwg.mxu0
    %v6089 = vsel %vm1044, %v5866, 0
    %6091 = vmatprep.subr.mxu0 0.0
    %6092 = vmatpush1.msra.mxu0 %v4274
    %6093 = vmatprep.subr.mxu0 0.0
    %6094 = vmatpush1.msra.mxu0 0.0
    %6095 = vmatprep.subr.mxu0 0.0
    %6096 = vmatpush1.msra.mxu0 0.0
    %6097 = vmatprep.subr.mxu0 0.0
    %6098 = vmatpush1.msra.mxu0 0.0
    %6099 = vmatprep.subr.mxu0 0.0
    %6100 = vmatpush1.msra.mxu0 0.0
    %6101 = vmatprep.subr.mxu0 0.0
    %6102 = vmatpush1.msra.mxu0 0.0
    %6103 = vmatprep.subr.mxu0 0.0
    %6104 = vmatpush1.msra.mxu0 0.0
    %6105 = vmatprep.subr.mxu0 0.0
    %6106 = vmatpush1.msra.mxu0 0.0
    %6107 = vmatprep.subr.mxu0 0.0
    %6108 = vmatpush1.msra.mxu0 0.0
    %6109 = vmatprep.subr.mxu0 0.0
    %6110 = vmatpush1.msra.mxu0 0.0
    %6111 = vmatprep.subr.mxu0 0.0
    %6112 = vmatpush1.msra.mxu0 0.0
    %6113 = vmatprep.subr.mxu0 0.0
    %6114 = vmatpush1.msra.mxu0 0.0
    %6115 = vmatprep.subr.mxu0 0.0
    %6116 = vmatpush1.msra.mxu0 0.0
    %6117 = vmatprep.subr.mxu0 0.0
    %6118 = vmatpush1.msra.mxu0 0.0
    %6119 = vmatprep.subr.mxu0 0.0
    %6120 = vmatpush1.msra.mxu0 0.0
    %6121 = vmatprep.subr.mxu0 0.0
    %6122 = vmatpush1.msra.mxu0 0.0
    %6123 = vmatprep.subr.mxu0 0.0
    %6124 = vmatpush1.msra.mxu0 0.0
    %6125 = vmatprep.subr.mxu0 0.0
    %6126 = vmatpush1.msra.mxu0 0.0
    %6127 = vmatprep.subr.mxu0 0.0
    %6128 = vmatpush1.msra.mxu0 0.0
    %6129 = vmatprep.subr.mxu0 0.0
    %6130 = vmatpush1.msra.mxu0 0.0
    %6131 = vmatprep.subr.mxu0 0.0
    %6132 = vmatpush1.msra.mxu0 0.0
    %6133 = vmatprep.subr.mxu0 0.0
    %6134 = vmatpush1.msra.mxu0 0.0
    %6135 = vmatprep.subr.mxu0 0.0
    %6136 = vmatpush1.msra.mxu0 0.0
    %6137 = vmatprep.subr.mxu0 0.0
    %6138 = vmatpush1.msra.mxu0 0.0
    %6139 = vmatprep.subr.mxu0 0.0
    %6140 = vmatpush1.msra.mxu0 0.0
    %6141 = vmatprep.subr.mxu0 0.0
    %6142 = vmatpush1.msra.mxu0 0.0
    %6143 = vmatprep.subr.mxu0 0.0
    %6144 = vmatpush1.msra.mxu0 0.0
    %6145 = vmatprep.subr.mxu0 0.0
    %6146 = vmatpush1.msra.mxu0 0.0
    %6147 = vmatprep.subr.mxu0 0.0
    %6148 = vmatpush1.msra.mxu0 0.0
    %6149 = vmatprep.subr.mxu0 0.0
    %6150 = vmatpush1.msra.mxu0 0.0
    %6151 = vmatprep.subr.mxu0 0.0
    %6152 = vmatpush1.msra.mxu0 0.0
    %6153 = vmatprep.subr.mxu0 0.0
    %6154 = vmatpush1.msra.mxu0 0.0
    %6155 = vmatprep.mubr.f32.mxu0 0.0
    %6156 = vmatmul.mubr.f32.gmra.mrb[0].mxu0 %v6089
    %v6157 = vpop.f32.mrb[0].mxu0
    %v6158 = vadd.f32 0.0, %v6157
    %v6159 = vpop.f32.mrb[0].mxu0
    %6160 = vdwg.mxu0
    %v6161 = vsel %vm149, %v5939, 0.0
    %v6162 = vsel %vm149, %v6012, 0.0
    %v6163 = vadd.f32 %v6161, %v6162
    %v6164 = vsel %vm149, %v6085, 0.0
    %v6165 = vadd.f32 %v6163, %v6164
    %v6166 = vsel %vm149, %v6158, 0.0
    %v6167 = vadd.f32 %v6165, %v6166
    %v6168 = vlaneseq
    %v6169 = vshrl.u32 %v6168, 7
    %v6170 = vsub.s32 0, %v6169
    %v6171 = vrot.slane %v4276, %v6170
    %v6172 = vadd.f32 %v6167, %v6171
    %v6173 = vadd.f32 %v2217, %v6172
    %v6174 = vsel %vm149, %v6173, 0.0
    %6175 = vadd.xlane.f32.xlu0 %v6174
    %v6176 = vpop.xlane.xlu0 %6175
    %v6177 = vmul.f32 %v6176, %v2017
    %v6178 = vsub.f32 %v6173, %v6177
    %v6179 = vmul.f32 %v6178, %v6178
    %v6180 = vsel %vm149, %v6179, 0.0
    %6181 = vadd.xlane.f32.xlu0 %v6180
    %v6182 = vpop.xlane.xlu0 %6181
    %v6183 = vmul.f32 %v6182, %v2017
    %v6184 = vadd.f32 %v6183, 1e-05
    %v6185 = vrsqrt.pop %v6184
    %v6186 = vmul.f32 %v6178, %v6185
    %v6187 = vlaneseq
    %v6188 = vshrl.u32 %v6187, 7
    %v6189 = vsub.s32 1, %v6188
    %v6190 = vrot.slane %v4276, %v6189
    %v6191 = vmul.f32 %v6186, %v6190
    %v6192 = vlaneseq
    %v6193 = vshrl.u32 %v6192, 7
    %v6194 = vsub.s32 2, %v6193
    %v6195 = vrot.slane %v4276, %v6194
    %v6196 = vadd.f32 %v6191, %v6195
    %v6197 = vlaneseq
    %v6198 = vshrl.u32 %v6197, 7
    %v6199 = vsub.s32 0, %v6198
    %v6200 = vrot.slane %v4282, %v6199
    %v6202 = vsel %vm149, %v6196, 0
    %6204 = vmatprep.subr.mxu0 0.0
    %6205 = vmatpush1.msra.mxu0 %v4278
    %6206 = vmatprep.subr.mxu0 0.0
    %6207 = vmatpush1.msra.mxu0 %v4279
    %6208 = vmatprep.subr.mxu0 0.0
    %6209 = vmatpush1.msra.mxu0 %v4280
    %6210 = vmatprep.subr.mxu0 0.0
    %6211 = vmatpush1.msra.mxu0 %v4281
    %6212 = vmatprep.subr.mxu0 0.0
    %6213 = vmatpush1.msra.mxu0 0.0
    %6214 = vmatprep.subr.mxu0 0.0
    %6215 = vmatpush1.msra.mxu0 0.0
    %6216 = vmatprep.subr.mxu0 0.0
    %6217 = vmatpush1.msra.mxu0 0.0
    %6218 = vmatprep.subr.mxu0 0.0
    %6219 = vmatpush1.msra.mxu0 0.0
    %6220 = vmatprep.subr.mxu0 0.0
    %6221 = vmatpush1.msra.mxu0 0.0
    %6222 = vmatprep.subr.mxu0 0.0
    %6223 = vmatpush1.msra.mxu0 0.0
    %6224 = vmatprep.subr.mxu0 0.0
    %6225 = vmatpush1.msra.mxu0 0.0
    %6226 = vmatprep.subr.mxu0 0.0
    %6227 = vmatpush1.msra.mxu0 0.0
    %6228 = vmatprep.subr.mxu0 0.0
    %6229 = vmatpush1.msra.mxu0 0.0
    %6230 = vmatprep.subr.mxu0 0.0
    %6231 = vmatpush1.msra.mxu0 0.0
    %6232 = vmatprep.subr.mxu0 0.0
    %6233 = vmatpush1.msra.mxu0 0.0
    %6234 = vmatprep.subr.mxu0 0.0
    %6235 = vmatpush1.msra.mxu0 0.0
    %6236 = vmatprep.subr.mxu0 0.0
    %6237 = vmatpush1.msra.mxu0 0.0
    %6238 = vmatprep.subr.mxu0 0.0
    %6239 = vmatpush1.msra.mxu0 0.0
    %6240 = vmatprep.subr.mxu0 0.0
    %6241 = vmatpush1.msra.mxu0 0.0
    %6242 = vmatprep.subr.mxu0 0.0
    %6243 = vmatpush1.msra.mxu0 0.0
    %6244 = vmatprep.subr.mxu0 0.0
    %6245 = vmatpush1.msra.mxu0 0.0
    %6246 = vmatprep.subr.mxu0 0.0
    %6247 = vmatpush1.msra.mxu0 0.0
    %6248 = vmatprep.subr.mxu0 0.0
    %6249 = vmatpush1.msra.mxu0 0.0
    %6250 = vmatprep.subr.mxu0 0.0
    %6251 = vmatpush1.msra.mxu0 0.0
    %6252 = vmatprep.subr.mxu0 0.0
    %6253 = vmatpush1.msra.mxu0 0.0
    %6254 = vmatprep.subr.mxu0 0.0
    %6255 = vmatpush1.msra.mxu0 0.0
    %6256 = vmatprep.subr.mxu0 0.0
    %6257 = vmatpush1.msra.mxu0 0.0
    %6258 = vmatprep.subr.mxu0 0.0
    %6259 = vmatpush1.msra.mxu0 0.0
    %6260 = vmatprep.subr.mxu0 0.0
    %6261 = vmatpush1.msra.mxu0 0.0
    %6262 = vmatprep.subr.mxu0 0.0
    %6263 = vmatpush1.msra.mxu0 0.0
    %6264 = vmatprep.subr.mxu0 0.0
    %6265 = vmatpush1.msra.mxu0 0.0
    %6266 = vmatprep.subr.mxu0 0.0
    %6267 = vmatpush1.msra.mxu0 0.0
    %6268 = vmatprep.mubr.f32.mxu0 0.0
    %6269 = vmatmul.mubr.f32.gmra.mrb[0].mxu0 %v6202
    %v6270 = vpop.f32.mrb[0].mxu0
    %v6271 = vadd.f32 %v6200, %v6270
    %v6272 = vpop.f32.mrb[0].mxu0
    %6273 = vdwg.mxu0
    %v6274 = vmax.f32 %v6271, 0.0
    %v6275 = vlaneseq
    %v6276 = vshrl.u32 %v6275, 7
    %v6277 = vsub.s32 3, %v6276
    %v6278 = vrot.slane %v4276, %v6277
    %v6280 = vsel %vm2120, %v6274, 0
    %6282 = vmatprep.subr.mxu0 0.0
    %6283 = vmatpush1.msra.mxu0 %v4284
    %6284 = vmatprep.subr.mxu0 0.0
    %6285 = vmatpush1.msra.mxu0 %v4285
    %6286 = vmatprep.subr.mxu0 0.0
    %6287 = vmatpush1.msra.mxu0 %v4286
    %6288 = vmatprep.subr.mxu0 0.0
    %6289 = vmatpush1.msra.mxu0 %v4287
    %6290 = vmatprep.subr.mxu0 0.0
    %6291 = vmatpush1.msra.mxu0 %v4288
    %6292 = vmatprep.subr.mxu0 0.0
    %6293 = vmatpush1.msra.mxu0 %v4289
    %6294 = vmatprep.subr.mxu0 0.0
    %6295 = vmatpush1.msra.mxu0 %v4290
    %6296 = vmatprep.subr.mxu0 0.0
    %6297 = vmatpush1.msra.mxu0 %v4291
    %6298 = vmatprep.subr.mxu0 0.0
    %6299 = vmatpush1.msra.mxu0 0.0
    %6300 = vmatprep.subr.mxu0 0.0
    %6301 = vmatpush1.msra.mxu0 0.0
    %6302 = vmatprep.subr.mxu0 0.0
    %6303 = vmatpush1.msra.mxu0 0.0
    %6304 = vmatprep.subr.mxu0 0.0
    %6305 = vmatpush1.msra.mxu0 0.0
    %6306 = vmatprep.subr.mxu0 0.0
    %6307 = vmatpush1.msra.mxu0 0.0
    %6308 = vmatprep.subr.mxu0 0.0
    %6309 = vmatpush1.msra.mxu0 0.0
    %6310 = vmatprep.subr.mxu0 0.0
    %6311 = vmatpush1.msra.mxu0 0.0
    %6312 = vmatprep.subr.mxu0 0.0
    %6313 = vmatpush1.msra.mxu0 0.0
    %6314 = vmatprep.subr.mxu0 0.0
    %6315 = vmatpush1.msra.mxu0 0.0
    %6316 = vmatprep.subr.mxu0 0.0
    %6317 = vmatpush1.msra.mxu0 0.0
    %6318 = vmatprep.subr.mxu0 0.0
    %6319 = vmatpush1.msra.mxu0 0.0
    %6320 = vmatprep.subr.mxu0 0.0
    %6321 = vmatpush1.msra.mxu0 0.0
    %6322 = vmatprep.subr.mxu0 0.0
    %6323 = vmatpush1.msra.mxu0 0.0
    %6324 = vmatprep.subr.mxu0 0.0
    %6325 = vmatpush1.msra.mxu0 0.0
    %6326 = vmatprep.subr.mxu0 0.0
    %6327 = vmatpush1.msra.mxu0 0.0
    %6328 = vmatprep.subr.mxu0 0.0
    %6329 = vmatpush1.msra.mxu0 0.0
    %6330 = vmatprep.subr.mxu0 0.0
    %6331 = vmatpush1.msra.mxu0 0.0
    %6332 = vmatprep.subr.mxu0 0.0
    %6333 = vmatpush1.msra.mxu0 0.0
    %6334 = vmatprep.subr.mxu0 0.0
    %6335 = vmatpush1.msra.mxu0 0.0
    %6336 = vmatprep.subr.mxu0 0.0
    %6337 = vmatpush1.msra.mxu0 0.0
    %6338 = vmatprep.subr.mxu0 0.0
    %6339 = vmatpush1.msra.mxu0 0.0
    %6340 = vmatprep.subr.mxu0 0.0
    %6341 = vmatpush1.msra.mxu0 0.0
    %6342 = vmatprep.subr.mxu0 0.0
    %6343 = vmatpush1.msra.mxu0 0.0
    %6344 = vmatprep.subr.mxu0 0.0
    %6345 = vmatpush1.msra.mxu0 0.0
    %6346 = vmatprep.mubr.f32.mxu0 0.0
    %6347 = vmatmul.mubr.f32.gmra.mrb[0].mxu0 %v6280
    %v6348 = vpop.f32.mrb[0].mxu0
    %v6349 = vadd.f32 %v6278, %v6348
    %v6350 = vpop.f32.mrb[0].mxu0
    %6351 = vdwg.mxu0
    %v6352 = vadd.f32 %v6196, %v6349
    %v6353 = vsel %vm149, %v6352, 0.0
    %6354 = vadd.xlane.f32.xlu0 %v6353
    %v6355 = vpop.xlane.xlu0 %6354
    %v6356 = vmul.f32 %v6355, %v2017
    %v6357 = vsub.f32 %v6352, %v6356
    %v6358 = vmul.f32 %v6357, %v6357
    %v6359 = vsel %vm149, %v6358, 0.0
    %6360 = vadd.xlane.f32.xlu0 %v6359
    %v6361 = vpop.xlane.xlu0 %6360
    %v6362 = vmul.f32 %v6361, %v2017
    %v6363 = vadd.f32 %v6362, 1e-05
    %v6364 = vrsqrt.pop %v6363
    %v6365 = vmul.f32 %v6357, %v6364
    %v6366 = vlaneseq
    %v6367 = vshrl.u32 %v6366, 7
    %v6368 = vsub.s32 4, %v6367
    %v6369 = vrot.slane %v4276, %v6368
    %v6370 = vmul.f32 %v6365, %v6369
    %v6371 = vlaneseq
    %v6372 = vshrl.u32 %v6371, 7
    %v6373 = vsub.s32 5, %v6372
    %v6374 = vrot.slane %v4276, %v6373
    %v6375 = vadd.f32 %v6370, %v6374
    %v6376 = vadd.f32 %v4207, %v40
    %v6378 = vsel %vm149, %v6376, 0
    %6380 = vmatprep.subr.mxu0 0.0
    %6381 = vmatpush1.msra.mxu0 %v4209
    %6382 = vmatprep.subr.mxu0 0.0
    %6383 = vmatpush1.msra.mxu0 %v4210
    %6384 = vmatprep.subr.mxu0 0.0
    %6385 = vmatpush1.msra.mxu0 %v4211
    %6386 = vmatprep.subr.mxu0 0.0
    %6387 = vmatpush1.msra.mxu0 %v4212
    %6388 = vmatprep.subr.mxu0 0.0
    %6389 = vmatpush1.msra.mxu0 0.0
    %6390 = vmatprep.subr.mxu0 0.0
    %6391 = vmatpush1.msra.mxu0 0.0
    %6392 = vmatprep.subr.mxu0 0.0
    %6393 = vmatpush1.msra.mxu0 0.0
    %6394 = vmatprep.subr.mxu0 0.0
    %6395 = vmatpush1.msra.mxu0 0.0
    %6396 = vmatprep.subr.mxu0 0.0
    %6397 = vmatpush1.msra.mxu0 0.0
    %6398 = vmatprep.subr.mxu0 0.0
    %6399 = vmatpush1.msra.mxu0 0.0
    %6400 = vmatprep.subr.mxu0 0.0
    %6401 = vmatpush1.msra.mxu0 0.0
    %6402 = vmatprep.subr.mxu0 0.0
    %6403 = vmatpush1.msra.mxu0 0.0
    %6404 = vmatprep.subr.mxu0 0.0
    %6405 = vmatpush1.msra.mxu0 0.0
    %6406 = vmatprep.subr.mxu0 0.0
    %6407 = vmatpush1.msra.mxu0 0.0
    %6408 = vmatprep.subr.mxu0 0.0
    %6409 = vmatpush1.msra.mxu0 0.0
    %6410 = vmatprep.subr.mxu0 0.0
    %6411 = vmatpush1.msra.mxu0 0.0
    %6412 = vmatprep.subr.mxu0 0.0
    %6413 = vmatpush1.msra.mxu0 0.0
    %6414 = vmatprep.subr.mxu0 0.0
    %6415 = vmatpush1.msra.mxu0 0.0
    %6416 = vmatprep.subr.mxu0 0.0
    %6417 = vmatpush1.msra.mxu0 0.0
    %6418 = vmatprep.subr.mxu0 0.0
    %6419 = vmatpush1.msra.mxu0 0.0
    %6420 = vmatprep.subr.mxu0 0.0
    %6421 = vmatpush1.msra.mxu0 0.0
    %6422 = vmatprep.subr.mxu0 0.0
    %6423 = vmatpush1.msra.mxu0 0.0
    %6424 = vmatprep.subr.mxu0 0.0
    %6425 = vmatpush1.msra.mxu0 0.0
    %6426 = vmatprep.subr.mxu0 0.0
    %6427 = vmatpush1.msra.mxu0 0.0
    %6428 = vmatprep.subr.mxu0 0.0
    %6429 = vmatpush1.msra.mxu0 0.0
    %6430 = vmatprep.subr.mxu0 0.0
    %6431 = vmatpush1.msra.mxu0 0.0
    %6432 = vmatprep.subr.mxu0 0.0
    %6433 = vmatpush1.msra.mxu0 0.0
    %6434 = vmatprep.subr.mxu0 0.0
    %6435 = vmatpush1.msra.mxu0 0.0
    %6436 = vmatprep.subr.mxu0 0.0
    %6437 = vmatpush1.msra.mxu0 0.0
    %6438 = vmatprep.subr.mxu0 0.0
    %6439 = vmatpush1.msra.mxu0 0.0
    %6440 = vmatprep.subr.mxu0 0.0
    %6441 = vmatpush1.msra.mxu0 0.0
    %6442 = vmatprep.subr.mxu0 0.0
    %6443 = vmatpush1.msra.mxu0 0.0
    %6444 = vmatprep.mubr.f32.mxu0 0.0
    %6445 = vmatmul.mubr.f32.gmra.mrb[0].mxu0 %v6378
    %v6446 = vpop.f32.mrb[0].mxu0
    %v6447 = vadd.f32 %v4300, %v6446
    %v6448 = vpop.f32.mrb[0].mxu0
    %6449 = vdwg.mxu0
    %6450 = vmatprep.subr.mxu0 0.0
    %6451 = vmatpush1.msra.mxu0 %v4213
    %6452 = vmatprep.subr.mxu0 0.0
    %6453 = vmatpush1.msra.mxu0 %v4214
    %6454 = vmatprep.subr.mxu0 0.0
    %6455 = vmatpush1.msra.mxu0 %v4215
    %6456 = vmatprep.subr.mxu0 0.0
    %6457 = vmatpush1.msra.mxu0 %v4216
    %6458 = vmatprep.subr.mxu0 0.0
    %6459 = vmatpush1.msra.mxu0 0.0
    %6460 = vmatprep.subr.mxu0 0.0
    %6461 = vmatpush1.msra.mxu0 0.0
    %6462 = vmatprep.subr.mxu0 0.0
    %6463 = vmatpush1.msra.mxu0 0.0
    %6464 = vmatprep.subr.mxu0 0.0
    %6465 = vmatpush1.msra.mxu0 0.0
    %6466 = vmatprep.subr.mxu0 0.0
    %6467 = vmatpush1.msra.mxu0 0.0
    %6468 = vmatprep.subr.mxu0 0.0
    %6469 = vmatpush1.msra.mxu0 0.0
    %6470 = vmatprep.subr.mxu0 0.0
    %6471 = vmatpush1.msra.mxu0 0.0
    %6472 = vmatprep.subr.mxu0 0.0
    %6473 = vmatpush1.msra.mxu0 0.0
    %6474 = vmatprep.subr.mxu0 0.0
    %6475 = vmatpush1.msra.mxu0 0.0
    %6476 = vmatprep.subr.mxu0 0.0
    %6477 = vmatpush1.msra.mxu0 0.0
    %6478 = vmatprep.subr.mxu0 0.0
    %6479 = vmatpush1.msra.mxu0 0.0
    %6480 = vmatprep.subr.mxu0 0.0
    %6481 = vmatpush1.msra.mxu0 0.0
    %6482 = vmatprep.subr.mxu0 0.0
    %6483 = vmatpush1.msra.mxu0 0.0
    %6484 = vmatprep.subr.mxu0 0.0
    %6485 = vmatpush1.msra.mxu0 0.0
    %6486 = vmatprep.subr.mxu0 0.0
    %6487 = vmatpush1.msra.mxu0 0.0
    %6488 = vmatprep.subr.mxu0 0.0
    %6489 = vmatpush1.msra.mxu0 0.0
    %6490 = vmatprep.subr.mxu0 0.0
    %6491 = vmatpush1.msra.mxu0 0.0
    %6492 = vmatprep.subr.mxu0 0.0
    %6493 = vmatpush1.msra.mxu0 0.0
    %6494 = vmatprep.subr.mxu0 0.0
    %6495 = vmatpush1.msra.mxu0 0.0
    %6496 = vmatprep.subr.mxu0 0.0
    %6497 = vmatpush1.msra.mxu0 0.0
    %6498 = vmatprep.subr.mxu0 0.0
    %6499 = vmatpush1.msra.mxu0 0.0
    %6500 = vmatprep.subr.mxu0 0.0
    %6501 = vmatpush1.msra.mxu0 0.0
    %6502 = vmatprep.subr.mxu0 0.0
    %6503 = vmatpush1.msra.mxu0 0.0
    %6504 = vmatprep.subr.mxu0 0.0
    %6505 = vmatpush1.msra.mxu0 0.0
    %6506 = vmatprep.subr.mxu0 0.0
    %6507 = vmatpush1.msra.mxu0 0.0
    %6508 = vmatprep.subr.mxu0 0.0
    %6509 = vmatpush1.msra.mxu0 0.0
    %6510 = vmatprep.subr.mxu0 0.0
    %6511 = vmatpush1.msra.mxu0 0.0
    %6512 = vmatprep.subr.mxu0 0.0
    %6513 = vmatpush1.msra.mxu0 0.0
    %6514 = vmatprep.mubr.f32.mxu0 0.0
    %6515 = vmatmul.mubr.f32.gmra.mrb[0].mxu0 %v6378
    %v6516 = vpop.f32.mrb[0].mxu0
    %v6517 = vadd.f32 %v4304, %v6516
    %v6518 = vpop.f32.mrb[0].mxu0
    %6519 = vdwg.mxu0
    %6520 = vmatprep.subr.mxu0 0.0
    %6521 = vmatpush1.msra.mxu0 %v4217
    %6522 = vmatprep.subr.mxu0 0.0
    %6523 = vmatpush1.msra.mxu0 %v4218
    %6524 = vmatprep.subr.mxu0 0.0
    %6525 = vmatpush1.msra.mxu0 %v4219
    %6526 = vmatprep.subr.mxu0 0.0
    %6527 = vmatpush1.msra.mxu0 %v4220
    %6528 = vmatprep.subr.mxu0 0.0
    %6529 = vmatpush1.msra.mxu0 0.0
    %6530 = vmatprep.subr.mxu0 0.0
    %6531 = vmatpush1.msra.mxu0 0.0
    %6532 = vmatprep.subr.mxu0 0.0
    %6533 = vmatpush1.msra.mxu0 0.0
    %6534 = vmatprep.subr.mxu0 0.0
    %6535 = vmatpush1.msra.mxu0 0.0
    %6536 = vmatprep.subr.mxu0 0.0
    %6537 = vmatpush1.msra.mxu0 0.0
    %6538 = vmatprep.subr.mxu0 0.0
    %6539 = vmatpush1.msra.mxu0 0.0
    %6540 = vmatprep.subr.mxu0 0.0
    %6541 = vmatpush1.msra.mxu0 0.0
    %6542 = vmatprep.subr.mxu0 0.0
    %6543 = vmatpush1.msra.mxu0 0.0
    %6544 = vmatprep.subr.mxu0 0.0
    %6545 = vmatpush1.msra.mxu0 0.0
    %6546 = vmatprep.subr.mxu0 0.0
    %6547 = vmatpush1.msra.mxu0 0.0
    %6548 = vmatprep.subr.mxu0 0.0
    %6549 = vmatpush1.msra.mxu0 0.0
    %6550 = vmatprep.subr.mxu0 0.0
    %6551 = vmatpush1.msra.mxu0 0.0
    %6552 = vmatprep.subr.mxu0 0.0
    %6553 = vmatpush1.msra.mxu0 0.0
    %6554 = vmatprep.subr.mxu0 0.0
    %6555 = vmatpush1.msra.mxu0 0.0
    %6556 = vmatprep.subr.mxu0 0.0
    %6557 = vmatpush1.msra.mxu0 0.0
    %6558 = vmatprep.subr.mxu0 0.0
    %6559 = vmatpush1.msra.mxu0 0.0
    %6560 = vmatprep.subr.mxu0 0.0
    %6561 = vmatpush1.msra.mxu0 0.0
    %6562 = vmatprep.subr.mxu0 0.0
    %6563 = vmatpush1.msra.mxu0 0.0
    %6564 = vmatprep.subr.mxu0 0.0
    %6565 = vmatpush1.msra.mxu0 0.0
    %6566 = vmatprep.subr.mxu0 0.0
    %6567 = vmatpush1.msra.mxu0 0.0
    %6568 = vmatprep.subr.mxu0 0.0
    %6569 = vmatpush1.msra.mxu0 0.0
    %6570 = vmatprep.subr.mxu0 0.0
    %6571 = vmatpush1.msra.mxu0 0.0
    %6572 = vmatprep.subr.mxu0 0.0
    %6573 = vmatpush1.msra.mxu0 0.0
    %6574 = vmatprep.subr.mxu0 0.0
    %6575 = vmatpush1.msra.mxu0 0.0
    %6576 = vmatprep.subr.mxu0 0.0
    %6577 = vmatpush1.msra.mxu0 0.0
    %6578 = vmatprep.subr.mxu0 0.0
    %6579 = vmatpush1.msra.mxu0 0.0
    %6580 = vmatprep.subr.mxu0 0.0
    %6581 = vmatpush1.msra.mxu0 0.0
    %6582 = vmatprep.subr.mxu0 0.0
    %6583 = vmatpush1.msra.mxu0 0.0
    %6584 = vmatprep.mubr.f32.mxu0 0.0
    %6585 = vmatmul.mubr.f32.gmra.mrb[0].mxu0 %v6378
    %v6586 = vpop.f32.mrb[0].mxu0
    %v6587 = vadd.f32 %v4308, %v6586
    %v6588 = vpop.f32.mrb[0].mxu0
    %6589 = vdwg.mxu0
    %6590 = vmatprep.subr.mxu0 0.0
    %6591 = vmatpush1.msra.mxu0 %v4221
    %6592 = vmatprep.subr.mxu0 0.0
    %6593 = vmatpush1.msra.mxu0 %v4222
    %6594 = vmatprep.subr.mxu0 0.0
    %6595 = vmatpush1.msra.mxu0 %v4223
    %6596 = vmatprep.subr.mxu0 0.0
    %6597 = vmatpush1.msra.mxu0 %v4224
    %6598 = vmatprep.subr.mxu0 0.0
    %6599 = vmatpush1.msra.mxu0 0.0
    %6600 = vmatprep.subr.mxu0 0.0
    %6601 = vmatpush1.msra.mxu0 0.0
    %6602 = vmatprep.subr.mxu0 0.0
    %6603 = vmatpush1.msra.mxu0 0.0
    %6604 = vmatprep.subr.mxu0 0.0
    %6605 = vmatpush1.msra.mxu0 0.0
    %6606 = vmatprep.subr.mxu0 0.0
    %6607 = vmatpush1.msra.mxu0 0.0
    %6608 = vmatprep.subr.mxu0 0.0
    %6609 = vmatpush1.msra.mxu0 0.0
    %6610 = vmatprep.subr.mxu0 0.0
    %6611 = vmatpush1.msra.mxu0 0.0
    %6612 = vmatprep.subr.mxu0 0.0
    %6613 = vmatpush1.msra.mxu0 0.0
    %6614 = vmatprep.subr.mxu0 0.0
    %6615 = vmatpush1.msra.mxu0 0.0
    %6616 = vmatprep.subr.mxu0 0.0
    %6617 = vmatpush1.msra.mxu0 0.0
    %6618 = vmatprep.subr.mxu0 0.0
    %6619 = vmatpush1.msra.mxu0 0.0
    %6620 = vmatprep.subr.mxu0 0.0
    %6621 = vmatpush1.msra.mxu0 0.0
    %6622 = vmatprep.subr.mxu0 0.0
    %6623 = vmatpush1.msra.mxu0 0.0
    %6624 = vmatprep.subr.mxu0 0.0
    %6625 = vmatpush1.msra.mxu0 0.0
    %6626 = vmatprep.subr.mxu0 0.0
    %6627 = vmatpush1.msra.mxu0 0.0
    %6628 = vmatprep.subr.mxu0 0.0
    %6629 = vmatpush1.msra.mxu0 0.0
    %6630 = vmatprep.subr.mxu0 0.0
    %6631 = vmatpush1.msra.mxu0 0.0
    %6632 = vmatprep.subr.mxu0 0.0
    %6633 = vmatpush1.msra.mxu0 0.0
    %6634 = vmatprep.subr.mxu0 0.0
    %6635 = vmatpush1.msra.mxu0 0.0
    %6636 = vmatprep.subr.mxu0 0.0
    %6637 = vmatpush1.msra.mxu0 0.0
    %6638 = vmatprep.subr.mxu0 0.0
    %6639 = vmatpush1.msra.mxu0 0.0
    %6640 = vmatprep.subr.mxu0 0.0
    %6641 = vmatpush1.msra.mxu0 0.0
    %6642 = vmatprep.subr.mxu0 0.0
    %6643 = vmatpush1.msra.mxu0 0.0
    %6644 = vmatprep.subr.mxu0 0.0
    %6645 = vmatpush1.msra.mxu0 0.0
    %6646 = vmatprep.subr.mxu0 0.0
    %6647 = vmatpush1.msra.mxu0 0.0
    %6648 = vmatprep.subr.mxu0 0.0
    %6649 = vmatpush1.msra.mxu0 0.0
    %6650 = vmatprep.subr.mxu0 0.0
    %6651 = vmatpush1.msra.mxu0 0.0
    %6652 = vmatprep.subr.mxu0 0.0
    %6653 = vmatpush1.msra.mxu0 0.0
    %6654 = vmatprep.mubr.f32.mxu0 0.0
    %6655 = vmatmul.mubr.f32.gmra.mrb[0].mxu0 %v6378
    %v6656 = vpop.f32.mrb[0].mxu0
    %v6657 = vadd.f32 %v4312, %v6656
    %v6658 = vpop.f32.mrb[0].mxu0
    %6659 = vdwg.mxu0
    %6660 = vmatprep.subr.mxu0 0.0
    %6661 = vmatpush1.msra.mxu0 %v4225
    %6662 = vmatprep.subr.mxu0 0.0
    %6663 = vmatpush1.msra.mxu0 %v4226
    %6664 = vmatprep.subr.mxu0 0.0
    %6665 = vmatpush1.msra.mxu0 %v4227
    %6666 = vmatprep.subr.mxu0 0.0
    %6667 = vmatpush1.msra.mxu0 %v4228
    %6668 = vmatprep.subr.mxu0 0.0
    %6669 = vmatpush1.msra.mxu0 0.0
    %6670 = vmatprep.subr.mxu0 0.0
    %6671 = vmatpush1.msra.mxu0 0.0
    %6672 = vmatprep.subr.mxu0 0.0
    %6673 = vmatpush1.msra.mxu0 0.0
    %6674 = vmatprep.subr.mxu0 0.0
    %6675 = vmatpush1.msra.mxu0 0.0
    %6676 = vmatprep.subr.mxu0 0.0
    %6677 = vmatpush1.msra.mxu0 0.0
    %6678 = vmatprep.subr.mxu0 0.0
    %6679 = vmatpush1.msra.mxu0 0.0
    %6680 = vmatprep.subr.mxu0 0.0
    %6681 = vmatpush1.msra.mxu0 0.0
    %6682 = vmatprep.subr.mxu0 0.0
    %6683 = vmatpush1.msra.mxu0 0.0
    %6684 = vmatprep.subr.mxu0 0.0
    %6685 = vmatpush1.msra.mxu0 0.0
    %6686 = vmatprep.subr.mxu0 0.0
    %6687 = vmatpush1.msra.mxu0 0.0
    %6688 = vmatprep.subr.mxu0 0.0
    %6689 = vmatpush1.msra.mxu0 0.0
    %6690 = vmatprep.subr.mxu0 0.0
    %6691 = vmatpush1.msra.mxu0 0.0
    %6692 = vmatprep.subr.mxu0 0.0
    %6693 = vmatpush1.msra.mxu0 0.0
    %6694 = vmatprep.subr.mxu0 0.0
    %6695 = vmatpush1.msra.mxu0 0.0
    %6696 = vmatprep.subr.mxu0 0.0
    %6697 = vmatpush1.msra.mxu0 0.0
    %6698 = vmatprep.subr.mxu0 0.0
    %6699 = vmatpush1.msra.mxu0 0.0
    %6700 = vmatprep.subr.mxu0 0.0
    %6701 = vmatpush1.msra.mxu0 0.0
    %6702 = vmatprep.subr.mxu0 0.0
    %6703 = vmatpush1.msra.mxu0 0.0
    %6704 = vmatprep.subr.mxu0 0.0
    %6705 = vmatpush1.msra.mxu0 0.0
    %6706 = vmatprep.subr.mxu0 0.0
    %6707 = vmatpush1.msra.mxu0 0.0
    %6708 = vmatprep.subr.mxu0 0.0
    %6709 = vmatpush1.msra.mxu0 0.0
    %6710 = vmatprep.subr.mxu0 0.0
    %6711 = vmatpush1.msra.mxu0 0.0
    %6712 = vmatprep.subr.mxu0 0.0
    %6713 = vmatpush1.msra.mxu0 0.0
    %6714 = vmatprep.subr.mxu0 0.0
    %6715 = vmatpush1.msra.mxu0 0.0
    %6716 = vmatprep.subr.mxu0 0.0
    %6717 = vmatpush1.msra.mxu0 0.0
    %6718 = vmatprep.subr.mxu0 0.0
    %6719 = vmatpush1.msra.mxu0 0.0
    %6720 = vmatprep.subr.mxu0 0.0
    %6721 = vmatpush1.msra.mxu0 0.0
    %6722 = vmatprep.subr.mxu0 0.0
    %6723 = vmatpush1.msra.mxu0 0.0
    %6724 = vmatprep.mubr.f32.mxu0 0.0
    %6725 = vmatmul.mubr.f32.gmra.mrb[0].mxu0 %v6378
    %v6726 = vpop.f32.mrb[0].mxu0
    %v6727 = vadd.f32 %v4607, %v6726
    %v6728 = vpop.f32.mrb[0].mxu0
    %6729 = vdwg.mxu0
    %6730 = vmatprep.subr.mxu0 0.0
    %6731 = vmatpush1.msra.mxu0 %v4229
    %6732 = vmatprep.subr.mxu0 0.0
    %6733 = vmatpush1.msra.mxu0 %v4230
    %6734 = vmatprep.subr.mxu0 0.0
    %6735 = vmatpush1.msra.mxu0 %v4231
    %6736 = vmatprep.subr.mxu0 0.0
    %6737 = vmatpush1.msra.mxu0 %v4232
    %6738 = vmatprep.subr.mxu0 0.0
    %6739 = vmatpush1.msra.mxu0 0.0
    %6740 = vmatprep.subr.mxu0 0.0
    %6741 = vmatpush1.msra.mxu0 0.0
    %6742 = vmatprep.subr.mxu0 0.0
    %6743 = vmatpush1.msra.mxu0 0.0
    %6744 = vmatprep.subr.mxu0 0.0
    %6745 = vmatpush1.msra.mxu0 0.0
    %6746 = vmatprep.subr.mxu0 0.0
    %6747 = vmatpush1.msra.mxu0 0.0
    %6748 = vmatprep.subr.mxu0 0.0
    %6749 = vmatpush1.msra.mxu0 0.0
    %6750 = vmatprep.subr.mxu0 0.0
    %6751 = vmatpush1.msra.mxu0 0.0
    %6752 = vmatprep.subr.mxu0 0.0
    %6753 = vmatpush1.msra.mxu0 0.0
    %6754 = vmatprep.subr.mxu0 0.0
    %6755 = vmatpush1.msra.mxu0 0.0
    %6756 = vmatprep.subr.mxu0 0.0
    %6757 = vmatpush1.msra.mxu0 0.0
    %6758 = vmatprep.subr.mxu0 0.0
    %6759 = vmatpush1.msra.mxu0 0.0
    %6760 = vmatprep.subr.mxu0 0.0
    %6761 = vmatpush1.msra.mxu0 0.0
    %6762 = vmatprep.subr.mxu0 0.0
    %6763 = vmatpush1.msra.mxu0 0.0
    %6764 = vmatprep.subr.mxu0 0.0
    %6765 = vmatpush1.msra.mxu0 0.0
    %6766 = vmatprep.subr.mxu0 0.0
    %6767 = vmatpush1.msra.mxu0 0.0
    %6768 = vmatprep.subr.mxu0 0.0
    %6769 = vmatpush1.msra.mxu0 0.0
    %6770 = vmatprep.subr.mxu0 0.0
    %6771 = vmatpush1.msra.mxu0 0.0
    %6772 = vmatprep.subr.mxu0 0.0
    %6773 = vmatpush1.msra.mxu0 0.0
    %6774 = vmatprep.subr.mxu0 0.0
    %6775 = vmatpush1.msra.mxu0 0.0
    %6776 = vmatprep.subr.mxu0 0.0
    %6777 = vmatpush1.msra.mxu0 0.0
    %6778 = vmatprep.subr.mxu0 0.0
    %6779 = vmatpush1.msra.mxu0 0.0
    %6780 = vmatprep.subr.mxu0 0.0
    %6781 = vmatpush1.msra.mxu0 0.0
    %6782 = vmatprep.subr.mxu0 0.0
    %6783 = vmatpush1.msra.mxu0 0.0
    %6784 = vmatprep.subr.mxu0 0.0
    %6785 = vmatpush1.msra.mxu0 0.0
    %6786 = vmatprep.subr.mxu0 0.0
    %6787 = vmatpush1.msra.mxu0 0.0
    %6788 = vmatprep.subr.mxu0 0.0
    %6789 = vmatpush1.msra.mxu0 0.0
    %6790 = vmatprep.subr.mxu0 0.0
    %6791 = vmatpush1.msra.mxu0 0.0
    %6792 = vmatprep.subr.mxu0 0.0
    %6793 = vmatpush1.msra.mxu0 0.0
    %6794 = vmatprep.mubr.f32.mxu0 0.0
    %6795 = vmatmul.mubr.f32.gmra.mrb[0].mxu0 %v6378
    %v6796 = vpop.f32.mrb[0].mxu0
    %v6797 = vadd.f32 %v4611, %v6796
    %v6798 = vpop.f32.mrb[0].mxu0
    %6799 = vdwg.mxu0
    %6800 = vmatprep.subr.mxu0 0.0
    %6801 = vmatpush1.msra.mxu0 %v4233
    %6802 = vmatprep.subr.mxu0 0.0
    %6803 = vmatpush1.msra.mxu0 %v4234
    %6804 = vmatprep.subr.mxu0 0.0
    %6805 = vmatpush1.msra.mxu0 %v4235
    %6806 = vmatprep.subr.mxu0 0.0
    %6807 = vmatpush1.msra.mxu0 %v4236
    %6808 = vmatprep.subr.mxu0 0.0
    %6809 = vmatpush1.msra.mxu0 0.0
    %6810 = vmatprep.subr.mxu0 0.0
    %6811 = vmatpush1.msra.mxu0 0.0
    %6812 = vmatprep.subr.mxu0 0.0
    %6813 = vmatpush1.msra.mxu0 0.0
    %6814 = vmatprep.subr.mxu0 0.0
    %6815 = vmatpush1.msra.mxu0 0.0
    %6816 = vmatprep.subr.mxu0 0.0
    %6817 = vmatpush1.msra.mxu0 0.0
    %6818 = vmatprep.subr.mxu0 0.0
    %6819 = vmatpush1.msra.mxu0 0.0
    %6820 = vmatprep.subr.mxu0 0.0
    %6821 = vmatpush1.msra.mxu0 0.0
    %6822 = vmatprep.subr.mxu0 0.0
    %6823 = vmatpush1.msra.mxu0 0.0
    %6824 = vmatprep.subr.mxu0 0.0
    %6825 = vmatpush1.msra.mxu0 0.0
    %6826 = vmatprep.subr.mxu0 0.0
    %6827 = vmatpush1.msra.mxu0 0.0
    %6828 = vmatprep.subr.mxu0 0.0
    %6829 = vmatpush1.msra.mxu0 0.0
    %6830 = vmatprep.subr.mxu0 0.0
    %6831 = vmatpush1.msra.mxu0 0.0
    %6832 = vmatprep.subr.mxu0 0.0
    %6833 = vmatpush1.msra.mxu0 0.0
    %6834 = vmatprep.subr.mxu0 0.0
    %6835 = vmatpush1.msra.mxu0 0.0
    %6836 = vmatprep.subr.mxu0 0.0
    %6837 = vmatpush1.msra.mxu0 0.0
    %6838 = vmatprep.subr.mxu0 0.0
    %6839 = vmatpush1.msra.mxu0 0.0
    %6840 = vmatprep.subr.mxu0 0.0
    %6841 = vmatpush1.msra.mxu0 0.0
    %6842 = vmatprep.subr.mxu0 0.0
    %6843 = vmatpush1.msra.mxu0 0.0
    %6844 = vmatprep.subr.mxu0 0.0
    %6845 = vmatpush1.msra.mxu0 0.0
    %6846 = vmatprep.subr.mxu0 0.0
    %6847 = vmatpush1.msra.mxu0 0.0
    %6848 = vmatprep.subr.mxu0 0.0
    %6849 = vmatpush1.msra.mxu0 0.0
    %6850 = vmatprep.subr.mxu0 0.0
    %6851 = vmatpush1.msra.mxu0 0.0
    %6852 = vmatprep.subr.mxu0 0.0
    %6853 = vmatpush1.msra.mxu0 0.0
    %6854 = vmatprep.subr.mxu0 0.0
    %6855 = vmatpush1.msra.mxu0 0.0
    %6856 = vmatprep.subr.mxu0 0.0
    %6857 = vmatpush1.msra.mxu0 0.0
    %6858 = vmatprep.subr.mxu0 0.0
    %6859 = vmatpush1.msra.mxu0 0.0
    %6860 = vmatprep.subr.mxu0 0.0
    %6861 = vmatpush1.msra.mxu0 0.0
    %6862 = vmatprep.subr.mxu0 0.0
    %6863 = vmatpush1.msra.mxu0 0.0
    %6864 = vmatprep.mubr.f32.mxu0 0.0
    %6865 = vmatmul.mubr.f32.gmra.mrb[0].mxu0 %v6378
    %v6866 = vpop.f32.mrb[0].mxu0
    %v6867 = vadd.f32 %v4615, %v6866
    %v6868 = vpop.f32.mrb[0].mxu0
    %6869 = vdwg.mxu0
    %6870 = vmatprep.subr.mxu0 0.0
    %6871 = vmatpush1.msra.mxu0 %v4237
    %6872 = vmatprep.subr.mxu0 0.0
    %6873 = vmatpush1.msra.mxu0 %v4238
    %6874 = vmatprep.subr.mxu0 0.0
    %6875 = vmatpush1.msra.mxu0 %v4239
    %6876 = vmatprep.subr.mxu0 0.0
    %6877 = vmatpush1.msra.mxu0 %v4240
    %6878 = vmatprep.subr.mxu0 0.0
    %6879 = vmatpush1.msra.mxu0 0.0
    %6880 = vmatprep.subr.mxu0 0.0
    %6881 = vmatpush1.msra.mxu0 0.0
    %6882 = vmatprep.subr.mxu0 0.0
    %6883 = vmatpush1.msra.mxu0 0.0
    %6884 = vmatprep.subr.mxu0 0.0
    %6885 = vmatpush1.msra.mxu0 0.0
    %6886 = vmatprep.subr.mxu0 0.0
    %6887 = vmatpush1.msra.mxu0 0.0
    %6888 = vmatprep.subr.mxu0 0.0
    %6889 = vmatpush1.msra.mxu0 0.0
    %6890 = vmatprep.subr.mxu0 0.0
    %6891 = vmatpush1.msra.mxu0 0.0
    %6892 = vmatprep.subr.mxu0 0.0
    %6893 = vmatpush1.msra.mxu0 0.0
    %6894 = vmatprep.subr.mxu0 0.0
    %6895 = vmatpush1.msra.mxu0 0.0
    %6896 = vmatprep.subr.mxu0 0.0
    %6897 = vmatpush1.msra.mxu0 0.0
    %6898 = vmatprep.subr.mxu0 0.0
    %6899 = vmatpush1.msra.mxu0 0.0
    %6900 = vmatprep.subr.mxu0 0.0
    %6901 = vmatpush1.msra.mxu0 0.0
    %6902 = vmatprep.subr.mxu0 0.0
    %6903 = vmatpush1.msra.mxu0 0.0
    %6904 = vmatprep.subr.mxu0 0.0
    %6905 = vmatpush1.msra.mxu0 0.0
    %6906 = vmatprep.subr.mxu0 0.0
    %6907 = vmatpush1.msra.mxu0 0.0
    %6908 = vmatprep.subr.mxu0 0.0
    %6909 = vmatpush1.msra.mxu0 0.0
    %6910 = vmatprep.subr.mxu0 0.0
    %6911 = vmatpush1.msra.mxu0 0.0
    %6912 = vmatprep.subr.mxu0 0.0
    %6913 = vmatpush1.msra.mxu0 0.0
    %6914 = vmatprep.subr.mxu0 0.0
    %6915 = vmatpush1.msra.mxu0 0.0
    %6916 = vmatprep.subr.mxu0 0.0
    %6917 = vmatpush1.msra.mxu0 0.0
    %6918 = vmatprep.subr.mxu0 0.0
    %6919 = vmatpush1.msra.mxu0 0.0
    %6920 = vmatprep.subr.mxu0 0.0
    %6921 = vmatpush1.msra.mxu0 0.0
    %6922 = vmatprep.subr.mxu0 0.0
    %6923 = vmatpush1.msra.mxu0 0.0
    %6924 = vmatprep.subr.mxu0 0.0
    %6925 = vmatpush1.msra.mxu0 0.0
    %6926 = vmatprep.subr.mxu0 0.0
    %6927 = vmatpush1.msra.mxu0 0.0
    %6928 = vmatprep.subr.mxu0 0.0
    %6929 = vmatpush1.msra.mxu0 0.0
    %6930 = vmatprep.subr.mxu0 0.0
    %6931 = vmatpush1.msra.mxu0 0.0
    %6932 = vmatprep.subr.mxu0 0.0
    %6933 = vmatpush1.msra.mxu0 0.0
    %6934 = vmatprep.mubr.f32.mxu0 0.0
    %6935 = vmatmul.mubr.f32.gmra.mrb[0].mxu0 %v6378
    %v6936 = vpop.f32.mrb[0].mxu0
    %v6937 = vadd.f32 %v4619, %v6936
    %v6938 = vpop.f32.mrb[0].mxu0
    %6939 = vdwg.mxu0
    %v6941 = vsel %vm149, %v4207, 0
    %6943 = vmatprep.subr.mxu0 0.0
    %6944 = vmatpush1.msra.mxu0 %v4241
    %6945 = vmatprep.subr.mxu0 0.0
    %6946 = vmatpush1.msra.mxu0 %v4242
    %6947 = vmatprep.subr.mxu0 0.0
    %6948 = vmatpush1.msra.mxu0 %v4243
    %6949 = vmatprep.subr.mxu0 0.0
    %6950 = vmatpush1.msra.mxu0 %v4244
    %6951 = vmatprep.subr.mxu0 0.0
    %6952 = vmatpush1.msra.mxu0 0.0
    %6953 = vmatprep.subr.mxu0 0.0
    %6954 = vmatpush1.msra.mxu0 0.0
    %6955 = vmatprep.subr.mxu0 0.0
    %6956 = vmatpush1.msra.mxu0 0.0
    %6957 = vmatprep.subr.mxu0 0.0
    %6958 = vmatpush1.msra.mxu0 0.0
    %6959 = vmatprep.subr.mxu0 0.0
    %6960 = vmatpush1.msra.mxu0 0.0
    %6961 = vmatprep.subr.mxu0 0.0
    %6962 = vmatpush1.msra.mxu0 0.0
    %6963 = vmatprep.subr.mxu0 0.0
    %6964 = vmatpush1.msra.mxu0 0.0
    %6965 = vmatprep.subr.mxu0 0.0
    %6966 = vmatpush1.msra.mxu0 0.0
    %6967 = vmatprep.subr.mxu0 0.0
    %6968 = vmatpush1.msra.mxu0 0.0
    %6969 = vmatprep.subr.mxu0 0.0
    %6970 = vmatpush1.msra.mxu0 0.0
    %6971 = vmatprep.subr.mxu0 0.0
    %6972 = vmatpush1.msra.mxu0 0.0
    %6973 = vmatprep.subr.mxu0 0.0
    %6974 = vmatpush1.msra.mxu0 0.0
    %6975 = vmatprep.subr.mxu0 0.0
    %6976 = vmatpush1.msra.mxu0 0.0
    %6977 = vmatprep.subr.mxu0 0.0
    %6978 = vmatpush1.msra.mxu0 0.0
    %6979 = vmatprep.subr.mxu0 0.0
    %6980 = vmatpush1.msra.mxu0 0.0
    %6981 = vmatprep.subr.mxu0 0.0
    %6982 = vmatpush1.msra.mxu0 0.0
    %6983 = vmatprep.subr.mxu0 0.0
    %6984 = vmatpush1.msra.mxu0 0.0
    %6985 = vmatprep.subr.mxu0 0.0
    %6986 = vmatpush1.msra.mxu0 0.0
    %6987 = vmatprep.subr.mxu0 0.0
    %6988 = vmatpush1.msra.mxu0 0.0
    %6989 = vmatprep.subr.mxu0 0.0
    %6990 = vmatpush1.msra.mxu0 0.0
    %6991 = vmatprep.subr.mxu0 0.0
    %6992 = vmatpush1.msra.mxu0 0.0
    %6993 = vmatprep.subr.mxu0 0.0
    %6994 = vmatpush1.msra.mxu0 0.0
    %6995 = vmatprep.subr.mxu0 0.0
    %6996 = vmatpush1.msra.mxu0 0.0
    %6997 = vmatprep.subr.mxu0 0.0
    %6998 = vmatpush1.msra.mxu0 0.0
    %6999 = vmatprep.subr.mxu0 0.0
    %7000 = vmatpush1.msra.mxu0 0.0
    %7001 = vmatprep.subr.mxu0 0.0
    %7002 = vmatpush1.msra.mxu0 0.0
    %7003 = vmatprep.subr.mxu0 0.0
    %7004 = vmatpush1.msra.mxu0 0.0
    %7005 = vmatprep.subr.mxu0 0.0
    %7006 = vmatpush1.msra.mxu0 0.0
    %7007 = vmatprep.mubr.f32.mxu0 0.0
    %7008 = vmatmul.mubr.f32.gmra.mrb[0].mxu0 %v6941
    %v7009 = vpop.f32.mrb[0].mxu0
    %v7010 = vadd.f32 %v4911, %v7009
    %v7011 = vpop.f32.mrb[0].mxu0
    %7012 = vdwg.mxu0
    %7013 = vmatprep.subr.mxu0 0.0
    %7014 = vmatpush1.msra.mxu0 %v4245
    %7015 = vmatprep.subr.mxu0 0.0
    %7016 = vmatpush1.msra.mxu0 %v4246
    %7017 = vmatprep.subr.mxu0 0.0
    %7018 = vmatpush1.msra.mxu0 %v4247
    %7019 = vmatprep.subr.mxu0 0.0
    %7020 = vmatpush1.msra.mxu0 %v4248
    %7021 = vmatprep.subr.mxu0 0.0
    %7022 = vmatpush1.msra.mxu0 0.0
    %7023 = vmatprep.subr.mxu0 0.0
    %7024 = vmatpush1.msra.mxu0 0.0
    %7025 = vmatprep.subr.mxu0 0.0
    %7026 = vmatpush1.msra.mxu0 0.0
    %7027 = vmatprep.subr.mxu0 0.0
    %7028 = vmatpush1.msra.mxu0 0.0
    %7029 = vmatprep.subr.mxu0 0.0
    %7030 = vmatpush1.msra.mxu0 0.0
    %7031 = vmatprep.subr.mxu0 0.0
    %7032 = vmatpush1.msra.mxu0 0.0
    %7033 = vmatprep.subr.mxu0 0.0
    %7034 = vmatpush1.msra.mxu0 0.0
    %7035 = vmatprep.subr.mxu0 0.0
    %7036 = vmatpush1.msra.mxu0 0.0
    %7037 = vmatprep.subr.mxu0 0.0
    %7038 = vmatpush1.msra.mxu0 0.0
    %7039 = vmatprep.subr.mxu0 0.0
    %7040 = vmatpush1.msra.mxu0 0.0
    %7041 = vmatprep.subr.mxu0 0.0
    %7042 = vmatpush1.msra.mxu0 0.0
    %7043 = vmatprep.subr.mxu0 0.0
    %7044 = vmatpush1.msra.mxu0 0.0
    %7045 = vmatprep.subr.mxu0 0.0
    %7046 = vmatpush1.msra.mxu0 0.0
    %7047 = vmatprep.subr.mxu0 0.0
    %7048 = vmatpush1.msra.mxu0 0.0
    %7049 = vmatprep.subr.mxu0 0.0
    %7050 = vmatpush1.msra.mxu0 0.0
    %7051 = vmatprep.subr.mxu0 0.0
    %7052 = vmatpush1.msra.mxu0 0.0
    %7053 = vmatprep.subr.mxu0 0.0
    %7054 = vmatpush1.msra.mxu0 0.0
    %7055 = vmatprep.subr.mxu0 0.0
    %7056 = vmatpush1.msra.mxu0 0.0
    %7057 = vmatprep.subr.mxu0 0.0
    %7058 = vmatpush1.msra.mxu0 0.0
    %7059 = vmatprep.subr.mxu0 0.0
    %7060 = vmatpush1.msra.mxu0 0.0
    %7061 = vmatprep.subr.mxu0 0.0
    %7062 = vmatpush1.msra.mxu0 0.0
    %7063 = vmatprep.subr.mxu0 0.0
    %7064 = vmatpush1.msra.mxu0 0.0
    %7065 = vmatprep.subr.mxu0 0.0
    %7066 = vmatpush1.msra.mxu0 0.0
    %7067 = vmatprep.subr.mxu0 0.0
    %7068 = vmatpush1.msra.mxu0 0.0
    %7069 = vmatprep.subr.mxu0 0.0
    %7070 = vmatpush1.msra.mxu0 0.0
    %7071 = vmatprep.subr.mxu0 0.0
    %7072 = vmatpush1.msra.mxu0 0.0
    %7073 = vmatprep.subr.mxu0 0.0
    %7074 = vmatpush1.msra.mxu0 0.0
    %7075 = vmatprep.subr.mxu0 0.0
    %7076 = vmatpush1.msra.mxu0 0.0
    %7077 = vmatprep.mubr.f32.mxu0 0.0
    %7078 = vmatmul.mubr.f32.gmra.mrb[0].mxu0 %v6941
    %v7079 = vpop.f32.mrb[0].mxu0
    %v7080 = vadd.f32 %v4915, %v7079
    %v7081 = vpop.f32.mrb[0].mxu0
    %7082 = vdwg.mxu0
    %7083 = vmatprep.subr.mxu0 0.0
    %7084 = vmatpush1.msra.mxu0 %v4249
    %7085 = vmatprep.subr.mxu0 0.0
    %7086 = vmatpush1.msra.mxu0 %v4250
    %7087 = vmatprep.subr.mxu0 0.0
    %7088 = vmatpush1.msra.mxu0 %v4251
    %7089 = vmatprep.subr.mxu0 0.0
    %7090 = vmatpush1.msra.mxu0 %v4252
    %7091 = vmatprep.subr.mxu0 0.0
    %7092 = vmatpush1.msra.mxu0 0.0
    %7093 = vmatprep.subr.mxu0 0.0
    %7094 = vmatpush1.msra.mxu0 0.0
    %7095 = vmatprep.subr.mxu0 0.0
    %7096 = vmatpush1.msra.mxu0 0.0
    %7097 = vmatprep.subr.mxu0 0.0
    %7098 = vmatpush1.msra.mxu0 0.0
    %7099 = vmatprep.subr.mxu0 0.0
    %7100 = vmatpush1.msra.mxu0 0.0
    %7101 = vmatprep.subr.mxu0 0.0
    %7102 = vmatpush1.msra.mxu0 0.0
    %7103 = vmatprep.subr.mxu0 0.0
    %7104 = vmatpush1.msra.mxu0 0.0
    %7105 = vmatprep.subr.mxu0 0.0
    %7106 = vmatpush1.msra.mxu0 0.0
    %7107 = vmatprep.subr.mxu0 0.0
    %7108 = vmatpush1.msra.mxu0 0.0
    %7109 = vmatprep.subr.mxu0 0.0
    %7110 = vmatpush1.msra.mxu0 0.0
    %7111 = vmatprep.subr.mxu0 0.0
    %7112 = vmatpush1.msra.mxu0 0.0
    %7113 = vmatprep.subr.mxu0 0.0
    %7114 = vmatpush1.msra.mxu0 0.0
    %7115 = vmatprep.subr.mxu0 0.0
    %7116 = vmatpush1.msra.mxu0 0.0
    %7117 = vmatprep.subr.mxu0 0.0
    %7118 = vmatpush1.msra.mxu0 0.0
    %7119 = vmatprep.subr.mxu0 0.0
    %7120 = vmatpush1.msra.mxu0 0.0
    %7121 = vmatprep.subr.mxu0 0.0
    %7122 = vmatpush1.msra.mxu0 0.0
    %7123 = vmatprep.subr.mxu0 0.0
    %7124 = vmatpush1.msra.mxu0 0.0
    %7125 = vmatprep.subr.mxu0 0.0
    %7126 = vmatpush1.msra.mxu0 0.0
    %7127 = vmatprep.subr.mxu0 0.0
    %7128 = vmatpush1.msra.mxu0 0.0
    %7129 = vmatprep.subr.mxu0 0.0
    %7130 = vmatpush1.msra.mxu0 0.0
    %7131 = vmatprep.subr.mxu0 0.0
    %7132 = vmatpush1.msra.mxu0 0.0
    %7133 = vmatprep.subr.mxu0 0.0
    %7134 = vmatpush1.msra.mxu0 0.0
    %7135 = vmatprep.subr.mxu0 0.0
    %7136 = vmatpush1.msra.mxu0 0.0
    %7137 = vmatprep.subr.mxu0 0.0
    %7138 = vmatpush1.msra.mxu0 0.0
    %7139 = vmatprep.subr.mxu0 0.0
    %7140 = vmatpush1.msra.mxu0 0.0
    %7141 = vmatprep.subr.mxu0 0.0
    %7142 = vmatpush1.msra.mxu0 0.0
    %7143 = vmatprep.subr.mxu0 0.0
    %7144 = vmatpush1.msra.mxu0 0.0
    %7145 = vmatprep.subr.mxu0 0.0
    %7146 = vmatpush1.msra.mxu0 0.0
    %7147 = vmatprep.mubr.f32.mxu0 0.0
    %7148 = vmatmul.mubr.f32.gmra.mrb[0].mxu0 %v6941
    %v7149 = vpop.f32.mrb[0].mxu0
    %v7150 = vadd.f32 %v4919, %v7149
    %v7151 = vpop.f32.mrb[0].mxu0
    %7152 = vdwg.mxu0
    %7153 = vmatprep.subr.mxu0 0.0
    %7154 = vmatpush1.msra.mxu0 %v4253
    %7155 = vmatprep.subr.mxu0 0.0
    %7156 = vmatpush1.msra.mxu0 %v4254
    %7157 = vmatprep.subr.mxu0 0.0
    %7158 = vmatpush1.msra.mxu0 %v4255
    %7159 = vmatprep.subr.mxu0 0.0
    %7160 = vmatpush1.msra.mxu0 %v4256
    %7161 = vmatprep.subr.mxu0 0.0
    %7162 = vmatpush1.msra.mxu0 0.0
    %7163 = vmatprep.subr.mxu0 0.0
    %7164 = vmatpush1.msra.mxu0 0.0
    %7165 = vmatprep.subr.mxu0 0.0
    %7166 = vmatpush1.msra.mxu0 0.0
    %7167 = vmatprep.subr.mxu0 0.0
    %7168 = vmatpush1.msra.mxu0 0.0
    %7169 = vmatprep.subr.mxu0 0.0
    %7170 = vmatpush1.msra.mxu0 0.0
    %7171 = vmatprep.subr.mxu0 0.0
    %7172 = vmatpush1.msra.mxu0 0.0
    %7173 = vmatprep.subr.mxu0 0.0
    %7174 = vmatpush1.msra.mxu0 0.0
    %7175 = vmatprep.subr.mxu0 0.0
    %7176 = vmatpush1.msra.mxu0 0.0
    %7177 = vmatprep.subr.mxu0 0.0
    %7178 = vmatpush1.msra.mxu0 0.0
    %7179 = vmatprep.subr.mxu0 0.0
    %7180 = vmatpush1.msra.mxu0 0.0
    %7181 = vmatprep.subr.mxu0 0.0
    %7182 = vmatpush1.msra.mxu0 0.0
    %7183 = vmatprep.subr.mxu0 0.0
    %7184 = vmatpush1.msra.mxu0 0.0
    %7185 = vmatprep.subr.mxu0 0.0
    %7186 = vmatpush1.msra.mxu0 0.0
    %7187 = vmatprep.subr.mxu0 0.0
    %7188 = vmatpush1.msra.mxu0 0.0
    %7189 = vmatprep.subr.mxu0 0.0
    %7190 = vmatpush1.msra.mxu0 0.0
    %7191 = vmatprep.subr.mxu0 0.0
    %7192 = vmatpush1.msra.mxu0 0.0
    %7193 = vmatprep.subr.mxu0 0.0
    %7194 = vmatpush1.msra.mxu0 0.0
    %7195 = vmatprep.subr.mxu0 0.0
    %7196 = vmatpush1.msra.mxu0 0.0
    %7197 = vmatprep.subr.mxu0 0.0
    %7198 = vmatpush1.msra.mxu0 0.0
    %7199 = vmatprep.subr.mxu0 0.0
    %7200 = vmatpush1.msra.mxu0 0.0
    %7201 = vmatprep.subr.mxu0 0.0
    %7202 = vmatpush1.msra.mxu0 0.0
    %7203 = vmatprep.subr.mxu0 0.0
    %7204 = vmatpush1.msra.mxu0 0.0
    %7205 = vmatprep.subr.mxu0 0.0
    %7206 = vmatpush1.msra.mxu0 0.0
    %7207 = vmatprep.subr.mxu0 0.0
    %7208 = vmatpush1.msra.mxu0 0.0
    %7209 = vmatprep.subr.mxu0 0.0
    %7210 = vmatpush1.msra.mxu0 0.0
    %7211 = vmatprep.subr.mxu0 0.0
    %7212 = vmatpush1.msra.mxu0 0.0
    %7213 = vmatprep.subr.mxu0 0.0
    %7214 = vmatpush1.msra.mxu0 0.0
    %7215 = vmatprep.subr.mxu0 0.0
    %7216 = vmatpush1.msra.mxu0 0.0
    %7217 = vmatprep.mubr.f32.mxu0 0.0
    %7218 = vmatmul.mubr.f32.gmra.mrb[0].mxu0 %v6941
    %v7219 = vpop.f32.mrb[0].mxu0
    %v7220 = vadd.f32 %v4923, %v7219
    %v7221 = vpop.f32.mrb[0].mxu0
    %7222 = vdwg.mxu0
    %v7224 = vsel %vm1044, %v6447, 0
    %v7227 = vsel %vm1044, %v6727, 0
    %7229 = vmatprep.subr.mxu0 0.0
    %7230 = vmatpush1.xpose.msra.mxu0 %v7227
    %7231 = vmatprep.subr.mxu0 0.0
    %7232 = vmatpush1.xpose.msra.mxu0 0.0
    %7233 = vmatprep.subr.mxu0 0.0
    %7234 = vmatpush1.xpose.msra.mxu0 0.0
    %7235 = vmatprep.subr.mxu0 0.0
    %7236 = vmatpush1.xpose.msra.mxu0 0.0
    %7237 = vmatprep.subr.mxu0 0.0
    %7238 = vmatpush1.xpose.msra.mxu0 0.0
    %7239 = vmatprep.subr.mxu0 0.0
    %7240 = vmatpush1.xpose.msra.mxu0 0.0
    %7241 = vmatprep.subr.mxu0 0.0
    %7242 = vmatpush1.xpose.msra.mxu0 0.0
    %7243 = vmatprep.subr.mxu0 0.0
    %7244 = vmatpush1.xpose.msra.mxu0 0.0
    %7245 = vmatprep.subr.mxu0 0.0
    %7246 = vmatpush1.xpose.msra.mxu0 0.0
    %7247 = vmatprep.subr.mxu0 0.0
    %7248 = vmatpush1.xpose.msra.mxu0 0.0
    %7249 = vmatprep.subr.mxu0 0.0
    %7250 = vmatpush1.xpose.msra.mxu0 0.0
    %7251 = vmatprep.subr.mxu0 0.0
    %7252 = vmatpush1.xpose.msra.mxu0 0.0
    %7253 = vmatprep.subr.mxu0 0.0
    %7254 = vmatpush1.xpose.msra.mxu0 0.0
    %7255 = vmatprep.subr.mxu0 0.0
    %7256 = vmatpush1.xpose.msra.mxu0 0.0
    %7257 = vmatprep.subr.mxu0 0.0
    %7258 = vmatpush1.xpose.msra.mxu0 0.0
    %7259 = vmatprep.subr.mxu0 0.0
    %7260 = vmatpush1.xpose.msra.mxu0 0.0
    %7261 = vmatprep.subr.mxu0 0.0
    %7262 = vmatpush1.xpose.msra.mxu0 0.0
    %7263 = vmatprep.subr.mxu0 0.0
    %7264 = vmatpush1.xpose.msra.mxu0 0.0
    %7265 = vmatprep.subr.mxu0 0.0
    %7266 = vmatpush1.xpose.msra.mxu0 0.0
    %7267 = vmatprep.subr.mxu0 0.0
    %7268 = vmatpush1.xpose.msra.mxu0 0.0
    %7269 = vmatprep.subr.mxu0 0.0
    %7270 = vmatpush1.xpose.msra.mxu0 0.0
    %7271 = vmatprep.subr.mxu0 0.0
    %7272 = vmatpush1.xpose.msra.mxu0 0.0
    %7273 = vmatprep.subr.mxu0 0.0
    %7274 = vmatpush1.xpose.msra.mxu0 0.0
    %7275 = vmatprep.subr.mxu0 0.0
    %7276 = vmatpush1.xpose.msra.mxu0 0.0
    %7277 = vmatprep.subr.mxu0 0.0
    %7278 = vmatpush1.xpose.msra.mxu0 0.0
    %7279 = vmatprep.subr.mxu0 0.0
    %7280 = vmatpush1.xpose.msra.mxu0 0.0
    %7281 = vmatprep.subr.mxu0 0.0
    %7282 = vmatpush1.xpose.msra.mxu0 0.0
    %7283 = vmatprep.subr.mxu0 0.0
    %7284 = vmatpush1.xpose.msra.mxu0 0.0
    %7285 = vmatprep.subr.mxu0 0.0
    %7286 = vmatpush1.xpose.msra.mxu0 0.0
    %7287 = vmatprep.subr.mxu0 0.0
    %7288 = vmatpush1.xpose.msra.mxu0 0.0
    %7289 = vmatprep.subr.mxu0 0.0
    %7290 = vmatpush1.xpose.msra.mxu0 0.0
    %7291 = vmatprep.subr.mxu0 0.0
    %7292 = vmatpush1.xpose.msra.mxu0 0.0
    %7293 = vmatprep.mubr.f32.mxu0 0.0
    %7294 = vmatmul.mubr.f32.gmra.mrb[0].mxu0 %v7224
    %v7295 = vpop.f32.mrb[0].mxu0
    %v7296 = vadd.f32 0.0, %v7295
    %v7297 = vpop.f32.mrb[0].mxu0
    %7298 = vdwg.mxu0
    %v7300 = vsel %vm1044, %v6517, 0
    %v7303 = vsel %vm1044, %v6797, 0
    %7305 = vmatprep.subr.mxu0 0.0
    %7306 = vmatpush1.xpose.msra.mxu0 %v7303
    %7307 = vmatprep.subr.mxu0 0.0
    %7308 = vmatpush1.xpose.msra.mxu0 0.0
    %7309 = vmatprep.subr.mxu0 0.0
    %7310 = vmatpush1.xpose.msra.mxu0 0.0
    %7311 = vmatprep.subr.mxu0 0.0
    %7312 = vmatpush1.xpose.msra.mxu0 0.0
    %7313 = vmatprep.subr.mxu0 0.0
    %7314 = vmatpush1.xpose.msra.mxu0 0.0
    %7315 = vmatprep.subr.mxu0 0.0
    %7316 = vmatpush1.xpose.msra.mxu0 0.0
    %7317 = vmatprep.subr.mxu0 0.0
    %7318 = vmatpush1.xpose.msra.mxu0 0.0
    %7319 = vmatprep.subr.mxu0 0.0
    %7320 = vmatpush1.xpose.msra.mxu0 0.0
    %7321 = vmatprep.subr.mxu0 0.0
    %7322 = vmatpush1.xpose.msra.mxu0 0.0
    %7323 = vmatprep.subr.mxu0 0.0
    %7324 = vmatpush1.xpose.msra.mxu0 0.0
    %7325 = vmatprep.subr.mxu0 0.0
    %7326 = vmatpush1.xpose.msra.mxu0 0.0
    %7327 = vmatprep.subr.mxu0 0.0
    %7328 = vmatpush1.xpose.msra.mxu0 0.0
    %7329 = vmatprep.subr.mxu0 0.0
    %7330 = vmatpush1.xpose.msra.mxu0 0.0
    %7331 = vmatprep.subr.mxu0 0.0
    %7332 = vmatpush1.xpose.msra.mxu0 0.0
    %7333 = vmatprep.subr.mxu0 0.0
    %7334 = vmatpush1.xpose.msra.mxu0 0.0
    %7335 = vmatprep.subr.mxu0 0.0
    %7336 = vmatpush1.xpose.msra.mxu0 0.0
    %7337 = vmatprep.subr.mxu0 0.0
    %7338 = vmatpush1.xpose.msra.mxu0 0.0
    %7339 = vmatprep.subr.mxu0 0.0
    %7340 = vmatpush1.xpose.msra.mxu0 0.0
    %7341 = vmatprep.subr.mxu0 0.0
    %7342 = vmatpush1.xpose.msra.mxu0 0.0
    %7343 = vmatprep.subr.mxu0 0.0
    %7344 = vmatpush1.xpose.msra.mxu0 0.0
    %7345 = vmatprep.subr.mxu0 0.0
    %7346 = vmatpush1.xpose.msra.mxu0 0.0
    %7347 = vmatprep.subr.mxu0 0.0
    %7348 = vmatpush1.xpose.msra.mxu0 0.0
    %7349 = vmatprep.subr.mxu0 0.0
    %7350 = vmatpush1.xpose.msra.mxu0 0.0
    %7351 = vmatprep.subr.mxu0 0.0
    %7352 = vmatpush1.xpose.msra.mxu0 0.0
    %7353 = vmatprep.subr.mxu0 0.0
    %7354 = vmatpush1.xpose.msra.mxu0 0.0
    %7355 = vmatprep.subr.mxu0 0.0
    %7356 = vmatpush1.xpose.msra.mxu0 0.0
    %7357 = vmatprep.subr.mxu0 0.0
    %7358 = vmatpush1.xpose.msra.mxu0 0.0
    %7359 = vmatprep.subr.mxu0 0.0
    %7360 = vmatpush1.xpose.msra.mxu0 0.0
    %7361 = vmatprep.subr.mxu0 0.0
    %7362 = vmatpush1.xpose.msra.mxu0 0.0
    %7363 = vmatprep.subr.mxu0 0.0
    %7364 = vmatpush1.xpose.msra.mxu0 0.0
    %7365 = vmatprep.subr.mxu0 0.0
    %7366 = vmatpush1.xpose.msra.mxu0 0.0
    %7367 = vmatprep.subr.mxu0 0.0
    %7368 = vmatpush1.xpose.msra.mxu0 0.0
    %7369 = vmatprep.mubr.f32.mxu0 0.0
    %7370 = vmatmul.mubr.f32.gmra.mrb[0].mxu0 %v7300
    %v7371 = vpop.f32.mrb[0].mxu0
    %v7372 = vadd.f32 0.0, %v7371
    %v7373 = vpop.f32.mrb[0].mxu0
    %7374 = vdwg.mxu0
    %v7376 = vsel %vm1044, %v6587, 0
    %v7379 = vsel %vm1044, %v6867, 0
    %7381 = vmatprep.subr.mxu0 0.0
    %7382 = vmatpush1.xpose.msra.mxu0 %v7379
    %7383 = vmatprep.subr.mxu0 0.0
    %7384 = vmatpush1.xpose.msra.mxu0 0.0
    %7385 = vmatprep.subr.mxu0 0.0
    %7386 = vmatpush1.xpose.msra.mxu0 0.0
    %7387 = vmatprep.subr.mxu0 0.0
    %7388 = vmatpush1.xpose.msra.mxu0 0.0
    %7389 = vmatprep.subr.mxu0 0.0
    %7390 = vmatpush1.xpose.msra.mxu0 0.0
    %7391 = vmatprep.subr.mxu0 0.0
    %7392 = vmatpush1.xpose.msra.mxu0 0.0
    %7393 = vmatprep.subr.mxu0 0.0
    %7394 = vmatpush1.xpose.msra.mxu0 0.0
    %7395 = vmatprep.subr.mxu0 0.0
    %7396 = vmatpush1.xpose.msra.mxu0 0.0
    %7397 = vmatprep.subr.mxu0 0.0
    %7398 = vmatpush1.xpose.msra.mxu0 0.0
    %7399 = vmatprep.subr.mxu0 0.0
    %7400 = vmatpush1.xpose.msra.mxu0 0.0
    %7401 = vmatprep.subr.mxu0 0.0
    %7402 = vmatpush1.xpose.msra.mxu0 0.0
    %7403 = vmatprep.subr.mxu0 0.0
    %7404 = vmatpush1.xpose.msra.mxu0 0.0
    %7405 = vmatprep.subr.mxu0 0.0
    %7406 = vmatpush1.xpose.msra.mxu0 0.0
    %7407 = vmatprep.subr.mxu0 0.0
    %7408 = vmatpush1.xpose.msra.mxu0 0.0
    %7409 = vmatprep.subr.mxu0 0.0
    %7410 = vmatpush1.xpose.msra.mxu0 0.0
    %7411 = vmatprep.subr.mxu0 0.0
    %7412 = vmatpush1.xpose.msra.mxu0 0.0
    %7413 = vmatprep.subr.mxu0 0.0
    %7414 = vmatpush1.xpose.msra.mxu0 0.0
    %7415 = vmatprep.subr.mxu0 0.0
    %7416 = vmatpush1.xpose.msra.mxu0 0.0
    %7417 = vmatprep.subr.mxu0 0.0
    %7418 = vmatpush1.xpose.msra.mxu0 0.0
    %7419 = vmatprep.subr.mxu0 0.0
    %7420 = vmatpush1.xpose.msra.mxu0 0.0
    %7421 = vmatprep.subr.mxu0 0.0
    %7422 = vmatpush1.xpose.msra.mxu0 0.0
    %7423 = vmatprep.subr.mxu0 0.0
    %7424 = vmatpush1.xpose.msra.mxu0 0.0
    %7425 = vmatprep.subr.mxu0 0.0
    %7426 = vmatpush1.xpose.msra.mxu0 0.0
    %7427 = vmatprep.subr.mxu0 0.0
    %7428 = vmatpush1.xpose.msra.mxu0 0.0
    %7429 = vmatprep.subr.mxu0 0.0
    %7430 = vmatpush1.xpose.msra.mxu0 0.0
    %7431 = vmatprep.subr.mxu0 0.0
    %7432 = vmatpush1.xpose.msra.mxu0 0.0
    %7433 = vmatprep.subr.mxu0 0.0
    %7434 = vmatpush1.xpose.msra.mxu0 0.0
    %7435 = vmatprep.subr.mxu0 0.0
    %7436 = vmatpush1.xpose.msra.mxu0 0.0
    %7437 = vmatprep.subr.mxu0 0.0
    %7438 = vmatpush1.xpose.msra.mxu0 0.0
    %7439 = vmatprep.subr.mxu0 0.0
    %7440 = vmatpush1.xpose.msra.mxu0 0.0
    %7441 = vmatprep.subr.mxu0 0.0
    %7442 = vmatpush1.xpose.msra.mxu0 0.0
    %7443 = vmatprep.subr.mxu0 0.0
    %7444 = vmatpush1.xpose.msra.mxu0 0.0
    %7445 = vmatprep.mubr.f32.mxu0 0.0
    %7446 = vmatmul.mubr.f32.gmra.mrb[0].mxu0 %v7376
    %v7447 = vpop.f32.mrb[0].mxu0
    %v7448 = vadd.f32 0.0, %v7447
    %v7449 = vpop.f32.mrb[0].mxu0
    %7450 = vdwg.mxu0
    %v7452 = vsel %vm1044, %v6657, 0
    %v7455 = vsel %vm1044, %v6937, 0
    %7457 = vmatprep.subr.mxu0 0.0
    %7458 = vmatpush1.xpose.msra.mxu0 %v7455
    %7459 = vmatprep.subr.mxu0 0.0
    %7460 = vmatpush1.xpose.msra.mxu0 0.0
    %7461 = vmatprep.subr.mxu0 0.0
    %7462 = vmatpush1.xpose.msra.mxu0 0.0
    %7463 = vmatprep.subr.mxu0 0.0
    %7464 = vmatpush1.xpose.msra.mxu0 0.0
    %7465 = vmatprep.subr.mxu0 0.0
    %7466 = vmatpush1.xpose.msra.mxu0 0.0
    %7467 = vmatprep.subr.mxu0 0.0
    %7468 = vmatpush1.xpose.msra.mxu0 0.0
    %7469 = vmatprep.subr.mxu0 0.0
    %7470 = vmatpush1.xpose.msra.mxu0 0.0
    %7471 = vmatprep.subr.mxu0 0.0
    %7472 = vmatpush1.xpose.msra.mxu0 0.0
    %7473 = vmatprep.subr.mxu0 0.0
    %7474 = vmatpush1.xpose.msra.mxu0 0.0
    %7475 = vmatprep.subr.mxu0 0.0
    %7476 = vmatpush1.xpose.msra.mxu0 0.0
    %7477 = vmatprep.subr.mxu0 0.0
    %7478 = vmatpush1.xpose.msra.mxu0 0.0
    %7479 = vmatprep.subr.mxu0 0.0
    %7480 = vmatpush1.xpose.msra.mxu0 0.0
    %7481 = vmatprep.subr.mxu0 0.0
    %7482 = vmatpush1.xpose.msra.mxu0 0.0
    %7483 = vmatprep.subr.mxu0 0.0
    %7484 = vmatpush1.xpose.msra.mxu0 0.0
    %7485 = vmatprep.subr.mxu0 0.0
    %7486 = vmatpush1.xpose.msra.mxu0 0.0
    %7487 = vmatprep.subr.mxu0 0.0
    %7488 = vmatpush1.xpose.msra.mxu0 0.0
    %7489 = vmatprep.subr.mxu0 0.0
    %7490 = vmatpush1.xpose.msra.mxu0 0.0
    %7491 = vmatprep.subr.mxu0 0.0
    %7492 = vmatpush1.xpose.msra.mxu0 0.0
    %7493 = vmatprep.subr.mxu0 0.0
    %7494 = vmatpush1.xpose.msra.mxu0 0.0
    %7495 = vmatprep.subr.mxu0 0.0
    %7496 = vmatpush1.xpose.msra.mxu0 0.0
    %7497 = vmatprep.subr.mxu0 0.0
    %7498 = vmatpush1.xpose.msra.mxu0 0.0
    %7499 = vmatprep.subr.mxu0 0.0
    %7500 = vmatpush1.xpose.msra.mxu0 0.0
    %7501 = vmatprep.subr.mxu0 0.0
    %7502 = vmatpush1.xpose.msra.mxu0 0.0
    %7503 = vmatprep.subr.mxu0 0.0
    %7504 = vmatpush1.xpose.msra.mxu0 0.0
    %7505 = vmatprep.subr.mxu0 0.0
    %7506 = vmatpush1.xpose.msra.mxu0 0.0
    %7507 = vmatprep.subr.mxu0 0.0
    %7508 = vmatpush1.xpose.msra.mxu0 0.0
    %7509 = vmatprep.subr.mxu0 0.0
    %7510 = vmatpush1.xpose.msra.mxu0 0.0
    %7511 = vmatprep.subr.mxu0 0.0
    %7512 = vmatpush1.xpose.msra.mxu0 0.0
    %7513 = vmatprep.subr.mxu0 0.0
    %7514 = vmatpush1.xpose.msra.mxu0 0.0
    %7515 = vmatprep.subr.mxu0 0.0
    %7516 = vmatpush1.xpose.msra.mxu0 0.0
    %7517 = vmatprep.subr.mxu0 0.0
    %7518 = vmatpush1.xpose.msra.mxu0 0.0
    %7519 = vmatprep.subr.mxu0 0.0
    %7520 = vmatpush1.xpose.msra.mxu0 0.0
    %7521 = vmatprep.mubr.f32.mxu0 0.0
    %7522 = vmatmul.mubr.f32.gmra.mrb[0].mxu0 %v7452
    %v7523 = vpop.f32.mrb[0].mxu0
    %v7524 = vadd.f32 0.0, %v7523
    %v7525 = vpop.f32.mrb[0].mxu0
    %7526 = vdwg.mxu0
    %v7527 = vmul.f32 %v7296, 0.35355338
    %v7528 = vmul.f32 %v7372, 0.35355338
    %v7529 = vmul.f32 %v7448, 0.35355338
    %v7530 = vmul.f32 %v7524, 0.35355338
    %v7531 = vadd.f32 %v7527, %v3377
    %v7532 = vadd.f32 %v7528, %v3377
    %v7533 = vadd.f32 %v7529, %v3377
    %v7534 = vadd.f32 %v7530, %v3377
    %v7535 = vsel %vm1044, %v7531, -inf
    %7536 = vmax.xlane.f32.xlu0 %v7535
    %v7537 = vpop.xlane.xlu0 %7536
    %v7538 = vsel %vm1044, %v7532, -inf
    %7539 = vmax.xlane.f32.xlu0 %v7538
    %v7540 = vpop.xlane.xlu0 %7539
    %v7541 = vsel %vm1044, %v7533, -inf
    %7542 = vmax.xlane.f32.xlu0 %v7541
    %v7543 = vpop.xlane.xlu0 %7542
    %v7544 = vsel %vm1044, %v7534, -inf
    %7545 = vmax.xlane.f32.xlu0 %v7544
    %v7546 = vpop.xlane.xlu0 %7545
    %v7547 = vsub.f32 %v7531, %v7537
    %v7548 = vsub.f32 %v7532, %v7540
    %v7549 = vsub.f32 %v7533, %v7543
    %v7550 = vsub.f32 %v7534, %v7546
    %v7551 = vmul.f32 %v7547, 1.442695
    %v7552 = vpow.pop %v7551
    %v7553 = vmul.f32 %v7548, 1.442695
    %v7554 = vpow.pop %v7553
    %v7555 = vmul.f32 %v7549, 1.442695
    %v7556 = vpow.pop %v7555
    %v7557 = vmul.f32 %v7550, 1.442695
    %v7558 = vpow.pop %v7557
    %v7559 = vsel %vm1044, %v7552, 0.0
    %7560 = vadd.xlane.f32.xlu0 %v7559
    %v7561 = vpop.xlane.xlu0 %7560
    %v7562 = vsel %vm1044, %v7554, 0.0
    %7563 = vadd.xlane.f32.xlu0 %v7562
    %v7564 = vpop.xlane.xlu0 %7563
    %v7565 = vsel %vm1044, %v7556, 0.0
    %7566 = vadd.xlane.f32.xlu0 %v7565
    %v7567 = vpop.xlane.xlu0 %7566
    %v7568 = vsel %vm1044, %v7558, 0.0
    %7569 = vadd.xlane.f32.xlu0 %v7568
    %v7570 = vpop.xlane.xlu0 %7569
    %v7571 = vrcp.pop %v7561
    %v7572 = vmul.f32 %v7552, %v7571
    %v7573 = vrcp.pop %v7564
    %v7574 = vmul.f32 %v7554, %v7573
    %v7575 = vrcp.pop %v7567
    %v7576 = vmul.f32 %v7556, %v7575
    %v7577 = vrcp.pop %v7570
    %v7578 = vmul.f32 %v7558, %v7577
    %v7579 = vsel %vm1044, %v7572, 0.0
    %v7580 = vsel %vm1044, %v7574, 0.0
    %v7581 = vadd.f32 %v7579, %v7580
    %v7582 = vsel %vm1044, %v7576, 0.0
    %v7583 = vadd.f32 %v7581, %v7582
    %v7584 = vsel %vm1044, %v7578, 0.0
    %v7585 = vadd.f32 %v7583, %v7584
    %v7586 = vmul.f32 %v7585, %v1414
    %s7587 = scalar_lea.vmem [#allocation2], 24
    %7588 = vst.msk [vmem:[%s7587] sm:$0xff] %vm1044, %v7586
    %v7590 = vsel %vm1044, %v7572, 0
    %7592 = vmatprep.subr.mxu0 0.0
    %7593 = vmatpush1.msra.mxu0 %v7010
    %7594 = vmatprep.subr.mxu0 0.0
    %7595 = vmatpush1.msra.mxu0 0.0
    %7596 = vmatprep.subr.mxu0 0.0
    %7597 = vmatpush1.msra.mxu0 0.0
    %7598 = vmatprep.subr.mxu0 0.0
    %7599 = vmatpush1.msra.mxu0 0.0
    %7600 = vmatprep.subr.mxu0 0.0
    %7601 = vmatpush1.msra.mxu0 0.0
    %7602 = vmatprep.subr.mxu0 0.0
    %7603 = vmatpush1.msra.mxu0 0.0
    %7604 = vmatprep.subr.mxu0 0.0
    %7605 = vmatpush1.msra.mxu0 0.0
    %7606 = vmatprep.subr.mxu0 0.0
    %7607 = vmatpush1.msra.mxu0 0.0
    %7608 = vmatprep.subr.mxu0 0.0
    %7609 = vmatpush1.msra.mxu0 0.0
    %7610 = vmatprep.subr.mxu0 0.0
    %7611 = vmatpush1.msra.mxu0 0.0
    %7612 = vmatprep.subr.mxu0 0.0
    %7613 = vmatpush1.msra.mxu0 0.0
    %7614 = vmatprep.subr.mxu0 0.0
    %7615 = vmatpush1.msra.mxu0 0.0
    %7616 = vmatprep.subr.mxu0 0.0
    %7617 = vmatpush1.msra.mxu0 0.0
    %7618 = vmatprep.subr.mxu0 0.0
    %7619 = vmatpush1.msra.mxu0 0.0
    %7620 = vmatprep.subr.mxu0 0.0
    %7621 = vmatpush1.msra.mxu0 0.0
    %7622 = vmatprep.subr.mxu0 0.0
    %7623 = vmatpush1.msra.mxu0 0.0
    %7624 = vmatprep.subr.mxu0 0.0
    %7625 = vmatpush1.msra.mxu0 0.0
    %7626 = vmatprep.subr.mxu0 0.0
    %7627 = vmatpush1.msra.mxu0 0.0
    %7628 = vmatprep.subr.mxu0 0.0
    %7629 = vmatpush1.msra.mxu0 0.0
    %7630 = vmatprep.subr.mxu0 0.0
    %7631 = vmatpush1.msra.mxu0 0.0
    %7632 = vmatprep.subr.mxu0 0.0
    %7633 = vmatpush1.msra.mxu0 0.0
    %7634 = vmatprep.subr.mxu0 0.0
    %7635 = vmatpush1.msra.mxu0 0.0
    %7636 = vmatprep.subr.mxu0 0.0
    %7637 = vmatpush1.msra.mxu0 0.0
    %7638 = vmatprep.subr.mxu0 0.0
    %7639 = vmatpush1.msra.mxu0 0.0
    %7640 = vmatprep.subr.mxu0 0.0
    %7641 = vmatpush1.msra.mxu0 0.0
    %7642 = vmatprep.subr.mxu0 0.0
    %7643 = vmatpush1.msra.mxu0 0.0
    %7644 = vmatprep.subr.mxu0 0.0
    %7645 = vmatpush1.msra.mxu0 0.0
    %7646 = vmatprep.subr.mxu0 0.0
    %7647 = vmatpush1.msra.mxu0 0.0
    %7648 = vmatprep.subr.mxu0 0.0
    %7649 = vmatpush1.msra.mxu0 0.0
    %7650 = vmatprep.subr.mxu0 0.0
    %7651 = vmatpush1.msra.mxu0 0.0
    %7652 = vmatprep.subr.mxu0 0.0
    %7653 = vmatpush1.msra.mxu0 0.0
    %7654 = vmatprep.subr.mxu0 0.0
    %7655 = vmatpush1.msra.mxu0 0.0
    %7656 = vmatprep.mubr.f32.mxu0 0.0
    %7657 = vmatmul.mubr.f32.gmra.mrb[0].mxu0 %v7590
    %v7658 = vpop.f32.mrb[0].mxu0
    %v7659 = vadd.f32 0.0, %v7658
    %v7660 = vpop.f32.mrb[0].mxu0
    %7661 = vdwg.mxu0
    %v7663 = vsel %vm1044, %v7574, 0
    %7665 = vmatprep.subr.mxu0 0.0
    %7666 = vmatpush1.msra.mxu0 %v7080
    %7667 = vmatprep.subr.mxu0 0.0
    %7668 = vmatpush1.msra.mxu0 0.0
    %7669 = vmatprep.subr.mxu0 0.0
    %7670 = vmatpush1.msra.mxu0 0.0
    %7671 = vmatprep.subr.mxu0 0.0
    %7672 = vmatpush1.msra.mxu0 0.0
    %7673 = vmatprep.subr.mxu0 0.0
    %7674 = vmatpush1.msra.mxu0 0.0
    %7675 = vmatprep.subr.mxu0 0.0
    %7676 = vmatpush1.msra.mxu0 0.0
    %7677 = vmatprep.subr.mxu0 0.0
    %7678 = vmatpush1.msra.mxu0 0.0
    %7679 = vmatprep.subr.mxu0 0.0
    %7680 = vmatpush1.msra.mxu0 0.0
    %7681 = vmatprep.subr.mxu0 0.0
    %7682 = vmatpush1.msra.mxu0 0.0
    %7683 = vmatprep.subr.mxu0 0.0
    %7684 = vmatpush1.msra.mxu0 0.0
    %7685 = vmatprep.subr.mxu0 0.0
    %7686 = vmatpush1.msra.mxu0 0.0
    %7687 = vmatprep.subr.mxu0 0.0
    %7688 = vmatpush1.msra.mxu0 0.0
    %7689 = vmatprep.subr.mxu0 0.0
    %7690 = vmatpush1.msra.mxu0 0.0
    %7691 = vmatprep.subr.mxu0 0.0
    %7692 = vmatpush1.msra.mxu0 0.0
    %7693 = vmatprep.subr.mxu0 0.0
    %7694 = vmatpush1.msra.mxu0 0.0
    %7695 = vmatprep.subr.mxu0 0.0
    %7696 = vmatpush1.msra.mxu0 0.0
    %7697 = vmatprep.subr.mxu0 0.0
    %7698 = vmatpush1.msra.mxu0 0.0
    %7699 = vmatprep.subr.mxu0 0.0
    %7700 = vmatpush1.msra.mxu0 0.0
    %7701 = vmatprep.subr.mxu0 0.0
    %7702 = vmatpush1.msra.mxu0 0.0
    %7703 = vmatprep.subr.mxu0 0.0
    %7704 = vmatpush1.msra.mxu0 0.0
    %7705 = vmatprep.subr.mxu0 0.0
    %7706 = vmatpush1.msra.mxu0 0.0
    %7707 = vmatprep.subr.mxu0 0.0
    %7708 = vmatpush1.msra.mxu0 0.0
    %7709 = vmatprep.subr.mxu0 0.0
    %7710 = vmatpush1.msra.mxu0 0.0
    %7711 = vmatprep.subr.mxu0 0.0
    %7712 = vmatpush1.msra.mxu0 0.0
    %7713 = vmatprep.subr.mxu0 0.0
    %7714 = vmatpush1.msra.mxu0 0.0
    %7715 = vmatprep.subr.mxu0 0.0
    %7716 = vmatpush1.msra.mxu0 0.0
    %7717 = vmatprep.subr.mxu0 0.0
    %7718 = vmatpush1.msra.mxu0 0.0
    %7719 = vmatprep.subr.mxu0 0.0
    %7720 = vmatpush1.msra.mxu0 0.0
    %7721 = vmatprep.subr.mxu0 0.0
    %7722 = vmatpush1.msra.mxu0 0.0
    %7723 = vmatprep.subr.mxu0 0.0
    %7724 = vmatpush1.msra.mxu0 0.0
    %7725 = vmatprep.subr.mxu0 0.0
    %7726 = vmatpush1.msra.mxu0 0.0
    %7727 = vmatprep.subr.mxu0 0.0
    %7728 = vmatpush1.msra.mxu0 0.0
    %7729 = vmatprep.mubr.f32.mxu0 0.0
    %7730 = vmatmul.mubr.f32.gmra.mrb[0].mxu0 %v7663
    %v7731 = vpop.f32.mrb[0].mxu0
    %v7732 = vadd.f32 0.0, %v7731
    %v7733 = vpop.f32.mrb[0].mxu0
    %7734 = vdwg.mxu0
    %v7736 = vsel %vm1044, %v7576, 0
    %7738 = vmatprep.subr.mxu0 0.0
    %7739 = vmatpush1.msra.mxu0 %v7150
    %7740 = vmatprep.subr.mxu0 0.0
    %7741 = vmatpush1.msra.mxu0 0.0
    %7742 = vmatprep.subr.mxu0 0.0
    %7743 = vmatpush1.msra.mxu0 0.0
    %7744 = vmatprep.subr.mxu0 0.0
    %7745 = vmatpush1.msra.mxu0 0.0
    %7746 = vmatprep.subr.mxu0 0.0
    %7747 = vmatpush1.msra.mxu0 0.0
    %7748 = vmatprep.subr.mxu0 0.0
    %7749 = vmatpush1.msra.mxu0 0.0
    %7750 = vmatprep.subr.mxu0 0.0
    %7751 = vmatpush1.msra.mxu0 0.0
    %7752 = vmatprep.subr.mxu0 0.0
    %7753 = vmatpush1.msra.mxu0 0.0
    %7754 = vmatprep.subr.mxu0 0.0
    %7755 = vmatpush1.msra.mxu0 0.0
    %7756 = vmatprep.subr.mxu0 0.0
    %7757 = vmatpush1.msra.mxu0 0.0
    %7758 = vmatprep.subr.mxu0 0.0
    %7759 = vmatpush1.msra.mxu0 0.0
    %7760 = vmatprep.subr.mxu0 0.0
    %7761 = vmatpush1.msra.mxu0 0.0
    %7762 = vmatprep.subr.mxu0 0.0
    %7763 = vmatpush1.msra.mxu0 0.0
    %7764 = vmatprep.subr.mxu0 0.0
    %7765 = vmatpush1.msra.mxu0 0.0
    %7766 = vmatprep.subr.mxu0 0.0
    %7767 = vmatpush1.msra.mxu0 0.0
    %7768 = vmatprep.subr.mxu0 0.0
    %7769 = vmatpush1.msra.mxu0 0.0
    %7770 = vmatprep.subr.mxu0 0.0
    %7771 = vmatpush1.msra.mxu0 0.0
    %7772 = vmatprep.subr.mxu0 0.0
    %7773 = vmatpush1.msra.mxu0 0.0
    %7774 = vmatprep.subr.mxu0 0.0
    %7775 = vmatpush1.msra.mxu0 0.0
    %7776 = vmatprep.subr.mxu0 0.0
    %7777 = vmatpush1.msra.mxu0 0.0
    %7778 = vmatprep.subr.mxu0 0.0
    %7779 = vmatpush1.msra.mxu0 0.0
    %7780 = vmatprep.subr.mxu0 0.0
    %7781 = vmatpush1.msra.mxu0 0.0
    %7782 = vmatprep.subr.mxu0 0.0
    %7783 = vmatpush1.msra.mxu0 0.0
    %7784 = vmatprep.subr.mxu0 0.0
    %7785 = vmatpush1.msra.mxu0 0.0
    %7786 = vmatprep.subr.mxu0 0.0
    %7787 = vmatpush1.msra.mxu0 0.0
    %7788 = vmatprep.subr.mxu0 0.0
    %7789 = vmatpush1.msra.mxu0 0.0
    %7790 = vmatprep.subr.mxu0 0.0
    %7791 = vmatpush1.msra.mxu0 0.0
    %7792 = vmatprep.subr.mxu0 0.0
    %7793 = vmatpush1.msra.mxu0 0.0
    %7794 = vmatprep.subr.mxu0 0.0
    %7795 = vmatpush1.msra.mxu0 0.0
    %7796 = vmatprep.subr.mxu0 0.0
    %7797 = vmatpush1.msra.mxu0 0.0
    %7798 = vmatprep.subr.mxu0 0.0
    %7799 = vmatpush1.msra.mxu0 0.0
    %7800 = vmatprep.subr.mxu0 0.0
    %7801 = vmatpush1.msra.mxu0 0.0
    %7802 = vmatprep.mubr.f32.mxu0 0.0
    %7803 = vmatmul.mubr.f32.gmra.mrb[0].mxu0 %v7736
    %v7804 = vpop.f32.mrb[0].mxu0
    %v7805 = vadd.f32 0.0, %v7804
    %v7806 = vpop.f32.mrb[0].mxu0
    %7807 = vdwg.mxu0
    %v7809 = vsel %vm1044, %v7578, 0
    %7811 = vmatprep.subr.mxu0 0.0
    %7812 = vmatpush1.msra.mxu0 %v7220
    %7813 = vmatprep.subr.mxu0 0.0
    %7814 = vmatpush1.msra.mxu0 0.0
    %7815 = vmatprep.subr.mxu0 0.0
    %7816 = vmatpush1.msra.mxu0 0.0
    %7817 = vmatprep.subr.mxu0 0.0
    %7818 = vmatpush1.msra.mxu0 0.0
    %7819 = vmatprep.subr.mxu0 0.0
    %7820 = vmatpush1.msra.mxu0 0.0
    %7821 = vmatprep.subr.mxu0 0.0
    %7822 = vmatpush1.msra.mxu0 0.0
    %7823 = vmatprep.subr.mxu0 0.0
    %7824 = vmatpush1.msra.mxu0 0.0
    %7825 = vmatprep.subr.mxu0 0.0
    %7826 = vmatpush1.msra.mxu0 0.0
    %7827 = vmatprep.subr.mxu0 0.0
    %7828 = vmatpush1.msra.mxu0 0.0
    %7829 = vmatprep.subr.mxu0 0.0
    %7830 = vmatpush1.msra.mxu0 0.0
    %7831 = vmatprep.subr.mxu0 0.0
    %7832 = vmatpush1.msra.mxu0 0.0
    %7833 = vmatprep.subr.mxu0 0.0
    %7834 = vmatpush1.msra.mxu0 0.0
    %7835 = vmatprep.subr.mxu0 0.0
    %7836 = vmatpush1.msra.mxu0 0.0
    %7837 = vmatprep.subr.mxu0 0.0
    %7838 = vmatpush1.msra.mxu0 0.0
    %7839 = vmatprep.subr.mxu0 0.0
    %7840 = vmatpush1.msra.mxu0 0.0
    %7841 = vmatprep.subr.mxu0 0.0
    %7842 = vmatpush1.msra.mxu0 0.0
    %7843 = vmatprep.subr.mxu0 0.0
    %7844 = vmatpush1.msra.mxu0 0.0
    %7845 = vmatprep.subr.mxu0 0.0
    %7846 = vmatpush1.msra.mxu0 0.0
    %7847 = vmatprep.subr.mxu0 0.0
    %7848 = vmatpush1.msra.mxu0 0.0
    %7849 = vmatprep.subr.mxu0 0.0
    %7850 = vmatpush1.msra.mxu0 0.0
    %7851 = vmatprep.subr.mxu0 0.0
    %7852 = vmatpush1.msra.mxu0 0.0
    %7853 = vmatprep.subr.mxu0 0.0
    %7854 = vmatpush1.msra.mxu0 0.0
    %7855 = vmatprep.subr.mxu0 0.0
    %7856 = vmatpush1.msra.mxu0 0.0
    %7857 = vmatprep.subr.mxu0 0.0
    %7858 = vmatpush1.msra.mxu0 0.0
    %7859 = vmatprep.subr.mxu0 0.0
    %7860 = vmatpush1.msra.mxu0 0.0
    %7861 = vmatprep.subr.mxu0 0.0
    %7862 = vmatpush1.msra.mxu0 0.0
    %7863 = vmatprep.subr.mxu0 0.0
    %7864 = vmatpush1.msra.mxu0 0.0
    %7865 = vmatprep.subr.mxu0 0.0
    %7866 = vmatpush1.msra.mxu0 0.0
    %7867 = vmatprep.subr.mxu0 0.0
    %7868 = vmatpush1.msra.mxu0 0.0
    %7869 = vmatprep.subr.mxu0 0.0
    %7870 = vmatpush1.msra.mxu0 0.0
    %7871 = vmatprep.subr.mxu0 0.0
    %7872 = vmatpush1.msra.mxu0 0.0
    %7873 = vmatprep.subr.mxu0 0.0
    %7874 = vmatpush1.msra.mxu0 0.0
    %7875 = vmatprep.mubr.f32.mxu0 0.0
    %7876 = vmatmul.mubr.f32.gmra.mrb[0].mxu0 %v7809
    %v7877 = vpop.f32.mrb[0].mxu0
    %v7878 = vadd.f32 0.0, %v7877
    %v7879 = vpop.f32.mrb[0].mxu0
    %7880 = vdwg.mxu0
    %v7882 = vsel %vm1044, %v7659, 0
    %7884 = vmatprep.subr.mxu0 0.0
    %7885 = vmatpush1.msra.mxu0 %v4271
    %7886 = vmatprep.subr.mxu0 0.0
    %7887 = vmatpush1.msra.mxu0 0.0
    %7888 = vmatprep.subr.mxu0 0.0
    %7889 = vmatpush1.msra.mxu0 0.0
    %7890 = vmatprep.subr.mxu0 0.0
    %7891 = vmatpush1.msra.mxu0 0.0
    %7892 = vmatprep.subr.mxu0 0.0
    %7893 = vmatpush1.msra.mxu0 0.0
    %7894 = vmatprep.subr.mxu0 0.0
    %7895 = vmatpush1.msra.mxu0 0.0
    %7896 = vmatprep.subr.mxu0 0.0
    %7897 = vmatpush1.msra.mxu0 0.0
    %7898 = vmatprep.subr.mxu0 0.0
    %7899 = vmatpush1.msra.mxu0 0.0
    %7900 = vmatprep.subr.mxu0 0.0
    %7901 = vmatpush1.msra.mxu0 0.0
    %7902 = vmatprep.subr.mxu0 0.0
    %7903 = vmatpush1.msra.mxu0 0.0
    %7904 = vmatprep.subr.mxu0 0.0
    %7905 = vmatpush1.msra.mxu0 0.0
    %7906 = vmatprep.subr.mxu0 0.0
    %7907 = vmatpush1.msra.mxu0 0.0
    %7908 = vmatprep.subr.mxu0 0.0
    %7909 = vmatpush1.msra.mxu0 0.0
    %7910 = vmatprep.subr.mxu0 0.0
    %7911 = vmatpush1.msra.mxu0 0.0
    %7912 = vmatprep.subr.mxu0 0.0
    %7913 = vmatpush1.msra.mxu0 0.0
    %7914 = vmatprep.subr.mxu0 0.0
    %7915 = vmatpush1.msra.mxu0 0.0
    %7916 = vmatprep.subr.mxu0 0.0
    %7917 = vmatpush1.msra.mxu0 0.0
    %7918 = vmatprep.subr.mxu0 0.0
    %7919 = vmatpush1.msra.mxu0 0.0
    %7920 = vmatprep.subr.mxu0 0.0
    %7921 = vmatpush1.msra.mxu0 0.0
    %7922 = vmatprep.subr.mxu0 0.0
    %7923 = vmatpush1.msra.mxu0 0.0
    %7924 = vmatprep.subr.mxu0 0.0
    %7925 = vmatpush1.msra.mxu0 0.0
    %7926 = vmatprep.subr.mxu0 0.0
    %7927 = vmatpush1.msra.mxu0 0.0
    %7928 = vmatprep.subr.mxu0 0.0
    %7929 = vmatpush1.msra.mxu0 0.0
    %7930 = vmatprep.subr.mxu0 0.0
    %7931 = vmatpush1.msra.mxu0 0.0
    %7932 = vmatprep.subr.mxu0 0.0
    %7933 = vmatpush1.msra.mxu0 0.0
    %7934 = vmatprep.subr.mxu0 0.0
    %7935 = vmatpush1.msra.mxu0 0.0
    %7936 = vmatprep.subr.mxu0 0.0
    %7937 = vmatpush1.msra.mxu0 0.0
    %7938 = vmatprep.subr.mxu0 0.0
    %7939 = vmatpush1.msra.mxu0 0.0
    %7940 = vmatprep.subr.mxu0 0.0
    %7941 = vmatpush1.msra.mxu0 0.0
    %7942 = vmatprep.subr.mxu0 0.0
    %7943 = vmatpush1.msra.mxu0 0.0
    %7944 = vmatprep.subr.mxu0 0.0
    %7945 = vmatpush1.msra.mxu0 0.0
    %7946 = vmatprep.subr.mxu0 0.0
    %7947 = vmatpush1.msra.mxu0 0.0
    %7948 = vmatprep.mubr.f32.mxu0 0.0
    %7949 = vmatmul.mubr.f32.gmra.mrb[0].mxu0 %v7882
    %v7950 = vpop.f32.mrb[0].mxu0
    %v7951 = vadd.f32 0.0, %v7950
    %v7952 = vpop.f32.mrb[0].mxu0
    %7953 = vdwg.mxu0
    %v7955 = vsel %vm1044, %v7732, 0
    %7957 = vmatprep.subr.mxu0 0.0
    %7958 = vmatpush1.msra.mxu0 %v4272
    %7959 = vmatprep.subr.mxu0 0.0
    %7960 = vmatpush1.msra.mxu0 0.0
    %7961 = vmatprep.subr.mxu0 0.0
    %7962 = vmatpush1.msra.mxu0 0.0
    %7963 = vmatprep.subr.mxu0 0.0
    %7964 = vmatpush1.msra.mxu0 0.0
    %7965 = vmatprep.subr.mxu0 0.0
    %7966 = vmatpush1.msra.mxu0 0.0
    %7967 = vmatprep.subr.mxu0 0.0
    %7968 = vmatpush1.msra.mxu0 0.0
    %7969 = vmatprep.subr.mxu0 0.0
    %7970 = vmatpush1.msra.mxu0 0.0
    %7971 = vmatprep.subr.mxu0 0.0
    %7972 = vmatpush1.msra.mxu0 0.0
    %7973 = vmatprep.subr.mxu0 0.0
    %7974 = vmatpush1.msra.mxu0 0.0
    %7975 = vmatprep.subr.mxu0 0.0
    %7976 = vmatpush1.msra.mxu0 0.0
    %7977 = vmatprep.subr.mxu0 0.0
    %7978 = vmatpush1.msra.mxu0 0.0
    %7979 = vmatprep.subr.mxu0 0.0
    %7980 = vmatpush1.msra.mxu0 0.0
    %7981 = vmatprep.subr.mxu0 0.0
    %7982 = vmatpush1.msra.mxu0 0.0
    %7983 = vmatprep.subr.mxu0 0.0
    %7984 = vmatpush1.msra.mxu0 0.0
    %7985 = vmatprep.subr.mxu0 0.0
    %7986 = vmatpush1.msra.mxu0 0.0
    %7987 = vmatprep.subr.mxu0 0.0
    %7988 = vmatpush1.msra.mxu0 0.0
    %7989 = vmatprep.subr.mxu0 0.0
    %7990 = vmatpush1.msra.mxu0 0.0
    %7991 = vmatprep.subr.mxu0 0.0
    %7992 = vmatpush1.msra.mxu0 0.0
    %7993 = vmatprep.subr.mxu0 0.0
    %7994 = vmatpush1.msra.mxu0 0.0
    %7995 = vmatprep.subr.mxu0 0.0
    %7996 = vmatpush1.msra.mxu0 0.0
    %7997 = vmatprep.subr.mxu0 0.0
    %7998 = vmatpush1.msra.mxu0 0.0
    %7999 = vmatprep.subr.mxu0 0.0
    %8000 = vmatpush1.msra.mxu0 0.0
    %8001 = vmatprep.subr.mxu0 0.0
    %8002 = vmatpush1.msra.mxu0 0.0
    %8003 = vmatprep.subr.mxu0 0.0
    %8004 = vmatpush1.msra.mxu0 0.0
    %8005 = vmatprep.subr.mxu0 0.0
    %8006 = vmatpush1.msra.mxu0 0.0
    %8007 = vmatprep.subr.mxu0 0.0
    %8008 = vmatpush1.msra.mxu0 0.0
    %8009 = vmatprep.subr.mxu0 0.0
    %8010 = vmatpush1.msra.mxu0 0.0
    %8011 = vmatprep.subr.mxu0 0.0
    %8012 = vmatpush1.msra.mxu0 0.0
    %8013 = vmatprep.subr.mxu0 0.0
    %8014 = vmatpush1.msra.mxu0 0.0
    %8015 = vmatprep.subr.mxu0 0.0
    %8016 = vmatpush1.msra.mxu0 0.0
    %8017 = vmatprep.subr.mxu0 0.0
    %8018 = vmatpush1.msra.mxu0 0.0
    %8019 = vmatprep.subr.mxu0 0.0
    %8020 = vmatpush1.msra.mxu0 0.0
    %8021 = vmatprep.mubr.f32.mxu0 0.0
    %8022 = vmatmul.mubr.f32.gmra.mrb[0].mxu0 %v7955
    %v8023 = vpop.f32.mrb[0].mxu0
    %v8024 = vadd.f32 0.0, %v8023
    %v8025 = vpop.f32.mrb[0].mxu0
    %8026 = vdwg.mxu0
    %v8028 = vsel %vm1044, %v7805, 0
    %8030 = vmatprep.subr.mxu0 0.0
    %8031 = vmatpush1.msra.mxu0 %v4273
    %8032 = vmatprep.subr.mxu0 0.0
    %8033 = vmatpush1.msra.mxu0 0.0
    %8034 = vmatprep.subr.mxu0 0.0
    %8035 = vmatpush1.msra.mxu0 0.0
    %8036 = vmatprep.subr.mxu0 0.0
    %8037 = vmatpush1.msra.mxu0 0.0
    %8038 = vmatprep.subr.mxu0 0.0
    %8039 = vmatpush1.msra.mxu0 0.0
    %8040 = vmatprep.subr.mxu0 0.0
    %8041 = vmatpush1.msra.mxu0 0.0
    %8042 = vmatprep.subr.mxu0 0.0
    %8043 = vmatpush1.msra.mxu0 0.0
    %8044 = vmatprep.subr.mxu0 0.0
    %8045 = vmatpush1.msra.mxu0 0.0
    %8046 = vmatprep.subr.mxu0 0.0
    %8047 = vmatpush1.msra.mxu0 0.0
    %8048 = vmatprep.subr.mxu0 0.0
    %8049 = vmatpush1.msra.mxu0 0.0
    %8050 = vmatprep.subr.mxu0 0.0
    %8051 = vmatpush1.msra.mxu0 0.0
    %8052 = vmatprep.subr.mxu0 0.0
    %8053 = vmatpush1.msra.mxu0 0.0
    %8054 = vmatprep.subr.mxu0 0.0
    %8055 = vmatpush1.msra.mxu0 0.0
    %8056 = vmatprep.subr.mxu0 0.0
    %8057 = vmatpush1.msra.mxu0 0.0
    %8058 = vmatprep.subr.mxu0 0.0
    %8059 = vmatpush1.msra.mxu0 0.0
    %8060 = vmatprep.subr.mxu0 0.0
    %8061 = vmatpush1.msra.mxu0 0.0
    %8062 = vmatprep.subr.mxu0 0.0
    %8063 = vmatpush1.msra.mxu0 0.0
    %8064 = vmatprep.subr.mxu0 0.0
    %8065 = vmatpush1.msra.mxu0 0.0
    %8066 = vmatprep.subr.mxu0 0.0
    %8067 = vmatpush1.msra.mxu0 0.0
    %8068 = vmatprep.subr.mxu0 0.0
    %8069 = vmatpush1.msra.mxu0 0.0
    %8070 = vmatprep.subr.mxu0 0.0
    %8071 = vmatpush1.msra.mxu0 0.0
    %8072 = vmatprep.subr.mxu0 0.0
    %8073 = vmatpush1.msra.mxu0 0.0
    %8074 = vmatprep.subr.mxu0 0.0
    %8075 = vmatpush1.msra.mxu0 0.0
    %8076 = vmatprep.subr.mxu0 0.0
    %8077 = vmatpush1.msra.mxu0 0.0
    %8078 = vmatprep.subr.mxu0 0.0
    %8079 = vmatpush1.msra.mxu0 0.0
    %8080 = vmatprep.subr.mxu0 0.0
    %8081 = vmatpush1.msra.mxu0 0.0
    %8082 = vmatprep.subr.mxu0 0.0
    %8083 = vmatpush1.msra.mxu0 0.0
    %8084 = vmatprep.subr.mxu0 0.0
    %8085 = vmatpush1.msra.mxu0 0.0
    %8086 = vmatprep.subr.mxu0 0.0
    %8087 = vmatpush1.msra.mxu0 0.0
    %8088 = vmatprep.subr.mxu0 0.0
    %8089 = vmatpush1.msra.mxu0 0.0
    %8090 = vmatprep.subr.mxu0 0.0
    %8091 = vmatpush1.msra.mxu0 0.0
    %8092 = vmatprep.subr.mxu0 0.0
    %8093 = vmatpush1.msra.mxu0 0.0
    %8094 = vmatprep.mubr.f32.mxu0 0.0
    %8095 = vmatmul.mubr.f32.gmra.mrb[0].mxu0 %v8028
    %v8096 = vpop.f32.mrb[0].mxu0
    %v8097 = vadd.f32 0.0, %v8096
    %v8098 = vpop.f32.mrb[0].mxu0
    %8099 = vdwg.mxu0
    %v8101 = vsel %vm1044, %v7878, 0
    %8103 = vmatprep.subr.mxu0 0.0
    %8104 = vmatpush1.msra.mxu0 %v4274
    %8105 = vmatprep.subr.mxu0 0.0
    %8106 = vmatpush1.msra.mxu0 0.0
    %8107 = vmatprep.subr.mxu0 0.0
    %8108 = vmatpush1.msra.mxu0 0.0
    %8109 = vmatprep.subr.mxu0 0.0
    %8110 = vmatpush1.msra.mxu0 0.0
    %8111 = vmatprep.subr.mxu0 0.0
    %8112 = vmatpush1.msra.mxu0 0.0
    %8113 = vmatprep.subr.mxu0 0.0
    %8114 = vmatpush1.msra.mxu0 0.0
    %8115 = vmatprep.subr.mxu0 0.0
    %8116 = vmatpush1.msra.mxu0 0.0
    %8117 = vmatprep.subr.mxu0 0.0
    %8118 = vmatpush1.msra.mxu0 0.0
    %8119 = vmatprep.subr.mxu0 0.0
    %8120 = vmatpush1.msra.mxu0 0.0
    %8121 = vmatprep.subr.mxu0 0.0
    %8122 = vmatpush1.msra.mxu0 0.0
    %8123 = vmatprep.subr.mxu0 0.0
    %8124 = vmatpush1.msra.mxu0 0.0
    %8125 = vmatprep.subr.mxu0 0.0
    %8126 = vmatpush1.msra.mxu0 0.0
    %8127 = vmatprep.subr.mxu0 0.0
    %8128 = vmatpush1.msra.mxu0 0.0
    %8129 = vmatprep.subr.mxu0 0.0
    %8130 = vmatpush1.msra.mxu0 0.0
    %8131 = vmatprep.subr.mxu0 0.0
    %8132 = vmatpush1.msra.mxu0 0.0
    %8133 = vmatprep.subr.mxu0 0.0
    %8134 = vmatpush1.msra.mxu0 0.0
    %8135 = vmatprep.subr.mxu0 0.0
    %8136 = vmatpush1.msra.mxu0 0.0
    %8137 = vmatprep.subr.mxu0 0.0
    %8138 = vmatpush1.msra.mxu0 0.0
    %8139 = vmatprep.subr.mxu0 0.0
    %8140 = vmatpush1.msra.mxu0 0.0
    %8141 = vmatprep.subr.mxu0 0.0
    %8142 = vmatpush1.msra.mxu0 0.0
    %8143 = vmatprep.subr.mxu0 0.0
    %8144 = vmatpush1.msra.mxu0 0.0
    %8145 = vmatprep.subr.mxu0 0.0
    %8146 = vmatpush1.msra.mxu0 0.0
    %8147 = vmatprep.subr.mxu0 0.0
    %8148 = vmatpush1.msra.mxu0 0.0
    %8149 = vmatprep.subr.mxu0 0.0
    %8150 = vmatpush1.msra.mxu0 0.0
    %8151 = vmatprep.subr.mxu0 0.0
    %8152 = vmatpush1.msra.mxu0 0.0
    %8153 = vmatprep.subr.mxu0 0.0
    %8154 = vmatpush1.msra.mxu0 0.0
    %8155 = vmatprep.subr.mxu0 0.0
    %8156 = vmatpush1.msra.mxu0 0.0
    %8157 = vmatprep.subr.mxu0 0.0
    %8158 = vmatpush1.msra.mxu0 0.0
    %8159 = vmatprep.subr.mxu0 0.0
    %8160 = vmatpush1.msra.mxu0 0.0
    %8161 = vmatprep.subr.mxu0 0.0
    %8162 = vmatpush1.msra.mxu0 0.0
    %8163 = vmatprep.subr.mxu0 0.0
    %8164 = vmatpush1.msra.mxu0 0.0
    %8165 = vmatprep.subr.mxu0 0.0
    %8166 = vmatpush1.msra.mxu0 0.0
    %8167 = vmatprep.mubr.f32.mxu0 0.0
    %8168 = vmatmul.mubr.f32.gmra.mrb[0].mxu0 %v8101
    %v8169 = vpop.f32.mrb[0].mxu0
    %v8170 = vadd.f32 0.0, %v8169
    %v8171 = vpop.f32.mrb[0].mxu0
    %8172 = vdwg.mxu0
    %v8173 = vsel %vm149, %v7951, 0.0
    %v8174 = vsel %vm149, %v8024, 0.0
    %v8175 = vadd.f32 %v8173, %v8174
    %v8176 = vsel %vm149, %v8097, 0.0
    %v8177 = vadd.f32 %v8175, %v8176
    %v8178 = vsel %vm149, %v8170, 0.0
    %v8179 = vadd.f32 %v8177, %v8178
    %v8180 = vadd.f32 %v8179, %v6171
    %v8181 = vadd.f32 %v4207, %v8180
    %v8182 = vsel %vm149, %v8181, 0.0
    %8183 = vadd.xlane.f32.xlu0 %v8182
    %v8184 = vpop.xlane.xlu0 %8183
    %v8185 = vmul.f32 %v8184, %v2017
    %v8186 = vsub.f32 %v8181, %v8185
    %v8187 = vmul.f32 %v8186, %v8186
    %v8188 = vsel %vm149, %v8187, 0.0
    %8189 = vadd.xlane.f32.xlu0 %v8188
    %v8190 = vpop.xlane.xlu0 %8189
    %v8191 = vmul.f32 %v8190, %v2017
    %v8192 = vadd.f32 %v8191, 1e-05
    %v8193 = vrsqrt.pop %v8192
    %v8194 = vmul.f32 %v8186, %v8193
    %v8195 = vmul.f32 %v8194, %v6190
    %v8196 = vadd.f32 %v8195, %v6195
    %v8198 = vsel %vm149, %v8196, 0
    %8200 = vmatprep.subr.mxu0 0.0
    %8201 = vmatpush1.msra.mxu0 %v4278
    %8202 = vmatprep.subr.mxu0 0.0
    %8203 = vmatpush1.msra.mxu0 %v4279
    %8204 = vmatprep.subr.mxu0 0.0
    %8205 = vmatpush1.msra.mxu0 %v4280
    %8206 = vmatprep.subr.mxu0 0.0
    %8207 = vmatpush1.msra.mxu0 %v4281
    %8208 = vmatprep.subr.mxu0 0.0
    %8209 = vmatpush1.msra.mxu0 0.0
    %8210 = vmatprep.subr.mxu0 0.0
    %8211 = vmatpush1.msra.mxu0 0.0
    %8212 = vmatprep.subr.mxu0 0.0
    %8213 = vmatpush1.msra.mxu0 0.0
    %8214 = vmatprep.subr.mxu0 0.0
    %8215 = vmatpush1.msra.mxu0 0.0
    %8216 = vmatprep.subr.mxu0 0.0
    %8217 = vmatpush1.msra.mxu0 0.0
    %8218 = vmatprep.subr.mxu0 0.0
    %8219 = vmatpush1.msra.mxu0 0.0
    %8220 = vmatprep.subr.mxu0 0.0
    %8221 = vmatpush1.msra.mxu0 0.0
    %8222 = vmatprep.subr.mxu0 0.0
    %8223 = vmatpush1.msra.mxu0 0.0
    %8224 = vmatprep.subr.mxu0 0.0
    %8225 = vmatpush1.msra.mxu0 0.0
    %8226 = vmatprep.subr.mxu0 0.0
    %8227 = vmatpush1.msra.mxu0 0.0
    %8228 = vmatprep.subr.mxu0 0.0
    %8229 = vmatpush1.msra.mxu0 0.0
    %8230 = vmatprep.subr.mxu0 0.0
    %8231 = vmatpush1.msra.mxu0 0.0
    %8232 = vmatprep.subr.mxu0 0.0
    %8233 = vmatpush1.msra.mxu0 0.0
    %8234 = vmatprep.subr.mxu0 0.0
    %8235 = vmatpush1.msra.mxu0 0.0
    %8236 = vmatprep.subr.mxu0 0.0
    %8237 = vmatpush1.msra.mxu0 0.0
    %8238 = vmatprep.subr.mxu0 0.0
    %8239 = vmatpush1.msra.mxu0 0.0
    %8240 = vmatprep.subr.mxu0 0.0
    %8241 = vmatpush1.msra.mxu0 0.0
    %8242 = vmatprep.subr.mxu0 0.0
    %8243 = vmatpush1.msra.mxu0 0.0
    %8244 = vmatprep.subr.mxu0 0.0
    %8245 = vmatpush1.msra.mxu0 0.0
    %8246 = vmatprep.subr.mxu0 0.0
    %8247 = vmatpush1.msra.mxu0 0.0
    %8248 = vmatprep.subr.mxu0 0.0
    %8249 = vmatpush1.msra.mxu0 0.0
    %8250 = vmatprep.subr.mxu0 0.0
    %8251 = vmatpush1.msra.mxu0 0.0
    %8252 = vmatprep.subr.mxu0 0.0
    %8253 = vmatpush1.msra.mxu0 0.0
    %8254 = vmatprep.subr.mxu0 0.0
    %8255 = vmatpush1.msra.mxu0 0.0
    %8256 = vmatprep.subr.mxu0 0.0
    %8257 = vmatpush1.msra.mxu0 0.0
    %8258 = vmatprep.subr.mxu0 0.0
    %8259 = vmatpush1.msra.mxu0 0.0
    %8260 = vmatprep.subr.mxu0 0.0
    %8261 = vmatpush1.msra.mxu0 0.0
    %8262 = vmatprep.subr.mxu0 0.0
    %8263 = vmatpush1.msra.mxu0 0.0
    %8264 = vmatprep.mubr.f32.mxu0 0.0
    %8265 = vmatmul.mubr.f32.gmra.mrb[0].mxu0 %v8198
    %v8266 = vpop.f32.mrb[0].mxu0
    %v8267 = vadd.f32 %v6200, %v8266
    %v8268 = vpop.f32.mrb[0].mxu0
    %8269 = vdwg.mxu0
    %v8270 = vmax.f32 %v8267, 0.0
    %v8272 = vsel %vm2120, %v8270, 0
    %8274 = vmatprep.subr.mxu0 0.0
    %8275 = vmatpush1.msra.mxu0 %v4284
    %8276 = vmatprep.subr.mxu0 0.0
    %8277 = vmatpush1.msra.mxu0 %v4285
    %8278 = vmatprep.subr.mxu0 0.0
    %8279 = vmatpush1.msra.mxu0 %v4286
    %8280 = vmatprep.subr.mxu0 0.0
    %8281 = vmatpush1.msra.mxu0 %v4287
    %8282 = vmatprep.subr.mxu0 0.0
    %8283 = vmatpush1.msra.mxu0 %v4288
    %8284 = vmatprep.subr.mxu0 0.0
    %8285 = vmatpush1.msra.mxu0 %v4289
    %8286 = vmatprep.subr.mxu0 0.0
    %8287 = vmatpush1.msra.mxu0 %v4290
    %8288 = vmatprep.subr.mxu0 0.0
    %8289 = vmatpush1.msra.mxu0 %v4291
    %8290 = vmatprep.subr.mxu0 0.0
    %8291 = vmatpush1.msra.mxu0 0.0
    %8292 = vmatprep.subr.mxu0 0.0
    %8293 = vmatpush1.msra.mxu0 0.0
    %8294 = vmatprep.subr.mxu0 0.0
    %8295 = vmatpush1.msra.mxu0 0.0
    %8296 = vmatprep.subr.mxu0 0.0
    %8297 = vmatpush1.msra.mxu0 0.0
    %8298 = vmatprep.subr.mxu0 0.0
    %8299 = vmatpush1.msra.mxu0 0.0
    %8300 = vmatprep.subr.mxu0 0.0
    %8301 = vmatpush1.msra.mxu0 0.0
    %8302 = vmatprep.subr.mxu0 0.0
    %8303 = vmatpush1.msra.mxu0 0.0
    %8304 = vmatprep.subr.mxu0 0.0
    %8305 = vmatpush1.msra.mxu0 0.0
    %8306 = vmatprep.subr.mxu0 0.0
    %8307 = vmatpush1.msra.mxu0 0.0
    %8308 = vmatprep.subr.mxu0 0.0
    %8309 = vmatpush1.msra.mxu0 0.0
    %8310 = vmatprep.subr.mxu0 0.0
    %8311 = vmatpush1.msra.mxu0 0.0
    %8312 = vmatprep.subr.mxu0 0.0
    %8313 = vmatpush1.msra.mxu0 0.0
    %8314 = vmatprep.subr.mxu0 0.0
    %8315 = vmatpush1.msra.mxu0 0.0
    %8316 = vmatprep.subr.mxu0 0.0
    %8317 = vmatpush1.msra.mxu0 0.0
    %8318 = vmatprep.subr.mxu0 0.0
    %8319 = vmatpush1.msra.mxu0 0.0
    %8320 = vmatprep.subr.mxu0 0.0
    %8321 = vmatpush1.msra.mxu0 0.0
    %8322 = vmatprep.subr.mxu0 0.0
    %8323 = vmatpush1.msra.mxu0 0.0
    %8324 = vmatprep.subr.mxu0 0.0
    %8325 = vmatpush1.msra.mxu0 0.0
    %8326 = vmatprep.subr.mxu0 0.0
    %8327 = vmatpush1.msra.mxu0 0.0
    %8328 = vmatprep.subr.mxu0 0.0
    %8329 = vmatpush1.msra.mxu0 0.0
    %8330 = vmatprep.subr.mxu0 0.0
    %8331 = vmatpush1.msra.mxu0 0.0
    %8332 = vmatprep.subr.mxu0 0.0
    %8333 = vmatpush1.msra.mxu0 0.0
    %8334 = vmatprep.subr.mxu0 0.0
    %8335 = vmatpush1.msra.mxu0 0.0
    %8336 = vmatprep.subr.mxu0 0.0
    %8337 = vmatpush1.msra.mxu0 0.0
    %8338 = vmatprep.mubr.f32.mxu0 0.0
    %8339 = vmatmul.mubr.f32.gmra.mrb[0].mxu0 %v8272
    %v8340 = vpop.f32.mrb[0].mxu0
    %v8341 = vadd.f32 %v6278, %v8340
    %v8342 = vpop.f32.mrb[0].mxu0
    %8343 = vdwg.mxu0
    %v8344 = vadd.f32 %v8196, %v8341
    %v8345 = vsel %vm149, %v8344, 0.0
    %8346 = vadd.xlane.f32.xlu0 %v8345
    %v8347 = vpop.xlane.xlu0 %8346
    %v8348 = vmul.f32 %v8347, %v2017
    %v8349 = vsub.f32 %v8344, %v8348
    %v8350 = vmul.f32 %v8349, %v8349
    %v8351 = vsel %vm149, %v8350, 0.0
    %8352 = vadd.xlane.f32.xlu0 %v8351
    %v8353 = vpop.xlane.xlu0 %8352
    %v8354 = vmul.f32 %v8353, %v2017
    %v8355 = vadd.f32 %v8354, 1e-05
    %v8356 = vrsqrt.pop %v8355
    %v8357 = vmul.f32 %v8349, %v8356
    %v8358 = vmul.f32 %v8357, %v6369
    %v8359 = vadd.f32 %v8358, %v6374
    %8360 = vst.msk [vmem:[%s9] sm:$0xff] %vm149, %v6375
    %s8361 = scalar_lea.vmem %s9, 8
    %8362 = vst.msk [vmem:[%s8361] sm:$0xff] %vm149, %v8359
    // Predicated region
    $region38: #{transformer_decoder.1} parent=1 // pred_check
      _
    $region39: #{transformer_decoder.1} parent=1 // pred_check_branch
      %8364 = sbr.rel (0) target = $region41
    $region40: #{transformer_decoder.1} parent=1 // pred_region
      _
    $region41: #{transformer_decoder.1} parent=1 // pred_fallthru
      _
    // Predicated region
    $region42: #{transformer_decoder.1} parent=1 // pred_check
      _
    $region43: #{transformer_decoder.1} parent=1 // pred_check_branch
      %8366 = sbr.rel (0) target = $region45
    $region44: #{transformer_decoder.1} parent=1 // pred_region
      %s8368 = ssub.s32 512, 512
      %8369 = vsyncadd [#allocation3], %s8368
      %s8370 = sshll.u32 [#allocation2], 4
      %s8371 = int_to_ptr.vmem [resolvable:$true] %s8370
      %8376 = dma.vmem_to_hbm [thread:$0]  %s8371, 512, %s10, [#allocation3], 128, 128, 8
    $region45: #{transformer_decoder.1} parent=1 // pred_fallthru
      _
    // Predicated region
    $region46: #{transformer_decoder.1} parent=1 // pred_check
      _
    $region47: #{transformer_decoder.1} parent=1 // pred_check_branch
      %8378 = sbr.rel (0) target = $region49
    $region48: #{transformer_decoder.1} parent=1 // pred_region
      _
    $region49: #{transformer_decoder.1} parent=1 // pred_fallthru
      _
    // Predicated region
    $region50: #{transformer_decoder.1} parent=1 // pred_check
      _
    $region51: #{transformer_decoder.1} parent=1 // pred_check_branch
      %8380 = sbr.rel (0) target = $region53
    $region52: #{transformer_decoder.1} parent=1 // pred_region
      %8381 = dma.done [#allocation3], 512
    $region53: #{transformer_decoder.1} parent=1 // pred_fallthru
      _
    %8382 = vsyncpa [#allocation3], 1

</llo_original>
